<compile_context>
chip_gen: v7x
topology: tpu7x:2x2x1
jax: 0.10.0
libtpu: 0.0.40
codegen_flags: <defaults>
</compile_context>

<pallas_src>
import functools

import numpy as np
import jax
import jax.numpy as jnp
from jax.experimental import pallas as pl
from jax.experimental.pallas import tpu as pltpu

EPS = 1e-5        # PyTorch default eps for BatchNorm1d and LayerNorm
ACTIONS = 27
OUT_PAD = 128     # lane-dense final store; wrapper slices back to 27

# ----------------------------------------------------------------------------
# Original branch specs (mirror the PyTorch nn.Sequential definitions)
# ----------------------------------------------------------------------------
SPEC_FC1 = [("bn", 78), ("linear", 78, 128), ("relu",), ("ln", 128),
            ("linear", 128, 64), ("relu",), ("ln", 64), ("linear", 64, 16)]
SPEC_FC2 = [("bn", 624), ("linear", 624, 1024), ("relu",), ("ln", 1024),
            ("linear", 1024, 256), ("relu",), ("ln", 256),
            ("linear", 256, 64), ("relu",), ("ln", 64), ("linear", 64, 16)]
SPEC_FC3 = [("bn", 36), ("linear", 36, 128), ("relu",), ("ln", 128),
            ("linear", 128, 64), ("relu",), ("ln", 64), ("linear", 64, 16)]
SPEC_FC4 = [("bn", 520), ("linear", 520, 1024), ("relu",), ("ln", 1024),
            ("linear", 1024, 256), ("relu",), ("ln", 256),
            ("linear", 256, 64), ("relu",), ("ln", 64), ("linear", 64, 16)]
SPEC_FC5 = [("ln", 14), ("linear", 14, 256), ("relu",), ("ln", 256),
            ("linear", 256, 128), ("relu",), ("ln", 128), ("linear", 128, 64)]
SPEC_OUT = [("ln", 128), ("linear", 128, 256), ("relu",), ("ln", 256),
            ("linear", 256, 128), ("relu",), ("ln", 128), ("linear", 128, ACTIONS)]

BRANCH_ORDER = ["fc1", "fc2", "fc3", "fc4", "fc5", "out"]
BRANCH_SPECS = {"fc1": SPEC_FC1, "fc2": SPEC_FC2, "fc3": SPEC_FC3,
                "fc4": SPEC_FC4, "fc5": SPEC_FC5, "out": SPEC_OUT}

# Where each branch's final head lands inside the shared 128-wide slab:
# torch.cat((o1,o2,o3,o4),1) -> cols [0:64]; state head -> cols [64:128];
# the final out head is padded 27 -> 128 at offset 0 and sliced in the wrapper.
EMBED_LAST = {"fc1": (128, 0), "fc2": (128, 16), "fc3": (128, 32),
              "fc4": (128, 48), "fc5": (128, 64), "out": (OUT_PAD, 0)}


# ----------------------------------------------------------------------------
# Parameter build: PyTorch-like init, then fold BN / LN affines into Linears.
# ----------------------------------------------------------------------------
def _build_branch(key, spec, embed_last=None):
    """Returns (ops, params, key).

    ops    : list over "ln" (standardize only), "relu", "linear"
    params : per Linear, [W (in,out) bf16, b (1,out) f32] with any preceding
             BN (eval) / LN affine folded in.
    """
    ops, params = [], []
    pending = None  # (scale, shift) over the input features of the next Linear
    last_linear = max(i for i, o in enumerate(spec) if o[0] == "linear")

    for li, op in enumerate(spec):
        kind = op[0]
        if kind == "bn":
            n = op[1]
            gamma = jnp.ones((n,), jnp.float32)
            beta = jnp.zeros((n,), jnp.float32)
            run_m = jnp.zeros((n,), jnp.float32)
            run_v = jnp.ones((n,), jnp.float32)
            s = gamma / jnp.sqrt(run_v + EPS)        # eval-mode BN == affine
            t = beta - run_m * s
            pending = (s, t)                         # fully folded, no kernel op
        elif kind == "ln":
            n = op[1]
            gamma = jnp.ones((n,), jnp.float32)
            beta = jnp.zeros((n,), jnp.float32)
            ops.append("ln")                         # data-dependent part stays
            pending = (gamma, beta)                  # affine folds into Linear
        elif kind == "relu":
            ops.append("relu")
        elif kind == "linear":
            fin, fout = op[1], op[2]
            key, kw, kb = jax.random.split(key, 3)
            bound = 1.0 / np.sqrt(fin)
            W = jax.random.uniform(kw, (fin, fout), jnp.float32, -bound, bound)
            b = jax.random.uniform(kb, (fout,), jnp.float32, -bound, bound)
            if pending is not None:
                s, t = pending
                b = b + t @ W                        # (x*s + t) @ W + b
                W = s[:, None] * W
                pending = None
            if embed_last is not None and li == last_linear:
                total, off = embed_last
                Wp = jnp.zeros((fin, total), jnp.float32)
                Wp = Wp.at[:, off:off + fout].set(W)
                bp = jnp.zeros((total,), jnp.float32)
                bp = bp.at[off:off + fout].set(b)
                W, b = Wp, bp
            ops.append("linear")
            params.append(W.astype(jnp.bfloat16))            # bf16 weight stream
            params.append(b.reshape(1, -1).astype(jnp.float32))
        else:
            raise ValueError(kind)
    assert pending is None
    return ops, params, key


def build_dqn_params(seed=0):
    key = jax.random.PRNGKey(seed)
    branch_ops, counts, flat_params = {}, {}, []
    for name in BRANCH_ORDER:
        ops, params, key = _build_branch(key, BRANCH_SPECS[name],
                                         embed_last=EMBED_LAST[name])
        branch_ops[name] = ops
        counts[name] = len(params)
        flat_params.extend(params)
    return branch_ops, counts, flat_params


# ----------------------------------------------------------------------------
# Fused kernel: all six branches + glue in one pallas_call (everything in VMEM)
# ----------------------------------------------------------------------------
def _chain(h, ops, prefs):
    i = 0
    for op in ops:
        if op == "ln":                               # standardize (affine folded)
            mu = jnp.mean(h, axis=-1, keepdims=True)
            var = jnp.mean(jnp.square(h - mu), axis=-1, keepdims=True)
            h = (h - mu) * jax.lax.rsqrt(var + EPS)
        elif op == "relu":
            h = jnp.maximum(h, 0.0)
        else:                                        # linear (bf16 W, f32 acc)
            w = prefs[i][...]
            b = prefs[i + 1][...]
            i += 2
            h = jnp.dot(h.astype(w.dtype), w,
                        preferred_element_type=jnp.float32) + b
    return h


def make_fused_kernel(branch_ops, counts):
    offsets, o = {}, 0
    for name in BRANCH_ORDER:
        offsets[name] = (o, o + counts[name])
        o += counts[name]

    def kernel(rep_ref, x1_ref, x2_ref, x3_ref, x4_ref, xs_ref, *rest):
        out_ref = rest[-1]
        prefs = rest[:-1]

        def branch(name, x):
            lo, hi = offsets[name]
            return _chain(x, branch_ops[name], prefs[lo:hi])

        f32 = jnp.float32
        # Four entity branches; heads are embedded at disjoint 16-wide column
        # groups of a 128-wide slab, so torch.cat((o1,o2,o3,o4),1) is a sum.
        o1 = branch("fc1", x1_ref[...].astype(f32))      # (B, 128)
        o2 = branch("fc2", x2_ref[...].astype(f32))
        o3 = branch("fc3", x3_ref[...].astype(f32))
        o4 = branch("fc4", x4_ref[...].astype(f32))
        st4 = o1 + o2 + o3 + o4                          # cols [0:64] live

        # Per-slot state branch; head lives in cols [64:128] of the same slab.
        o_state = branch("fc5", xs_ref[...].astype(f32))  # (B*6, 128)

        # expand((B,6,64)) == one-hot row replication; cat along features == add.
        z = jnp.dot(rep_ref[...], st4,
                    preferred_element_type=jnp.float32) + o_state  # (B*6, 128)

        out_ref[...] = branch("out", z).astype(out_ref.dtype)      # (B*6, 128)

    return kernel


def dqn_forward(branch_ops, counts, flat_params,
                my_airs, my_weapons, en_airs, en_weapons, state):
    B = my_airs.shape[0]
    x1 = my_airs.reshape(B, 6 * 13).astype(jnp.float32)
    x2 = my_weapons.reshape(B, 52 * 12).astype(jnp.float32)
    x3 = en_airs.reshape(B, 6 * 6).astype(jnp.float32)
    x4 = en_weapons.reshape(B, 52 * 10).astype(jnp.float32)
    xs = state.reshape(B * 6, 14).astype(jnp.float32)
    # One-hot replication matrix: row r of (B*6) pulls batch row r // 6.
    rep = jnp.repeat(jnp.eye(B, dtype=jnp.float32), 6, axis=0)     # (B*6, B)

    vmem = pl.BlockSpec(memory_space=pltpu.MemorySpace.VMEM)
    n_in = 6 + len(flat_params)
    out = pl.pallas_call(
        make_fused_kernel(branch_ops, counts),
        out_shape=jax.ShapeDtypeStruct((B * 6, OUT_PAD), jnp.float32),
        in_specs=[vmem] * n_in,
        out_specs=vmem,
        compiler_params=pltpu.CompilerParams(vmem_limit_bytes=32 * 1024 * 1024),
    )(rep, x1, x2, x3, x4, xs, *flat_params)
    return out[:, :ACTIONS].reshape(B, 6, ACTIONS)


# ----------------------------------------------------------------------------
# Pure-JAX reference (same folded params) for a correctness check.
# ----------------------------------------------------------------------------
def ref_forward(branch_ops, counts, flat_params,
                my_airs, my_weapons, en_airs, en_weapons, state):
    B = my_airs.shape[0]
    split, o = {}, 0
    for name in BRANCH_ORDER:
        split[name] = flat_params[o:o + counts[name]]
        o += counts[name]

    def chain(h, ops, params):
        i = 0
        for op in ops:
            if op == "ln":
                mu = jnp.mean(h, -1, keepdims=True)
                var = jnp.mean(jnp.square(h - mu), -1, keepdims=True)
                h = (h - mu) * jax.lax.rsqrt(var + EPS)
            elif op == "relu":
                h = jnp.maximum(h, 0.0)
            else:
                w, b = params[i], params[i + 1]
                i += 2
                h = jnp.dot(h.astype(w.dtype), w,
                            preferred_element_type=jnp.float32) + b
        return h

    f32 = jnp.float32
    o1 = chain(my_airs.reshape(B, 78).astype(f32), branch_ops["fc1"], split["fc1"])
    o2 = chain(my_weapons.reshape(B, 624).astype(f32), branch_ops["fc2"], split["fc2"])
    o3 = chain(en_airs.reshape(B, 36).astype(f32), branch_ops["fc3"], split["fc3"])
    o4 = chain(en_weapons.reshape(B, 520).astype(f32), branch_ops["fc4"], split["fc4"])
    st4 = o1 + o2 + o3 + o4
    o_state = chain(state.reshape(B * 6, 14).astype(f32), branch_ops["fc5"], split["fc5"])
    z = jnp.repeat(st4, 6, axis=0) + o_state
    out = chain(z, branch_ops["out"], split["out"])
    return out[:, :ACTIONS].reshape(B, 6, ACTIONS)


if __name__ == "__main__":
    B = 2
    branch_ops, counts, flat_params = build_dqn_params(seed=0)

    key = jax.random.PRNGKey(0)
    k1, k2, k3, k4, k5 = jax.random.split(key, 5)
    my_airs = jax.random.normal(k1, (B, 1, 6, 13), jnp.float32)
    my_weapons = jax.random.normal(k2, (B, 1, 52, 12), jnp.float32)
    en_airs = jax.random.normal(k3, (B, 1, 6, 6), jnp.float32)
    en_weapons = jax.random.normal(k4, (B, 1, 52, 10), jnp.float32)
    nn_state = jax.random.normal(k5, (B, 6, 14), jnp.float32)

    fwd = jax.jit(functools.partial(dqn_forward, branch_ops, counts))
    out = fwd(flat_params, my_airs, my_weapons, en_airs, en_weapons, nn_state)
    out = jax.block_until_ready(out)

    assert out.shape == (B, 6, ACTIONS) and out.dtype == jnp.float32
    assert bool(jnp.all(jnp.isfinite(out)))

    ref = ref_forward(branch_ops, counts, flat_params,
                      my_airs, my_weapons, en_airs, en_weapons, nn_state)
    np.testing.assert_allclose(np.asarray(out), np.asarray(ref),
                               rtol=2e-2, atol=2e-2)
    print("KERNEL_OK")
</pallas_src>

<mosaic_0001>
module attributes {stable_mosaic.version = 11 : i64} {
  func.func @kernel(%arg0: memref<12x2xf32, #tpu.memory_space<vmem>>, %arg1: memref<2x78xf32, #tpu.memory_space<vmem>>, %arg2: memref<2x624xf32, #tpu.memory_space<vmem>>, %arg3: memref<2x36xf32, #tpu.memory_space<vmem>>, %arg4: memref<2x520xf32, #tpu.memory_space<vmem>>, %arg5: memref<12x14xf32, #tpu.memory_space<vmem>>, %arg6: memref<78x128xbf16, #tpu.memory_space<vmem>>, %arg7: memref<1x128xf32, #tpu.memory_space<vmem>>, %arg8: memref<128x64xbf16, #tpu.memory_space<vmem>>, %arg9: memref<1x64xf32, #tpu.memory_space<vmem>>, %arg10: memref<64x128xbf16, #tpu.memory_space<vmem>>, %arg11: memref<1x128xf32, #tpu.memory_space<vmem>>, %arg12: memref<624x1024xbf16, #tpu.memory_space<vmem>>, %arg13: memref<1x1024xf32, #tpu.memory_space<vmem>>, %arg14: memref<1024x256xbf16, #tpu.memory_space<vmem>>, %arg15: memref<1x256xf32, #tpu.memory_space<vmem>>, %arg16: memref<256x64xbf16, #tpu.memory_space<vmem>>, %arg17: memref<1x64xf32, #tpu.memory_space<vmem>>, %arg18: memref<64x128xbf16, #tpu.memory_space<vmem>>, %arg19: memref<1x128xf32, #tpu.memory_space<vmem>>, %arg20: memref<36x128xbf16, #tpu.memory_space<vmem>>, %arg21: memref<1x128xf32, #tpu.memory_space<vmem>>, %arg22: memref<128x64xbf16, #tpu.memory_space<vmem>>, %arg23: memref<1x64xf32, #tpu.memory_space<vmem>>, %arg24: memref<64x128xbf16, #tpu.memory_space<vmem>>, %arg25: memref<1x128xf32, #tpu.memory_space<vmem>>, %arg26: memref<520x1024xbf16, #tpu.memory_space<vmem>>, %arg27: memref<1x1024xf32, #tpu.memory_space<vmem>>, %arg28: memref<1024x256xbf16, #tpu.memory_space<vmem>>, %arg29: memref<1x256xf32, #tpu.memory_space<vmem>>, %arg30: memref<256x64xbf16, #tpu.memory_space<vmem>>, %arg31: memref<1x64xf32, #tpu.memory_space<vmem>>, %arg32: memref<64x128xbf16, #tpu.memory_space<vmem>>, %arg33: memref<1x128xf32, #tpu.memory_space<vmem>>, %arg34: memref<14x256xbf16, #tpu.memory_space<vmem>>, %arg35: memref<1x256xf32, #tpu.memory_space<vmem>>, %arg36: memref<256x128xbf16, #tpu.memory_space<vmem>>, %arg37: memref<1x128xf32, #tpu.memory_space<vmem>>, %arg38: memref<128x128xbf16, #tpu.memory_space<vmem>>, %arg39: memref<1x128xf32, #tpu.memory_space<vmem>>, %arg40: memref<128x256xbf16, #tpu.memory_space<vmem>>, %arg41: memref<1x256xf32, #tpu.memory_space<vmem>>, %arg42: memref<256x128xbf16, #tpu.memory_space<vmem>>, %arg43: memref<1x128xf32, #tpu.memory_space<vmem>>, %arg44: memref<128x128xbf16, #tpu.memory_space<vmem>>, %arg45: memref<1x128xf32, #tpu.memory_space<vmem>>, %arg46: memref<12x128xf32, #tpu.memory_space<vmem>>) attributes {dimension_semantics = [], scalar_prefetch = 0 : i64, scratch_operands = 0 : i64, tpu.core_type = #tpu.core_type<tc>} {
    %c0 = arith.constant 0 : index
    %c0_0 = arith.constant 0 : index
    %0 = vector.load %arg1[%c0, %c0_0] : memref<2x78xf32, #tpu.memory_space<vmem>>, vector<2x78xf32>
    %c0_1 = arith.constant 0 : index
    %c0_2 = arith.constant 0 : index
    %1 = vector.load %arg6[%c0_1, %c0_2] : memref<78x128xbf16, #tpu.memory_space<vmem>>, vector<78x128xbf16>
    %c0_3 = arith.constant 0 : index
    %c0_4 = arith.constant 0 : index
    %2 = vector.load %arg7[%c0_3, %c0_4] : memref<1x128xf32, #tpu.memory_space<vmem>>, vector<1x128xf32>
    %3 = arith.truncf %0 : vector<2x78xf32> to vector<2x78xbf16>
    %cst = arith.constant dense<0.000000e+00> : vector<2x128xf32>
    %4 = tpu.matmul %3, %1, %cst {dimension_numbers = #tpu.dot_dimension_numbers<[1], [0], [0], [1], [0, 0, 1, 1], [], []>} : vector<2x78xbf16>, vector<78x128xbf16>, vector<2x128xf32> -> vector<2x128xf32>
    %5 = vector.broadcast %2 : vector<1x128xf32> to vector<2x128xf32>
    %6 = arith.addf %4, %5 : vector<2x128xf32>
    %cst_5 = arith.constant 0.000000e+00 : f32
    %7 = vector.broadcast %cst_5 : f32 to vector<2x128xf32>
    %8 = arith.maximumf %6, %7 : vector<2x128xf32>
    %cst_6 = arith.constant dense<0.000000e+00> : vector<2xf32>
    %9 = vector.multi_reduction <add>, %8, %cst_6 [1] : vector<2x128xf32> to vector<2xf32>
    %10 = vector.shape_cast %9 : vector<2xf32> to vector<2x1xf32>
    %cst_7 = arith.constant 1.280000e+02 : f32
    %11 = vector.broadcast %cst_7 : f32 to vector<2x1xf32>
    %12 = arith.divf %10, %11 : vector<2x1xf32>
    %13 = vector.broadcast %12 : vector<2x1xf32> to vector<2x128xf32>
    %14 = arith.subf %8, %13 : vector<2x128xf32>
    %15 = arith.mulf %14, %14 : vector<2x128xf32>
    %cst_8 = arith.constant dense<0.000000e+00> : vector<2xf32>
    %16 = vector.multi_reduction <add>, %15, %cst_8 [1] : vector<2x128xf32> to vector<2xf32>
    %17 = vector.shape_cast %16 : vector<2xf32> to vector<2x1xf32>
    %cst_9 = arith.constant 1.280000e+02 : f32
    %18 = vector.broadcast %cst_9 : f32 to vector<2x1xf32>
    %19 = arith.divf %17, %18 : vector<2x1xf32>
    %20 = vector.broadcast %12 : vector<2x1xf32> to vector<2x128xf32>
    %21 = arith.subf %8, %20 : vector<2x128xf32>
    %cst_10 = arith.constant 9.99999974E-6 : f32
    %22 = vector.broadcast %cst_10 : f32 to vector<2x1xf32>
    %23 = arith.addf %19, %22 : vector<2x1xf32>
    %24 = math.rsqrt %23 : vector<2x1xf32>
    %25 = vector.broadcast %24 : vector<2x1xf32> to vector<2x128xf32>
    %26 = arith.mulf %21, %25 : vector<2x128xf32>
    %c0_11 = arith.constant 0 : index
    %c0_12 = arith.constant 0 : index
    %27 = vector.load %arg8[%c0_11, %c0_12] : memref<128x64xbf16, #tpu.memory_space<vmem>>, vector<128x64xbf16>
    %c0_13 = arith.constant 0 : index
    %c0_14 = arith.constant 0 : index
    %28 = vector.load %arg9[%c0_13, %c0_14] : memref<1x64xf32, #tpu.memory_space<vmem>>, vector<1x64xf32>
    %29 = arith.truncf %26 : vector<2x128xf32> to vector<2x128xbf16>
    %cst_15 = arith.constant dense<0.000000e+00> : vector<2x64xf32>
    %30 = tpu.matmul %29, %27, %cst_15 {dimension_numbers = #tpu.dot_dimension_numbers<[1], [0], [0], [1], [0, 0, 1, 1], [], []>} : vector<2x128xbf16>, vector<128x64xbf16>, vector<2x64xf32> -> vector<2x64xf32>
    %31 = vector.broadcast %28 : vector<1x64xf32> to vector<2x64xf32>
    %32 = arith.addf %30, %31 : vector<2x64xf32>
    %cst_16 = arith.constant 0.000000e+00 : f32
    %33 = vector.broadcast %cst_16 : f32 to vector<2x64xf32>
    %34 = arith.maximumf %32, %33 : vector<2x64xf32>
    %cst_17 = arith.constant dense<0.000000e+00> : vector<2xf32>
    %35 = vector.multi_reduction <add>, %34, %cst_17 [1] : vector<2x64xf32> to vector<2xf32>
    %36 = vector.shape_cast %35 : vector<2xf32> to vector<2x1xf32>
    %cst_18 = arith.constant 6.400000e+01 : f32
    %37 = vector.broadcast %cst_18 : f32 to vector<2x1xf32>
    %38 = arith.divf %36, %37 : vector<2x1xf32>
    %39 = vector.broadcast %38 : vector<2x1xf32> to vector<2x64xf32>
    %40 = arith.subf %34, %39 : vector<2x64xf32>
    %41 = arith.mulf %40, %40 : vector<2x64xf32>
    %cst_19 = arith.constant dense<0.000000e+00> : vector<2xf32>
    %42 = vector.multi_reduction <add>, %41, %cst_19 [1] : vector<2x64xf32> to vector<2xf32>
    %43 = vector.shape_cast %42 : vector<2xf32> to vector<2x1xf32>
    %cst_20 = arith.constant 6.400000e+01 : f32
    %44 = vector.broadcast %cst_20 : f32 to vector<2x1xf32>
    %45 = arith.divf %43, %44 : vector<2x1xf32>
    %46 = vector.broadcast %38 : vector<2x1xf32> to vector<2x64xf32>
    %47 = arith.subf %34, %46 : vector<2x64xf32>
    %cst_21 = arith.constant 9.99999974E-6 : f32
    %48 = vector.broadcast %cst_21 : f32 to vector<2x1xf32>
    %49 = arith.addf %45, %48 : vector<2x1xf32>
    %50 = math.rsqrt %49 : vector<2x1xf32>
    %51 = vector.broadcast %50 : vector<2x1xf32> to vector<2x64xf32>
    %52 = arith.mulf %47, %51 : vector<2x64xf32>
    %c0_22 = arith.constant 0 : index
    %c0_23 = arith.constant 0 : index
    %53 = vector.load %arg10[%c0_22, %c0_23] : memref<64x128xbf16, #tpu.memory_space<vmem>>, vector<64x128xbf16>
    %c0_24 = arith.constant 0 : index
    %c0_25 = arith.constant 0 : index
    %54 = vector.load %arg11[%c0_24, %c0_25] : memref<1x128xf32, #tpu.memory_space<vmem>>, vector<1x128xf32>
    %55 = arith.truncf %52 : vector<2x64xf32> to vector<2x64xbf16>
    %cst_26 = arith.constant dense<0.000000e+00> : vector<2x128xf32>
    %56 = tpu.matmul %55, %53, %cst_26 {dimension_numbers = #tpu.dot_dimension_numbers<[1], [0], [0], [1], [0, 0, 1, 1], [], []>} : vector<2x64xbf16>, vector<64x128xbf16>, vector<2x128xf32> -> vector<2x128xf32>
    %57 = vector.broadcast %54 : vector<1x128xf32> to vector<2x128xf32>
    %58 = arith.addf %56, %57 : vector<2x128xf32>
    %c0_27 = arith.constant 0 : index
    %c0_28 = arith.constant 0 : index
    %59 = vector.load %arg2[%c0_27, %c0_28] : memref<2x624xf32, #tpu.memory_space<vmem>>, vector<2x624xf32>
    %c0_29 = arith.constant 0 : index
    %c0_30 = arith.constant 0 : index
    %60 = vector.load %arg12[%c0_29, %c0_30] : memref<624x1024xbf16, #tpu.memory_space<vmem>>, vector<624x1024xbf16>
    %c0_31 = arith.constant 0 : index
    %c0_32 = arith.constant 0 : index
    %61 = vector.load %arg13[%c0_31, %c0_32] : memref<1x1024xf32, #tpu.memory_space<vmem>>, vector<1x1024xf32>
    %62 = arith.truncf %59 : vector<2x624xf32> to vector<2x624xbf16>
    %cst_33 = arith.constant dense<0.000000e+00> : vector<2x1024xf32>
    %63 = tpu.matmul %62, %60, %cst_33 {dimension_numbers = #tpu.dot_dimension_numbers<[1], [0], [0], [1], [0, 0, 1, 1], [], []>} : vector<2x624xbf16>, vector<624x1024xbf16>, vector<2x1024xf32> -> vector<2x1024xf32>
    %64 = vector.broadcast %61 : vector<1x1024xf32> to vector<2x1024xf32>
    %65 = arith.addf %63, %64 : vector<2x1024xf32>
    %cst_34 = arith.constant 0.000000e+00 : f32
    %66 = vector.broadcast %cst_34 : f32 to vector<2x1024xf32>
    %67 = arith.maximumf %65, %66 : vector<2x1024xf32>
    %cst_35 = arith.constant dense<0.000000e+00> : vector<2xf32>
    %68 = vector.multi_reduction <add>, %67, %cst_35 [1] : vector<2x1024xf32> to vector<2xf32>
    %69 = vector.shape_cast %68 : vector<2xf32> to vector<2x1xf32>
    %cst_36 = arith.constant 1.024000e+03 : f32
    %70 = vector.broadcast %cst_36 : f32 to vector<2x1xf32>
    %71 = arith.divf %69, %70 : vector<2x1xf32>
    %72 = vector.broadcast %71 : vector<2x1xf32> to vector<2x1024xf32>
    %73 = arith.subf %67, %72 : vector<2x1024xf32>
    %74 = arith.mulf %73, %73 : vector<2x1024xf32>
    %cst_37 = arith.constant dense<0.000000e+00> : vector<2xf32>
    %75 = vector.multi_reduction <add>, %74, %cst_37 [1] : vector<2x1024xf32> to vector<2xf32>
    %76 = vector.shape_cast %75 : vector<2xf32> to vector<2x1xf32>
    %cst_38 = arith.constant 1.024000e+03 : f32
    %77 = vector.broadcast %cst_38 : f32 to vector<2x1xf32>
    %78 = arith.divf %76, %77 : vector<2x1xf32>
    %79 = vector.broadcast %71 : vector<2x1xf32> to vector<2x1024xf32>
    %80 = arith.subf %67, %79 : vector<2x1024xf32>
    %cst_39 = arith.constant 9.99999974E-6 : f32
    %81 = vector.broadcast %cst_39 : f32 to vector<2x1xf32>
    %82 = arith.addf %78, %81 : vector<2x1xf32>
    %83 = math.rsqrt %82 : vector<2x1xf32>
    %84 = vector.broadcast %83 : vector<2x1xf32> to vector<2x1024xf32>
    %85 = arith.mulf %80, %84 : vector<2x1024xf32>
    %c0_40 = arith.constant 0 : index
    %c0_41 = arith.constant 0 : index
    %86 = vector.load %arg14[%c0_40, %c0_41] : memref<1024x256xbf16, #tpu.memory_space<vmem>>, vector<1024x256xbf16>
    %c0_42 = arith.constant 0 : index
    %c0_43 = arith.constant 0 : index
    %87 = vector.load %arg15[%c0_42, %c0_43] : memref<1x256xf32, #tpu.memory_space<vmem>>, vector<1x256xf32>
    %88 = arith.truncf %85 : vector<2x1024xf32> to vector<2x1024xbf16>
    %cst_44 = arith.constant dense<0.000000e+00> : vector<2x256xf32>
    %89 = tpu.matmul %88, %86, %cst_44 {dimension_numbers = #tpu.dot_dimension_numbers<[1], [0], [0], [1], [0, 0, 1, 1], [], []>} : vector<2x1024xbf16>, vector<1024x256xbf16>, vector<2x256xf32> -> vector<2x256xf32>
    %90 = vector.broadcast %87 : vector<1x256xf32> to vector<2x256xf32>
    %91 = arith.addf %89, %90 : vector<2x256xf32>
    %cst_45 = arith.constant 0.000000e+00 : f32
    %92 = vector.broadcast %cst_45 : f32 to vector<2x256xf32>
    %93 = arith.maximumf %91, %92 : vector<2x256xf32>
    %cst_46 = arith.constant dense<0.000000e+00> : vector<2xf32>
    %94 = vector.multi_reduction <add>, %93, %cst_46 [1] : vector<2x256xf32> to vector<2xf32>
    %95 = vector.shape_cast %94 : vector<2xf32> to vector<2x1xf32>
    %cst_47 = arith.constant 2.560000e+02 : f32
    %96 = vector.broadcast %cst_47 : f32 to vector<2x1xf32>
    %97 = arith.divf %95, %96 : vector<2x1xf32>
    %98 = vector.broadcast %97 : vector<2x1xf32> to vector<2x256xf32>
    %99 = arith.subf %93, %98 : vector<2x256xf32>
    %100 = arith.mulf %99, %99 : vector<2x256xf32>
    %cst_48 = arith.constant dense<0.000000e+00> : vector<2xf32>
    %101 = vector.multi_reduction <add>, %100, %cst_48 [1] : vector<2x256xf32> to vector<2xf32>
    %102 = vector.shape_cast %101 : vector<2xf32> to vector<2x1xf32>
    %cst_49 = arith.constant 2.560000e+02 : f32
    %103 = vector.broadcast %cst_49 : f32 to vector<2x1xf32>
    %104 = arith.divf %102, %103 : vector<2x1xf32>
    %105 = vector.broadcast %97 : vector<2x1xf32> to vector<2x256xf32>
    %106 = arith.subf %93, %105 : vector<2x256xf32>
    %cst_50 = arith.constant 9.99999974E-6 : f32
    %107 = vector.broadcast %cst_50 : f32 to vector<2x1xf32>
    %108 = arith.addf %104, %107 : vector<2x1xf32>
    %109 = math.rsqrt %108 : vector<2x1xf32>
    %110 = vector.broadcast %109 : vector<2x1xf32> to vector<2x256xf32>
    %111 = arith.mulf %106, %110 : vector<2x256xf32>
    %c0_51 = arith.constant 0 : index
    %c0_52 = arith.constant 0 : index
    %112 = vector.load %arg16[%c0_51, %c0_52] : memref<256x64xbf16, #tpu.memory_space<vmem>>, vector<256x64xbf16>
    %c0_53 = arith.constant 0 : index
    %c0_54 = arith.constant 0 : index
    %113 = vector.load %arg17[%c0_53, %c0_54] : memref<1x64xf32, #tpu.memory_space<vmem>>, vector<1x64xf32>
    %114 = arith.truncf %111 : vector<2x256xf32> to vector<2x256xbf16>
    %cst_55 = arith.constant dense<0.000000e+00> : vector<2x64xf32>
    %115 = tpu.matmul %114, %112, %cst_55 {dimension_numbers = #tpu.dot_dimension_numbers<[1], [0], [0], [1], [0, 0, 1, 1], [], []>} : vector<2x256xbf16>, vector<256x64xbf16>, vector<2x64xf32> -> vector<2x64xf32>
    %116 = vector.broadcast %113 : vector<1x64xf32> to vector<2x64xf32>
    %117 = arith.addf %115, %116 : vector<2x64xf32>
    %cst_56 = arith.constant 0.000000e+00 : f32
    %118 = vector.broadcast %cst_56 : f32 to vector<2x64xf32>
    %119 = arith.maximumf %117, %118 : vector<2x64xf32>
    %cst_57 = arith.constant dense<0.000000e+00> : vector<2xf32>
    %120 = vector.multi_reduction <add>, %119, %cst_57 [1] : vector<2x64xf32> to vector<2xf32>
    %121 = vector.shape_cast %120 : vector<2xf32> to vector<2x1xf32>
    %cst_58 = arith.constant 6.400000e+01 : f32
    %122 = vector.broadcast %cst_58 : f32 to vector<2x1xf32>
    %123 = arith.divf %121, %122 : vector<2x1xf32>
    %124 = vector.broadcast %123 : vector<2x1xf32> to vector<2x64xf32>
    %125 = arith.subf %119, %124 : vector<2x64xf32>
    %126 = arith.mulf %125, %125 : vector<2x64xf32>
    %cst_59 = arith.constant dense<0.000000e+00> : vector<2xf32>
    %127 = vector.multi_reduction <add>, %126, %cst_59 [1] : vector<2x64xf32> to vector<2xf32>
    %128 = vector.shape_cast %127 : vector<2xf32> to vector<2x1xf32>
    %cst_60 = arith.constant 6.400000e+01 : f32
    %129 = vector.broadcast %cst_60 : f32 to vector<2x1xf32>
    %130 = arith.divf %128, %129 : vector<2x1xf32>
    %131 = vector.broadcast %123 : vector<2x1xf32> to vector<2x64xf32>
    %132 = arith.subf %119, %131 : vector<2x64xf32>
    %cst_61 = arith.constant 9.99999974E-6 : f32
    %133 = vector.broadcast %cst_61 : f32 to vector<2x1xf32>
    %134 = arith.addf %130, %133 : vector<2x1xf32>
    %135 = math.rsqrt %134 : vector<2x1xf32>
    %136 = vector.broadcast %135 : vector<2x1xf32> to vector<2x64xf32>
    %137 = arith.mulf %132, %136 : vector<2x64xf32>
    %c0_62 = arith.constant 0 : index
    %c0_63 = arith.constant 0 : index
    %138 = vector.load %arg18[%c0_62, %c0_63] : memref<64x128xbf16, #tpu.memory_space<vmem>>, vector<64x128xbf16>
    %c0_64 = arith.constant 0 : index
    %c0_65 = arith.constant 0 : index
    %139 = vector.load %arg19[%c0_64, %c0_65] : memref<1x128xf32, #tpu.memory_space<vmem>>, vector<1x128xf32>
    %140 = arith.truncf %137 : vector<2x64xf32> to vector<2x64xbf16>
    %cst_66 = arith.constant dense<0.000000e+00> : vector<2x128xf32>
    %141 = tpu.matmul %140, %138, %cst_66 {dimension_numbers = #tpu.dot_dimension_numbers<[1], [0], [0], [1], [0, 0, 1, 1], [], []>} : vector<2x64xbf16>, vector<64x128xbf16>, vector<2x128xf32> -> vector<2x128xf32>
    %142 = vector.broadcast %139 : vector<1x128xf32> to vector<2x128xf32>
    %143 = arith.addf %141, %142 : vector<2x128xf32>
    %c0_67 = arith.constant 0 : index
    %c0_68 = arith.constant 0 : index
    %144 = vector.load %arg3[%c0_67, %c0_68] : memref<2x36xf32, #tpu.memory_space<vmem>>, vector<2x36xf32>
    %c0_69 = arith.constant 0 : index
    %c0_70 = arith.constant 0 : index
    %145 = vector.load %arg20[%c0_69, %c0_70] : memref<36x128xbf16, #tpu.memory_space<vmem>>, vector<36x128xbf16>
    %c0_71 = arith.constant 0 : index
    %c0_72 = arith.constant 0 : index
    %146 = vector.load %arg21[%c0_71, %c0_72] : memref<1x128xf32, #tpu.memory_space<vmem>>, vector<1x128xf32>
    %147 = arith.truncf %144 : vector<2x36xf32> to vector<2x36xbf16>
    %cst_73 = arith.constant dense<0.000000e+00> : vector<2x128xf32>
    %148 = tpu.matmul %147, %145, %cst_73 {dimension_numbers = #tpu.dot_dimension_numbers<[1], [0], [0], [1], [0, 0, 1, 1], [], []>} : vector<2x36xbf16>, vector<36x128xbf16>, vector<2x128xf32> -> vector<2x128xf32>
    %149 = vector.broadcast %146 : vector<1x128xf32> to vector<2x128xf32>
    %150 = arith.addf %148, %149 : vector<2x128xf32>
    %cst_74 = arith.constant 0.000000e+00 : f32
    %151 = vector.broadcast %cst_74 : f32 to vector<2x128xf32>
    %152 = arith.maximumf %150, %151 : vector<2x128xf32>
    %cst_75 = arith.constant dense<0.000000e+00> : vector<2xf32>
    %153 = vector.multi_reduction <add>, %152, %cst_75 [1] : vector<2x128xf32> to vector<2xf32>
    %154 = vector.shape_cast %153 : vector<2xf32> to vector<2x1xf32>
    %cst_76 = arith.constant 1.280000e+02 : f32
    %155 = vector.broadcast %cst_76 : f32 to vector<2x1xf32>
    %156 = arith.divf %154, %155 : vector<2x1xf32>
    %157 = vector.broadcast %156 : vector<2x1xf32> to vector<2x128xf32>
    %158 = arith.subf %152, %157 : vector<2x128xf32>
    %159 = arith.mulf %158, %158 : vector<2x128xf32>
    %cst_77 = arith.constant dense<0.000000e+00> : vector<2xf32>
    %160 = vector.multi_reduction <add>, %159, %cst_77 [1] : vector<2x128xf32> to vector<2xf32>
    %161 = vector.shape_cast %160 : vector<2xf32> to vector<2x1xf32>
    %cst_78 = arith.constant 1.280000e+02 : f32
    %162 = vector.broadcast %cst_78 : f32 to vector<2x1xf32>
    %163 = arith.divf %161, %162 : vector<2x1xf32>
    %164 = vector.broadcast %156 : vector<2x1xf32> to vector<2x128xf32>
    %165 = arith.subf %152, %164 : vector<2x128xf32>
    %cst_79 = arith.constant 9.99999974E-6 : f32
    %166 = vector.broadcast %cst_79 : f32 to vector<2x1xf32>
    %167 = arith.addf %163, %166 : vector<2x1xf32>
    %168 = math.rsqrt %167 : vector<2x1xf32>
    %169 = vector.broadcast %168 : vector<2x1xf32> to vector<2x128xf32>
    %170 = arith.mulf %165, %169 : vector<2x128xf32>
    %c0_80 = arith.constant 0 : index
    %c0_81 = arith.constant 0 : index
    %171 = vector.load %arg22[%c0_80, %c0_81] : memref<128x64xbf16, #tpu.memory_space<vmem>>, vector<128x64xbf16>
    %c0_82 = arith.constant 0 : index
    %c0_83 = arith.constant 0 : index
    %172 = vector.load %arg23[%c0_82, %c0_83] : memref<1x64xf32, #tpu.memory_space<vmem>>, vector<1x64xf32>
    %173 = arith.truncf %170 : vector<2x128xf32> to vector<2x128xbf16>
    %cst_84 = arith.constant dense<0.000000e+00> : vector<2x64xf32>
    %174 = tpu.matmul %173, %171, %cst_84 {dimension_numbers = #tpu.dot_dimension_numbers<[1], [0], [0], [1], [0, 0, 1, 1], [], []>} : vector<2x128xbf16>, vector<128x64xbf16>, vector<2x64xf32> -> vector<2x64xf32>
    %175 = vector.broadcast %172 : vector<1x64xf32> to vector<2x64xf32>
    %176 = arith.addf %174, %175 : vector<2x64xf32>
    %cst_85 = arith.constant 0.000000e+00 : f32
    %177 = vector.broadcast %cst_85 : f32 to vector<2x64xf32>
    %178 = arith.maximumf %176, %177 : vector<2x64xf32>
    %cst_86 = arith.constant dense<0.000000e+00> : vector<2xf32>
    %179 = vector.multi_reduction <add>, %178, %cst_86 [1] : vector<2x64xf32> to vector<2xf32>
    %180 = vector.shape_cast %179 : vector<2xf32> to vector<2x1xf32>
    %cst_87 = arith.constant 6.400000e+01 : f32
    %181 = vector.broadcast %cst_87 : f32 to vector<2x1xf32>
    %182 = arith.divf %180, %181 : vector<2x1xf32>
    %183 = vector.broadcast %182 : vector<2x1xf32> to vector<2x64xf32>
    %184 = arith.subf %178, %183 : vector<2x64xf32>
    %185 = arith.mulf %184, %184 : vector<2x64xf32>
    %cst_88 = arith.constant dense<0.000000e+00> : vector<2xf32>
    %186 = vector.multi_reduction <add>, %185, %cst_88 [1] : vector<2x64xf32> to vector<2xf32>
    %187 = vector.shape_cast %186 : vector<2xf32> to vector<2x1xf32>
    %cst_89 = arith.constant 6.400000e+01 : f32
    %188 = vector.broadcast %cst_89 : f32 to vector<2x1xf32>
    %189 = arith.divf %187, %188 : vector<2x1xf32>
    %190 = vector.broadcast %182 : vector<2x1xf32> to vector<2x64xf32>
    %191 = arith.subf %178, %190 : vector<2x64xf32>
    %cst_90 = arith.constant 9.99999974E-6 : f32
    %192 = vector.broadcast %cst_90 : f32 to vector<2x1xf32>
    %193 = arith.addf %189, %192 : vector<2x1xf32>
    %194 = math.rsqrt %193 : vector<2x1xf32>
    %195 = vector.broadcast %194 : vector<2x1xf32> to vector<2x64xf32>
    %196 = arith.mulf %191, %195 : vector<2x64xf32>
    %c0_91 = arith.constant 0 : index
    %c0_92 = arith.constant 0 : index
    %197 = vector.load %arg24[%c0_91, %c0_92] : memref<64x128xbf16, #tpu.memory_space<vmem>>, vector<64x128xbf16>
    %c0_93 = arith.constant 0 : index
    %c0_94 = arith.constant 0 : index
    %198 = vector.load %arg25[%c0_93, %c0_94] : memref<1x128xf32, #tpu.memory_space<vmem>>, vector<1x128xf32>
    %199 = arith.truncf %196 : vector<2x64xf32> to vector<2x64xbf16>
    %cst_95 = arith.constant dense<0.000000e+00> : vector<2x128xf32>
    %200 = tpu.matmul %199, %197, %cst_95 {dimension_numbers = #tpu.dot_dimension_numbers<[1], [0], [0], [1], [0, 0, 1, 1], [], []>} : vector<2x64xbf16>, vector<64x128xbf16>, vector<2x128xf32> -> vector<2x128xf32>
    %201 = vector.broadcast %198 : vector<1x128xf32> to vector<2x128xf32>
    %202 = arith.addf %200, %201 : vector<2x128xf32>
    %c0_96 = arith.constant 0 : index
    %c0_97 = arith.constant 0 : index
    %203 = vector.load %arg4[%c0_96, %c0_97] : memref<2x520xf32, #tpu.memory_space<vmem>>, vector<2x520xf32>
    %c0_98 = arith.constant 0 : index
    %c0_99 = arith.constant 0 : index
    %204 = vector.load %arg26[%c0_98, %c0_99] : memref<520x1024xbf16, #tpu.memory_space<vmem>>, vector<520x1024xbf16>
    %c0_100 = arith.constant 0 : index
    %c0_101 = arith.constant 0 : index
    %205 = vector.load %arg27[%c0_100, %c0_101] : memref<1x1024xf32, #tpu.memory_space<vmem>>, vector<1x1024xf32>
    %206 = arith.truncf %203 : vector<2x520xf32> to vector<2x520xbf16>
    %cst_102 = arith.constant dense<0.000000e+00> : vector<2x1024xf32>
    %207 = tpu.matmul %206, %204, %cst_102 {dimension_numbers = #tpu.dot_dimension_numbers<[1], [0], [0], [1], [0, 0, 1, 1], [], []>} : vector<2x520xbf16>, vector<520x1024xbf16>, vector<2x1024xf32> -> vector<2x1024xf32>
    %208 = vector.broadcast %205 : vector<1x1024xf32> to vector<2x1024xf32>
    %209 = arith.addf %207, %208 : vector<2x1024xf32>
    %cst_103 = arith.constant 0.000000e+00 : f32
    %210 = vector.broadcast %cst_103 : f32 to vector<2x1024xf32>
    %211 = arith.maximumf %209, %210 : vector<2x1024xf32>
    %cst_104 = arith.constant dense<0.000000e+00> : vector<2xf32>
    %212 = vector.multi_reduction <add>, %211, %cst_104 [1] : vector<2x1024xf32> to vector<2xf32>
    %213 = vector.shape_cast %212 : vector<2xf32> to vector<2x1xf32>
    %cst_105 = arith.constant 1.024000e+03 : f32
    %214 = vector.broadcast %cst_105 : f32 to vector<2x1xf32>
    %215 = arith.divf %213, %214 : vector<2x1xf32>
    %216 = vector.broadcast %215 : vector<2x1xf32> to vector<2x1024xf32>
    %217 = arith.subf %211, %216 : vector<2x1024xf32>
    %218 = arith.mulf %217, %217 : vector<2x1024xf32>
    %cst_106 = arith.constant dense<0.000000e+00> : vector<2xf32>
    %219 = vector.multi_reduction <add>, %218, %cst_106 [1] : vector<2x1024xf32> to vector<2xf32>
    %220 = vector.shape_cast %219 : vector<2xf32> to vector<2x1xf32>
    %cst_107 = arith.constant 1.024000e+03 : f32
    %221 = vector.broadcast %cst_107 : f32 to vector<2x1xf32>
    %222 = arith.divf %220, %221 : vector<2x1xf32>
    %223 = vector.broadcast %215 : vector<2x1xf32> to vector<2x1024xf32>
    %224 = arith.subf %211, %223 : vector<2x1024xf32>
    %cst_108 = arith.constant 9.99999974E-6 : f32
    %225 = vector.broadcast %cst_108 : f32 to vector<2x1xf32>
    %226 = arith.addf %222, %225 : vector<2x1xf32>
    %227 = math.rsqrt %226 : vector<2x1xf32>
    %228 = vector.broadcast %227 : vector<2x1xf32> to vector<2x1024xf32>
    %229 = arith.mulf %224, %228 : vector<2x1024xf32>
    %c0_109 = arith.constant 0 : index
    %c0_110 = arith.constant 0 : index
    %230 = vector.load %arg28[%c0_109, %c0_110] : memref<1024x256xbf16, #tpu.memory_space<vmem>>, vector<1024x256xbf16>
    %c0_111 = arith.constant 0 : index
    %c0_112 = arith.constant 0 : index
    %231 = vector.load %arg29[%c0_111, %c0_112] : memref<1x256xf32, #tpu.memory_space<vmem>>, vector<1x256xf32>
    %232 = arith.truncf %229 : vector<2x1024xf32> to vector<2x1024xbf16>
    %cst_113 = arith.constant dense<0.000000e+00> : vector<2x256xf32>
    %233 = tpu.matmul %232, %230, %cst_113 {dimension_numbers = #tpu.dot_dimension_numbers<[1], [0], [0], [1], [0, 0, 1, 1], [], []>} : vector<2x1024xbf16>, vector<1024x256xbf16>, vector<2x256xf32> -> vector<2x256xf32>
    %234 = vector.broadcast %231 : vector<1x256xf32> to vector<2x256xf32>
    %235 = arith.addf %233, %234 : vector<2x256xf32>
    %cst_114 = arith.constant 0.000000e+00 : f32
    %236 = vector.broadcast %cst_114 : f32 to vector<2x256xf32>
    %237 = arith.maximumf %235, %236 : vector<2x256xf32>
    %cst_115 = arith.constant dense<0.000000e+00> : vector<2xf32>
    %238 = vector.multi_reduction <add>, %237, %cst_115 [1] : vector<2x256xf32> to vector<2xf32>
    %239 = vector.shape_cast %238 : vector<2xf32> to vector<2x1xf32>
    %cst_116 = arith.constant 2.560000e+02 : f32
    %240 = vector.broadcast %cst_116 : f32 to vector<2x1xf32>
    %241 = arith.divf %239, %240 : vector<2x1xf32>
    %242 = vector.broadcast %241 : vector<2x1xf32> to vector<2x256xf32>
    %243 = arith.subf %237, %242 : vector<2x256xf32>
    %244 = arith.mulf %243, %243 : vector<2x256xf32>
    %cst_117 = arith.constant dense<0.000000e+00> : vector<2xf32>
    %245 = vector.multi_reduction <add>, %244, %cst_117 [1] : vector<2x256xf32> to vector<2xf32>
    %246 = vector.shape_cast %245 : vector<2xf32> to vector<2x1xf32>
    %cst_118 = arith.constant 2.560000e+02 : f32
    %247 = vector.broadcast %cst_118 : f32 to vector<2x1xf32>
    %248 = arith.divf %246, %247 : vector<2x1xf32>
    %249 = vector.broadcast %241 : vector<2x1xf32> to vector<2x256xf32>
    %250 = arith.subf %237, %249 : vector<2x256xf32>
    %cst_119 = arith.constant 9.99999974E-6 : f32
    %251 = vector.broadcast %cst_119 : f32 to vector<2x1xf32>
    %252 = arith.addf %248, %251 : vector<2x1xf32>
    %253 = math.rsqrt %252 : vector<2x1xf32>
    %254 = vector.broadcast %253 : vector<2x1xf32> to vector<2x256xf32>
    %255 = arith.mulf %250, %254 : vector<2x256xf32>
    %c0_120 = arith.constant 0 : index
    %c0_121 = arith.constant 0 : index
    %256 = vector.load %arg30[%c0_120, %c0_121] : memref<256x64xbf16, #tpu.memory_space<vmem>>, vector<256x64xbf16>
    %c0_122 = arith.constant 0 : index
    %c0_123 = arith.constant 0 : index
    %257 = vector.load %arg31[%c0_122, %c0_123] : memref<1x64xf32, #tpu.memory_space<vmem>>, vector<1x64xf32>
    %258 = arith.truncf %255 : vector<2x256xf32> to vector<2x256xbf16>
    %cst_124 = arith.constant dense<0.000000e+00> : vector<2x64xf32>
    %259 = tpu.matmul %258, %256, %cst_124 {dimension_numbers = #tpu.dot_dimension_numbers<[1], [0], [0], [1], [0, 0, 1, 1], [], []>} : vector<2x256xbf16>, vector<256x64xbf16>, vector<2x64xf32> -> vector<2x64xf32>
    %260 = vector.broadcast %257 : vector<1x64xf32> to vector<2x64xf32>
    %261 = arith.addf %259, %260 : vector<2x64xf32>
    %cst_125 = arith.constant 0.000000e+00 : f32
    %262 = vector.broadcast %cst_125 : f32 to vector<2x64xf32>
    %263 = arith.maximumf %261, %262 : vector<2x64xf32>
    %cst_126 = arith.constant dense<0.000000e+00> : vector<2xf32>
    %264 = vector.multi_reduction <add>, %263, %cst_126 [1] : vector<2x64xf32> to vector<2xf32>
    %265 = vector.shape_cast %264 : vector<2xf32> to vector<2x1xf32>
    %cst_127 = arith.constant 6.400000e+01 : f32
    %266 = vector.broadcast %cst_127 : f32 to vector<2x1xf32>
    %267 = arith.divf %265, %266 : vector<2x1xf32>
    %268 = vector.broadcast %267 : vector<2x1xf32> to vector<2x64xf32>
    %269 = arith.subf %263, %268 : vector<2x64xf32>
    %270 = arith.mulf %269, %269 : vector<2x64xf32>
    %cst_128 = arith.constant dense<0.000000e+00> : vector<2xf32>
    %271 = vector.multi_reduction <add>, %270, %cst_128 [1] : vector<2x64xf32> to vector<2xf32>
    %272 = vector.shape_cast %271 : vector<2xf32> to vector<2x1xf32>
    %cst_129 = arith.constant 6.400000e+01 : f32
    %273 = vector.broadcast %cst_129 : f32 to vector<2x1xf32>
    %274 = arith.divf %272, %273 : vector<2x1xf32>
    %275 = vector.broadcast %267 : vector<2x1xf32> to vector<2x64xf32>
    %276 = arith.subf %263, %275 : vector<2x64xf32>
    %cst_130 = arith.constant 9.99999974E-6 : f32
    %277 = vector.broadcast %cst_130 : f32 to vector<2x1xf32>
    %278 = arith.addf %274, %277 : vector<2x1xf32>
    %279 = math.rsqrt %278 : vector<2x1xf32>
    %280 = vector.broadcast %279 : vector<2x1xf32> to vector<2x64xf32>
    %281 = arith.mulf %276, %280 : vector<2x64xf32>
    %c0_131 = arith.constant 0 : index
    %c0_132 = arith.constant 0 : index
    %282 = vector.load %arg32[%c0_131, %c0_132] : memref<64x128xbf16, #tpu.memory_space<vmem>>, vector<64x128xbf16>
    %c0_133 = arith.constant 0 : index
    %c0_134 = arith.constant 0 : index
    %283 = vector.load %arg33[%c0_133, %c0_134] : memref<1x128xf32, #tpu.memory_space<vmem>>, vector<1x128xf32>
    %284 = arith.truncf %281 : vector<2x64xf32> to vector<2x64xbf16>
    %cst_135 = arith.constant dense<0.000000e+00> : vector<2x128xf32>
    %285 = tpu.matmul %284, %282, %cst_135 {dimension_numbers = #tpu.dot_dimension_numbers<[1], [0], [0], [1], [0, 0, 1, 1], [], []>} : vector<2x64xbf16>, vector<64x128xbf16>, vector<2x128xf32> -> vector<2x128xf32>
    %286 = vector.broadcast %283 : vector<1x128xf32> to vector<2x128xf32>
    %287 = arith.addf %285, %286 : vector<2x128xf32>
    %288 = arith.addf %58, %143 : vector<2x128xf32>
    %289 = arith.addf %288, %202 : vector<2x128xf32>
    %290 = arith.addf %289, %287 : vector<2x128xf32>
    %c0_136 = arith.constant 0 : index
    %c0_137 = arith.constant 0 : index
    %291 = vector.load %arg5[%c0_136, %c0_137] : memref<12x14xf32, #tpu.memory_space<vmem>>, vector<12x14xf32>
    %cst_138 = arith.constant dense<0.000000e+00> : vector<12xf32>
    %292 = vector.multi_reduction <add>, %291, %cst_138 [1] : vector<12x14xf32> to vector<12xf32>
    %293 = vector.shape_cast %292 : vector<12xf32> to vector<12x1xf32>
    %cst_139 = arith.constant 1.400000e+01 : f32
    %294 = vector.broadcast %cst_139 : f32 to vector<12x1xf32>
    %295 = arith.divf %293, %294 : vector<12x1xf32>
    %296 = vector.broadcast %295 : vector<12x1xf32> to vector<12x14xf32>
    %297 = arith.subf %291, %296 : vector<12x14xf32>
    %298 = arith.mulf %297, %297 : vector<12x14xf32>
    %cst_140 = arith.constant dense<0.000000e+00> : vector<12xf32>
    %299 = vector.multi_reduction <add>, %298, %cst_140 [1] : vector<12x14xf32> to vector<12xf32>
    %300 = vector.shape_cast %299 : vector<12xf32> to vector<12x1xf32>
    %cst_141 = arith.constant 1.400000e+01 : f32
    %301 = vector.broadcast %cst_141 : f32 to vector<12x1xf32>
    %302 = arith.divf %300, %301 : vector<12x1xf32>
    %303 = vector.broadcast %295 : vector<12x1xf32> to vector<12x14xf32>
    %304 = arith.subf %291, %303 : vector<12x14xf32>
    %cst_142 = arith.constant 9.99999974E-6 : f32
    %305 = vector.broadcast %cst_142 : f32 to vector<12x1xf32>
    %306 = arith.addf %302, %305 : vector<12x1xf32>
    %307 = math.rsqrt %306 : vector<12x1xf32>
    %308 = vector.broadcast %307 : vector<12x1xf32> to vector<12x14xf32>
    %309 = arith.mulf %304, %308 : vector<12x14xf32>
    %c0_143 = arith.constant 0 : index
    %c0_144 = arith.constant 0 : index
    %310 = vector.load %arg34[%c0_143, %c0_144] : memref<14x256xbf16, #tpu.memory_space<vmem>>, vector<14x256xbf16>
    %c0_145 = arith.constant 0 : index
    %c0_146 = arith.constant 0 : index
    %311 = vector.load %arg35[%c0_145, %c0_146] : memref<1x256xf32, #tpu.memory_space<vmem>>, vector<1x256xf32>
    %312 = arith.truncf %309 : vector<12x14xf32> to vector<12x14xbf16>
    %cst_147 = arith.constant dense<0.000000e+00> : vector<12x256xf32>
    %313 = tpu.matmul %312, %310, %cst_147 {dimension_numbers = #tpu.dot_dimension_numbers<[1], [0], [0], [1], [0, 0, 1, 1], [], []>} : vector<12x14xbf16>, vector<14x256xbf16>, vector<12x256xf32> -> vector<12x256xf32>
    %314 = vector.broadcast %311 : vector<1x256xf32> to vector<12x256xf32>
    %315 = arith.addf %313, %314 : vector<12x256xf32>
    %cst_148 = arith.constant 0.000000e+00 : f32
    %316 = vector.broadcast %cst_148 : f32 to vector<12x256xf32>
    %317 = arith.maximumf %315, %316 : vector<12x256xf32>
    %cst_149 = arith.constant dense<0.000000e+00> : vector<12xf32>
    %318 = vector.multi_reduction <add>, %317, %cst_149 [1] : vector<12x256xf32> to vector<12xf32>
    %319 = vector.shape_cast %318 : vector<12xf32> to vector<12x1xf32>
    %cst_150 = arith.constant 2.560000e+02 : f32
    %320 = vector.broadcast %cst_150 : f32 to vector<12x1xf32>
    %321 = arith.divf %319, %320 : vector<12x1xf32>
    %322 = vector.broadcast %321 : vector<12x1xf32> to vector<12x256xf32>
    %323 = arith.subf %317, %322 : vector<12x256xf32>
    %324 = arith.mulf %323, %323 : vector<12x256xf32>
    %cst_151 = arith.constant dense<0.000000e+00> : vector<12xf32>
    %325 = vector.multi_reduction <add>, %324, %cst_151 [1] : vector<12x256xf32> to vector<12xf32>
    %326 = vector.shape_cast %325 : vector<12xf32> to vector<12x1xf32>
    %cst_152 = arith.constant 2.560000e+02 : f32
    %327 = vector.broadcast %cst_152 : f32 to vector<12x1xf32>
    %328 = arith.divf %326, %327 : vector<12x1xf32>
    %329 = vector.broadcast %321 : vector<12x1xf32> to vector<12x256xf32>
    %330 = arith.subf %317, %329 : vector<12x256xf32>
    %cst_153 = arith.constant 9.99999974E-6 : f32
    %331 = vector.broadcast %cst_153 : f32 to vector<12x1xf32>
    %332 = arith.addf %328, %331 : vector<12x1xf32>
    %333 = math.rsqrt %332 : vector<12x1xf32>
    %334 = vector.broadcast %333 : vector<12x1xf32> to vector<12x256xf32>
    %335 = arith.mulf %330, %334 : vector<12x256xf32>
    %c0_154 = arith.constant 0 : index
    %c0_155 = arith.constant 0 : index
    %336 = vector.load %arg36[%c0_154, %c0_155] : memref<256x128xbf16, #tpu.memory_space<vmem>>, vector<256x128xbf16>
    %c0_156 = arith.constant 0 : index
    %c0_157 = arith.constant 0 : index
    %337 = vector.load %arg37[%c0_156, %c0_157] : memref<1x128xf32, #tpu.memory_space<vmem>>, vector<1x128xf32>
    %338 = arith.truncf %335 : vector<12x256xf32> to vector<12x256xbf16>
    %cst_158 = arith.constant dense<0.000000e+00> : vector<12x128xf32>
    %339 = tpu.matmul %338, %336, %cst_158 {dimension_numbers = #tpu.dot_dimension_numbers<[1], [0], [0], [1], [0, 0, 1, 1], [], []>} : vector<12x256xbf16>, vector<256x128xbf16>, vector<12x128xf32> -> vector<12x128xf32>
    %340 = vector.broadcast %337 : vector<1x128xf32> to vector<12x128xf32>
    %341 = arith.addf %339, %340 : vector<12x128xf32>
    %cst_159 = arith.constant 0.000000e+00 : f32
    %342 = vector.broadcast %cst_159 : f32 to vector<12x128xf32>
    %343 = arith.maximumf %341, %342 : vector<12x128xf32>
    %cst_160 = arith.constant dense<0.000000e+00> : vector<12xf32>
    %344 = vector.multi_reduction <add>, %343, %cst_160 [1] : vector<12x128xf32> to vector<12xf32>
    %345 = vector.shape_cast %344 : vector<12xf32> to vector<12x1xf32>
    %cst_161 = arith.constant 1.280000e+02 : f32
    %346 = vector.broadcast %cst_161 : f32 to vector<12x1xf32>
    %347 = arith.divf %345, %346 : vector<12x1xf32>
    %348 = vector.broadcast %347 : vector<12x1xf32> to vector<12x128xf32>
    %349 = arith.subf %343, %348 : vector<12x128xf32>
    %350 = arith.mulf %349, %349 : vector<12x128xf32>
    %cst_162 = arith.constant dense<0.000000e+00> : vector<12xf32>
    %351 = vector.multi_reduction <add>, %350, %cst_162 [1] : vector<12x128xf32> to vector<12xf32>
    %352 = vector.shape_cast %351 : vector<12xf32> to vector<12x1xf32>
    %cst_163 = arith.constant 1.280000e+02 : f32
    %353 = vector.broadcast %cst_163 : f32 to vector<12x1xf32>
    %354 = arith.divf %352, %353 : vector<12x1xf32>
    %355 = vector.broadcast %347 : vector<12x1xf32> to vector<12x128xf32>
    %356 = arith.subf %343, %355 : vector<12x128xf32>
    %cst_164 = arith.constant 9.99999974E-6 : f32
    %357 = vector.broadcast %cst_164 : f32 to vector<12x1xf32>
    %358 = arith.addf %354, %357 : vector<12x1xf32>
    %359 = math.rsqrt %358 : vector<12x1xf32>
    %360 = vector.broadcast %359 : vector<12x1xf32> to vector<12x128xf32>
    %361 = arith.mulf %356, %360 : vector<12x128xf32>
    %c0_165 = arith.constant 0 : index
    %c0_166 = arith.constant 0 : index
    %362 = vector.load %arg38[%c0_165, %c0_166] : memref<128x128xbf16, #tpu.memory_space<vmem>>, vector<128x128xbf16>
    %c0_167 = arith.constant 0 : index
    %c0_168 = arith.constant 0 : index
    %363 = vector.load %arg39[%c0_167, %c0_168] : memref<1x128xf32, #tpu.memory_space<vmem>>, vector<1x128xf32>
    %364 = arith.truncf %361 : vector<12x128xf32> to vector<12x128xbf16>
    %cst_169 = arith.constant dense<0.000000e+00> : vector<12x128xf32>
    %365 = tpu.matmul %364, %362, %cst_169 {dimension_numbers = #tpu.dot_dimension_numbers<[1], [0], [0], [1], [0, 0, 1, 1], [], []>} : vector<12x128xbf16>, vector<128x128xbf16>, vector<12x128xf32> -> vector<12x128xf32>
    %366 = vector.broadcast %363 : vector<1x128xf32> to vector<12x128xf32>
    %367 = arith.addf %365, %366 : vector<12x128xf32>
    %c0_170 = arith.constant 0 : index
    %c0_171 = arith.constant 0 : index
    %368 = vector.load %arg0[%c0_170, %c0_171] : memref<12x2xf32, #tpu.memory_space<vmem>>, vector<12x2xf32>
    %cst_172 = arith.constant dense<0.000000e+00> : vector<12x128xf32>
    %369 = tpu.matmul %368, %290, %cst_172 {dimension_numbers = #tpu.dot_dimension_numbers<[1], [0], [0], [1], [0, 0, 1, 1], [], []>} : vector<12x2xf32>, vector<2x128xf32>, vector<12x128xf32> -> vector<12x128xf32>
    %370 = arith.addf %369, %367 : vector<12x128xf32>
    %cst_173 = arith.constant dense<0.000000e+00> : vector<12xf32>
    %371 = vector.multi_reduction <add>, %370, %cst_173 [1] : vector<12x128xf32> to vector<12xf32>
    %372 = vector.shape_cast %371 : vector<12xf32> to vector<12x1xf32>
    %cst_174 = arith.constant 1.280000e+02 : f32
    %373 = vector.broadcast %cst_174 : f32 to vector<12x1xf32>
    %374 = arith.divf %372, %373 : vector<12x1xf32>
    %375 = vector.broadcast %374 : vector<12x1xf32> to vector<12x128xf32>
    %376 = arith.subf %370, %375 : vector<12x128xf32>
    %377 = arith.mulf %376, %376 : vector<12x128xf32>
    %cst_175 = arith.constant dense<0.000000e+00> : vector<12xf32>
    %378 = vector.multi_reduction <add>, %377, %cst_175 [1] : vector<12x128xf32> to vector<12xf32>
    %379 = vector.shape_cast %378 : vector<12xf32> to vector<12x1xf32>
    %cst_176 = arith.constant 1.280000e+02 : f32
    %380 = vector.broadcast %cst_176 : f32 to vector<12x1xf32>
    %381 = arith.divf %379, %380 : vector<12x1xf32>
    %382 = vector.broadcast %374 : vector<12x1xf32> to vector<12x128xf32>
    %383 = arith.subf %370, %382 : vector<12x128xf32>
    %cst_177 = arith.constant 9.99999974E-6 : f32
    %384 = vector.broadcast %cst_177 : f32 to vector<12x1xf32>
    %385 = arith.addf %381, %384 : vector<12x1xf32>
    %386 = math.rsqrt %385 : vector<12x1xf32>
    %387 = vector.broadcast %386 : vector<12x1xf32> to vector<12x128xf32>
    %388 = arith.mulf %383, %387 : vector<12x128xf32>
    %c0_178 = arith.constant 0 : index
    %c0_179 = arith.constant 0 : index
    %389 = vector.load %arg40[%c0_178, %c0_179] : memref<128x256xbf16, #tpu.memory_space<vmem>>, vector<128x256xbf16>
    %c0_180 = arith.constant 0 : index
    %c0_181 = arith.constant 0 : index
    %390 = vector.load %arg41[%c0_180, %c0_181] : memref<1x256xf32, #tpu.memory_space<vmem>>, vector<1x256xf32>
    %391 = arith.truncf %388 : vector<12x128xf32> to vector<12x128xbf16>
    %cst_182 = arith.constant dense<0.000000e+00> : vector<12x256xf32>
    %392 = tpu.matmul %391, %389, %cst_182 {dimension_numbers = #tpu.dot_dimension_numbers<[1], [0], [0], [1], [0, 0, 1, 1], [], []>} : vector<12x128xbf16>, vector<128x256xbf16>, vector<12x256xf32> -> vector<12x256xf32>
    %393 = vector.broadcast %390 : vector<1x256xf32> to vector<12x256xf32>
    %394 = arith.addf %392, %393 : vector<12x256xf32>
    %cst_183 = arith.constant 0.000000e+00 : f32
    %395 = vector.broadcast %cst_183 : f32 to vector<12x256xf32>
    %396 = arith.maximumf %394, %395 : vector<12x256xf32>
    %cst_184 = arith.constant dense<0.000000e+00> : vector<12xf32>
    %397 = vector.multi_reduction <add>, %396, %cst_184 [1] : vector<12x256xf32> to vector<12xf32>
    %398 = vector.shape_cast %397 : vector<12xf32> to vector<12x1xf32>
    %cst_185 = arith.constant 2.560000e+02 : f32
    %399 = vector.broadcast %cst_185 : f32 to vector<12x1xf32>
    %400 = arith.divf %398, %399 : vector<12x1xf32>
    %401 = vector.broadcast %400 : vector<12x1xf32> to vector<12x256xf32>
    %402 = arith.subf %396, %401 : vector<12x256xf32>
    %403 = arith.mulf %402, %402 : vector<12x256xf32>
    %cst_186 = arith.constant dense<0.000000e+00> : vector<12xf32>
    %404 = vector.multi_reduction <add>, %403, %cst_186 [1] : vector<12x256xf32> to vector<12xf32>
    %405 = vector.shape_cast %404 : vector<12xf32> to vector<12x1xf32>
    %cst_187 = arith.constant 2.560000e+02 : f32
    %406 = vector.broadcast %cst_187 : f32 to vector<12x1xf32>
    %407 = arith.divf %405, %406 : vector<12x1xf32>
    %408 = vector.broadcast %400 : vector<12x1xf32> to vector<12x256xf32>
    %409 = arith.subf %396, %408 : vector<12x256xf32>
    %cst_188 = arith.constant 9.99999974E-6 : f32
    %410 = vector.broadcast %cst_188 : f32 to vector<12x1xf32>
    %411 = arith.addf %407, %410 : vector<12x1xf32>
    %412 = math.rsqrt %411 : vector<12x1xf32>
    %413 = vector.broadcast %412 : vector<12x1xf32> to vector<12x256xf32>
    %414 = arith.mulf %409, %413 : vector<12x256xf32>
    %c0_189 = arith.constant 0 : index
    %c0_190 = arith.constant 0 : index
    %415 = vector.load %arg42[%c0_189, %c0_190] : memref<256x128xbf16, #tpu.memory_space<vmem>>, vector<256x128xbf16>
    %c0_191 = arith.constant 0 : index
    %c0_192 = arith.constant 0 : index
    %416 = vector.load %arg43[%c0_191, %c0_192] : memref<1x128xf32, #tpu.memory_space<vmem>>, vector<1x128xf32>
    %417 = arith.truncf %414 : vector<12x256xf32> to vector<12x256xbf16>
    %cst_193 = arith.constant dense<0.000000e+00> : vector<12x128xf32>
    %418 = tpu.matmul %417, %415, %cst_193 {dimension_numbers = #tpu.dot_dimension_numbers<[1], [0], [0], [1], [0, 0, 1, 1], [], []>} : vector<12x256xbf16>, vector<256x128xbf16>, vector<12x128xf32> -> vector<12x128xf32>
    %419 = vector.broadcast %416 : vector<1x128xf32> to vector<12x128xf32>
    %420 = arith.addf %418, %419 : vector<12x128xf32>
    %cst_194 = arith.constant 0.000000e+00 : f32
    %421 = vector.broadcast %cst_194 : f32 to vector<12x128xf32>
    %422 = arith.maximumf %420, %421 : vector<12x128xf32>
    %cst_195 = arith.constant dense<0.000000e+00> : vector<12xf32>
    %423 = vector.multi_reduction <add>, %422, %cst_195 [1] : vector<12x128xf32> to vector<12xf32>
    %424 = vector.shape_cast %423 : vector<12xf32> to vector<12x1xf32>
    %cst_196 = arith.constant 1.280000e+02 : f32
    %425 = vector.broadcast %cst_196 : f32 to vector<12x1xf32>
    %426 = arith.divf %424, %425 : vector<12x1xf32>
    %427 = vector.broadcast %426 : vector<12x1xf32> to vector<12x128xf32>
    %428 = arith.subf %422, %427 : vector<12x128xf32>
    %429 = arith.mulf %428, %428 : vector<12x128xf32>
    %cst_197 = arith.constant dense<0.000000e+00> : vector<12xf32>
    %430 = vector.multi_reduction <add>, %429, %cst_197 [1] : vector<12x128xf32> to vector<12xf32>
    %431 = vector.shape_cast %430 : vector<12xf32> to vector<12x1xf32>
    %cst_198 = arith.constant 1.280000e+02 : f32
    %432 = vector.broadcast %cst_198 : f32 to vector<12x1xf32>
    %433 = arith.divf %431, %432 : vector<12x1xf32>
    %434 = vector.broadcast %426 : vector<12x1xf32> to vector<12x128xf32>
    %435 = arith.subf %422, %434 : vector<12x128xf32>
    %cst_199 = arith.constant 9.99999974E-6 : f32
    %436 = vector.broadcast %cst_199 : f32 to vector<12x1xf32>
    %437 = arith.addf %433, %436 : vector<12x1xf32>
    %438 = math.rsqrt %437 : vector<12x1xf32>
    %439 = vector.broadcast %438 : vector<12x1xf32> to vector<12x128xf32>
    %440 = arith.mulf %435, %439 : vector<12x128xf32>
    %c0_200 = arith.constant 0 : index
    %c0_201 = arith.constant 0 : index
    %441 = vector.load %arg44[%c0_200, %c0_201] : memref<128x128xbf16, #tpu.memory_space<vmem>>, vector<128x128xbf16>
    %c0_202 = arith.constant 0 : index
    %c0_203 = arith.constant 0 : index
    %442 = vector.load %arg45[%c0_202, %c0_203] : memref<1x128xf32, #tpu.memory_space<vmem>>, vector<1x128xf32>
    %443 = arith.truncf %440 : vector<12x128xf32> to vector<12x128xbf16>
    %cst_204 = arith.constant dense<0.000000e+00> : vector<12x128xf32>
    %444 = tpu.matmul %443, %441, %cst_204 {dimension_numbers = #tpu.dot_dimension_numbers<[1], [0], [0], [1], [0, 0, 1, 1], [], []>} : vector<12x128xbf16>, vector<128x128xbf16>, vector<12x128xf32> -> vector<12x128xf32>
    %445 = vector.broadcast %442 : vector<1x128xf32> to vector<12x128xf32>
    %446 = arith.addf %444, %445 : vector<12x128xf32>
    %c0_205 = arith.constant 0 : index
    %c0_206 = arith.constant 0 : index
    %447 = vector.load %arg46[%c0_205, %c0_206] : memref<12x128xf32, #tpu.memory_space<vmem>>, vector<12x128xf32>
    tpu.vector_store %arg46[%c0_205, %c0_206], %446 {strides = array<i32>} : memref<12x128xf32, #tpu.memory_space<vmem>>, vector<12x128xf32>,
    return
  }
}

</mosaic_0001>

<llo_original>
// kernel: dqn_forward.1
$region0: #{dqn_forward.1}
  #allocation0 [shape = 'u32[]', space=smem, size = 0x4, offset = 0x4, fixed_abs, tag = 'smem constant byte address 0x4 - core index']
  #allocation1 [shape = 'u32[144,128]{1,0:T(1,128)}', space=vmem, size = 0x12000, scoped, tag = 'internal scratch']
  %s0 = inlined_call_operand.smem [shape: u32[47], index: -1, kind: input, shape index: {}]
  %s1 = sld [smem:[%s0]]
  %s2 = scalar_lea.smem %s0, 1
  %s3 = sld [smem:[%s2]]
  %s4 = scalar_lea.smem %s0, 2
  %s5 = sld [smem:[%s4]]
  %s6 = scalar_lea.smem %s0, 3
  %s7 = sld [smem:[%s6]]
  %s8 = scalar_lea.smem %s0, 4
  %s9 = sld [smem:[%s8]]
  %s10 = scalar_lea.smem %s0, 5
  %s11 = sld [smem:[%s10]]
  %s12 = scalar_lea.smem %s0, 6
  %s13 = sld [smem:[%s12]]
  %s14 = scalar_lea.smem %s0, 7
  %s15 = sld [smem:[%s14]]
  %s16 = scalar_lea.smem %s0, 8
  %s17 = sld [smem:[%s16]]
  %s18 = scalar_lea.smem %s0, 9
  %s19 = sld [smem:[%s18]]
  %s20 = scalar_lea.smem %s0, 10
  %s21 = sld [smem:[%s20]]
  %s22 = scalar_lea.smem %s0, 11
  %s23 = sld [smem:[%s22]]
  %s24 = scalar_lea.smem %s0, 12
  %s25 = sld [smem:[%s24]]
  %s26 = scalar_lea.smem %s0, 13
  %s27 = sld [smem:[%s26]]
  %s28 = scalar_lea.smem %s0, 14
  %s29 = sld [smem:[%s28]]
  %s30 = scalar_lea.smem %s0, 15
  %s31 = sld [smem:[%s30]]
  %s32 = scalar_lea.smem %s0, 16
  %s33 = sld [smem:[%s32]]
  %s34 = scalar_lea.smem %s0, 17
  %s35 = sld [smem:[%s34]]
  %s36 = scalar_lea.smem %s0, 18
  %s37 = sld [smem:[%s36]]
  %s38 = scalar_lea.smem %s0, 19
  %s39 = sld [smem:[%s38]]
  %s40 = scalar_lea.smem %s0, 20
  %s41 = sld [smem:[%s40]]
  %s42 = scalar_lea.smem %s0, 21
  %s43 = sld [smem:[%s42]]
  %s44 = scalar_lea.smem %s0, 22
  %s45 = sld [smem:[%s44]]
  %s46 = scalar_lea.smem %s0, 23
  %s47 = sld [smem:[%s46]]
  %s48 = scalar_lea.smem %s0, 24
  %s49 = sld [smem:[%s48]]
  %s50 = scalar_lea.smem %s0, 25
  %s51 = sld [smem:[%s50]]
  %s52 = scalar_lea.smem %s0, 26
  %s53 = sld [smem:[%s52]]
  %s54 = scalar_lea.smem %s0, 27
  %s55 = sld [smem:[%s54]]
  %s56 = scalar_lea.smem %s0, 28
  %s57 = sld [smem:[%s56]]
  %s58 = scalar_lea.smem %s0, 29
  %s59 = sld [smem:[%s58]]
  %s60 = scalar_lea.smem %s0, 30
  %s61 = sld [smem:[%s60]]
  %s62 = scalar_lea.smem %s0, 31
  %s63 = sld [smem:[%s62]]
  %s64 = scalar_lea.smem %s0, 32
  %s65 = sld [smem:[%s64]]
  %s66 = scalar_lea.smem %s0, 33
  %s67 = sld [smem:[%s66]]
  %s68 = scalar_lea.smem %s0, 34
  %s69 = sld [smem:[%s68]]
  %s70 = scalar_lea.smem %s0, 35
  %s71 = sld [smem:[%s70]]
  %s72 = scalar_lea.smem %s0, 36
  %s73 = sld [smem:[%s72]]
  %s74 = scalar_lea.smem %s0, 37
  %s75 = sld [smem:[%s74]]
  %s76 = scalar_lea.smem %s0, 38
  %s77 = sld [smem:[%s76]]
  %s78 = scalar_lea.smem %s0, 39
  %s79 = sld [smem:[%s78]]
  %s80 = scalar_lea.smem %s0, 40
  %s81 = sld [smem:[%s80]]
  %s82 = scalar_lea.smem %s0, 41
  %s83 = sld [smem:[%s82]]
  %s84 = scalar_lea.smem %s0, 42
  %s85 = sld [smem:[%s84]]
  %s86 = scalar_lea.smem %s0, 43
  %s87 = sld [smem:[%s86]]
  %s88 = scalar_lea.smem %s0, 44
  %s89 = sld [smem:[%s88]]
  %s90 = scalar_lea.smem %s0, 45
  %s91 = sld [smem:[%s90]]
  %s92 = scalar_lea.smem %s0, 46
  %s93 = sld [smem:[%s92]]
  %s94 = sld [smem:[#allocation0]]
  $region338: #{dqn_forward.1} parent=0
    _
  %s96 = ssub.s32 1, %s94
  %s97 = scalar_select 0, %s96, %s94
  $region1: #{dqn_forward.1} parent=0
    #allocation2 [shape = 'u8[20480]{0}', space=vmem, size = 0x5000, scoped, tag = 'input window, operand 6, single buffered']
    #allocation3 [shape = 's32[1]{0}', space=sflag, size = 0x4, scoped, tag = 'scoped memory for dqn_forward.1']
    #allocation4 [shape = 'u8[512]{0}', space=vmem, size = 0x400, scoped, tag = 'input window, operand 7, single buffered']
    #allocation5 [shape = 's32[1]{0}', space=sflag, size = 0x4, scoped, tag = 'scoped memory for dqn_forward.1']
    #allocation6 [shape = 'u8[512]{0}', space=vmem, size = 0x400, scoped, tag = 'input window, operand 9, single buffered']
    #allocation7 [shape = 'u8[16384]{0}', space=vmem, size = 0x4000, scoped, tag = 'input window, operand 10, single buffered']
    #allocation8 [shape = 's32[1]{0}', space=sflag, size = 0x4, scoped, tag = 'scoped memory for dqn_forward.1']
    #allocation9 [shape = 'u8[512]{0}', space=vmem, size = 0x400, scoped, tag = 'input window, operand 11, single buffered']
    #allocation10 [shape = 'u8[1277952]{0}', space=vmem, size = 0x138000, scoped, tag = 'input window, operand 12, single buffered']
    #allocation11 [shape = 's32[1]{0}', space=sflag, size = 0x4, scoped, tag = 'scoped memory for dqn_forward.1']
    #allocation12 [shape = 'u8[4096]{0}', space=vmem, size = 0x1000, scoped, tag = 'input window, operand 13, single buffered']
    #allocation13 [shape = 'u8[524288]{0}', space=vmem, size = 0x80000, scoped, tag = 'input window, operand 14, single buffered']
    #allocation14 [shape = 's32[1]{0}', space=sflag, size = 0x4, scoped, tag = 'scoped memory for dqn_forward.1']
    #allocation15 [shape = 'u8[1024]{0}', space=vmem, size = 0x400, scoped, tag = 'input window, operand 15, single buffered']
    #allocation16 [shape = 'u8[512]{0}', space=vmem, size = 0x400, scoped, tag = 'input window, operand 17, single buffered']
    #allocation17 [shape = 's32[1]{0}', space=sflag, size = 0x4, scoped, tag = 'scoped memory for dqn_forward.1']
    #allocation18 [shape = 'u8[16384]{0}', space=vmem, size = 0x4000, scoped, tag = 'input window, operand 18, single buffered']
    #allocation19 [shape = 'u8[512]{0}', space=vmem, size = 0x400, scoped, tag = 'input window, operand 19, single buffered']
    #allocation20 [shape = 's32[1]{0}', space=sflag, size = 0x4, scoped, tag = 'scoped memory for dqn_forward.1']
    #allocation21 [shape = 'u8[10240]{0}', space=vmem, size = 0x2800, scoped, tag = 'input window, operand 20, single buffered']
    #allocation22 [shape = 'u8[512]{0}', space=vmem, size = 0x400, scoped, tag = 'input window, operand 21, single buffered']
    #allocation23 [shape = 's32[1]{0}', space=sflag, size = 0x4, scoped, tag = 'scoped memory for dqn_forward.1']
    #allocation24 [shape = 'u8[512]{0}', space=vmem, size = 0x400, scoped, tag = 'input window, operand 23, single buffered']
    #allocation25 [shape = 'u8[16384]{0}', space=vmem, size = 0x4000, scoped, tag = 'input window, operand 24, single buffered']
    #allocation26 [shape = 's32[1]{0}', space=sflag, size = 0x4, scoped, tag = 'scoped memory for dqn_forward.1']
    #allocation27 [shape = 'u8[512]{0}', space=vmem, size = 0x400, scoped, tag = 'input window, operand 25, single buffered']
    #allocation28 [shape = 'u8[1064960]{0}', space=vmem, size = 0x104000, scoped, tag = 'input window, operand 26, single buffered']
    #allocation29 [shape = 's32[1]{0}', space=sflag, size = 0x4, scoped, tag = 'scoped memory for dqn_forward.1']
    #allocation30 [shape = 'u8[4096]{0}', space=vmem, size = 0x1000, scoped, tag = 'input window, operand 27, single buffered']
    #allocation31 [shape = 'u8[524288]{0}', space=vmem, size = 0x80000, scoped, tag = 'input window, operand 28, single buffered']
    #allocation32 [shape = 's32[1]{0}', space=sflag, size = 0x4, scoped, tag = 'scoped memory for dqn_forward.1']
    #allocation33 [shape = 'u8[1024]{0}', space=vmem, size = 0x400, scoped, tag = 'input window, operand 29, single buffered']
    #allocation34 [shape = 'u8[512]{0}', space=vmem, size = 0x400, scoped, tag = 'input window, operand 31, single buffered']
    #allocation35 [shape = 's32[1]{0}', space=sflag, size = 0x4, scoped, tag = 'scoped memory for dqn_forward.1']
    #allocation36 [shape = 'u8[16384]{0}', space=vmem, size = 0x4000, scoped, tag = 'input window, operand 32, single buffered']
    #allocation37 [shape = 'u8[512]{0}', space=vmem, size = 0x400, scoped, tag = 'input window, operand 33, single buffered']
    #allocation38 [shape = 's32[1]{0}', space=sflag, size = 0x4, scoped, tag = 'scoped memory for dqn_forward.1']
    #allocation39 [shape = 'u8[8192]{0}', space=vmem, size = 0x2000, scoped, tag = 'input window, operand 34, single buffered']
    #allocation40 [shape = 'u8[1024]{0}', space=vmem, size = 0x400, scoped, tag = 'input window, operand 35, single buffered']
    #allocation41 [shape = 's32[1]{0}', space=sflag, size = 0x4, scoped, tag = 'scoped memory for dqn_forward.1']
    #allocation42 [shape = 'u8[65536]{0}', space=vmem, size = 0x10000, scoped, tag = 'input window, operand 36, single buffered']
    #allocation43 [shape = 'u8[512]{0}', space=vmem, size = 0x400, scoped, tag = 'input window, operand 37, single buffered']
    #allocation44 [shape = 's32[1]{0}', space=sflag, size = 0x4, scoped, tag = 'scoped memory for dqn_forward.1']
    #allocation45 [shape = 'u8[32768]{0}', space=vmem, size = 0x8000, scoped, tag = 'input window, operand 38, single buffered']
    #allocation46 [shape = 'u8[512]{0}', space=vmem, size = 0x400, scoped, tag = 'input window, operand 39, single buffered']
    #allocation47 [shape = 's32[1]{0}', space=sflag, size = 0x4, scoped, tag = 'scoped memory for dqn_forward.1']
    #allocation48 [shape = 'u8[65536]{0}', space=vmem, size = 0x10000, scoped, tag = 'input window, operand 40, single buffered']
    #allocation49 [shape = 'u8[1024]{0}', space=vmem, size = 0x400, scoped, tag = 'input window, operand 41, single buffered']
    #allocation50 [shape = 's32[1]{0}', space=sflag, size = 0x4, scoped, tag = 'scoped memory for dqn_forward.1']
    #allocation51 [shape = 'u8[65536]{0}', space=vmem, size = 0x10000, scoped, tag = 'input window, operand 42, single buffered']
    #allocation52 [shape = 'u8[512]{0}', space=vmem, size = 0x400, scoped, tag = 'input window, operand 43, single buffered']
    #allocation53 [shape = 's32[1]{0}', space=sflag, size = 0x4, scoped, tag = 'scoped memory for dqn_forward.1']
    #allocation54 [shape = 'u8[32768]{0}', space=vmem, size = 0x8000, scoped, tag = 'input window, operand 44, single buffered']
    #allocation55 [shape = 'u8[512]{0}', space=vmem, size = 0x400, scoped, tag = 'input window, operand 45, single buffered']
    #allocation56 [shape = 's32[1]{0}', space=sflag, size = 0x4, scoped, tag = 'scoped memory for dqn_forward.1']
    %98 = vsyncpa [#allocation3], 0
    %99 = vsyncpa [#allocation5], 0
    %100 = vsyncpa [#allocation8], 0
    %101 = vsyncpa [#allocation11], 0
    %102 = vsyncpa [#allocation14], 0
    %103 = vsyncpa [#allocation17], 0
    %104 = vsyncpa [#allocation20], 0
    %105 = vsyncpa [#allocation23], 0
    %106 = vsyncpa [#allocation26], 0
    %107 = vsyncpa [#allocation29], 0
    %108 = vsyncpa [#allocation32], 0
    %109 = vsyncpa [#allocation35], 0
    %110 = vsyncpa [#allocation38], 0
    %111 = vsyncpa [#allocation41], 0
    %112 = vsyncpa [#allocation44], 0
    %113 = vsyncpa [#allocation47], 0
    %114 = vsyncpa [#allocation50], 0
    %115 = vsyncpa [#allocation53], 0
    %116 = vsyncpa [#allocation56], 0
    // Predicated region
    $region2: #{dqn_forward.1} parent=1 // pred_check
      _
    $region3: #{dqn_forward.1} parent=1 // pred_check_branch
      %118 = sbr.rel (0) target = $region5
    $region4: #{dqn_forward.1} parent=1 // pred_region
      _
    $region5: #{dqn_forward.1} parent=1 // pred_fallthru
      _
    // Predicated region
    $region6: #{dqn_forward.1} parent=1 // pred_check
      _
    $region7: #{dqn_forward.1} parent=1 // pred_check_branch
      %120 = sbr.rel (0) target = $region9
    $region8: #{dqn_forward.1} parent=1 // pred_region
      _
    $region9: #{dqn_forward.1} parent=1 // pred_fallthru
      _
    // Predicated region
    $region10: #{dqn_forward.1} parent=1 // pred_check
      _
    $region11: #{dqn_forward.1} parent=1 // pred_check_branch
      %122 = sbr.rel (0) target = $region13
    $region12: #{dqn_forward.1} parent=1 // pred_region
      _
    $region13: #{dqn_forward.1} parent=1 // pred_fallthru
      _
    // Predicated region
    $region14: #{dqn_forward.1} parent=1 // pred_check
      _
    $region15: #{dqn_forward.1} parent=1 // pred_check_branch
      %124 = sbr.rel (0) target = $region17
    $region16: #{dqn_forward.1} parent=1 // pred_region
      _
    $region17: #{dqn_forward.1} parent=1 // pred_fallthru
      _
    // Predicated region
    $region18: #{dqn_forward.1} parent=1 // pred_check
      _
    $region19: #{dqn_forward.1} parent=1 // pred_check_branch
      %126 = sbr.rel (0) target = $region21
    $region20: #{dqn_forward.1} parent=1 // pred_region
      _
    $region21: #{dqn_forward.1} parent=1 // pred_fallthru
      _
    // Predicated region
    $region22: #{dqn_forward.1} parent=1 // pred_check
      _
    $region23: #{dqn_forward.1} parent=1 // pred_check_branch
      %128 = sbr.rel (0) target = $region25
    $region24: #{dqn_forward.1} parent=1 // pred_region
      _
    $region25: #{dqn_forward.1} parent=1 // pred_fallthru
      _
    // Predicated region
    $region26: #{dqn_forward.1} parent=1 // pred_check
      _
    $region27: #{dqn_forward.1} parent=1 // pred_check_branch
      %130 = sbr.rel (0) target = $region29
    $region28: #{dqn_forward.1} parent=1 // pred_region
      %s132 = ssub.s32 640, 640
      %133 = vsyncadd [#allocation3], %s132
      %s134 = sshll.u32 [#allocation2], 4
      %s135 = int_to_ptr.vmem [resolvable:$true] %s134
      %140 = dma.hbm_to_vmem [thread:$0]  %s13, 640, %s135, [#allocation3], 64, 64, 4
    $region29: #{dqn_forward.1} parent=1 // pred_fallthru
      _
    // Predicated region
    $region30: #{dqn_forward.1} parent=1 // pred_check
      _
    $region31: #{dqn_forward.1} parent=1 // pred_check_branch
      %142 = sbr.rel (0) target = $region33
    $region32: #{dqn_forward.1} parent=1 // pred_region
      %s144 = ssub.s32 16, 16
      %145 = vsyncadd [#allocation5], %s144
      %s147 = sshll.u32 [#allocation4], 4
      %s148 = int_to_ptr.vmem [resolvable:$true] %s147
      %150 = dma.hbm_to_vmem [thread:$0]  %s15, 16, %s148, [#allocation5]
    $region33: #{dqn_forward.1} parent=1 // pred_fallthru
      _
    // Predicated region
    $region34: #{dqn_forward.1} parent=1 // pred_check
      _
    $region35: #{dqn_forward.1} parent=1 // pred_check_branch
      %152 = sbr.rel (0) target = $region37
    $region36: #{dqn_forward.1} parent=1 // pred_region
      _
    $region37: #{dqn_forward.1} parent=1 // pred_fallthru
      _
    // Predicated region
    $region38: #{dqn_forward.1} parent=1 // pred_check
      _
    $region39: #{dqn_forward.1} parent=1 // pred_check_branch
      %154 = sbr.rel (0) target = $region41
    $region40: #{dqn_forward.1} parent=1 // pred_region
      %s156 = ssub.s32 16, 16
      %157 = vsyncadd [#allocation5], %s156
      %s159 = sshll.u32 [#allocation6], 4
      %s160 = int_to_ptr.vmem [resolvable:$true] %s159
      %162 = dma.hbm_to_vmem [thread:$0]  %s19, 16, %s160, [#allocation5]
    $region41: #{dqn_forward.1} parent=1 // pred_fallthru
      _
    // Predicated region
    $region42: #{dqn_forward.1} parent=1 // pred_check
      _
    $region43: #{dqn_forward.1} parent=1 // pred_check_branch
      %164 = sbr.rel (0) target = $region45
    $region44: #{dqn_forward.1} parent=1 // pred_region
      %s166 = ssub.s32 512, 512
      %167 = vsyncadd [#allocation8], %s166
      %s168 = sshll.u32 [#allocation7], 4
      %s169 = int_to_ptr.vmem [resolvable:$true] %s168
      %174 = dma.hbm_to_vmem [thread:$0]  %s21, 512, %s169, [#allocation8], 64, 64, 4
    $region45: #{dqn_forward.1} parent=1 // pred_fallthru
      _
    // Predicated region
    $region46: #{dqn_forward.1} parent=1 // pred_check
      _
    $region47: #{dqn_forward.1} parent=1 // pred_check_branch
      %176 = sbr.rel (0) target = $region49
    $region48: #{dqn_forward.1} parent=1 // pred_region
      %s178 = ssub.s32 16, 16
      %179 = vsyncadd [#allocation8], %s178
      %s181 = sshll.u32 [#allocation9], 4
      %s182 = int_to_ptr.vmem [resolvable:$true] %s181
      %184 = dma.hbm_to_vmem [thread:$0]  %s23, 16, %s182, [#allocation8]
    $region49: #{dqn_forward.1} parent=1 // pred_fallthru
      _
    // Predicated region
    $region50: #{dqn_forward.1} parent=1 // pred_check
      _
    $region51: #{dqn_forward.1} parent=1 // pred_check_branch
      %186 = sbr.rel (0) target = $region53
    $region52: #{dqn_forward.1} parent=1 // pred_region
      %s188 = ssub.s32 39936, 39936
      %189 = vsyncadd [#allocation11], %s188
      %s190 = sshll.u32 [#allocation10], 4
      %s191 = int_to_ptr.vmem [resolvable:$true] %s190
      %196 = dma.hbm_to_vmem [thread:$0]  %s25, 39936, %s191, [#allocation11], 512, 512, 32
    $region53: #{dqn_forward.1} parent=1 // pred_fallthru
      _
    // Predicated region
    $region54: #{dqn_forward.1} parent=1 // pred_check
      _
    $region55: #{dqn_forward.1} parent=1 // pred_check_branch
      %198 = sbr.rel (0) target = $region57
    $region56: #{dqn_forward.1} parent=1 // pred_region
      %s200 = ssub.s32 128, 128
      %201 = vsyncadd [#allocation11], %s200
      %s203 = sshll.u32 [#allocation12], 4
      %s204 = int_to_ptr.vmem [resolvable:$true] %s203
      %206 = dma.hbm_to_vmem [thread:$0]  %s27, 128, %s204, [#allocation11]
    $region57: #{dqn_forward.1} parent=1 // pred_fallthru
      _
    // Predicated region
    $region58: #{dqn_forward.1} parent=1 // pred_check
      _
    $region59: #{dqn_forward.1} parent=1 // pred_check_branch
      %208 = sbr.rel (0) target = $region61
    $region60: #{dqn_forward.1} parent=1 // pred_region
      %s210 = ssub.s32 16384, 16384
      %211 = vsyncadd [#allocation14], %s210
      %s212 = sshll.u32 [#allocation13], 4
      %s213 = int_to_ptr.vmem [resolvable:$true] %s212
      %218 = dma.hbm_to_vmem [thread:$0]  %s29, 16384, %s213, [#allocation14], 128, 128, 8
    $region61: #{dqn_forward.1} parent=1 // pred_fallthru
      _
    // Predicated region
    $region62: #{dqn_forward.1} parent=1 // pred_check
      _
    $region63: #{dqn_forward.1} parent=1 // pred_check_branch
      %220 = sbr.rel (0) target = $region65
    $region64: #{dqn_forward.1} parent=1 // pred_region
      %s222 = ssub.s32 32, 32
      %223 = vsyncadd [#allocation14], %s222
      %s225 = sshll.u32 [#allocation15], 4
      %s226 = int_to_ptr.vmem [resolvable:$true] %s225
      %228 = dma.hbm_to_vmem [thread:$0]  %s31, 32, %s226, [#allocation14]
    $region65: #{dqn_forward.1} parent=1 // pred_fallthru
      _
    // Predicated region
    $region66: #{dqn_forward.1} parent=1 // pred_check
      _
    $region67: #{dqn_forward.1} parent=1 // pred_check_branch
      %230 = sbr.rel (0) target = $region69
    $region68: #{dqn_forward.1} parent=1 // pred_region
      _
    $region69: #{dqn_forward.1} parent=1 // pred_fallthru
      _
    // Predicated region
    $region70: #{dqn_forward.1} parent=1 // pred_check
      _
    $region71: #{dqn_forward.1} parent=1 // pred_check_branch
      %232 = sbr.rel (0) target = $region73
    $region72: #{dqn_forward.1} parent=1 // pred_region
      %s234 = ssub.s32 16, 16
      %235 = vsyncadd [#allocation17], %s234
      %s237 = sshll.u32 [#allocation16], 4
      %s238 = int_to_ptr.vmem [resolvable:$true] %s237
      %240 = dma.hbm_to_vmem [thread:$0]  %s35, 16, %s238, [#allocation17]
    $region73: #{dqn_forward.1} parent=1 // pred_fallthru
      _
    // Predicated region
    $region74: #{dqn_forward.1} parent=1 // pred_check
      _
    $region75: #{dqn_forward.1} parent=1 // pred_check_branch
      %242 = sbr.rel (0) target = $region77
    $region76: #{dqn_forward.1} parent=1 // pred_region
      %s244 = ssub.s32 512, 512
      %245 = vsyncadd [#allocation17], %s244
      %s246 = sshll.u32 [#allocation18], 4
      %s247 = int_to_ptr.vmem [resolvable:$true] %s246
      %252 = dma.hbm_to_vmem [thread:$0]  %s37, 512, %s247, [#allocation17], 64, 64, 4
    $region77: #{dqn_forward.1} parent=1 // pred_fallthru
      _
    // Predicated region
    $region78: #{dqn_forward.1} parent=1 // pred_check
      _
    $region79: #{dqn_forward.1} parent=1 // pred_check_branch
      %254 = sbr.rel (0) target = $region81
    $region80: #{dqn_forward.1} parent=1 // pred_region
      %s256 = ssub.s32 16, 16
      %257 = vsyncadd [#allocation20], %s256
      %s259 = sshll.u32 [#allocation19], 4
      %s260 = int_to_ptr.vmem [resolvable:$true] %s259
      %262 = dma.hbm_to_vmem [thread:$0]  %s39, 16, %s260, [#allocation20]
    $region81: #{dqn_forward.1} parent=1 // pred_fallthru
      _
    // Predicated region
    $region82: #{dqn_forward.1} parent=1 // pred_check
      _
    $region83: #{dqn_forward.1} parent=1 // pred_check_branch
      %264 = sbr.rel (0) target = $region85
    $region84: #{dqn_forward.1} parent=1 // pred_region
      %s266 = ssub.s32 320, 320
      %267 = vsyncadd [#allocation20], %s266
      %s268 = sshll.u32 [#allocation21], 4
      %s269 = int_to_ptr.vmem [resolvable:$true] %s268
      %274 = dma.hbm_to_vmem [thread:$0]  %s41, 320, %s269, [#allocation20], 64, 64, 4
    $region85: #{dqn_forward.1} parent=1 // pred_fallthru
      _
    // Predicated region
    $region86: #{dqn_forward.1} parent=1 // pred_check
      _
    $region87: #{dqn_forward.1} parent=1 // pred_check_branch
      %276 = sbr.rel (0) target = $region89
    $region88: #{dqn_forward.1} parent=1 // pred_region
      %s278 = ssub.s32 16, 16
      %279 = vsyncadd [#allocation23], %s278
      %s281 = sshll.u32 [#allocation22], 4
      %s282 = int_to_ptr.vmem [resolvable:$true] %s281
      %284 = dma.hbm_to_vmem [thread:$0]  %s43, 16, %s282, [#allocation23]
    $region89: #{dqn_forward.1} parent=1 // pred_fallthru
      _
    // Predicated region
    $region90: #{dqn_forward.1} parent=1 // pred_check
      _
    $region91: #{dqn_forward.1} parent=1 // pred_check_branch
      %286 = sbr.rel (0) target = $region93
    $region92: #{dqn_forward.1} parent=1 // pred_region
      _
    $region93: #{dqn_forward.1} parent=1 // pred_fallthru
      _
    // Predicated region
    $region94: #{dqn_forward.1} parent=1 // pred_check
      _
    $region95: #{dqn_forward.1} parent=1 // pred_check_branch
      %288 = sbr.rel (0) target = $region97
    $region96: #{dqn_forward.1} parent=1 // pred_region
      %s290 = ssub.s32 16, 16
      %291 = vsyncadd [#allocation23], %s290
      %s293 = sshll.u32 [#allocation24], 4
      %s294 = int_to_ptr.vmem [resolvable:$true] %s293
      %296 = dma.hbm_to_vmem [thread:$0]  %s47, 16, %s294, [#allocation23]
    $region97: #{dqn_forward.1} parent=1 // pred_fallthru
      _
    // Predicated region
    $region98: #{dqn_forward.1} parent=1 // pred_check
      _
    $region99: #{dqn_forward.1} parent=1 // pred_check_branch
      %298 = sbr.rel (0) target = $region101
    $region100: #{dqn_forward.1} parent=1 // pred_region
      %s300 = ssub.s32 512, 512
      %301 = vsyncadd [#allocation26], %s300
      %s302 = sshll.u32 [#allocation25], 4
      %s303 = int_to_ptr.vmem [resolvable:$true] %s302
      %308 = dma.hbm_to_vmem [thread:$0]  %s49, 512, %s303, [#allocation26], 64, 64, 4
    $region101: #{dqn_forward.1} parent=1 // pred_fallthru
      _
    // Predicated region
    $region102: #{dqn_forward.1} parent=1 // pred_check
      _
    $region103: #{dqn_forward.1} parent=1 // pred_check_branch
      %310 = sbr.rel (0) target = $region105
    $region104: #{dqn_forward.1} parent=1 // pred_region
      %s312 = ssub.s32 16, 16
      %313 = vsyncadd [#allocation26], %s312
      %s315 = sshll.u32 [#allocation27], 4
      %s316 = int_to_ptr.vmem [resolvable:$true] %s315
      %318 = dma.hbm_to_vmem [thread:$0]  %s51, 16, %s316, [#allocation26]
    $region105: #{dqn_forward.1} parent=1 // pred_fallthru
      _
    // Predicated region
    $region106: #{dqn_forward.1} parent=1 // pred_check
      _
    $region107: #{dqn_forward.1} parent=1 // pred_check_branch
      %320 = sbr.rel (0) target = $region109
    $region108: #{dqn_forward.1} parent=1 // pred_region
      %s322 = ssub.s32 33280, 33280
      %323 = vsyncadd [#allocation29], %s322
      %s324 = sshll.u32 [#allocation28], 4
      %s325 = int_to_ptr.vmem [resolvable:$true] %s324
      %330 = dma.hbm_to_vmem [thread:$0]  %s53, 33280, %s325, [#allocation29], 512, 512, 32
    $region109: #{dqn_forward.1} parent=1 // pred_fallthru
      _
    // Predicated region
    $region110: #{dqn_forward.1} parent=1 // pred_check
      _
    $region111: #{dqn_forward.1} parent=1 // pred_check_branch
      %332 = sbr.rel (0) target = $region113
    $region112: #{dqn_forward.1} parent=1 // pred_region
      %s334 = ssub.s32 128, 128
      %335 = vsyncadd [#allocation29], %s334
      %s337 = sshll.u32 [#allocation30], 4
      %s338 = int_to_ptr.vmem [resolvable:$true] %s337
      %340 = dma.hbm_to_vmem [thread:$0]  %s55, 128, %s338, [#allocation29]
    $region113: #{dqn_forward.1} parent=1 // pred_fallthru
      _
    // Predicated region
    $region114: #{dqn_forward.1} parent=1 // pred_check
      _
    $region115: #{dqn_forward.1} parent=1 // pred_check_branch
      %342 = sbr.rel (0) target = $region117
    $region116: #{dqn_forward.1} parent=1 // pred_region
      %s344 = ssub.s32 16384, 16384
      %345 = vsyncadd [#allocation32], %s344
      %s346 = sshll.u32 [#allocation31], 4
      %s347 = int_to_ptr.vmem [resolvable:$true] %s346
      %352 = dma.hbm_to_vmem [thread:$0]  %s57, 16384, %s347, [#allocation32], 128, 128, 8
    $region117: #{dqn_forward.1} parent=1 // pred_fallthru
      _
    // Predicated region
    $region118: #{dqn_forward.1} parent=1 // pred_check
      _
    $region119: #{dqn_forward.1} parent=1 // pred_check_branch
      %354 = sbr.rel (0) target = $region121
    $region120: #{dqn_forward.1} parent=1 // pred_region
      %s356 = ssub.s32 32, 32
      %357 = vsyncadd [#allocation32], %s356
      %s359 = sshll.u32 [#allocation33], 4
      %s360 = int_to_ptr.vmem [resolvable:$true] %s359
      %362 = dma.hbm_to_vmem [thread:$0]  %s59, 32, %s360, [#allocation32]
    $region121: #{dqn_forward.1} parent=1 // pred_fallthru
      _
    // Predicated region
    $region122: #{dqn_forward.1} parent=1 // pred_check
      _
    $region123: #{dqn_forward.1} parent=1 // pred_check_branch
      %364 = sbr.rel (0) target = $region125
    $region124: #{dqn_forward.1} parent=1 // pred_region
      _
    $region125: #{dqn_forward.1} parent=1 // pred_fallthru
      _
    // Predicated region
    $region126: #{dqn_forward.1} parent=1 // pred_check
      _
    $region127: #{dqn_forward.1} parent=1 // pred_check_branch
      %366 = sbr.rel (0) target = $region129
    $region128: #{dqn_forward.1} parent=1 // pred_region
      %s368 = ssub.s32 16, 16
      %369 = vsyncadd [#allocation35], %s368
      %s371 = sshll.u32 [#allocation34], 4
      %s372 = int_to_ptr.vmem [resolvable:$true] %s371
      %374 = dma.hbm_to_vmem [thread:$0]  %s63, 16, %s372, [#allocation35]
    $region129: #{dqn_forward.1} parent=1 // pred_fallthru
      _
    // Predicated region
    $region130: #{dqn_forward.1} parent=1 // pred_check
      _
    $region131: #{dqn_forward.1} parent=1 // pred_check_branch
      %376 = sbr.rel (0) target = $region133
    $region132: #{dqn_forward.1} parent=1 // pred_region
      %s378 = ssub.s32 512, 512
      %379 = vsyncadd [#allocation35], %s378
      %s380 = sshll.u32 [#allocation36], 4
      %s381 = int_to_ptr.vmem [resolvable:$true] %s380
      %386 = dma.hbm_to_vmem [thread:$0]  %s65, 512, %s381, [#allocation35], 64, 64, 4
    $region133: #{dqn_forward.1} parent=1 // pred_fallthru
      _
    // Predicated region
    $region134: #{dqn_forward.1} parent=1 // pred_check
      _
    $region135: #{dqn_forward.1} parent=1 // pred_check_branch
      %388 = sbr.rel (0) target = $region137
    $region136: #{dqn_forward.1} parent=1 // pred_region
      %s390 = ssub.s32 16, 16
      %391 = vsyncadd [#allocation38], %s390
      %s393 = sshll.u32 [#allocation37], 4
      %s394 = int_to_ptr.vmem [resolvable:$true] %s393
      %396 = dma.hbm_to_vmem [thread:$0]  %s67, 16, %s394, [#allocation38]
    $region137: #{dqn_forward.1} parent=1 // pred_fallthru
      _
    // Predicated region
    $region138: #{dqn_forward.1} parent=1 // pred_check
      _
    $region139: #{dqn_forward.1} parent=1 // pred_check_branch
      %398 = sbr.rel (0) target = $region141
    $region140: #{dqn_forward.1} parent=1 // pred_region
      %s400 = ssub.s32 256, 256
      %401 = vsyncadd [#allocation38], %s400
      %s402 = sshll.u32 [#allocation39], 4
      %s403 = int_to_ptr.vmem [resolvable:$true] %s402
      %408 = dma.hbm_to_vmem [thread:$0]  %s69, 256, %s403, [#allocation38], 128, 128, 8
    $region141: #{dqn_forward.1} parent=1 // pred_fallthru
      _
    // Predicated region
    $region142: #{dqn_forward.1} parent=1 // pred_check
      _
    $region143: #{dqn_forward.1} parent=1 // pred_check_branch
      %410 = sbr.rel (0) target = $region145
    $region144: #{dqn_forward.1} parent=1 // pred_region
      %s412 = ssub.s32 32, 32
      %413 = vsyncadd [#allocation41], %s412
      %s415 = sshll.u32 [#allocation40], 4
      %s416 = int_to_ptr.vmem [resolvable:$true] %s415
      %418 = dma.hbm_to_vmem [thread:$0]  %s71, 32, %s416, [#allocation41]
    $region145: #{dqn_forward.1} parent=1 // pred_fallthru
      _
    // Predicated region
    $region146: #{dqn_forward.1} parent=1 // pred_check
      _
    $region147: #{dqn_forward.1} parent=1 // pred_check_branch
      %420 = sbr.rel (0) target = $region149
    $region148: #{dqn_forward.1} parent=1 // pred_region
      %s422 = ssub.s32 2048, 2048
      %423 = vsyncadd [#allocation41], %s422
      %s424 = sshll.u32 [#allocation42], 4
      %s425 = int_to_ptr.vmem [resolvable:$true] %s424
      %430 = dma.hbm_to_vmem [thread:$0]  %s73, 2048, %s425, [#allocation41], 64, 64, 4
    $region149: #{dqn_forward.1} parent=1 // pred_fallthru
      _
    // Predicated region
    $region150: #{dqn_forward.1} parent=1 // pred_check
      _
    $region151: #{dqn_forward.1} parent=1 // pred_check_branch
      %432 = sbr.rel (0) target = $region153
    $region152: #{dqn_forward.1} parent=1 // pred_region
      %s434 = ssub.s32 16, 16
      %435 = vsyncadd [#allocation44], %s434
      %s437 = sshll.u32 [#allocation43], 4
      %s438 = int_to_ptr.vmem [resolvable:$true] %s437
      %440 = dma.hbm_to_vmem [thread:$0]  %s75, 16, %s438, [#allocation44]
    $region153: #{dqn_forward.1} parent=1 // pred_fallthru
      _
    // Predicated region
    $region154: #{dqn_forward.1} parent=1 // pred_check
      _
    $region155: #{dqn_forward.1} parent=1 // pred_check_branch
      %442 = sbr.rel (0) target = $region157
    $region156: #{dqn_forward.1} parent=1 // pred_region
      %s444 = ssub.s32 1024, 1024
      %445 = vsyncadd [#allocation44], %s444
      %s446 = sshll.u32 [#allocation45], 4
      %s447 = int_to_ptr.vmem [resolvable:$true] %s446
      %452 = dma.hbm_to_vmem [thread:$0]  %s77, 1024, %s447, [#allocation44], 64, 64, 4
    $region157: #{dqn_forward.1} parent=1 // pred_fallthru
      _
    // Predicated region
    $region158: #{dqn_forward.1} parent=1 // pred_check
      _
    $region159: #{dqn_forward.1} parent=1 // pred_check_branch
      %454 = sbr.rel (0) target = $region161
    $region160: #{dqn_forward.1} parent=1 // pred_region
      %s456 = ssub.s32 16, 16
      %457 = vsyncadd [#allocation47], %s456
      %s459 = sshll.u32 [#allocation46], 4
      %s460 = int_to_ptr.vmem [resolvable:$true] %s459
      %462 = dma.hbm_to_vmem [thread:$0]  %s79, 16, %s460, [#allocation47]
    $region161: #{dqn_forward.1} parent=1 // pred_fallthru
      _
    // Predicated region
    $region162: #{dqn_forward.1} parent=1 // pred_check
      _
    $region163: #{dqn_forward.1} parent=1 // pred_check_branch
      %464 = sbr.rel (0) target = $region165
    $region164: #{dqn_forward.1} parent=1 // pred_region
      %s466 = ssub.s32 2048, 2048
      %467 = vsyncadd [#allocation47], %s466
      %s468 = sshll.u32 [#allocation48], 4
      %s469 = int_to_ptr.vmem [resolvable:$true] %s468
      %474 = dma.hbm_to_vmem [thread:$0]  %s81, 2048, %s469, [#allocation47], 128, 128, 8
    $region165: #{dqn_forward.1} parent=1 // pred_fallthru
      _
    // Predicated region
    $region166: #{dqn_forward.1} parent=1 // pred_check
      _
    $region167: #{dqn_forward.1} parent=1 // pred_check_branch
      %476 = sbr.rel (0) target = $region169
    $region168: #{dqn_forward.1} parent=1 // pred_region
      %s478 = ssub.s32 32, 32
      %479 = vsyncadd [#allocation50], %s478
      %s481 = sshll.u32 [#allocation49], 4
      %s482 = int_to_ptr.vmem [resolvable:$true] %s481
      %484 = dma.hbm_to_vmem [thread:$0]  %s83, 32, %s482, [#allocation50]
    $region169: #{dqn_forward.1} parent=1 // pred_fallthru
      _
    // Predicated region
    $region170: #{dqn_forward.1} parent=1 // pred_check
      _
    $region171: #{dqn_forward.1} parent=1 // pred_check_branch
      %486 = sbr.rel (0) target = $region173
    $region172: #{dqn_forward.1} parent=1 // pred_region
      %s488 = ssub.s32 2048, 2048
      %489 = vsyncadd [#allocation50], %s488
      %s490 = sshll.u32 [#allocation51], 4
      %s491 = int_to_ptr.vmem [resolvable:$true] %s490
      %496 = dma.hbm_to_vmem [thread:$0]  %s85, 2048, %s491, [#allocation50], 64, 64, 4
    $region173: #{dqn_forward.1} parent=1 // pred_fallthru
      _
    // Predicated region
    $region174: #{dqn_forward.1} parent=1 // pred_check
      _
    $region175: #{dqn_forward.1} parent=1 // pred_check_branch
      %498 = sbr.rel (0) target = $region177
    $region176: #{dqn_forward.1} parent=1 // pred_region
      %s500 = ssub.s32 16, 16
      %501 = vsyncadd [#allocation53], %s500
      %s503 = sshll.u32 [#allocation52], 4
      %s504 = int_to_ptr.vmem [resolvable:$true] %s503
      %506 = dma.hbm_to_vmem [thread:$0]  %s87, 16, %s504, [#allocation53]
    $region177: #{dqn_forward.1} parent=1 // pred_fallthru
      _
    // Predicated region
    $region178: #{dqn_forward.1} parent=1 // pred_check
      _
    $region179: #{dqn_forward.1} parent=1 // pred_check_branch
      %508 = sbr.rel (0) target = $region181
    $region180: #{dqn_forward.1} parent=1 // pred_region
      %s510 = ssub.s32 1024, 1024
      %511 = vsyncadd [#allocation53], %s510
      %s512 = sshll.u32 [#allocation54], 4
      %s513 = int_to_ptr.vmem [resolvable:$true] %s512
      %518 = dma.hbm_to_vmem [thread:$0]  %s89, 1024, %s513, [#allocation53], 64, 64, 4
    $region181: #{dqn_forward.1} parent=1 // pred_fallthru
      _
    // Predicated region
    $region182: #{dqn_forward.1} parent=1 // pred_check
      _
    $region183: #{dqn_forward.1} parent=1 // pred_check_branch
      %520 = sbr.rel (0) target = $region185
    $region184: #{dqn_forward.1} parent=1 // pred_region
      %s522 = ssub.s32 16, 16
      %523 = vsyncadd [#allocation56], %s522
      %s525 = sshll.u32 [#allocation55], 4
      %s526 = int_to_ptr.vmem [resolvable:$true] %s525
      %528 = dma.hbm_to_vmem [thread:$0]  %s91, 16, %s526, [#allocation56]
    $region185: #{dqn_forward.1} parent=1 // pred_fallthru
      _
    // Predicated region
    $region186: #{dqn_forward.1} parent=1 // pred_check
      _
    $region187: #{dqn_forward.1} parent=1 // pred_check_branch
      %530 = sbr.rel (0) target = $region189
    $region188: #{dqn_forward.1} parent=1 // pred_region
      %531 = dma.done [#allocation3], 640
    $region189: #{dqn_forward.1} parent=1 // pred_fallthru
      _
    // Predicated region
    $region190: #{dqn_forward.1} parent=1 // pred_check
      _
    $region191: #{dqn_forward.1} parent=1 // pred_check_branch
      %533 = sbr.rel (0) target = $region193
    $region192: #{dqn_forward.1} parent=1 // pred_region
      %534 = dma.done [#allocation5], 16
    $region193: #{dqn_forward.1} parent=1 // pred_fallthru
      _
    // Predicated region
    $region194: #{dqn_forward.1} parent=1 // pred_check
      _
    $region195: #{dqn_forward.1} parent=1 // pred_check_branch
      %536 = sbr.rel (0) target = $region197
    $region196: #{dqn_forward.1} parent=1 // pred_region
      %537 = dma.done [#allocation5], 16
    $region197: #{dqn_forward.1} parent=1 // pred_fallthru
      _
    // Predicated region
    $region198: #{dqn_forward.1} parent=1 // pred_check
      _
    $region199: #{dqn_forward.1} parent=1 // pred_check_branch
      %539 = sbr.rel (0) target = $region201
    $region200: #{dqn_forward.1} parent=1 // pred_region
      %540 = dma.done [#allocation8], 512
    $region201: #{dqn_forward.1} parent=1 // pred_fallthru
      _
    // Predicated region
    $region202: #{dqn_forward.1} parent=1 // pred_check
      _
    $region203: #{dqn_forward.1} parent=1 // pred_check_branch
      %542 = sbr.rel (0) target = $region205
    $region204: #{dqn_forward.1} parent=1 // pred_region
      %543 = dma.done [#allocation8], 16
    $region205: #{dqn_forward.1} parent=1 // pred_fallthru
      _
    // Predicated region
    $region206: #{dqn_forward.1} parent=1 // pred_check
      _
    $region207: #{dqn_forward.1} parent=1 // pred_check_branch
      %545 = sbr.rel (0) target = $region209
    $region208: #{dqn_forward.1} parent=1 // pred_region
      %546 = dma.done [#allocation11], 39936
    $region209: #{dqn_forward.1} parent=1 // pred_fallthru
      _
    // Predicated region
    $region210: #{dqn_forward.1} parent=1 // pred_check
      _
    $region211: #{dqn_forward.1} parent=1 // pred_check_branch
      %548 = sbr.rel (0) target = $region213
    $region212: #{dqn_forward.1} parent=1 // pred_region
      %549 = dma.done [#allocation11], 128
    $region213: #{dqn_forward.1} parent=1 // pred_fallthru
      _
    // Predicated region
    $region214: #{dqn_forward.1} parent=1 // pred_check
      _
    $region215: #{dqn_forward.1} parent=1 // pred_check_branch
      %551 = sbr.rel (0) target = $region217
    $region216: #{dqn_forward.1} parent=1 // pred_region
      %552 = dma.done [#allocation14], 16384
    $region217: #{dqn_forward.1} parent=1 // pred_fallthru
      _
    // Predicated region
    $region218: #{dqn_forward.1} parent=1 // pred_check
      _
    $region219: #{dqn_forward.1} parent=1 // pred_check_branch
      %554 = sbr.rel (0) target = $region221
    $region220: #{dqn_forward.1} parent=1 // pred_region
      %555 = dma.done [#allocation14], 32
    $region221: #{dqn_forward.1} parent=1 // pred_fallthru
      _
    // Predicated region
    $region222: #{dqn_forward.1} parent=1 // pred_check
      _
    $region223: #{dqn_forward.1} parent=1 // pred_check_branch
      %557 = sbr.rel (0) target = $region225
    $region224: #{dqn_forward.1} parent=1 // pred_region
      %558 = dma.done [#allocation17], 16
    $region225: #{dqn_forward.1} parent=1 // pred_fallthru
      _
    // Predicated region
    $region226: #{dqn_forward.1} parent=1 // pred_check
      _
    $region227: #{dqn_forward.1} parent=1 // pred_check_branch
      %560 = sbr.rel (0) target = $region229
    $region228: #{dqn_forward.1} parent=1 // pred_region
      %561 = dma.done [#allocation17], 512
    $region229: #{dqn_forward.1} parent=1 // pred_fallthru
      _
    // Predicated region
    $region230: #{dqn_forward.1} parent=1 // pred_check
      _
    $region231: #{dqn_forward.1} parent=1 // pred_check_branch
      %563 = sbr.rel (0) target = $region233
    $region232: #{dqn_forward.1} parent=1 // pred_region
      %564 = dma.done [#allocation20], 16
    $region233: #{dqn_forward.1} parent=1 // pred_fallthru
      _
    // Predicated region
    $region234: #{dqn_forward.1} parent=1 // pred_check
      _
    $region235: #{dqn_forward.1} parent=1 // pred_check_branch
      %566 = sbr.rel (0) target = $region237
    $region236: #{dqn_forward.1} parent=1 // pred_region
      %567 = dma.done [#allocation20], 320
    $region237: #{dqn_forward.1} parent=1 // pred_fallthru
      _
    // Predicated region
    $region238: #{dqn_forward.1} parent=1 // pred_check
      _
    $region239: #{dqn_forward.1} parent=1 // pred_check_branch
      %569 = sbr.rel (0) target = $region241
    $region240: #{dqn_forward.1} parent=1 // pred_region
      %570 = dma.done [#allocation23], 16
    $region241: #{dqn_forward.1} parent=1 // pred_fallthru
      _
    // Predicated region
    $region242: #{dqn_forward.1} parent=1 // pred_check
      _
    $region243: #{dqn_forward.1} parent=1 // pred_check_branch
      %572 = sbr.rel (0) target = $region245
    $region244: #{dqn_forward.1} parent=1 // pred_region
      %573 = dma.done [#allocation23], 16
    $region245: #{dqn_forward.1} parent=1 // pred_fallthru
      _
    // Predicated region
    $region246: #{dqn_forward.1} parent=1 // pred_check
      _
    $region247: #{dqn_forward.1} parent=1 // pred_check_branch
      %575 = sbr.rel (0) target = $region249
    $region248: #{dqn_forward.1} parent=1 // pred_region
      %576 = dma.done [#allocation26], 512
    $region249: #{dqn_forward.1} parent=1 // pred_fallthru
      _
    // Predicated region
    $region250: #{dqn_forward.1} parent=1 // pred_check
      _
    $region251: #{dqn_forward.1} parent=1 // pred_check_branch
      %578 = sbr.rel (0) target = $region253
    $region252: #{dqn_forward.1} parent=1 // pred_region
      %579 = dma.done [#allocation26], 16
    $region253: #{dqn_forward.1} parent=1 // pred_fallthru
      _
    // Predicated region
    $region254: #{dqn_forward.1} parent=1 // pred_check
      _
    $region255: #{dqn_forward.1} parent=1 // pred_check_branch
      %581 = sbr.rel (0) target = $region257
    $region256: #{dqn_forward.1} parent=1 // pred_region
      %582 = dma.done [#allocation29], 33280
    $region257: #{dqn_forward.1} parent=1 // pred_fallthru
      _
    // Predicated region
    $region258: #{dqn_forward.1} parent=1 // pred_check
      _
    $region259: #{dqn_forward.1} parent=1 // pred_check_branch
      %584 = sbr.rel (0) target = $region261
    $region260: #{dqn_forward.1} parent=1 // pred_region
      %585 = dma.done [#allocation29], 128
    $region261: #{dqn_forward.1} parent=1 // pred_fallthru
      _
    // Predicated region
    $region262: #{dqn_forward.1} parent=1 // pred_check
      _
    $region263: #{dqn_forward.1} parent=1 // pred_check_branch
      %587 = sbr.rel (0) target = $region265
    $region264: #{dqn_forward.1} parent=1 // pred_region
      %588 = dma.done [#allocation32], 16384
    $region265: #{dqn_forward.1} parent=1 // pred_fallthru
      _
    // Predicated region
    $region266: #{dqn_forward.1} parent=1 // pred_check
      _
    $region267: #{dqn_forward.1} parent=1 // pred_check_branch
      %590 = sbr.rel (0) target = $region269
    $region268: #{dqn_forward.1} parent=1 // pred_region
      %591 = dma.done [#allocation32], 32
    $region269: #{dqn_forward.1} parent=1 // pred_fallthru
      _
    // Predicated region
    $region270: #{dqn_forward.1} parent=1 // pred_check
      _
    $region271: #{dqn_forward.1} parent=1 // pred_check_branch
      %593 = sbr.rel (0) target = $region273
    $region272: #{dqn_forward.1} parent=1 // pred_region
      %594 = dma.done [#allocation35], 16
    $region273: #{dqn_forward.1} parent=1 // pred_fallthru
      _
    // Predicated region
    $region274: #{dqn_forward.1} parent=1 // pred_check
      _
    $region275: #{dqn_forward.1} parent=1 // pred_check_branch
      %596 = sbr.rel (0) target = $region277
    $region276: #{dqn_forward.1} parent=1 // pred_region
      %597 = dma.done [#allocation35], 512
    $region277: #{dqn_forward.1} parent=1 // pred_fallthru
      _
    // Predicated region
    $region278: #{dqn_forward.1} parent=1 // pred_check
      _
    $region279: #{dqn_forward.1} parent=1 // pred_check_branch
      %599 = sbr.rel (0) target = $region281
    $region280: #{dqn_forward.1} parent=1 // pred_region
      %600 = dma.done [#allocation38], 16
    $region281: #{dqn_forward.1} parent=1 // pred_fallthru
      _
    // Predicated region
    $region282: #{dqn_forward.1} parent=1 // pred_check
      _
    $region283: #{dqn_forward.1} parent=1 // pred_check_branch
      %602 = sbr.rel (0) target = $region285
    $region284: #{dqn_forward.1} parent=1 // pred_region
      %603 = dma.done [#allocation38], 256
    $region285: #{dqn_forward.1} parent=1 // pred_fallthru
      _
    // Predicated region
    $region286: #{dqn_forward.1} parent=1 // pred_check
      _
    $region287: #{dqn_forward.1} parent=1 // pred_check_branch
      %605 = sbr.rel (0) target = $region289
    $region288: #{dqn_forward.1} parent=1 // pred_region
      %606 = dma.done [#allocation41], 32
    $region289: #{dqn_forward.1} parent=1 // pred_fallthru
      _
    // Predicated region
    $region290: #{dqn_forward.1} parent=1 // pred_check
      _
    $region291: #{dqn_forward.1} parent=1 // pred_check_branch
      %608 = sbr.rel (0) target = $region293
    $region292: #{dqn_forward.1} parent=1 // pred_region
      %609 = dma.done [#allocation41], 2048
    $region293: #{dqn_forward.1} parent=1 // pred_fallthru
      _
    // Predicated region
    $region294: #{dqn_forward.1} parent=1 // pred_check
      _
    $region295: #{dqn_forward.1} parent=1 // pred_check_branch
      %611 = sbr.rel (0) target = $region297
    $region296: #{dqn_forward.1} parent=1 // pred_region
      %612 = dma.done [#allocation44], 16
    $region297: #{dqn_forward.1} parent=1 // pred_fallthru
      _
    // Predicated region
    $region298: #{dqn_forward.1} parent=1 // pred_check
      _
    $region299: #{dqn_forward.1} parent=1 // pred_check_branch
      %614 = sbr.rel (0) target = $region301
    $region300: #{dqn_forward.1} parent=1 // pred_region
      %615 = dma.done [#allocation44], 1024
    $region301: #{dqn_forward.1} parent=1 // pred_fallthru
      _
    // Predicated region
    $region302: #{dqn_forward.1} parent=1 // pred_check
      _
    $region303: #{dqn_forward.1} parent=1 // pred_check_branch
      %617 = sbr.rel (0) target = $region305
    $region304: #{dqn_forward.1} parent=1 // pred_region
      %618 = dma.done [#allocation47], 16
    $region305: #{dqn_forward.1} parent=1 // pred_fallthru
      _
    // Predicated region
    $region306: #{dqn_forward.1} parent=1 // pred_check
      _
    $region307: #{dqn_forward.1} parent=1 // pred_check_branch
      %620 = sbr.rel (0) target = $region309
    $region308: #{dqn_forward.1} parent=1 // pred_region
      %621 = dma.done [#allocation47], 2048
    $region309: #{dqn_forward.1} parent=1 // pred_fallthru
      _
    // Predicated region
    $region310: #{dqn_forward.1} parent=1 // pred_check
      _
    $region311: #{dqn_forward.1} parent=1 // pred_check_branch
      %623 = sbr.rel (0) target = $region313
    $region312: #{dqn_forward.1} parent=1 // pred_region
      %624 = dma.done [#allocation50], 32
    $region313: #{dqn_forward.1} parent=1 // pred_fallthru
      _
    // Predicated region
    $region314: #{dqn_forward.1} parent=1 // pred_check
      _
    $region315: #{dqn_forward.1} parent=1 // pred_check_branch
      %626 = sbr.rel (0) target = $region317
    $region316: #{dqn_forward.1} parent=1 // pred_region
      %627 = dma.done [#allocation50], 2048
    $region317: #{dqn_forward.1} parent=1 // pred_fallthru
      _
    // Predicated region
    $region318: #{dqn_forward.1} parent=1 // pred_check
      _
    $region319: #{dqn_forward.1} parent=1 // pred_check_branch
      %629 = sbr.rel (0) target = $region321
    $region320: #{dqn_forward.1} parent=1 // pred_region
      %630 = dma.done [#allocation53], 16
    $region321: #{dqn_forward.1} parent=1 // pred_fallthru
      _
    // Predicated region
    $region322: #{dqn_forward.1} parent=1 // pred_check
      _
    $region323: #{dqn_forward.1} parent=1 // pred_check_branch
      %632 = sbr.rel (0) target = $region325
    $region324: #{dqn_forward.1} parent=1 // pred_region
      %633 = dma.done [#allocation53], 1024
    $region325: #{dqn_forward.1} parent=1 // pred_fallthru
      _
    // Predicated region
    $region326: #{dqn_forward.1} parent=1 // pred_check
      _
    $region327: #{dqn_forward.1} parent=1 // pred_check_branch
      %635 = sbr.rel (0) target = $region329
    $region328: #{dqn_forward.1} parent=1 // pred_region
      %636 = dma.done [#allocation56], 16
    $region329: #{dqn_forward.1} parent=1 // pred_fallthru
      _
    %v638 = vld [vmem:[%s3] sm:$0x3]
    %v639 = vld [vmem:[#allocation2] sm:$0xf]
    %v640 = vld [vmem:[#allocation2 + $0x4] sm:$0xf]
    %v641 = vld [vmem:[#allocation2 + $0x8] sm:$0xf]
    %v642 = vld [vmem:[#allocation2 + $0xc] sm:$0xf]
    %v643 = vld [vmem:[#allocation2 + $0x10] sm:$0xf]
    %v644 = vld [vmem:[#allocation2 + $0x14] sm:$0xf]
    %v645 = vld [vmem:[#allocation2 + $0x18] sm:$0xf]
    %v646 = vld [vmem:[#allocation2 + $0x1c] sm:$0xf]
    %v647 = vld [vmem:[#allocation2 + $0x20] sm:$0xf]
    %v648 = vld [vmem:[#allocation2 + $0x24] sm:$0x7]
    %v649 = vld [vmem:[#allocation4] sm:$0x1]
    %v650 = vpack.c.bf16 %v638, %v638
    %v652 = vlaneseq
    %v653 = vshrl.u32 %v652, 7
    %v654 = vsub.s32 0, %v653
    %v655 = vrot.slane %v649, %v654
    %v667 = vunpack.c.l.b16 %v639
    %v668 = vunpack.c.l.b16 %v640
    %v669 = vunpack.c.l.b16 %v641
    %v670 = vunpack.c.l.b16 %v642
    %v671 = vunpack.c.l.b16 %v643
    %v672 = vunpack.c.l.b16 %v644
    %v673 = vunpack.c.l.b16 %v645
    %v674 = vunpack.c.l.b16 %v646
    %v675 = vunpack.c.l.b16 %v647
    %v676 = vunpack.c.l.b16 %v648
    %v677 = vpack.c.b16 %v668, %v667
    %v678 = vpack.c.b16 %v670, %v669
    %v679 = vpack.c.b16 %v672, %v671
    %v680 = vpack.c.b16 %v674, %v673
    %v681 = vpack.c.b16 %v676, %v675
    %vm686 = vcmask 637952
    %v688 = vsel %vm686, %v650, 0
    %vm690 = vcmask 1046528
    %v692 = vsel %vm690, %v681, 0
    %694 = vmatprep.subr.bf16.mxu0 0
    %695 = vmatpush1.bf16.msra.mxu0 %v677
    %696 = vmatprep.subr.bf16.mxu0 0
    %697 = vmatpush1.bf16.msra.mxu0 %v678
    %698 = vmatprep.subr.bf16.mxu0 0
    %699 = vmatpush1.bf16.msra.mxu0 %v679
    %700 = vmatprep.subr.bf16.mxu0 0
    %701 = vmatpush1.bf16.msra.mxu0 %v680
    %702 = vmatprep.subr.bf16.mxu0 0
    %703 = vmatpush1.bf16.msra.mxu0 %v692
    %704 = vmatprep.subr.bf16.mxu0 0
    %705 = vmatpush1.bf16.msra.mxu0 0
    %706 = vmatprep.subr.bf16.mxu0 0
    %707 = vmatpush1.bf16.msra.mxu0 0
    %708 = vmatprep.subr.bf16.mxu0 0
    %709 = vmatpush1.bf16.msra.mxu0 0
    %710 = vmatprep.subr.bf16.mxu0 0
    %711 = vmatpush1.bf16.msra.mxu0 0
    %712 = vmatprep.subr.bf16.mxu0 0
    %713 = vmatpush1.bf16.msra.mxu0 0
    %714 = vmatprep.subr.bf16.mxu0 0
    %715 = vmatpush1.bf16.msra.mxu0 0
    %716 = vmatprep.subr.bf16.mxu0 0
    %717 = vmatpush1.bf16.msra.mxu0 0
    %718 = vmatprep.subr.bf16.mxu0 0
    %719 = vmatpush1.bf16.msra.mxu0 0
    %720 = vmatprep.subr.bf16.mxu0 0
    %721 = vmatpush1.bf16.msra.mxu0 0
    %722 = vmatprep.subr.bf16.mxu0 0
    %723 = vmatpush1.bf16.msra.mxu0 0
    %724 = vmatprep.subr.bf16.mxu0 0
    %725 = vmatpush1.bf16.msra.mxu0 0
    %726 = vmatprep.mubr.bf16.mxu0 0
    %727 = vmatmul.mubr.bf16.gmra.mrb[0].mxu0 %v688
    %v728 = vpop.f32.mrb[0].mxu0
    %v729 = vadd.f32 %v655, %v728
    %v730 = vpop.f32.mrb[0].mxu0
    %v731 = vpop.f32.mrb[0].mxu0
    %v732 = vpop.f32.mrb[0].mxu0
    %733 = vdwg.mxu0
    %v734 = vmax.f32 %v729, 0.0
    %vm735 = vcmask 1041408
    %v736 = vsel %vm735, %v734, 0.0
    %737 = vadd.xlane.f32.xlu0 %v736
    %v738 = vpop.xlane.xlu0 %737
    %v739 = vrcp.pop 128.0
    %v740 = vmul.f32 %v738, %v739
    %v741 = vsub.f32 %v734, %v740
    %v742 = vmul.f32 %v741, %v741
    %v743 = vsel %vm735, %v742, 0.0
    %744 = vadd.xlane.f32.xlu0 %v743
    %v745 = vpop.xlane.xlu0 %744
    %v746 = vmul.f32 %v745, %v739
    %v747 = vadd.f32 %v746, 1e-05
    %v748 = vrsqrt.pop %v747
    %v749 = vmul.f32 %v741, %v748
    %v750 = vld [vmem:[%s17] sm:$0xf]
    %v751 = vld [vmem:[%s17 + $0x4] sm:$0xf]
    %v752 = vld [vmem:[%s17 + $0x8] sm:$0xf]
    %v753 = vld [vmem:[%s17 + $0xc] sm:$0xf]
    %v754 = vld [vmem:[%s17 + $0x10] sm:$0xf]
    %v755 = vld [vmem:[%s17 + $0x14] sm:$0xf]
    %v756 = vld [vmem:[%s17 + $0x18] sm:$0xf]
    %v757 = vld [vmem:[%s17 + $0x1c] sm:$0xf]
    %v758 = vld [vmem:[%s17 + $0x20] sm:$0xf]
    %v759 = vld [vmem:[%s17 + $0x24] sm:$0xf]
    %v760 = vld [vmem:[%s17 + $0x28] sm:$0xf]
    %v761 = vld [vmem:[%s17 + $0x2c] sm:$0xf]
    %v762 = vld [vmem:[%s17 + $0x30] sm:$0xf]
    %v763 = vld [vmem:[%s17 + $0x34] sm:$0xf]
    %v764 = vld [vmem:[%s17 + $0x38] sm:$0xf]
    %v765 = vld [vmem:[%s17 + $0x3c] sm:$0xf]
    %v766 = vld [vmem:[#allocation6] sm:$0x1]
    %v767 = vpack.c.bf16 %v749, %v749
    %v769 = vlaneseq
    %v770 = vshrl.u32 %v769, 7
    %v771 = vsub.s32 0, %v770
    %v772 = vrot.slane %v766, %v771
    %v790 = vunpack.c.l.b16 %v750
    %v791 = vunpack.c.l.b16 %v751
    %v792 = vunpack.c.l.b16 %v752
    %v793 = vunpack.c.l.b16 %v753
    %v794 = vunpack.c.l.b16 %v754
    %v795 = vunpack.c.l.b16 %v755
    %v796 = vunpack.c.l.b16 %v756
    %v797 = vunpack.c.l.b16 %v757
    %v798 = vunpack.c.l.b16 %v758
    %v799 = vunpack.c.l.b16 %v759
    %v800 = vunpack.c.l.b16 %v760
    %v801 = vunpack.c.l.b16 %v761
    %v802 = vunpack.c.l.b16 %v762
    %v803 = vunpack.c.l.b16 %v763
    %v804 = vunpack.c.l.b16 %v764
    %v805 = vunpack.c.l.b16 %v765
    %v806 = vpack.c.b16 %v791, %v790
    %v807 = vpack.c.b16 %v793, %v792
    %v808 = vpack.c.b16 %v795, %v794
    %v809 = vpack.c.b16 %v797, %v796
    %v810 = vpack.c.b16 %v799, %v798
    %v811 = vpack.c.b16 %v801, %v800
    %v812 = vpack.c.b16 %v803, %v802
    %v813 = vpack.c.b16 %v805, %v804
    %822 = vmatprep.subr.bf16.mxu0 0
    %823 = vmatpush1.bf16.msra.mxu0 %v806
    %824 = vmatprep.subr.bf16.mxu0 0
    %825 = vmatpush1.bf16.msra.mxu0 %v807
    %826 = vmatprep.subr.bf16.mxu0 0
    %827 = vmatpush1.bf16.msra.mxu0 %v808
    %828 = vmatprep.subr.bf16.mxu0 0
    %829 = vmatpush1.bf16.msra.mxu0 %v809
    %830 = vmatprep.subr.bf16.mxu0 0
    %831 = vmatpush1.bf16.msra.mxu0 %v810
    %832 = vmatprep.subr.bf16.mxu0 0
    %833 = vmatpush1.bf16.msra.mxu0 %v811
    %834 = vmatprep.subr.bf16.mxu0 0
    %835 = vmatpush1.bf16.msra.mxu0 %v812
    %836 = vmatprep.subr.bf16.mxu0 0
    %837 = vmatpush1.bf16.msra.mxu0 %v813
    %838 = vmatprep.subr.bf16.mxu0 0
    %839 = vmatpush1.bf16.msra.mxu0 0
    %840 = vmatprep.subr.bf16.mxu0 0
    %841 = vmatpush1.bf16.msra.mxu0 0
    %842 = vmatprep.subr.bf16.mxu0 0
    %843 = vmatpush1.bf16.msra.mxu0 0
    %844 = vmatprep.subr.bf16.mxu0 0
    %845 = vmatpush1.bf16.msra.mxu0 0
    %846 = vmatprep.subr.bf16.mxu0 0
    %847 = vmatpush1.bf16.msra.mxu0 0
    %848 = vmatprep.subr.bf16.mxu0 0
    %849 = vmatpush1.bf16.msra.mxu0 0
    %850 = vmatprep.subr.bf16.mxu0 0
    %851 = vmatpush1.bf16.msra.mxu0 0
    %852 = vmatprep.subr.bf16.mxu0 0
    %853 = vmatpush1.bf16.msra.mxu0 0
    %854 = vmatprep.mubr.bf16.mxu0 0
    %855 = vmatmul.mubr.bf16.gmra.mrb[0].mxu0 %v767
    %v856 = vpop.f32.mrb[0].mxu0
    %v857 = vadd.f32 %v772, %v856
    %v858 = vpop.f32.mrb[0].mxu0
    %v859 = vpop.f32.mrb[0].mxu0
    %v860 = vpop.f32.mrb[0].mxu0
    %861 = vdwg.mxu0
    %v862 = vmax.f32 %v857, 0.0
    %vm863 = vcmask 517120
    %v864 = vsel %vm863, %v862, 0.0
    %865 = vadd.xlane.f32.xlu0 %v864
    %v866 = vpop.xlane.xlu0 %865
    %v867 = vrcp.pop 64.0
    %v868 = vmul.f32 %v866, %v867
    %v869 = vsub.f32 %v862, %v868
    %v870 = vmul.f32 %v869, %v869
    %v871 = vsel %vm863, %v870, 0.0
    %872 = vadd.xlane.f32.xlu0 %v871
    %v873 = vpop.xlane.xlu0 %872
    %v874 = vmul.f32 %v873, %v867
    %v875 = vadd.f32 %v874, 1e-05
    %v876 = vrsqrt.pop %v875
    %v877 = vmul.f32 %v869, %v876
    %v878 = vld [vmem:[#allocation7] sm:$0xf]
    %v879 = vld [vmem:[#allocation7 + $0x4] sm:$0xf]
    %v880 = vld [vmem:[#allocation7 + $0x8] sm:$0xf]
    %v881 = vld [vmem:[#allocation7 + $0xc] sm:$0xf]
    %v882 = vld [vmem:[#allocation7 + $0x10] sm:$0xf]
    %v883 = vld [vmem:[#allocation7 + $0x14] sm:$0xf]
    %v884 = vld [vmem:[#allocation7 + $0x18] sm:$0xf]
    %v885 = vld [vmem:[#allocation7 + $0x1c] sm:$0xf]
    %v886 = vld [vmem:[#allocation9] sm:$0x1]
    %v887 = vpack.c.bf16 %v877, %v877
    %v889 = vlaneseq
    %v890 = vshrl.u32 %v889, 7
    %v891 = vsub.s32 0, %v890
    %v892 = vrot.slane %v886, %v891
    %v902 = vunpack.c.l.b16 %v878
    %v903 = vunpack.c.l.b16 %v879
    %v904 = vunpack.c.l.b16 %v880
    %v905 = vunpack.c.l.b16 %v881
    %v906 = vunpack.c.l.b16 %v882
    %v907 = vunpack.c.l.b16 %v883
    %v908 = vunpack.c.l.b16 %v884
    %v909 = vunpack.c.l.b16 %v885
    %v910 = vpack.c.b16 %v903, %v902
    %v911 = vpack.c.b16 %v905, %v904
    %v912 = vpack.c.b16 %v907, %v906
    %v913 = vpack.c.b16 %v909, %v908
    %vm918 = vcmask 523264
    %v920 = vsel %vm918, %v887, 0
    %922 = vmatprep.subr.bf16.mxu0 0
    %923 = vmatpush1.bf16.msra.mxu0 %v910
    %924 = vmatprep.subr.bf16.mxu0 0
    %925 = vmatpush1.bf16.msra.mxu0 %v911
    %926 = vmatprep.subr.bf16.mxu0 0
    %927 = vmatpush1.bf16.msra.mxu0 %v912
    %928 = vmatprep.subr.bf16.mxu0 0
    %929 = vmatpush1.bf16.msra.mxu0 %v913
    %930 = vmatprep.subr.bf16.mxu0 0
    %931 = vmatpush1.bf16.msra.mxu0 0
    %932 = vmatprep.subr.bf16.mxu0 0
    %933 = vmatpush1.bf16.msra.mxu0 0
    %934 = vmatprep.subr.bf16.mxu0 0
    %935 = vmatpush1.bf16.msra.mxu0 0
    %936 = vmatprep.subr.bf16.mxu0 0
    %937 = vmatpush1.bf16.msra.mxu0 0
    %938 = vmatprep.subr.bf16.mxu0 0
    %939 = vmatpush1.bf16.msra.mxu0 0
    %940 = vmatprep.subr.bf16.mxu0 0
    %941 = vmatpush1.bf16.msra.mxu0 0
    %942 = vmatprep.subr.bf16.mxu0 0
    %943 = vmatpush1.bf16.msra.mxu0 0
    %944 = vmatprep.subr.bf16.mxu0 0
    %945 = vmatpush1.bf16.msra.mxu0 0
    %946 = vmatprep.subr.bf16.mxu0 0
    %947 = vmatpush1.bf16.msra.mxu0 0
    %948 = vmatprep.subr.bf16.mxu0 0
    %949 = vmatpush1.bf16.msra.mxu0 0
    %950 = vmatprep.subr.bf16.mxu0 0
    %951 = vmatpush1.bf16.msra.mxu0 0
    %952 = vmatprep.subr.bf16.mxu0 0
    %953 = vmatpush1.bf16.msra.mxu0 0
    %954 = vmatprep.mubr.bf16.mxu0 0
    %955 = vmatmul.mubr.bf16.gmra.mrb[0].mxu0 %v920
    %v956 = vpop.f32.mrb[0].mxu0
    %v957 = vadd.f32 %v892, %v956
    %v958 = vpop.f32.mrb[0].mxu0
    %v959 = vpop.f32.mrb[0].mxu0
    %v960 = vpop.f32.mrb[0].mxu0
    %961 = vdwg.mxu0
    %v962 = vld [vmem:[%s5] sm:$0xff]
    %v963 = vld [vmem:[%s5 + $0x8] sm:$0x3]
    %v964 = vld [vmem:[#allocation10] sm:$0xff]
    %v965 = vld [vmem:[#allocation10 + $0x8] sm:$0xff]
    %v966 = vld [vmem:[#allocation10 + $0x10] sm:$0xff]
    %v967 = vld [vmem:[#allocation10 + $0x18] sm:$0xff]
    %v968 = vld [vmem:[#allocation10 + $0x20] sm:$0xff]
    %v969 = vld [vmem:[#allocation10 + $0x28] sm:$0xff]
    %v970 = vld [vmem:[#allocation10 + $0x30] sm:$0xff]
    %v971 = vld [vmem:[#allocation10 + $0x38] sm:$0xff]
    %v972 = vld [vmem:[#allocation10 + $0x40] sm:$0xff]
    %v973 = vld [vmem:[#allocation10 + $0x48] sm:$0xff]
    %v974 = vld [vmem:[#allocation10 + $0x50] sm:$0xff]
    %v975 = vld [vmem:[#allocation10 + $0x58] sm:$0xff]
    %v976 = vld [vmem:[#allocation10 + $0x60] sm:$0xff]
    %v977 = vld [vmem:[#allocation10 + $0x68] sm:$0xff]
    %v978 = vld [vmem:[#allocation10 + $0x70] sm:$0xff]
    %v979 = vld [vmem:[#allocation10 + $0x78] sm:$0xff]
    %v980 = vld [vmem:[#allocation10 + $0x80] sm:$0xff]
    %v981 = vld [vmem:[#allocation10 + $0x88] sm:$0xff]
    %v982 = vld [vmem:[#allocation10 + $0x90] sm:$0xff]
    %v983 = vld [vmem:[#allocation10 + $0x98] sm:$0xff]
    %v984 = vld [vmem:[#allocation10 + $0xa0] sm:$0xff]
    %v985 = vld [vmem:[#allocation10 + $0xa8] sm:$0xff]
    %v986 = vld [vmem:[#allocation10 + $0xb0] sm:$0xff]
    %v987 = vld [vmem:[#allocation10 + $0xb8] sm:$0xff]
    %v988 = vld [vmem:[#allocation10 + $0xc0] sm:$0xff]
    %v989 = vld [vmem:[#allocation10 + $0xc8] sm:$0xff]
    %v990 = vld [vmem:[#allocation10 + $0xd0] sm:$0xff]
    %v991 = vld [vmem:[#allocation10 + $0xd8] sm:$0xff]
    %v992 = vld [vmem:[#allocation10 + $0xe0] sm:$0xff]
    %v993 = vld [vmem:[#allocation10 + $0xe8] sm:$0xff]
    %v994 = vld [vmem:[#allocation10 + $0xf0] sm:$0xff]
    %v995 = vld [vmem:[#allocation10 + $0xf8] sm:$0xff]
    %v996 = vld [vmem:[#allocation10 + $0x100] sm:$0xff]
    %v997 = vld [vmem:[#allocation10 + $0x108] sm:$0xff]
    %v998 = vld [vmem:[#allocation10 + $0x110] sm:$0xff]
    %v999 = vld [vmem:[#allocation10 + $0x118] sm:$0xff]
    %v1000 = vld [vmem:[#allocation10 + $0x120] sm:$0xff]
    %v1001 = vld [vmem:[#allocation10 + $0x128] sm:$0xff]
    %v1002 = vld [vmem:[#allocation10 + $0x130] sm:$0xff]
    %v1003 = vld [vmem:[#allocation10 + $0x138] sm:$0xff]
    %v1004 = vld [vmem:[#allocation10 + $0x140] sm:$0xff]
    %v1005 = vld [vmem:[#allocation10 + $0x148] sm:$0xff]
    %v1006 = vld [vmem:[#allocation10 + $0x150] sm:$0xff]
    %v1007 = vld [vmem:[#allocation10 + $0x158] sm:$0xff]
    %v1008 = vld [vmem:[#allocation10 + $0x160] sm:$0xff]
    %v1009 = vld [vmem:[#allocation10 + $0x168] sm:$0xff]
    %v1010 = vld [vmem:[#allocation10 + $0x170] sm:$0xff]
    %v1011 = vld [vmem:[#allocation10 + $0x178] sm:$0xff]
    %v1012 = vld [vmem:[#allocation10 + $0x180] sm:$0xff]
    %v1013 = vld [vmem:[#allocation10 + $0x188] sm:$0xff]
    %v1014 = vld [vmem:[#allocation10 + $0x190] sm:$0xff]
    %v1015 = vld [vmem:[#allocation10 + $0x198] sm:$0xff]
    %v1016 = vld [vmem:[#allocation10 + $0x1a0] sm:$0xff]
    %v1017 = vld [vmem:[#allocation10 + $0x1a8] sm:$0xff]
    %v1018 = vld [vmem:[#allocation10 + $0x1b0] sm:$0xff]
    %v1019 = vld [vmem:[#allocation10 + $0x1b8] sm:$0xff]
    %v1020 = vld [vmem:[#allocation10 + $0x1c0] sm:$0xff]
    %v1021 = vld [vmem:[#allocation10 + $0x1c8] sm:$0xff]
    %v1022 = vld [vmem:[#allocation10 + $0x1d0] sm:$0xff]
    %v1023 = vld [vmem:[#allocation10 + $0x1d8] sm:$0xff]
    %v1024 = vld [vmem:[#allocation10 + $0x1e0] sm:$0xff]
    %v1025 = vld [vmem:[#allocation10 + $0x1e8] sm:$0xff]
    %v1026 = vld [vmem:[#allocation10 + $0x1f0] sm:$0xff]
    %v1027 = vld [vmem:[#allocation10 + $0x1f8] sm:$0xff]
    %v1028 = vld [vmem:[#allocation10 + $0x200] sm:$0xff]
    %v1029 = vld [vmem:[#allocation10 + $0x208] sm:$0xff]
    %v1030 = vld [vmem:[#allocation10 + $0x210] sm:$0xff]
    %v1031 = vld [vmem:[#allocation10 + $0x218] sm:$0xff]
    %v1032 = vld [vmem:[#allocation10 + $0x220] sm:$0xff]
    %v1033 = vld [vmem:[#allocation10 + $0x228] sm:$0xff]
    %v1034 = vld [vmem:[#allocation10 + $0x230] sm:$0xff]
    %v1035 = vld [vmem:[#allocation10 + $0x238] sm:$0xff]
    %v1036 = vld [vmem:[#allocation10 + $0x240] sm:$0xff]
    %v1037 = vld [vmem:[#allocation10 + $0x248] sm:$0xff]
    %v1038 = vld [vmem:[#allocation10 + $0x250] sm:$0xff]
    %v1039 = vld [vmem:[#allocation10 + $0x258] sm:$0xff]
    %v1040 = vld [vmem:[#allocation10 + $0x260] sm:$0xff]
    %v1041 = vld [vmem:[#allocation10 + $0x268] sm:$0xff]
    %v1042 = vld [vmem:[#allocation10 + $0x270] sm:$0xff]
    %v1043 = vld [vmem:[#allocation10 + $0x278] sm:$0xff]
    %v1044 = vld [vmem:[#allocation10 + $0x280] sm:$0xff]
    %v1045 = vld [vmem:[#allocation10 + $0x288] sm:$0xff]
    %v1046 = vld [vmem:[#allocation10 + $0x290] sm:$0xff]
    %v1047 = vld [vmem:[#allocation10 + $0x298] sm:$0xff]
    %v1048 = vld [vmem:[#allocation10 + $0x2a0] sm:$0xff]
    %v1049 = vld [vmem:[#allocation10 + $0x2a8] sm:$0xff]
    %v1050 = vld [vmem:[#allocation10 + $0x2b0] sm:$0xff]
    %v1051 = vld [vmem:[#allocation10 + $0x2b8] sm:$0xff]
    %v1052 = vld [vmem:[#allocation10 + $0x2c0] sm:$0xff]
    %v1053 = vld [vmem:[#allocation10 + $0x2c8] sm:$0xff]
    %v1054 = vld [vmem:[#allocation10 + $0x2d0] sm:$0xff]
    %v1055 = vld [vmem:[#allocation10 + $0x2d8] sm:$0xff]
    %v1056 = vld [vmem:[#allocation10 + $0x2e0] sm:$0xff]
    %v1057 = vld [vmem:[#allocation10 + $0x2e8] sm:$0xff]
    %v1058 = vld [vmem:[#allocation10 + $0x2f0] sm:$0xff]
    %v1059 = vld [vmem:[#allocation10 + $0x2f8] sm:$0xff]
    %v1060 = vld [vmem:[#allocation10 + $0x300] sm:$0xff]
    %v1061 = vld [vmem:[#allocation10 + $0x308] sm:$0xff]
    %v1062 = vld [vmem:[#allocation10 + $0x310] sm:$0xff]
    %v1063 = vld [vmem:[#allocation10 + $0x318] sm:$0xff]
    %v1064 = vld [vmem:[#allocation10 + $0x320] sm:$0xff]
    %v1065 = vld [vmem:[#allocation10 + $0x328] sm:$0xff]
    %v1066 = vld [vmem:[#allocation10 + $0x330] sm:$0xff]
    %v1067 = vld [vmem:[#allocation10 + $0x338] sm:$0xff]
    %v1068 = vld [vmem:[#allocation10 + $0x340] sm:$0xff]
    %v1069 = vld [vmem:[#allocation10 + $0x348] sm:$0xff]
    %v1070 = vld [vmem:[#allocation10 + $0x350] sm:$0xff]
    %v1071 = vld [vmem:[#allocation10 + $0x358] sm:$0xff]
    %v1072 = vld [vmem:[#allocation10 + $0x360] sm:$0xff]
    %v1073 = vld [vmem:[#allocation10 + $0x368] sm:$0xff]
    %v1074 = vld [vmem:[#allocation10 + $0x370] sm:$0xff]
    %v1075 = vld [vmem:[#allocation10 + $0x378] sm:$0xff]
    %v1076 = vld [vmem:[#allocation10 + $0x380] sm:$0xff]
    %v1077 = vld [vmem:[#allocation10 + $0x388] sm:$0xff]
    %v1078 = vld [vmem:[#allocation10 + $0x390] sm:$0xff]
    %v1079 = vld [vmem:[#allocation10 + $0x398] sm:$0xff]
    %v1080 = vld [vmem:[#allocation10 + $0x3a0] sm:$0xff]
    %v1081 = vld [vmem:[#allocation10 + $0x3a8] sm:$0xff]
    %v1082 = vld [vmem:[#allocation10 + $0x3b0] sm:$0xff]
    %v1083 = vld [vmem:[#allocation10 + $0x3b8] sm:$0xff]
    %v1084 = vld [vmem:[#allocation10 + $0x3c0] sm:$0xff]
    %v1085 = vld [vmem:[#allocation10 + $0x3c8] sm:$0xff]
    %v1086 = vld [vmem:[#allocation10 + $0x3d0] sm:$0xff]
    %v1087 = vld [vmem:[#allocation10 + $0x3d8] sm:$0xff]
    %v1088 = vld [vmem:[#allocation10 + $0x3e0] sm:$0xff]
    %v1089 = vld [vmem:[#allocation10 + $0x3e8] sm:$0xff]
    %v1090 = vld [vmem:[#allocation10 + $0x3f0] sm:$0xff]
    %v1091 = vld [vmem:[#allocation10 + $0x3f8] sm:$0xff]
    %v1092 = vld [vmem:[#allocation10 + $0x400] sm:$0xff]
    %v1093 = vld [vmem:[#allocation10 + $0x408] sm:$0xff]
    %v1094 = vld [vmem:[#allocation10 + $0x410] sm:$0xff]
    %v1095 = vld [vmem:[#allocation10 + $0x418] sm:$0xff]
    %v1096 = vld [vmem:[#allocation10 + $0x420] sm:$0xff]
    %v1097 = vld [vmem:[#allocation10 + $0x428] sm:$0xff]
    %v1098 = vld [vmem:[#allocation10 + $0x430] sm:$0xff]
    %v1099 = vld [vmem:[#allocation10 + $0x438] sm:$0xff]
    %v1100 = vld [vmem:[#allocation10 + $0x440] sm:$0xff]
    %v1101 = vld [vmem:[#allocation10 + $0x448] sm:$0xff]
    %v1102 = vld [vmem:[#allocation10 + $0x450] sm:$0xff]
    %v1103 = vld [vmem:[#allocation10 + $0x458] sm:$0xff]
    %v1104 = vld [vmem:[#allocation10 + $0x460] sm:$0xff]
    %v1105 = vld [vmem:[#allocation10 + $0x468] sm:$0xff]
    %v1106 = vld [vmem:[#allocation10 + $0x470] sm:$0xff]
    %v1107 = vld [vmem:[#allocation10 + $0x478] sm:$0xff]
    %v1108 = vld [vmem:[#allocation10 + $0x480] sm:$0xff]
    %v1109 = vld [vmem:[#allocation10 + $0x488] sm:$0xff]
    %v1110 = vld [vmem:[#allocation10 + $0x490] sm:$0xff]
    %v1111 = vld [vmem:[#allocation10 + $0x498] sm:$0xff]
    %v1112 = vld [vmem:[#allocation10 + $0x4a0] sm:$0xff]
    %v1113 = vld [vmem:[#allocation10 + $0x4a8] sm:$0xff]
    %v1114 = vld [vmem:[#allocation10 + $0x4b0] sm:$0xff]
    %v1115 = vld [vmem:[#allocation10 + $0x4b8] sm:$0xff]
    %v1116 = vld [vmem:[#allocation10 + $0x4c0] sm:$0xff]
    %v1117 = vld [vmem:[#allocation10 + $0x4c8] sm:$0xff]
    %v1118 = vld [vmem:[#allocation10 + $0x4d0] sm:$0xff]
    %v1119 = vld [vmem:[#allocation10 + $0x4d8] sm:$0xff]
    %v1120 = vld [vmem:[#allocation10 + $0x4e0] sm:$0xff]
    %v1121 = vld [vmem:[#allocation10 + $0x4e8] sm:$0xff]
    %v1122 = vld [vmem:[#allocation10 + $0x4f0] sm:$0xff]
    %v1123 = vld [vmem:[#allocation10 + $0x4f8] sm:$0xff]
    %v1124 = vld [vmem:[#allocation10 + $0x500] sm:$0xff]
    %v1125 = vld [vmem:[#allocation10 + $0x508] sm:$0xff]
    %v1126 = vld [vmem:[#allocation10 + $0x510] sm:$0xff]
    %v1127 = vld [vmem:[#allocation10 + $0x518] sm:$0xff]
    %v1128 = vld [vmem:[#allocation10 + $0x520] sm:$0xff]
    %v1129 = vld [vmem:[#allocation10 + $0x528] sm:$0xff]
    %v1130 = vld [vmem:[#allocation10 + $0x530] sm:$0xff]
    %v1131 = vld [vmem:[#allocation10 + $0x538] sm:$0xff]
    %v1132 = vld [vmem:[#allocation10 + $0x540] sm:$0xff]
    %v1133 = vld [vmem:[#allocation10 + $0x548] sm:$0xff]
    %v1134 = vld [vmem:[#allocation10 + $0x550] sm:$0xff]
    %v1135 = vld [vmem:[#allocation10 + $0x558] sm:$0xff]
    %v1136 = vld [vmem:[#allocation10 + $0x560] sm:$0xff]
    %v1137 = vld [vmem:[#allocation10 + $0x568] sm:$0xff]
    %v1138 = vld [vmem:[#allocation10 + $0x570] sm:$0xff]
    %v1139 = vld [vmem:[#allocation10 + $0x578] sm:$0xff]
    %v1140 = vld [vmem:[#allocation10 + $0x580] sm:$0xff]
    %v1141 = vld [vmem:[#allocation10 + $0x588] sm:$0xff]
    %v1142 = vld [vmem:[#allocation10 + $0x590] sm:$0xff]
    %v1143 = vld [vmem:[#allocation10 + $0x598] sm:$0xff]
    %v1144 = vld [vmem:[#allocation10 + $0x5a0] sm:$0xff]
    %v1145 = vld [vmem:[#allocation10 + $0x5a8] sm:$0xff]
    %v1146 = vld [vmem:[#allocation10 + $0x5b0] sm:$0xff]
    %v1147 = vld [vmem:[#allocation10 + $0x5b8] sm:$0xff]
    %v1148 = vld [vmem:[#allocation10 + $0x5c0] sm:$0xff]
    %v1149 = vld [vmem:[#allocation10 + $0x5c8] sm:$0xff]
    %v1150 = vld [vmem:[#allocation10 + $0x5d0] sm:$0xff]
    %v1151 = vld [vmem:[#allocation10 + $0x5d8] sm:$0xff]
    %v1152 = vld [vmem:[#allocation10 + $0x5e0] sm:$0xff]
    %v1153 = vld [vmem:[#allocation10 + $0x5e8] sm:$0xff]
    %v1154 = vld [vmem:[#allocation10 + $0x5f0] sm:$0xff]
    %v1155 = vld [vmem:[#allocation10 + $0x5f8] sm:$0xff]
    %v1156 = vld [vmem:[#allocation10 + $0x600] sm:$0xff]
    %v1157 = vld [vmem:[#allocation10 + $0x608] sm:$0xff]
    %v1158 = vld [vmem:[#allocation10 + $0x610] sm:$0xff]
    %v1159 = vld [vmem:[#allocation10 + $0x618] sm:$0xff]
    %v1160 = vld [vmem:[#allocation10 + $0x620] sm:$0xff]
    %v1161 = vld [vmem:[#allocation10 + $0x628] sm:$0xff]
    %v1162 = vld [vmem:[#allocation10 + $0x630] sm:$0xff]
    %v1163 = vld [vmem:[#allocation10 + $0x638] sm:$0xff]
    %v1164 = vld [vmem:[#allocation10 + $0x640] sm:$0xff]
    %v1165 = vld [vmem:[#allocation10 + $0x648] sm:$0xff]
    %v1166 = vld [vmem:[#allocation10 + $0x650] sm:$0xff]
    %v1167 = vld [vmem:[#allocation10 + $0x658] sm:$0xff]
    %v1168 = vld [vmem:[#allocation10 + $0x660] sm:$0xff]
    %v1169 = vld [vmem:[#allocation10 + $0x668] sm:$0xff]
    %v1170 = vld [vmem:[#allocation10 + $0x670] sm:$0xff]
    %v1171 = vld [vmem:[#allocation10 + $0x678] sm:$0xff]
    %v1172 = vld [vmem:[#allocation10 + $0x680] sm:$0xff]
    %v1173 = vld [vmem:[#allocation10 + $0x688] sm:$0xff]
    %v1174 = vld [vmem:[#allocation10 + $0x690] sm:$0xff]
    %v1175 = vld [vmem:[#allocation10 + $0x698] sm:$0xff]
    %v1176 = vld [vmem:[#allocation10 + $0x6a0] sm:$0xff]
    %v1177 = vld [vmem:[#allocation10 + $0x6a8] sm:$0xff]
    %v1178 = vld [vmem:[#allocation10 + $0x6b0] sm:$0xff]
    %v1179 = vld [vmem:[#allocation10 + $0x6b8] sm:$0xff]
    %v1180 = vld [vmem:[#allocation10 + $0x6c0] sm:$0xff]
    %v1181 = vld [vmem:[#allocation10 + $0x6c8] sm:$0xff]
    %v1182 = vld [vmem:[#allocation10 + $0x6d0] sm:$0xff]
    %v1183 = vld [vmem:[#allocation10 + $0x6d8] sm:$0xff]
    %v1184 = vld [vmem:[#allocation10 + $0x6e0] sm:$0xff]
    %v1185 = vld [vmem:[#allocation10 + $0x6e8] sm:$0xff]
    %v1186 = vld [vmem:[#allocation10 + $0x6f0] sm:$0xff]
    %v1187 = vld [vmem:[#allocation10 + $0x6f8] sm:$0xff]
    %v1188 = vld [vmem:[#allocation10 + $0x700] sm:$0xff]
    %v1189 = vld [vmem:[#allocation10 + $0x708] sm:$0xff]
    %v1190 = vld [vmem:[#allocation10 + $0x710] sm:$0xff]
    %v1191 = vld [vmem:[#allocation10 + $0x718] sm:$0xff]
    %v1192 = vld [vmem:[#allocation10 + $0x720] sm:$0xff]
    %v1193 = vld [vmem:[#allocation10 + $0x728] sm:$0xff]
    %v1194 = vld [vmem:[#allocation10 + $0x730] sm:$0xff]
    %v1195 = vld [vmem:[#allocation10 + $0x738] sm:$0xff]
    %v1196 = vld [vmem:[#allocation10 + $0x740] sm:$0xff]
    %v1197 = vld [vmem:[#allocation10 + $0x748] sm:$0xff]
    %v1198 = vld [vmem:[#allocation10 + $0x750] sm:$0xff]
    %v1199 = vld [vmem:[#allocation10 + $0x758] sm:$0xff]
    %v1200 = vld [vmem:[#allocation10 + $0x760] sm:$0xff]
    %v1201 = vld [vmem:[#allocation10 + $0x768] sm:$0xff]
    %v1202 = vld [vmem:[#allocation10 + $0x770] sm:$0xff]
    %v1203 = vld [vmem:[#allocation10 + $0x778] sm:$0xff]
    %v1204 = vld [vmem:[#allocation10 + $0x780] sm:$0xff]
    %v1205 = vld [vmem:[#allocation10 + $0x788] sm:$0xff]
    %v1206 = vld [vmem:[#allocation10 + $0x790] sm:$0xff]
    %v1207 = vld [vmem:[#allocation10 + $0x798] sm:$0xff]
    %v1208 = vld [vmem:[#allocation10 + $0x7a0] sm:$0xff]
    %v1209 = vld [vmem:[#allocation10 + $0x7a8] sm:$0xff]
    %v1210 = vld [vmem:[#allocation10 + $0x7b0] sm:$0xff]
    %v1211 = vld [vmem:[#allocation10 + $0x7b8] sm:$0xff]
    %v1212 = vld [vmem:[#allocation10 + $0x7c0] sm:$0xff]
    %v1213 = vld [vmem:[#allocation10 + $0x7c8] sm:$0xff]
    %v1214 = vld [vmem:[#allocation10 + $0x7d0] sm:$0xff]
    %v1215 = vld [vmem:[#allocation10 + $0x7d8] sm:$0xff]
    %v1216 = vld [vmem:[#allocation10 + $0x7e0] sm:$0xff]
    %v1217 = vld [vmem:[#allocation10 + $0x7e8] sm:$0xff]
    %v1218 = vld [vmem:[#allocation10 + $0x7f0] sm:$0xff]
    %v1219 = vld [vmem:[#allocation10 + $0x7f8] sm:$0xff]
    %v1220 = vld [vmem:[#allocation10 + $0x800] sm:$0xff]
    %v1221 = vld [vmem:[#allocation10 + $0x808] sm:$0xff]
    %v1222 = vld [vmem:[#allocation10 + $0x810] sm:$0xff]
    %v1223 = vld [vmem:[#allocation10 + $0x818] sm:$0xff]
    %v1224 = vld [vmem:[#allocation10 + $0x820] sm:$0xff]
    %v1225 = vld [vmem:[#allocation10 + $0x828] sm:$0xff]
    %v1226 = vld [vmem:[#allocation10 + $0x830] sm:$0xff]
    %v1227 = vld [vmem:[#allocation10 + $0x838] sm:$0xff]
    %v1228 = vld [vmem:[#allocation10 + $0x840] sm:$0xff]
    %v1229 = vld [vmem:[#allocation10 + $0x848] sm:$0xff]
    %v1230 = vld [vmem:[#allocation10 + $0x850] sm:$0xff]
    %v1231 = vld [vmem:[#allocation10 + $0x858] sm:$0xff]
    %v1232 = vld [vmem:[#allocation10 + $0x860] sm:$0xff]
    %v1233 = vld [vmem:[#allocation10 + $0x868] sm:$0xff]
    %v1234 = vld [vmem:[#allocation10 + $0x870] sm:$0xff]
    %v1235 = vld [vmem:[#allocation10 + $0x878] sm:$0xff]
    %v1236 = vld [vmem:[#allocation10 + $0x880] sm:$0xff]
    %v1237 = vld [vmem:[#allocation10 + $0x888] sm:$0xff]
    %v1238 = vld [vmem:[#allocation10 + $0x890] sm:$0xff]
    %v1239 = vld [vmem:[#allocation10 + $0x898] sm:$0xff]
    %v1240 = vld [vmem:[#allocation10 + $0x8a0] sm:$0xff]
    %v1241 = vld [vmem:[#allocation10 + $0x8a8] sm:$0xff]
    %v1242 = vld [vmem:[#allocation10 + $0x8b0] sm:$0xff]
    %v1243 = vld [vmem:[#allocation10 + $0x8b8] sm:$0xff]
    %v1244 = vld [vmem:[#allocation10 + $0x8c0] sm:$0xff]
    %v1245 = vld [vmem:[#allocation10 + $0x8c8] sm:$0xff]
    %v1246 = vld [vmem:[#allocation10 + $0x8d0] sm:$0xff]
    %v1247 = vld [vmem:[#allocation10 + $0x8d8] sm:$0xff]
    %v1248 = vld [vmem:[#allocation10 + $0x8e0] sm:$0xff]
    %v1249 = vld [vmem:[#allocation10 + $0x8e8] sm:$0xff]
    %v1250 = vld [vmem:[#allocation10 + $0x8f0] sm:$0xff]
    %v1251 = vld [vmem:[#allocation10 + $0x8f8] sm:$0xff]
    %v1252 = vld [vmem:[#allocation10 + $0x900] sm:$0xff]
    %v1253 = vld [vmem:[#allocation10 + $0x908] sm:$0xff]
    %v1254 = vld [vmem:[#allocation10 + $0x910] sm:$0xff]
    %v1255 = vld [vmem:[#allocation10 + $0x918] sm:$0xff]
    %v1256 = vld [vmem:[#allocation10 + $0x920] sm:$0xff]
    %v1257 = vld [vmem:[#allocation10 + $0x928] sm:$0xff]
    %v1258 = vld [vmem:[#allocation10 + $0x930] sm:$0xff]
    %v1259 = vld [vmem:[#allocation10 + $0x938] sm:$0xff]
    %v1260 = vld [vmem:[#allocation10 + $0x940] sm:$0xff]
    %v1261 = vld [vmem:[#allocation10 + $0x948] sm:$0xff]
    %v1262 = vld [vmem:[#allocation10 + $0x950] sm:$0xff]
    %v1263 = vld [vmem:[#allocation10 + $0x958] sm:$0xff]
    %v1264 = vld [vmem:[#allocation10 + $0x960] sm:$0xff]
    %v1265 = vld [vmem:[#allocation10 + $0x968] sm:$0xff]
    %v1266 = vld [vmem:[#allocation10 + $0x970] sm:$0xff]
    %v1267 = vld [vmem:[#allocation10 + $0x978] sm:$0xff]
    %v1268 = vld [vmem:[#allocation10 + $0x980] sm:$0xff]
    %v1269 = vld [vmem:[#allocation10 + $0x988] sm:$0xff]
    %v1270 = vld [vmem:[#allocation10 + $0x990] sm:$0xff]
    %v1271 = vld [vmem:[#allocation10 + $0x998] sm:$0xff]
    %v1272 = vld [vmem:[#allocation10 + $0x9a0] sm:$0xff]
    %v1273 = vld [vmem:[#allocation10 + $0x9a8] sm:$0xff]
    %v1274 = vld [vmem:[#allocation10 + $0x9b0] sm:$0xff]
    %v1275 = vld [vmem:[#allocation10 + $0x9b8] sm:$0xff]
    %v1276 = vld [vmem:[#allocation12] sm:$0xff]
    %v1279 = vcombine.high %v962, %v962
    %v1281 = vunpack.c.l.s4 1983009808
    %v1282 = vunpack.c.0.s8 %v1281
    %v1283 = vlaneseq
    %v1284 = vshrl.u32 %v1283, 7
    %v1285 = vsub.s32 %v1282, %v1284
    %v1286 = vrot.slane %v962, %v1285
    %v1288 = vunpack.c.l.s4 1983009808
    %v1289 = vunpack.c.0.s8 %v1288
    %v1290 = vlaneseq
    %v1291 = vshrl.u32 %v1290, 7
    %v1292 = vsub.s32 %v1289, %v1291
    %v1293 = vrot.slane %v1279, %v1292
    %v1294 = vcombine.high %v1286, %v1286
    %v1295 = vcombine.high %v1293, %v1293
    %v1297 = vunpack.c.l.s4 1983009808
    %v1298 = vunpack.c.0.s8 %v1297
    %v1299 = vlaneseq
    %v1300 = vshrl.u32 %v1299, 7
    %v1301 = vsub.s32 %v1298, %v1300
    %v1302 = vrot.slane %v963, %v1301
    %v1308 = vpack.c.bf16 %v1286, %v1286
    %v1309 = vpack.c.bf16 %v1294, %v1294
    %v1310 = vpack.c.bf16 %v1293, %v1293
    %v1311 = vpack.c.bf16 %v1295, %v1295
    %v1312 = vpack.c.bf16 %v1302, %v1302
    %v1314 = vlaneseq
    %v1315 = vshrl.u32 %v1314, 7
    %v1316 = vsub.s32 0, %v1315
    %v1317 = vrot.slane %v1276, %v1316
    %v1318 = vlaneseq
    %v1319 = vshrl.u32 %v1318, 7
    %v1320 = vsub.s32 1, %v1319
    %v1321 = vrot.slane %v1276, %v1320
    %v1322 = vlaneseq
    %v1323 = vshrl.u32 %v1322, 7
    %v1324 = vsub.s32 2, %v1323
    %v1325 = vrot.slane %v1276, %v1324
    %v1326 = vlaneseq
    %v1327 = vshrl.u32 %v1326, 7
    %v1328 = vsub.s32 3, %v1327
    %v1329 = vrot.slane %v1276, %v1328
    %v1330 = vlaneseq
    %v1331 = vshrl.u32 %v1330, 7
    %v1332 = vsub.s32 4, %v1331
    %v1333 = vrot.slane %v1276, %v1332
    %v1334 = vlaneseq
    %v1335 = vshrl.u32 %v1334, 7
    %v1336 = vsub.s32 5, %v1335
    %v1337 = vrot.slane %v1276, %v1336
    %v1338 = vlaneseq
    %v1339 = vshrl.u32 %v1338, 7
    %v1340 = vsub.s32 6, %v1339
    %v1341 = vrot.slane %v1276, %v1340
    %v1342 = vlaneseq
    %v1343 = vshrl.u32 %v1342, 7
    %v1344 = vsub.s32 7, %v1343
    %v1345 = vrot.slane %v1276, %v1344
    %v1666 = vunpack.c.l.b16 %v964
    %v1667 = vunpack.c.h.b16 %v964
    %v1668 = vunpack.c.l.b16 %v965
    %v1669 = vunpack.c.h.b16 %v965
    %v1670 = vunpack.c.l.b16 %v966
    %v1671 = vunpack.c.h.b16 %v966
    %v1672 = vunpack.c.l.b16 %v967
    %v1673 = vunpack.c.h.b16 %v967
    %v1674 = vunpack.c.l.b16 %v968
    %v1675 = vunpack.c.h.b16 %v968
    %v1676 = vunpack.c.l.b16 %v969
    %v1677 = vunpack.c.h.b16 %v969
    %v1678 = vunpack.c.l.b16 %v970
    %v1679 = vunpack.c.h.b16 %v970
    %v1680 = vunpack.c.l.b16 %v971
    %v1681 = vunpack.c.h.b16 %v971
    %v1682 = vunpack.c.l.b16 %v972
    %v1683 = vunpack.c.h.b16 %v972
    %v1684 = vunpack.c.l.b16 %v973
    %v1685 = vunpack.c.h.b16 %v973
    %v1686 = vunpack.c.l.b16 %v974
    %v1687 = vunpack.c.h.b16 %v974
    %v1688 = vunpack.c.l.b16 %v975
    %v1689 = vunpack.c.h.b16 %v975
    %v1690 = vunpack.c.l.b16 %v976
    %v1691 = vunpack.c.h.b16 %v976
    %v1692 = vunpack.c.l.b16 %v977
    %v1693 = vunpack.c.h.b16 %v977
    %v1694 = vunpack.c.l.b16 %v978
    %v1695 = vunpack.c.h.b16 %v978
    %v1696 = vunpack.c.l.b16 %v979
    %v1697 = vunpack.c.h.b16 %v979
    %v1698 = vunpack.c.l.b16 %v980
    %v1699 = vunpack.c.h.b16 %v980
    %v1700 = vunpack.c.l.b16 %v981
    %v1701 = vunpack.c.h.b16 %v981
    %v1702 = vunpack.c.l.b16 %v982
    %v1703 = vunpack.c.h.b16 %v982
    %v1704 = vunpack.c.l.b16 %v983
    %v1705 = vunpack.c.h.b16 %v983
    %v1706 = vunpack.c.l.b16 %v984
    %v1707 = vunpack.c.h.b16 %v984
    %v1708 = vunpack.c.l.b16 %v985
    %v1709 = vunpack.c.h.b16 %v985
    %v1710 = vunpack.c.l.b16 %v986
    %v1711 = vunpack.c.h.b16 %v986
    %v1712 = vunpack.c.l.b16 %v987
    %v1713 = vunpack.c.h.b16 %v987
    %v1714 = vunpack.c.l.b16 %v988
    %v1715 = vunpack.c.h.b16 %v988
    %v1716 = vunpack.c.l.b16 %v989
    %v1717 = vunpack.c.h.b16 %v989
    %v1718 = vunpack.c.l.b16 %v990
    %v1719 = vunpack.c.h.b16 %v990
    %v1720 = vunpack.c.l.b16 %v991
    %v1721 = vunpack.c.h.b16 %v991
    %v1722 = vunpack.c.l.b16 %v992
    %v1723 = vunpack.c.h.b16 %v992
    %v1724 = vunpack.c.l.b16 %v993
    %v1725 = vunpack.c.h.b16 %v993
    %v1726 = vunpack.c.l.b16 %v994
    %v1727 = vunpack.c.h.b16 %v994
    %v1728 = vunpack.c.l.b16 %v995
    %v1729 = vunpack.c.h.b16 %v995
    %v1730 = vunpack.c.l.b16 %v996
    %v1731 = vunpack.c.h.b16 %v996
    %v1732 = vunpack.c.l.b16 %v997
    %v1733 = vunpack.c.h.b16 %v997
    %v1734 = vunpack.c.l.b16 %v998
    %v1735 = vunpack.c.h.b16 %v998
    %v1736 = vunpack.c.l.b16 %v999
    %v1737 = vunpack.c.h.b16 %v999
    %v1738 = vunpack.c.l.b16 %v1000
    %v1739 = vunpack.c.h.b16 %v1000
    %v1740 = vunpack.c.l.b16 %v1001
    %v1741 = vunpack.c.h.b16 %v1001
    %v1742 = vunpack.c.l.b16 %v1002
    %v1743 = vunpack.c.h.b16 %v1002
    %v1744 = vunpack.c.l.b16 %v1003
    %v1745 = vunpack.c.h.b16 %v1003
    %v1746 = vunpack.c.l.b16 %v1004
    %v1747 = vunpack.c.h.b16 %v1004
    %v1748 = vunpack.c.l.b16 %v1005
    %v1749 = vunpack.c.h.b16 %v1005
    %v1750 = vunpack.c.l.b16 %v1006
    %v1751 = vunpack.c.h.b16 %v1006
    %v1752 = vunpack.c.l.b16 %v1007
    %v1753 = vunpack.c.h.b16 %v1007
    %v1754 = vunpack.c.l.b16 %v1008
    %v1755 = vunpack.c.h.b16 %v1008
    %v1756 = vunpack.c.l.b16 %v1009
    %v1757 = vunpack.c.h.b16 %v1009
    %v1758 = vunpack.c.l.b16 %v1010
    %v1759 = vunpack.c.h.b16 %v1010
    %v1760 = vunpack.c.l.b16 %v1011
    %v1761 = vunpack.c.h.b16 %v1011
    %v1762 = vunpack.c.l.b16 %v1012
    %v1763 = vunpack.c.h.b16 %v1012
    %v1764 = vunpack.c.l.b16 %v1013
    %v1765 = vunpack.c.h.b16 %v1013
    %v1766 = vunpack.c.l.b16 %v1014
    %v1767 = vunpack.c.h.b16 %v1014
    %v1768 = vunpack.c.l.b16 %v1015
    %v1769 = vunpack.c.h.b16 %v1015
    %v1770 = vunpack.c.l.b16 %v1016
    %v1771 = vunpack.c.h.b16 %v1016
    %v1772 = vunpack.c.l.b16 %v1017
    %v1773 = vunpack.c.h.b16 %v1017
    %v1774 = vunpack.c.l.b16 %v1018
    %v1775 = vunpack.c.h.b16 %v1018
    %v1776 = vunpack.c.l.b16 %v1019
    %v1777 = vunpack.c.h.b16 %v1019
    %v1778 = vunpack.c.l.b16 %v1020
    %v1779 = vunpack.c.h.b16 %v1020
    %v1780 = vunpack.c.l.b16 %v1021
    %v1781 = vunpack.c.h.b16 %v1021
    %v1782 = vunpack.c.l.b16 %v1022
    %v1783 = vunpack.c.h.b16 %v1022
    %v1784 = vunpack.c.l.b16 %v1023
    %v1785 = vunpack.c.h.b16 %v1023
    %v1786 = vunpack.c.l.b16 %v1024
    %v1787 = vunpack.c.h.b16 %v1024
    %v1788 = vunpack.c.l.b16 %v1025
    %v1789 = vunpack.c.h.b16 %v1025
    %v1790 = vunpack.c.l.b16 %v1026
    %v1791 = vunpack.c.h.b16 %v1026
    %v1792 = vunpack.c.l.b16 %v1027
    %v1793 = vunpack.c.h.b16 %v1027
    %v1794 = vunpack.c.l.b16 %v1028
    %v1795 = vunpack.c.h.b16 %v1028
    %v1796 = vunpack.c.l.b16 %v1029
    %v1797 = vunpack.c.h.b16 %v1029
    %v1798 = vunpack.c.l.b16 %v1030
    %v1799 = vunpack.c.h.b16 %v1030
    %v1800 = vunpack.c.l.b16 %v1031
    %v1801 = vunpack.c.h.b16 %v1031
    %v1802 = vunpack.c.l.b16 %v1032
    %v1803 = vunpack.c.h.b16 %v1032
    %v1804 = vunpack.c.l.b16 %v1033
    %v1805 = vunpack.c.h.b16 %v1033
    %v1806 = vunpack.c.l.b16 %v1034
    %v1807 = vunpack.c.h.b16 %v1034
    %v1808 = vunpack.c.l.b16 %v1035
    %v1809 = vunpack.c.h.b16 %v1035
    %v1810 = vunpack.c.l.b16 %v1036
    %v1811 = vunpack.c.h.b16 %v1036
    %v1812 = vunpack.c.l.b16 %v1037
    %v1813 = vunpack.c.h.b16 %v1037
    %v1814 = vunpack.c.l.b16 %v1038
    %v1815 = vunpack.c.h.b16 %v1038
    %v1816 = vunpack.c.l.b16 %v1039
    %v1817 = vunpack.c.h.b16 %v1039
    %v1818 = vunpack.c.l.b16 %v1040
    %v1819 = vunpack.c.h.b16 %v1040
    %v1820 = vunpack.c.l.b16 %v1041
    %v1821 = vunpack.c.h.b16 %v1041
    %v1822 = vunpack.c.l.b16 %v1042
    %v1823 = vunpack.c.h.b16 %v1042
    %v1824 = vunpack.c.l.b16 %v1043
    %v1825 = vunpack.c.h.b16 %v1043
    %v1826 = vunpack.c.l.b16 %v1044
    %v1827 = vunpack.c.h.b16 %v1044
    %v1828 = vunpack.c.l.b16 %v1045
    %v1829 = vunpack.c.h.b16 %v1045
    %v1830 = vunpack.c.l.b16 %v1046
    %v1831 = vunpack.c.h.b16 %v1046
    %v1832 = vunpack.c.l.b16 %v1047
    %v1833 = vunpack.c.h.b16 %v1047
    %v1834 = vunpack.c.l.b16 %v1048
    %v1835 = vunpack.c.h.b16 %v1048
    %v1836 = vunpack.c.l.b16 %v1049
    %v1837 = vunpack.c.h.b16 %v1049
    %v1838 = vunpack.c.l.b16 %v1050
    %v1839 = vunpack.c.h.b16 %v1050
    %v1840 = vunpack.c.l.b16 %v1051
    %v1841 = vunpack.c.h.b16 %v1051
    %v1842 = vunpack.c.l.b16 %v1052
    %v1843 = vunpack.c.h.b16 %v1052
    %v1844 = vunpack.c.l.b16 %v1053
    %v1845 = vunpack.c.h.b16 %v1053
    %v1846 = vunpack.c.l.b16 %v1054
    %v1847 = vunpack.c.h.b16 %v1054
    %v1848 = vunpack.c.l.b16 %v1055
    %v1849 = vunpack.c.h.b16 %v1055
    %v1850 = vunpack.c.l.b16 %v1056
    %v1851 = vunpack.c.h.b16 %v1056
    %v1852 = vunpack.c.l.b16 %v1057
    %v1853 = vunpack.c.h.b16 %v1057
    %v1854 = vunpack.c.l.b16 %v1058
    %v1855 = vunpack.c.h.b16 %v1058
    %v1856 = vunpack.c.l.b16 %v1059
    %v1857 = vunpack.c.h.b16 %v1059
    %v1858 = vunpack.c.l.b16 %v1060
    %v1859 = vunpack.c.h.b16 %v1060
    %v1860 = vunpack.c.l.b16 %v1061
    %v1861 = vunpack.c.h.b16 %v1061
    %v1862 = vunpack.c.l.b16 %v1062
    %v1863 = vunpack.c.h.b16 %v1062
    %v1864 = vunpack.c.l.b16 %v1063
    %v1865 = vunpack.c.h.b16 %v1063
    %v1866 = vunpack.c.l.b16 %v1064
    %v1867 = vunpack.c.h.b16 %v1064
    %v1868 = vunpack.c.l.b16 %v1065
    %v1869 = vunpack.c.h.b16 %v1065
    %v1870 = vunpack.c.l.b16 %v1066
    %v1871 = vunpack.c.h.b16 %v1066
    %v1872 = vunpack.c.l.b16 %v1067
    %v1873 = vunpack.c.h.b16 %v1067
    %v1874 = vunpack.c.l.b16 %v1068
    %v1875 = vunpack.c.h.b16 %v1068
    %v1876 = vunpack.c.l.b16 %v1069
    %v1877 = vunpack.c.h.b16 %v1069
    %v1878 = vunpack.c.l.b16 %v1070
    %v1879 = vunpack.c.h.b16 %v1070
    %v1880 = vunpack.c.l.b16 %v1071
    %v1881 = vunpack.c.h.b16 %v1071
    %v1882 = vunpack.c.l.b16 %v1072
    %v1883 = vunpack.c.h.b16 %v1072
    %v1884 = vunpack.c.l.b16 %v1073
    %v1885 = vunpack.c.h.b16 %v1073
    %v1886 = vunpack.c.l.b16 %v1074
    %v1887 = vunpack.c.h.b16 %v1074
    %v1888 = vunpack.c.l.b16 %v1075
    %v1889 = vunpack.c.h.b16 %v1075
    %v1890 = vunpack.c.l.b16 %v1076
    %v1891 = vunpack.c.h.b16 %v1076
    %v1892 = vunpack.c.l.b16 %v1077
    %v1893 = vunpack.c.h.b16 %v1077
    %v1894 = vunpack.c.l.b16 %v1078
    %v1895 = vunpack.c.h.b16 %v1078
    %v1896 = vunpack.c.l.b16 %v1079
    %v1897 = vunpack.c.h.b16 %v1079
    %v1898 = vunpack.c.l.b16 %v1080
    %v1899 = vunpack.c.h.b16 %v1080
    %v1900 = vunpack.c.l.b16 %v1081
    %v1901 = vunpack.c.h.b16 %v1081
    %v1902 = vunpack.c.l.b16 %v1082
    %v1903 = vunpack.c.h.b16 %v1082
    %v1904 = vunpack.c.l.b16 %v1083
    %v1905 = vunpack.c.h.b16 %v1083
    %v1906 = vunpack.c.l.b16 %v1084
    %v1907 = vunpack.c.h.b16 %v1084
    %v1908 = vunpack.c.l.b16 %v1085
    %v1909 = vunpack.c.h.b16 %v1085
    %v1910 = vunpack.c.l.b16 %v1086
    %v1911 = vunpack.c.h.b16 %v1086
    %v1912 = vunpack.c.l.b16 %v1087
    %v1913 = vunpack.c.h.b16 %v1087
    %v1914 = vunpack.c.l.b16 %v1088
    %v1915 = vunpack.c.h.b16 %v1088
    %v1916 = vunpack.c.l.b16 %v1089
    %v1917 = vunpack.c.h.b16 %v1089
    %v1918 = vunpack.c.l.b16 %v1090
    %v1919 = vunpack.c.h.b16 %v1090
    %v1920 = vunpack.c.l.b16 %v1091
    %v1921 = vunpack.c.h.b16 %v1091
    %v1922 = vunpack.c.l.b16 %v1092
    %v1923 = vunpack.c.h.b16 %v1092
    %v1924 = vunpack.c.l.b16 %v1093
    %v1925 = vunpack.c.h.b16 %v1093
    %v1926 = vunpack.c.l.b16 %v1094
    %v1927 = vunpack.c.h.b16 %v1094
    %v1928 = vunpack.c.l.b16 %v1095
    %v1929 = vunpack.c.h.b16 %v1095
    %v1930 = vunpack.c.l.b16 %v1096
    %v1931 = vunpack.c.h.b16 %v1096
    %v1932 = vunpack.c.l.b16 %v1097
    %v1933 = vunpack.c.h.b16 %v1097
    %v1934 = vunpack.c.l.b16 %v1098
    %v1935 = vunpack.c.h.b16 %v1098
    %v1936 = vunpack.c.l.b16 %v1099
    %v1937 = vunpack.c.h.b16 %v1099
    %v1938 = vunpack.c.l.b16 %v1100
    %v1939 = vunpack.c.h.b16 %v1100
    %v1940 = vunpack.c.l.b16 %v1101
    %v1941 = vunpack.c.h.b16 %v1101
    %v1942 = vunpack.c.l.b16 %v1102
    %v1943 = vunpack.c.h.b16 %v1102
    %v1944 = vunpack.c.l.b16 %v1103
    %v1945 = vunpack.c.h.b16 %v1103
    %v1946 = vunpack.c.l.b16 %v1104
    %v1947 = vunpack.c.h.b16 %v1104
    %v1948 = vunpack.c.l.b16 %v1105
    %v1949 = vunpack.c.h.b16 %v1105
    %v1950 = vunpack.c.l.b16 %v1106
    %v1951 = vunpack.c.h.b16 %v1106
    %v1952 = vunpack.c.l.b16 %v1107
    %v1953 = vunpack.c.h.b16 %v1107
    %v1954 = vunpack.c.l.b16 %v1108
    %v1955 = vunpack.c.h.b16 %v1108
    %v1956 = vunpack.c.l.b16 %v1109
    %v1957 = vunpack.c.h.b16 %v1109
    %v1958 = vunpack.c.l.b16 %v1110
    %v1959 = vunpack.c.h.b16 %v1110
    %v1960 = vunpack.c.l.b16 %v1111
    %v1961 = vunpack.c.h.b16 %v1111
    %v1962 = vunpack.c.l.b16 %v1112
    %v1963 = vunpack.c.h.b16 %v1112
    %v1964 = vunpack.c.l.b16 %v1113
    %v1965 = vunpack.c.h.b16 %v1113
    %v1966 = vunpack.c.l.b16 %v1114
    %v1967 = vunpack.c.h.b16 %v1114
    %v1968 = vunpack.c.l.b16 %v1115
    %v1969 = vunpack.c.h.b16 %v1115
    %v1970 = vunpack.c.l.b16 %v1116
    %v1971 = vunpack.c.h.b16 %v1116
    %v1972 = vunpack.c.l.b16 %v1117
    %v1973 = vunpack.c.h.b16 %v1117
    %v1974 = vunpack.c.l.b16 %v1118
    %v1975 = vunpack.c.h.b16 %v1118
    %v1976 = vunpack.c.l.b16 %v1119
    %v1977 = vunpack.c.h.b16 %v1119
    %v1978 = vunpack.c.l.b16 %v1120
    %v1979 = vunpack.c.h.b16 %v1120
    %v1980 = vunpack.c.l.b16 %v1121
    %v1981 = vunpack.c.h.b16 %v1121
    %v1982 = vunpack.c.l.b16 %v1122
    %v1983 = vunpack.c.h.b16 %v1122
    %v1984 = vunpack.c.l.b16 %v1123
    %v1985 = vunpack.c.h.b16 %v1123
    %v1986 = vunpack.c.l.b16 %v1124
    %v1987 = vunpack.c.h.b16 %v1124
    %v1988 = vunpack.c.l.b16 %v1125
    %v1989 = vunpack.c.h.b16 %v1125
    %v1990 = vunpack.c.l.b16 %v1126
    %v1991 = vunpack.c.h.b16 %v1126
    %v1992 = vunpack.c.l.b16 %v1127
    %v1993 = vunpack.c.h.b16 %v1127
    %v1994 = vunpack.c.l.b16 %v1128
    %v1995 = vunpack.c.h.b16 %v1128
    %v1996 = vunpack.c.l.b16 %v1129
    %v1997 = vunpack.c.h.b16 %v1129
    %v1998 = vunpack.c.l.b16 %v1130
    %v1999 = vunpack.c.h.b16 %v1130
    %v2000 = vunpack.c.l.b16 %v1131
    %v2001 = vunpack.c.h.b16 %v1131
    %v2002 = vunpack.c.l.b16 %v1132
    %v2003 = vunpack.c.h.b16 %v1132
    %v2004 = vunpack.c.l.b16 %v1133
    %v2005 = vunpack.c.h.b16 %v1133
    %v2006 = vunpack.c.l.b16 %v1134
    %v2007 = vunpack.c.h.b16 %v1134
    %v2008 = vunpack.c.l.b16 %v1135
    %v2009 = vunpack.c.h.b16 %v1135
    %v2010 = vunpack.c.l.b16 %v1136
    %v2011 = vunpack.c.h.b16 %v1136
    %v2012 = vunpack.c.l.b16 %v1137
    %v2013 = vunpack.c.h.b16 %v1137
    %v2014 = vunpack.c.l.b16 %v1138
    %v2015 = vunpack.c.h.b16 %v1138
    %v2016 = vunpack.c.l.b16 %v1139
    %v2017 = vunpack.c.h.b16 %v1139
    %v2018 = vunpack.c.l.b16 %v1140
    %v2019 = vunpack.c.h.b16 %v1140
    %v2020 = vunpack.c.l.b16 %v1141
    %v2021 = vunpack.c.h.b16 %v1141
    %v2022 = vunpack.c.l.b16 %v1142
    %v2023 = vunpack.c.h.b16 %v1142
    %v2024 = vunpack.c.l.b16 %v1143
    %v2025 = vunpack.c.h.b16 %v1143
    %v2026 = vunpack.c.l.b16 %v1144
    %v2027 = vunpack.c.h.b16 %v1144
    %v2028 = vunpack.c.l.b16 %v1145
    %v2029 = vunpack.c.h.b16 %v1145
    %v2030 = vunpack.c.l.b16 %v1146
    %v2031 = vunpack.c.h.b16 %v1146
    %v2032 = vunpack.c.l.b16 %v1147
    %v2033 = vunpack.c.h.b16 %v1147
    %v2034 = vunpack.c.l.b16 %v1148
    %v2035 = vunpack.c.h.b16 %v1148
    %v2036 = vunpack.c.l.b16 %v1149
    %v2037 = vunpack.c.h.b16 %v1149
    %v2038 = vunpack.c.l.b16 %v1150
    %v2039 = vunpack.c.h.b16 %v1150
    %v2040 = vunpack.c.l.b16 %v1151
    %v2041 = vunpack.c.h.b16 %v1151
    %v2042 = vunpack.c.l.b16 %v1152
    %v2043 = vunpack.c.h.b16 %v1152
    %v2044 = vunpack.c.l.b16 %v1153
    %v2045 = vunpack.c.h.b16 %v1153
    %v2046 = vunpack.c.l.b16 %v1154
    %v2047 = vunpack.c.h.b16 %v1154
    %v2048 = vunpack.c.l.b16 %v1155
    %v2049 = vunpack.c.h.b16 %v1155
    %v2050 = vunpack.c.l.b16 %v1156
    %v2051 = vunpack.c.h.b16 %v1156
    %v2052 = vunpack.c.l.b16 %v1157
    %v2053 = vunpack.c.h.b16 %v1157
    %v2054 = vunpack.c.l.b16 %v1158
    %v2055 = vunpack.c.h.b16 %v1158
    %v2056 = vunpack.c.l.b16 %v1159
    %v2057 = vunpack.c.h.b16 %v1159
    %v2058 = vunpack.c.l.b16 %v1160
    %v2059 = vunpack.c.h.b16 %v1160
    %v2060 = vunpack.c.l.b16 %v1161
    %v2061 = vunpack.c.h.b16 %v1161
    %v2062 = vunpack.c.l.b16 %v1162
    %v2063 = vunpack.c.h.b16 %v1162
    %v2064 = vunpack.c.l.b16 %v1163
    %v2065 = vunpack.c.h.b16 %v1163
    %v2066 = vunpack.c.l.b16 %v1164
    %v2067 = vunpack.c.h.b16 %v1164
    %v2068 = vunpack.c.l.b16 %v1165
    %v2069 = vunpack.c.h.b16 %v1165
    %v2070 = vunpack.c.l.b16 %v1166
    %v2071 = vunpack.c.h.b16 %v1166
    %v2072 = vunpack.c.l.b16 %v1167
    %v2073 = vunpack.c.h.b16 %v1167
    %v2074 = vunpack.c.l.b16 %v1168
    %v2075 = vunpack.c.h.b16 %v1168
    %v2076 = vunpack.c.l.b16 %v1169
    %v2077 = vunpack.c.h.b16 %v1169
    %v2078 = vunpack.c.l.b16 %v1170
    %v2079 = vunpack.c.h.b16 %v1170
    %v2080 = vunpack.c.l.b16 %v1171
    %v2081 = vunpack.c.h.b16 %v1171
    %v2082 = vunpack.c.l.b16 %v1172
    %v2083 = vunpack.c.h.b16 %v1172
    %v2084 = vunpack.c.l.b16 %v1173
    %v2085 = vunpack.c.h.b16 %v1173
    %v2086 = vunpack.c.l.b16 %v1174
    %v2087 = vunpack.c.h.b16 %v1174
    %v2088 = vunpack.c.l.b16 %v1175
    %v2089 = vunpack.c.h.b16 %v1175
    %v2090 = vunpack.c.l.b16 %v1176
    %v2091 = vunpack.c.h.b16 %v1176
    %v2092 = vunpack.c.l.b16 %v1177
    %v2093 = vunpack.c.h.b16 %v1177
    %v2094 = vunpack.c.l.b16 %v1178
    %v2095 = vunpack.c.h.b16 %v1178
    %v2096 = vunpack.c.l.b16 %v1179
    %v2097 = vunpack.c.h.b16 %v1179
    %v2098 = vunpack.c.l.b16 %v1180
    %v2099 = vunpack.c.h.b16 %v1180
    %v2100 = vunpack.c.l.b16 %v1181
    %v2101 = vunpack.c.h.b16 %v1181
    %v2102 = vunpack.c.l.b16 %v1182
    %v2103 = vunpack.c.h.b16 %v1182
    %v2104 = vunpack.c.l.b16 %v1183
    %v2105 = vunpack.c.h.b16 %v1183
    %v2106 = vunpack.c.l.b16 %v1184
    %v2107 = vunpack.c.h.b16 %v1184
    %v2108 = vunpack.c.l.b16 %v1185
    %v2109 = vunpack.c.h.b16 %v1185
    %v2110 = vunpack.c.l.b16 %v1186
    %v2111 = vunpack.c.h.b16 %v1186
    %v2112 = vunpack.c.l.b16 %v1187
    %v2113 = vunpack.c.h.b16 %v1187
    %v2114 = vunpack.c.l.b16 %v1188
    %v2115 = vunpack.c.h.b16 %v1188
    %v2116 = vunpack.c.l.b16 %v1189
    %v2117 = vunpack.c.h.b16 %v1189
    %v2118 = vunpack.c.l.b16 %v1190
    %v2119 = vunpack.c.h.b16 %v1190
    %v2120 = vunpack.c.l.b16 %v1191
    %v2121 = vunpack.c.h.b16 %v1191
    %v2122 = vunpack.c.l.b16 %v1192
    %v2123 = vunpack.c.h.b16 %v1192
    %v2124 = vunpack.c.l.b16 %v1193
    %v2125 = vunpack.c.h.b16 %v1193
    %v2126 = vunpack.c.l.b16 %v1194
    %v2127 = vunpack.c.h.b16 %v1194
    %v2128 = vunpack.c.l.b16 %v1195
    %v2129 = vunpack.c.h.b16 %v1195
    %v2130 = vunpack.c.l.b16 %v1196
    %v2131 = vunpack.c.h.b16 %v1196
    %v2132 = vunpack.c.l.b16 %v1197
    %v2133 = vunpack.c.h.b16 %v1197
    %v2134 = vunpack.c.l.b16 %v1198
    %v2135 = vunpack.c.h.b16 %v1198
    %v2136 = vunpack.c.l.b16 %v1199
    %v2137 = vunpack.c.h.b16 %v1199
    %v2138 = vunpack.c.l.b16 %v1200
    %v2139 = vunpack.c.h.b16 %v1200
    %v2140 = vunpack.c.l.b16 %v1201
    %v2141 = vunpack.c.h.b16 %v1201
    %v2142 = vunpack.c.l.b16 %v1202
    %v2143 = vunpack.c.h.b16 %v1202
    %v2144 = vunpack.c.l.b16 %v1203
    %v2145 = vunpack.c.h.b16 %v1203
    %v2146 = vunpack.c.l.b16 %v1204
    %v2147 = vunpack.c.h.b16 %v1204
    %v2148 = vunpack.c.l.b16 %v1205
    %v2149 = vunpack.c.h.b16 %v1205
    %v2150 = vunpack.c.l.b16 %v1206
    %v2151 = vunpack.c.h.b16 %v1206
    %v2152 = vunpack.c.l.b16 %v1207
    %v2153 = vunpack.c.h.b16 %v1207
    %v2154 = vunpack.c.l.b16 %v1208
    %v2155 = vunpack.c.h.b16 %v1208
    %v2156 = vunpack.c.l.b16 %v1209
    %v2157 = vunpack.c.h.b16 %v1209
    %v2158 = vunpack.c.l.b16 %v1210
    %v2159 = vunpack.c.h.b16 %v1210
    %v2160 = vunpack.c.l.b16 %v1211
    %v2161 = vunpack.c.h.b16 %v1211
    %v2162 = vunpack.c.l.b16 %v1212
    %v2163 = vunpack.c.h.b16 %v1212
    %v2164 = vunpack.c.l.b16 %v1213
    %v2165 = vunpack.c.h.b16 %v1213
    %v2166 = vunpack.c.l.b16 %v1214
    %v2167 = vunpack.c.h.b16 %v1214
    %v2168 = vunpack.c.l.b16 %v1215
    %v2169 = vunpack.c.h.b16 %v1215
    %v2170 = vunpack.c.l.b16 %v1216
    %v2171 = vunpack.c.h.b16 %v1216
    %v2172 = vunpack.c.l.b16 %v1217
    %v2173 = vunpack.c.h.b16 %v1217
    %v2174 = vunpack.c.l.b16 %v1218
    %v2175 = vunpack.c.h.b16 %v1218
    %v2176 = vunpack.c.l.b16 %v1219
    %v2177 = vunpack.c.h.b16 %v1219
    %v2178 = vunpack.c.l.b16 %v1220
    %v2179 = vunpack.c.h.b16 %v1220
    %v2180 = vunpack.c.l.b16 %v1221
    %v2181 = vunpack.c.h.b16 %v1221
    %v2182 = vunpack.c.l.b16 %v1222
    %v2183 = vunpack.c.h.b16 %v1222
    %v2184 = vunpack.c.l.b16 %v1223
    %v2185 = vunpack.c.h.b16 %v1223
    %v2186 = vunpack.c.l.b16 %v1224
    %v2187 = vunpack.c.h.b16 %v1224
    %v2188 = vunpack.c.l.b16 %v1225
    %v2189 = vunpack.c.h.b16 %v1225
    %v2190 = vunpack.c.l.b16 %v1226
    %v2191 = vunpack.c.h.b16 %v1226
    %v2192 = vunpack.c.l.b16 %v1227
    %v2193 = vunpack.c.h.b16 %v1227
    %v2194 = vunpack.c.l.b16 %v1228
    %v2195 = vunpack.c.h.b16 %v1228
    %v2196 = vunpack.c.l.b16 %v1229
    %v2197 = vunpack.c.h.b16 %v1229
    %v2198 = vunpack.c.l.b16 %v1230
    %v2199 = vunpack.c.h.b16 %v1230
    %v2200 = vunpack.c.l.b16 %v1231
    %v2201 = vunpack.c.h.b16 %v1231
    %v2202 = vunpack.c.l.b16 %v1232
    %v2203 = vunpack.c.h.b16 %v1232
    %v2204 = vunpack.c.l.b16 %v1233
    %v2205 = vunpack.c.h.b16 %v1233
    %v2206 = vunpack.c.l.b16 %v1234
    %v2207 = vunpack.c.h.b16 %v1234
    %v2208 = vunpack.c.l.b16 %v1235
    %v2209 = vunpack.c.h.b16 %v1235
    %v2210 = vunpack.c.l.b16 %v1236
    %v2211 = vunpack.c.h.b16 %v1236
    %v2212 = vunpack.c.l.b16 %v1237
    %v2213 = vunpack.c.h.b16 %v1237
    %v2214 = vunpack.c.l.b16 %v1238
    %v2215 = vunpack.c.h.b16 %v1238
    %v2216 = vunpack.c.l.b16 %v1239
    %v2217 = vunpack.c.h.b16 %v1239
    %v2218 = vunpack.c.l.b16 %v1240
    %v2219 = vunpack.c.h.b16 %v1240
    %v2220 = vunpack.c.l.b16 %v1241
    %v2221 = vunpack.c.h.b16 %v1241
    %v2222 = vunpack.c.l.b16 %v1242
    %v2223 = vunpack.c.h.b16 %v1242
    %v2224 = vunpack.c.l.b16 %v1243
    %v2225 = vunpack.c.h.b16 %v1243
    %v2226 = vunpack.c.l.b16 %v1244
    %v2227 = vunpack.c.h.b16 %v1244
    %v2228 = vunpack.c.l.b16 %v1245
    %v2229 = vunpack.c.h.b16 %v1245
    %v2230 = vunpack.c.l.b16 %v1246
    %v2231 = vunpack.c.h.b16 %v1246
    %v2232 = vunpack.c.l.b16 %v1247
    %v2233 = vunpack.c.h.b16 %v1247
    %v2234 = vunpack.c.l.b16 %v1248
    %v2235 = vunpack.c.h.b16 %v1248
    %v2236 = vunpack.c.l.b16 %v1249
    %v2237 = vunpack.c.h.b16 %v1249
    %v2238 = vunpack.c.l.b16 %v1250
    %v2239 = vunpack.c.h.b16 %v1250
    %v2240 = vunpack.c.l.b16 %v1251
    %v2241 = vunpack.c.h.b16 %v1251
    %v2242 = vunpack.c.l.b16 %v1252
    %v2243 = vunpack.c.h.b16 %v1252
    %v2244 = vunpack.c.l.b16 %v1253
    %v2245 = vunpack.c.h.b16 %v1253
    %v2246 = vunpack.c.l.b16 %v1254
    %v2247 = vunpack.c.h.b16 %v1254
    %v2248 = vunpack.c.l.b16 %v1255
    %v2249 = vunpack.c.h.b16 %v1255
    %v2250 = vunpack.c.l.b16 %v1256
    %v2251 = vunpack.c.h.b16 %v1256
    %v2252 = vunpack.c.l.b16 %v1257
    %v2253 = vunpack.c.h.b16 %v1257
    %v2254 = vunpack.c.l.b16 %v1258
    %v2255 = vunpack.c.h.b16 %v1258
    %v2256 = vunpack.c.l.b16 %v1259
    %v2257 = vunpack.c.h.b16 %v1259
    %v2258 = vunpack.c.l.b16 %v1260
    %v2259 = vunpack.c.h.b16 %v1260
    %v2260 = vunpack.c.l.b16 %v1261
    %v2261 = vunpack.c.h.b16 %v1261
    %v2262 = vunpack.c.l.b16 %v1262
    %v2263 = vunpack.c.h.b16 %v1262
    %v2264 = vunpack.c.l.b16 %v1263
    %v2265 = vunpack.c.h.b16 %v1263
    %v2266 = vunpack.c.l.b16 %v1264
    %v2267 = vunpack.c.h.b16 %v1264
    %v2268 = vunpack.c.l.b16 %v1265
    %v2269 = vunpack.c.h.b16 %v1265
    %v2270 = vunpack.c.l.b16 %v1266
    %v2271 = vunpack.c.h.b16 %v1266
    %v2272 = vunpack.c.l.b16 %v1267
    %v2273 = vunpack.c.h.b16 %v1267
    %v2274 = vunpack.c.l.b16 %v1268
    %v2275 = vunpack.c.h.b16 %v1268
    %v2276 = vunpack.c.l.b16 %v1269
    %v2277 = vunpack.c.h.b16 %v1269
    %v2278 = vunpack.c.l.b16 %v1270
    %v2279 = vunpack.c.h.b16 %v1270
    %v2280 = vunpack.c.l.b16 %v1271
    %v2281 = vunpack.c.h.b16 %v1271
    %v2282 = vunpack.c.l.b16 %v1272
    %v2283 = vunpack.c.h.b16 %v1272
    %v2284 = vunpack.c.l.b16 %v1273
    %v2285 = vunpack.c.h.b16 %v1273
    %v2286 = vunpack.c.l.b16 %v1274
    %v2287 = vunpack.c.h.b16 %v1274
    %v2288 = vunpack.c.l.b16 %v1275
    %v2289 = vunpack.c.h.b16 %v1275
    %v2290 = vpack.c.b16 %v1674, %v1666
    %v2291 = vpack.c.b16 %v1675, %v1667
    %v2292 = vpack.c.b16 %v1676, %v1668
    %v2293 = vpack.c.b16 %v1677, %v1669
    %v2294 = vpack.c.b16 %v1678, %v1670
    %v2295 = vpack.c.b16 %v1679, %v1671
    %v2296 = vpack.c.b16 %v1680, %v1672
    %v2297 = vpack.c.b16 %v1681, %v1673
    %v2298 = vpack.c.b16 %v1690, %v1682
    %v2299 = vpack.c.b16 %v1691, %v1683
    %v2300 = vpack.c.b16 %v1692, %v1684
    %v2301 = vpack.c.b16 %v1693, %v1685
    %v2302 = vpack.c.b16 %v1694, %v1686
    %v2303 = vpack.c.b16 %v1695, %v1687
    %v2304 = vpack.c.b16 %v1696, %v1688
    %v2305 = vpack.c.b16 %v1697, %v1689
    %v2306 = vpack.c.b16 %v1706, %v1698
    %v2307 = vpack.c.b16 %v1707, %v1699
    %v2308 = vpack.c.b16 %v1708, %v1700
    %v2309 = vpack.c.b16 %v1709, %v1701
    %v2310 = vpack.c.b16 %v1710, %v1702
    %v2311 = vpack.c.b16 %v1711, %v1703
    %v2312 = vpack.c.b16 %v1712, %v1704
    %v2313 = vpack.c.b16 %v1713, %v1705
    %v2314 = vpack.c.b16 %v1722, %v1714
    %v2315 = vpack.c.b16 %v1723, %v1715
    %v2316 = vpack.c.b16 %v1724, %v1716
    %v2317 = vpack.c.b16 %v1725, %v1717
    %v2318 = vpack.c.b16 %v1726, %v1718
    %v2319 = vpack.c.b16 %v1727, %v1719
    %v2320 = vpack.c.b16 %v1728, %v1720
    %v2321 = vpack.c.b16 %v1729, %v1721
    %v2322 = vpack.c.b16 %v1738, %v1730
    %v2323 = vpack.c.b16 %v1739, %v1731
    %v2324 = vpack.c.b16 %v1740, %v1732
    %v2325 = vpack.c.b16 %v1741, %v1733
    %v2326 = vpack.c.b16 %v1742, %v1734
    %v2327 = vpack.c.b16 %v1743, %v1735
    %v2328 = vpack.c.b16 %v1744, %v1736
    %v2329 = vpack.c.b16 %v1745, %v1737
    %v2330 = vpack.c.b16 %v1754, %v1746
    %v2331 = vpack.c.b16 %v1755, %v1747
    %v2332 = vpack.c.b16 %v1756, %v1748
    %v2333 = vpack.c.b16 %v1757, %v1749
    %v2334 = vpack.c.b16 %v1758, %v1750
    %v2335 = vpack.c.b16 %v1759, %v1751
    %v2336 = vpack.c.b16 %v1760, %v1752
    %v2337 = vpack.c.b16 %v1761, %v1753
    %v2338 = vpack.c.b16 %v1770, %v1762
    %v2339 = vpack.c.b16 %v1771, %v1763
    %v2340 = vpack.c.b16 %v1772, %v1764
    %v2341 = vpack.c.b16 %v1773, %v1765
    %v2342 = vpack.c.b16 %v1774, %v1766
    %v2343 = vpack.c.b16 %v1775, %v1767
    %v2344 = vpack.c.b16 %v1776, %v1768
    %v2345 = vpack.c.b16 %v1777, %v1769
    %v2346 = vpack.c.b16 %v1786, %v1778
    %v2347 = vpack.c.b16 %v1787, %v1779
    %v2348 = vpack.c.b16 %v1788, %v1780
    %v2349 = vpack.c.b16 %v1789, %v1781
    %v2350 = vpack.c.b16 %v1790, %v1782
    %v2351 = vpack.c.b16 %v1791, %v1783
    %v2352 = vpack.c.b16 %v1792, %v1784
    %v2353 = vpack.c.b16 %v1793, %v1785
    %v2354 = vpack.c.b16 %v1802, %v1794
    %v2355 = vpack.c.b16 %v1803, %v1795
    %v2356 = vpack.c.b16 %v1804, %v1796
    %v2357 = vpack.c.b16 %v1805, %v1797
    %v2358 = vpack.c.b16 %v1806, %v1798
    %v2359 = vpack.c.b16 %v1807, %v1799
    %v2360 = vpack.c.b16 %v1808, %v1800
    %v2361 = vpack.c.b16 %v1809, %v1801
    %v2362 = vpack.c.b16 %v1818, %v1810
    %v2363 = vpack.c.b16 %v1819, %v1811
    %v2364 = vpack.c.b16 %v1820, %v1812
    %v2365 = vpack.c.b16 %v1821, %v1813
    %v2366 = vpack.c.b16 %v1822, %v1814
    %v2367 = vpack.c.b16 %v1823, %v1815
    %v2368 = vpack.c.b16 %v1824, %v1816
    %v2369 = vpack.c.b16 %v1825, %v1817
    %v2370 = vpack.c.b16 %v1834, %v1826
    %v2371 = vpack.c.b16 %v1835, %v1827
    %v2372 = vpack.c.b16 %v1836, %v1828
    %v2373 = vpack.c.b16 %v1837, %v1829
    %v2374 = vpack.c.b16 %v1838, %v1830
    %v2375 = vpack.c.b16 %v1839, %v1831
    %v2376 = vpack.c.b16 %v1840, %v1832
    %v2377 = vpack.c.b16 %v1841, %v1833
    %v2378 = vpack.c.b16 %v1850, %v1842
    %v2379 = vpack.c.b16 %v1851, %v1843
    %v2380 = vpack.c.b16 %v1852, %v1844
    %v2381 = vpack.c.b16 %v1853, %v1845
    %v2382 = vpack.c.b16 %v1854, %v1846
    %v2383 = vpack.c.b16 %v1855, %v1847
    %v2384 = vpack.c.b16 %v1856, %v1848
    %v2385 = vpack.c.b16 %v1857, %v1849
    %v2386 = vpack.c.b16 %v1866, %v1858
    %v2387 = vpack.c.b16 %v1867, %v1859
    %v2388 = vpack.c.b16 %v1868, %v1860
    %v2389 = vpack.c.b16 %v1869, %v1861
    %v2390 = vpack.c.b16 %v1870, %v1862
    %v2391 = vpack.c.b16 %v1871, %v1863
    %v2392 = vpack.c.b16 %v1872, %v1864
    %v2393 = vpack.c.b16 %v1873, %v1865
    %v2394 = vpack.c.b16 %v1882, %v1874
    %v2395 = vpack.c.b16 %v1883, %v1875
    %v2396 = vpack.c.b16 %v1884, %v1876
    %v2397 = vpack.c.b16 %v1885, %v1877
    %v2398 = vpack.c.b16 %v1886, %v1878
    %v2399 = vpack.c.b16 %v1887, %v1879
    %v2400 = vpack.c.b16 %v1888, %v1880
    %v2401 = vpack.c.b16 %v1889, %v1881
    %v2402 = vpack.c.b16 %v1898, %v1890
    %v2403 = vpack.c.b16 %v1899, %v1891
    %v2404 = vpack.c.b16 %v1900, %v1892
    %v2405 = vpack.c.b16 %v1901, %v1893
    %v2406 = vpack.c.b16 %v1902, %v1894
    %v2407 = vpack.c.b16 %v1903, %v1895
    %v2408 = vpack.c.b16 %v1904, %v1896
    %v2409 = vpack.c.b16 %v1905, %v1897
    %v2410 = vpack.c.b16 %v1914, %v1906
    %v2411 = vpack.c.b16 %v1915, %v1907
    %v2412 = vpack.c.b16 %v1916, %v1908
    %v2413 = vpack.c.b16 %v1917, %v1909
    %v2414 = vpack.c.b16 %v1918, %v1910
    %v2415 = vpack.c.b16 %v1919, %v1911
    %v2416 = vpack.c.b16 %v1920, %v1912
    %v2417 = vpack.c.b16 %v1921, %v1913
    %v2418 = vpack.c.b16 %v1930, %v1922
    %v2419 = vpack.c.b16 %v1931, %v1923
    %v2420 = vpack.c.b16 %v1932, %v1924
    %v2421 = vpack.c.b16 %v1933, %v1925
    %v2422 = vpack.c.b16 %v1934, %v1926
    %v2423 = vpack.c.b16 %v1935, %v1927
    %v2424 = vpack.c.b16 %v1936, %v1928
    %v2425 = vpack.c.b16 %v1937, %v1929
    %v2426 = vpack.c.b16 %v1946, %v1938
    %v2427 = vpack.c.b16 %v1947, %v1939
    %v2428 = vpack.c.b16 %v1948, %v1940
    %v2429 = vpack.c.b16 %v1949, %v1941
    %v2430 = vpack.c.b16 %v1950, %v1942
    %v2431 = vpack.c.b16 %v1951, %v1943
    %v2432 = vpack.c.b16 %v1952, %v1944
    %v2433 = vpack.c.b16 %v1953, %v1945
    %v2434 = vpack.c.b16 %v1962, %v1954
    %v2435 = vpack.c.b16 %v1963, %v1955
    %v2436 = vpack.c.b16 %v1964, %v1956
    %v2437 = vpack.c.b16 %v1965, %v1957
    %v2438 = vpack.c.b16 %v1966, %v1958
    %v2439 = vpack.c.b16 %v1967, %v1959
    %v2440 = vpack.c.b16 %v1968, %v1960
    %v2441 = vpack.c.b16 %v1969, %v1961
    %v2442 = vpack.c.b16 %v1978, %v1970
    %v2443 = vpack.c.b16 %v1979, %v1971
    %v2444 = vpack.c.b16 %v1980, %v1972
    %v2445 = vpack.c.b16 %v1981, %v1973
    %v2446 = vpack.c.b16 %v1982, %v1974
    %v2447 = vpack.c.b16 %v1983, %v1975
    %v2448 = vpack.c.b16 %v1984, %v1976
    %v2449 = vpack.c.b16 %v1985, %v1977
    %v2450 = vpack.c.b16 %v1994, %v1986
    %v2451 = vpack.c.b16 %v1995, %v1987
    %v2452 = vpack.c.b16 %v1996, %v1988
    %v2453 = vpack.c.b16 %v1997, %v1989
    %v2454 = vpack.c.b16 %v1998, %v1990
    %v2455 = vpack.c.b16 %v1999, %v1991
    %v2456 = vpack.c.b16 %v2000, %v1992
    %v2457 = vpack.c.b16 %v2001, %v1993
    %v2458 = vpack.c.b16 %v2010, %v2002
    %v2459 = vpack.c.b16 %v2011, %v2003
    %v2460 = vpack.c.b16 %v2012, %v2004
    %v2461 = vpack.c.b16 %v2013, %v2005
    %v2462 = vpack.c.b16 %v2014, %v2006
    %v2463 = vpack.c.b16 %v2015, %v2007
    %v2464 = vpack.c.b16 %v2016, %v2008
    %v2465 = vpack.c.b16 %v2017, %v2009
    %v2466 = vpack.c.b16 %v2026, %v2018
    %v2467 = vpack.c.b16 %v2027, %v2019
    %v2468 = vpack.c.b16 %v2028, %v2020
    %v2469 = vpack.c.b16 %v2029, %v2021
    %v2470 = vpack.c.b16 %v2030, %v2022
    %v2471 = vpack.c.b16 %v2031, %v2023
    %v2472 = vpack.c.b16 %v2032, %v2024
    %v2473 = vpack.c.b16 %v2033, %v2025
    %v2474 = vpack.c.b16 %v2042, %v2034
    %v2475 = vpack.c.b16 %v2043, %v2035
    %v2476 = vpack.c.b16 %v2044, %v2036
    %v2477 = vpack.c.b16 %v2045, %v2037
    %v2478 = vpack.c.b16 %v2046, %v2038
    %v2479 = vpack.c.b16 %v2047, %v2039
    %v2480 = vpack.c.b16 %v2048, %v2040
    %v2481 = vpack.c.b16 %v2049, %v2041
    %v2482 = vpack.c.b16 %v2058, %v2050
    %v2483 = vpack.c.b16 %v2059, %v2051
    %v2484 = vpack.c.b16 %v2060, %v2052
    %v2485 = vpack.c.b16 %v2061, %v2053
    %v2486 = vpack.c.b16 %v2062, %v2054
    %v2487 = vpack.c.b16 %v2063, %v2055
    %v2488 = vpack.c.b16 %v2064, %v2056
    %v2489 = vpack.c.b16 %v2065, %v2057
    %v2490 = vpack.c.b16 %v2074, %v2066
    %v2491 = vpack.c.b16 %v2075, %v2067
    %v2492 = vpack.c.b16 %v2076, %v2068
    %v2493 = vpack.c.b16 %v2077, %v2069
    %v2494 = vpack.c.b16 %v2078, %v2070
    %v2495 = vpack.c.b16 %v2079, %v2071
    %v2496 = vpack.c.b16 %v2080, %v2072
    %v2497 = vpack.c.b16 %v2081, %v2073
    %v2498 = vpack.c.b16 %v2090, %v2082
    %v2499 = vpack.c.b16 %v2091, %v2083
    %v2500 = vpack.c.b16 %v2092, %v2084
    %v2501 = vpack.c.b16 %v2093, %v2085
    %v2502 = vpack.c.b16 %v2094, %v2086
    %v2503 = vpack.c.b16 %v2095, %v2087
    %v2504 = vpack.c.b16 %v2096, %v2088
    %v2505 = vpack.c.b16 %v2097, %v2089
    %v2506 = vpack.c.b16 %v2106, %v2098
    %v2507 = vpack.c.b16 %v2107, %v2099
    %v2508 = vpack.c.b16 %v2108, %v2100
    %v2509 = vpack.c.b16 %v2109, %v2101
    %v2510 = vpack.c.b16 %v2110, %v2102
    %v2511 = vpack.c.b16 %v2111, %v2103
    %v2512 = vpack.c.b16 %v2112, %v2104
    %v2513 = vpack.c.b16 %v2113, %v2105
    %v2514 = vpack.c.b16 %v2122, %v2114
    %v2515 = vpack.c.b16 %v2123, %v2115
    %v2516 = vpack.c.b16 %v2124, %v2116
    %v2517 = vpack.c.b16 %v2125, %v2117
    %v2518 = vpack.c.b16 %v2126, %v2118
    %v2519 = vpack.c.b16 %v2127, %v2119
    %v2520 = vpack.c.b16 %v2128, %v2120
    %v2521 = vpack.c.b16 %v2129, %v2121
    %v2522 = vpack.c.b16 %v2138, %v2130
    %v2523 = vpack.c.b16 %v2139, %v2131
    %v2524 = vpack.c.b16 %v2140, %v2132
    %v2525 = vpack.c.b16 %v2141, %v2133
    %v2526 = vpack.c.b16 %v2142, %v2134
    %v2527 = vpack.c.b16 %v2143, %v2135
    %v2528 = vpack.c.b16 %v2144, %v2136
    %v2529 = vpack.c.b16 %v2145, %v2137
    %v2530 = vpack.c.b16 %v2154, %v2146
    %v2531 = vpack.c.b16 %v2155, %v2147
    %v2532 = vpack.c.b16 %v2156, %v2148
    %v2533 = vpack.c.b16 %v2157, %v2149
    %v2534 = vpack.c.b16 %v2158, %v2150
    %v2535 = vpack.c.b16 %v2159, %v2151
    %v2536 = vpack.c.b16 %v2160, %v2152
    %v2537 = vpack.c.b16 %v2161, %v2153
    %v2538 = vpack.c.b16 %v2170, %v2162
    %v2539 = vpack.c.b16 %v2171, %v2163
    %v2540 = vpack.c.b16 %v2172, %v2164
    %v2541 = vpack.c.b16 %v2173, %v2165
    %v2542 = vpack.c.b16 %v2174, %v2166
    %v2543 = vpack.c.b16 %v2175, %v2167
    %v2544 = vpack.c.b16 %v2176, %v2168
    %v2545 = vpack.c.b16 %v2177, %v2169
    %v2546 = vpack.c.b16 %v2186, %v2178
    %v2547 = vpack.c.b16 %v2187, %v2179
    %v2548 = vpack.c.b16 %v2188, %v2180
    %v2549 = vpack.c.b16 %v2189, %v2181
    %v2550 = vpack.c.b16 %v2190, %v2182
    %v2551 = vpack.c.b16 %v2191, %v2183
    %v2552 = vpack.c.b16 %v2192, %v2184
    %v2553 = vpack.c.b16 %v2193, %v2185
    %v2554 = vpack.c.b16 %v2202, %v2194
    %v2555 = vpack.c.b16 %v2203, %v2195
    %v2556 = vpack.c.b16 %v2204, %v2196
    %v2557 = vpack.c.b16 %v2205, %v2197
    %v2558 = vpack.c.b16 %v2206, %v2198
    %v2559 = vpack.c.b16 %v2207, %v2199
    %v2560 = vpack.c.b16 %v2208, %v2200
    %v2561 = vpack.c.b16 %v2209, %v2201
    %v2562 = vpack.c.b16 %v2218, %v2210
    %v2563 = vpack.c.b16 %v2219, %v2211
    %v2564 = vpack.c.b16 %v2220, %v2212
    %v2565 = vpack.c.b16 %v2221, %v2213
    %v2566 = vpack.c.b16 %v2222, %v2214
    %v2567 = vpack.c.b16 %v2223, %v2215
    %v2568 = vpack.c.b16 %v2224, %v2216
    %v2569 = vpack.c.b16 %v2225, %v2217
    %v2570 = vpack.c.b16 %v2234, %v2226
    %v2571 = vpack.c.b16 %v2235, %v2227
    %v2572 = vpack.c.b16 %v2236, %v2228
    %v2573 = vpack.c.b16 %v2237, %v2229
    %v2574 = vpack.c.b16 %v2238, %v2230
    %v2575 = vpack.c.b16 %v2239, %v2231
    %v2576 = vpack.c.b16 %v2240, %v2232
    %v2577 = vpack.c.b16 %v2241, %v2233
    %v2578 = vpack.c.b16 %v2250, %v2242
    %v2579 = vpack.c.b16 %v2251, %v2243
    %v2580 = vpack.c.b16 %v2252, %v2244
    %v2581 = vpack.c.b16 %v2253, %v2245
    %v2582 = vpack.c.b16 %v2254, %v2246
    %v2583 = vpack.c.b16 %v2255, %v2247
    %v2584 = vpack.c.b16 %v2256, %v2248
    %v2585 = vpack.c.b16 %v2257, %v2249
    %v2586 = vpack.c.b16 %v2266, %v2258
    %v2587 = vpack.c.b16 %v2267, %v2259
    %v2588 = vpack.c.b16 %v2268, %v2260
    %v2589 = vpack.c.b16 %v2269, %v2261
    %v2590 = vpack.c.b16 %v2270, %v2262
    %v2591 = vpack.c.b16 %v2271, %v2263
    %v2592 = vpack.c.b16 %v2272, %v2264
    %v2593 = vpack.c.b16 %v2273, %v2265
    %v2594 = vpack.c.b16 %v2282, %v2274
    %v2595 = vpack.c.b16 %v2283, %v2275
    %v2596 = vpack.c.b16 %v2284, %v2276
    %v2597 = vpack.c.b16 %v2285, %v2277
    %v2598 = vpack.c.b16 %v2286, %v2278
    %v2599 = vpack.c.b16 %v2287, %v2279
    %v2600 = vpack.c.b16 %v2288, %v2280
    %v2601 = vpack.c.b16 %v2289, %v2281
    %vm2914 = vcmask 916480
    %v2916 = vsel %vm2914, %v1312, 0
    %2918 = vmatprep.subr.bf16.mxu0 %v2291
    %2919 = vmatpush1.bf16.msra.mxu0 %v2290
    %2920 = vmatprep.subr.bf16.mxu0 %v2299
    %2921 = vmatpush1.bf16.msra.mxu0 %v2298
    %2922 = vmatprep.subr.bf16.mxu0 %v2307
    %2923 = vmatpush1.bf16.msra.mxu0 %v2306
    %2924 = vmatprep.subr.bf16.mxu0 %v2315
    %2925 = vmatpush1.bf16.msra.mxu0 %v2314
    %2926 = vmatprep.subr.bf16.mxu0 %v2323
    %2927 = vmatpush1.bf16.msra.mxu0 %v2322
    %2928 = vmatprep.subr.bf16.mxu0 %v2331
    %2929 = vmatpush1.bf16.msra.mxu0 %v2330
    %2930 = vmatprep.subr.bf16.mxu0 %v2339
    %2931 = vmatpush1.bf16.msra.mxu0 %v2338
    %2932 = vmatprep.subr.bf16.mxu0 %v2347
    %2933 = vmatpush1.bf16.msra.mxu0 %v2346
    %2934 = vmatprep.subr.bf16.mxu0 %v2355
    %2935 = vmatpush1.bf16.msra.mxu0 %v2354
    %2936 = vmatprep.subr.bf16.mxu0 %v2363
    %2937 = vmatpush1.bf16.msra.mxu0 %v2362
    %2938 = vmatprep.subr.bf16.mxu0 %v2371
    %2939 = vmatpush1.bf16.msra.mxu0 %v2370
    %2940 = vmatprep.subr.bf16.mxu0 %v2379
    %2941 = vmatpush1.bf16.msra.mxu0 %v2378
    %2942 = vmatprep.subr.bf16.mxu0 %v2387
    %2943 = vmatpush1.bf16.msra.mxu0 %v2386
    %2944 = vmatprep.subr.bf16.mxu0 %v2395
    %2945 = vmatpush1.bf16.msra.mxu0 %v2394
    %2946 = vmatprep.subr.bf16.mxu0 %v2403
    %2947 = vmatpush1.bf16.msra.mxu0 %v2402
    %2948 = vmatprep.subr.bf16.mxu0 %v2411
    %2949 = vmatpush1.bf16.msra.mxu0 %v2410
    %2950 = vmatprep.mubr.bf16.mxu0 %v1309
    %2951 = vmatmul.mubr.bf16.gmra.mrb[0].mxu0 %v1308
    %v2952 = vpop.f32.mrb[0].mxu0
    %v2953 = vadd.f32 %v1317, %v2952
    %v2954 = vpop.f32.mrb[0].mxu0
    %v2955 = vadd.f32 %v1321, %v2954
    %v2956 = vpop.f32.mrb[0].mxu0
    %v2957 = vpop.f32.mrb[0].mxu0
    %2958 = vdwg.mxu0
    %2959 = vmatprep.subr.bf16.mxu0 %v2419
    %2960 = vmatpush1.bf16.msra.mxu0 %v2418
    %2961 = vmatprep.subr.bf16.mxu0 %v2427
    %2962 = vmatpush1.bf16.msra.mxu0 %v2426
    %2963 = vmatprep.subr.bf16.mxu0 %v2435
    %2964 = vmatpush1.bf16.msra.mxu0 %v2434
    %2965 = vmatprep.subr.bf16.mxu0 %v2443
    %2966 = vmatpush1.bf16.msra.mxu0 %v2442
    %2967 = vmatprep.subr.bf16.mxu0 %v2451
    %2968 = vmatpush1.bf16.msra.mxu0 %v2450
    %2969 = vmatprep.subr.bf16.mxu0 %v2459
    %2970 = vmatpush1.bf16.msra.mxu0 %v2458
    %2971 = vmatprep.subr.bf16.mxu0 %v2467
    %2972 = vmatpush1.bf16.msra.mxu0 %v2466
    %2973 = vmatprep.subr.bf16.mxu0 %v2475
    %2974 = vmatpush1.bf16.msra.mxu0 %v2474
    %2975 = vmatprep.subr.bf16.mxu0 %v2483
    %2976 = vmatpush1.bf16.msra.mxu0 %v2482
    %2977 = vmatprep.subr.bf16.mxu0 %v2491
    %2978 = vmatpush1.bf16.msra.mxu0 %v2490
    %2979 = vmatprep.subr.bf16.mxu0 %v2499
    %2980 = vmatpush1.bf16.msra.mxu0 %v2498
    %2981 = vmatprep.subr.bf16.mxu0 %v2507
    %2982 = vmatpush1.bf16.msra.mxu0 %v2506
    %2983 = vmatprep.subr.bf16.mxu0 %v2515
    %2984 = vmatpush1.bf16.msra.mxu0 %v2514
    %2985 = vmatprep.subr.bf16.mxu0 %v2523
    %2986 = vmatpush1.bf16.msra.mxu0 %v2522
    %2987 = vmatprep.subr.bf16.mxu0 %v2531
    %2988 = vmatpush1.bf16.msra.mxu0 %v2530
    %2989 = vmatprep.subr.bf16.mxu0 %v2539
    %2990 = vmatpush1.bf16.msra.mxu0 %v2538
    %2991 = vmatprep.mubr.bf16.mxu0 %v1311
    %2992 = vmatmul.mubr.bf16.gmra.mrb[0].mxu0 %v1310
    %v2993 = vpop.f32.mrb[0].mxu0
    %v2994 = vadd.f32 %v2953, %v2993
    %v2995 = vpop.f32.mrb[0].mxu0
    %v2996 = vadd.f32 %v2955, %v2995
    %v2997 = vpop.f32.mrb[0].mxu0
    %v2998 = vpop.f32.mrb[0].mxu0
    %2999 = vdwg.mxu0
    %3000 = vmatprep.subr.bf16.mxu0 %v2547
    %3001 = vmatpush1.bf16.msra.mxu0 %v2546
    %3002 = vmatprep.subr.bf16.mxu0 %v2555
    %3003 = vmatpush1.bf16.msra.mxu0 %v2554
    %3004 = vmatprep.subr.bf16.mxu0 %v2563
    %3005 = vmatpush1.bf16.msra.mxu0 %v2562
    %3006 = vmatprep.subr.bf16.mxu0 %v2571
    %3007 = vmatpush1.bf16.msra.mxu0 %v2570
    %3008 = vmatprep.subr.bf16.mxu0 %v2579
    %3009 = vmatpush1.bf16.msra.mxu0 %v2578
    %3010 = vmatprep.subr.bf16.mxu0 %v2587
    %3011 = vmatpush1.bf16.msra.mxu0 %v2586
    %3012 = vmatprep.subr.bf16.mxu0 %v2595
    %3013 = vmatpush1.bf16.msra.mxu0 %v2594
    %3014 = vmatprep.subr.bf16.mxu0 0
    %3015 = vmatpush1.bf16.msra.mxu0 0
    %3016 = vmatprep.subr.bf16.mxu0 0
    %3017 = vmatpush1.bf16.msra.mxu0 0
    %3018 = vmatprep.subr.bf16.mxu0 0
    %3019 = vmatpush1.bf16.msra.mxu0 0
    %3020 = vmatprep.subr.bf16.mxu0 0
    %3021 = vmatpush1.bf16.msra.mxu0 0
    %3022 = vmatprep.subr.bf16.mxu0 0
    %3023 = vmatpush1.bf16.msra.mxu0 0
    %3024 = vmatprep.subr.bf16.mxu0 0
    %3025 = vmatpush1.bf16.msra.mxu0 0
    %3026 = vmatprep.subr.bf16.mxu0 0
    %3027 = vmatpush1.bf16.msra.mxu0 0
    %3028 = vmatprep.subr.bf16.mxu0 0
    %3029 = vmatpush1.bf16.msra.mxu0 0
    %3030 = vmatprep.subr.bf16.mxu0 0
    %3031 = vmatpush1.bf16.msra.mxu0 0
    %3032 = vmatprep.mubr.bf16.mxu0 0
    %3033 = vmatmul.mubr.bf16.gmra.mrb[0].mxu0 %v2916
    %v3034 = vpop.f32.mrb[0].mxu0
    %v3035 = vadd.f32 %v2994, %v3034
    %v3036 = vpop.f32.mrb[0].mxu0
    %v3037 = vadd.f32 %v2996, %v3036
    %v3038 = vpop.f32.mrb[0].mxu0
    %v3039 = vpop.f32.mrb[0].mxu0
    %3040 = vdwg.mxu0
    %3041 = vmatprep.subr.bf16.mxu0 %v2293
    %3042 = vmatpush1.bf16.msra.mxu0 %v2292
    %3043 = vmatprep.subr.bf16.mxu0 %v2301
    %3044 = vmatpush1.bf16.msra.mxu0 %v2300
    %3045 = vmatprep.subr.bf16.mxu0 %v2309
    %3046 = vmatpush1.bf16.msra.mxu0 %v2308
    %3047 = vmatprep.subr.bf16.mxu0 %v2317
    %3048 = vmatpush1.bf16.msra.mxu0 %v2316
    %3049 = vmatprep.subr.bf16.mxu0 %v2325
    %3050 = vmatpush1.bf16.msra.mxu0 %v2324
    %3051 = vmatprep.subr.bf16.mxu0 %v2333
    %3052 = vmatpush1.bf16.msra.mxu0 %v2332
    %3053 = vmatprep.subr.bf16.mxu0 %v2341
    %3054 = vmatpush1.bf16.msra.mxu0 %v2340
    %3055 = vmatprep.subr.bf16.mxu0 %v2349
    %3056 = vmatpush1.bf16.msra.mxu0 %v2348
    %3057 = vmatprep.subr.bf16.mxu0 %v2357
    %3058 = vmatpush1.bf16.msra.mxu0 %v2356
    %3059 = vmatprep.subr.bf16.mxu0 %v2365
    %3060 = vmatpush1.bf16.msra.mxu0 %v2364
    %3061 = vmatprep.subr.bf16.mxu0 %v2373
    %3062 = vmatpush1.bf16.msra.mxu0 %v2372
    %3063 = vmatprep.subr.bf16.mxu0 %v2381
    %3064 = vmatpush1.bf16.msra.mxu0 %v2380
    %3065 = vmatprep.subr.bf16.mxu0 %v2389
    %3066 = vmatpush1.bf16.msra.mxu0 %v2388
    %3067 = vmatprep.subr.bf16.mxu0 %v2397
    %3068 = vmatpush1.bf16.msra.mxu0 %v2396
    %3069 = vmatprep.subr.bf16.mxu0 %v2405
    %3070 = vmatpush1.bf16.msra.mxu0 %v2404
    %3071 = vmatprep.subr.bf16.mxu0 %v2413
    %3072 = vmatpush1.bf16.msra.mxu0 %v2412
    %3073 = vmatprep.mubr.bf16.mxu0 %v1309
    %3074 = vmatmul.mubr.bf16.gmra.mrb[0].mxu0 %v1308
    %v3075 = vpop.f32.mrb[0].mxu0
    %v3076 = vadd.f32 %v1325, %v3075
    %v3077 = vpop.f32.mrb[0].mxu0
    %v3078 = vadd.f32 %v1329, %v3077
    %v3079 = vpop.f32.mrb[0].mxu0
    %v3080 = vpop.f32.mrb[0].mxu0
    %3081 = vdwg.mxu0
    %3082 = vmatprep.subr.bf16.mxu0 %v2421
    %3083 = vmatpush1.bf16.msra.mxu0 %v2420
    %3084 = vmatprep.subr.bf16.mxu0 %v2429
    %3085 = vmatpush1.bf16.msra.mxu0 %v2428
    %3086 = vmatprep.subr.bf16.mxu0 %v2437
    %3087 = vmatpush1.bf16.msra.mxu0 %v2436
    %3088 = vmatprep.subr.bf16.mxu0 %v2445
    %3089 = vmatpush1.bf16.msra.mxu0 %v2444
    %3090 = vmatprep.subr.bf16.mxu0 %v2453
    %3091 = vmatpush1.bf16.msra.mxu0 %v2452
    %3092 = vmatprep.subr.bf16.mxu0 %v2461
    %3093 = vmatpush1.bf16.msra.mxu0 %v2460
    %3094 = vmatprep.subr.bf16.mxu0 %v2469
    %3095 = vmatpush1.bf16.msra.mxu0 %v2468
    %3096 = vmatprep.subr.bf16.mxu0 %v2477
    %3097 = vmatpush1.bf16.msra.mxu0 %v2476
    %3098 = vmatprep.subr.bf16.mxu0 %v2485
    %3099 = vmatpush1.bf16.msra.mxu0 %v2484
    %3100 = vmatprep.subr.bf16.mxu0 %v2493
    %3101 = vmatpush1.bf16.msra.mxu0 %v2492
    %3102 = vmatprep.subr.bf16.mxu0 %v2501
    %3103 = vmatpush1.bf16.msra.mxu0 %v2500
    %3104 = vmatprep.subr.bf16.mxu0 %v2509
    %3105 = vmatpush1.bf16.msra.mxu0 %v2508
    %3106 = vmatprep.subr.bf16.mxu0 %v2517
    %3107 = vmatpush1.bf16.msra.mxu0 %v2516
    %3108 = vmatprep.subr.bf16.mxu0 %v2525
    %3109 = vmatpush1.bf16.msra.mxu0 %v2524
    %3110 = vmatprep.subr.bf16.mxu0 %v2533
    %3111 = vmatpush1.bf16.msra.mxu0 %v2532
    %3112 = vmatprep.subr.bf16.mxu0 %v2541
    %3113 = vmatpush1.bf16.msra.mxu0 %v2540
    %3114 = vmatprep.mubr.bf16.mxu0 %v1311
    %3115 = vmatmul.mubr.bf16.gmra.mrb[0].mxu0 %v1310
    %v3116 = vpop.f32.mrb[0].mxu0
    %v3117 = vadd.f32 %v3076, %v3116
    %v3118 = vpop.f32.mrb[0].mxu0
    %v3119 = vadd.f32 %v3078, %v3118
    %v3120 = vpop.f32.mrb[0].mxu0
    %v3121 = vpop.f32.mrb[0].mxu0
    %3122 = vdwg.mxu0
    %3123 = vmatprep.subr.bf16.mxu0 %v2549
    %3124 = vmatpush1.bf16.msra.mxu0 %v2548
    %3125 = vmatprep.subr.bf16.mxu0 %v2557
    %3126 = vmatpush1.bf16.msra.mxu0 %v2556
    %3127 = vmatprep.subr.bf16.mxu0 %v2565
    %3128 = vmatpush1.bf16.msra.mxu0 %v2564
    %3129 = vmatprep.subr.bf16.mxu0 %v2573
    %3130 = vmatpush1.bf16.msra.mxu0 %v2572
    %3131 = vmatprep.subr.bf16.mxu0 %v2581
    %3132 = vmatpush1.bf16.msra.mxu0 %v2580
    %3133 = vmatprep.subr.bf16.mxu0 %v2589
    %3134 = vmatpush1.bf16.msra.mxu0 %v2588
    %3135 = vmatprep.subr.bf16.mxu0 %v2597
    %3136 = vmatpush1.bf16.msra.mxu0 %v2596
    %3137 = vmatprep.subr.bf16.mxu0 0
    %3138 = vmatpush1.bf16.msra.mxu0 0
    %3139 = vmatprep.subr.bf16.mxu0 0
    %3140 = vmatpush1.bf16.msra.mxu0 0
    %3141 = vmatprep.subr.bf16.mxu0 0
    %3142 = vmatpush1.bf16.msra.mxu0 0
    %3143 = vmatprep.subr.bf16.mxu0 0
    %3144 = vmatpush1.bf16.msra.mxu0 0
    %3145 = vmatprep.subr.bf16.mxu0 0
    %3146 = vmatpush1.bf16.msra.mxu0 0
    %3147 = vmatprep.subr.bf16.mxu0 0
    %3148 = vmatpush1.bf16.msra.mxu0 0
    %3149 = vmatprep.subr.bf16.mxu0 0
    %3150 = vmatpush1.bf16.msra.mxu0 0
    %3151 = vmatprep.subr.bf16.mxu0 0
    %3152 = vmatpush1.bf16.msra.mxu0 0
    %3153 = vmatprep.subr.bf16.mxu0 0
    %3154 = vmatpush1.bf16.msra.mxu0 0
    %3155 = vmatprep.mubr.bf16.mxu0 0
    %3156 = vmatmul.mubr.bf16.gmra.mrb[0].mxu0 %v2916
    %v3157 = vpop.f32.mrb[0].mxu0
    %v3158 = vadd.f32 %v3117, %v3157
    %v3159 = vpop.f32.mrb[0].mxu0
    %v3160 = vadd.f32 %v3119, %v3159
    %v3161 = vpop.f32.mrb[0].mxu0
    %v3162 = vpop.f32.mrb[0].mxu0
    %3163 = vdwg.mxu0
    %3164 = vmatprep.subr.bf16.mxu0 %v2295
    %3165 = vmatpush1.bf16.msra.mxu0 %v2294
    %3166 = vmatprep.subr.bf16.mxu0 %v2303
    %3167 = vmatpush1.bf16.msra.mxu0 %v2302
    %3168 = vmatprep.subr.bf16.mxu0 %v2311
    %3169 = vmatpush1.bf16.msra.mxu0 %v2310
    %3170 = vmatprep.subr.bf16.mxu0 %v2319
    %3171 = vmatpush1.bf16.msra.mxu0 %v2318
    %3172 = vmatprep.subr.bf16.mxu0 %v2327
    %3173 = vmatpush1.bf16.msra.mxu0 %v2326
    %3174 = vmatprep.subr.bf16.mxu0 %v2335
    %3175 = vmatpush1.bf16.msra.mxu0 %v2334
    %3176 = vmatprep.subr.bf16.mxu0 %v2343
    %3177 = vmatpush1.bf16.msra.mxu0 %v2342
    %3178 = vmatprep.subr.bf16.mxu0 %v2351
    %3179 = vmatpush1.bf16.msra.mxu0 %v2350
    %3180 = vmatprep.subr.bf16.mxu0 %v2359
    %3181 = vmatpush1.bf16.msra.mxu0 %v2358
    %3182 = vmatprep.subr.bf16.mxu0 %v2367
    %3183 = vmatpush1.bf16.msra.mxu0 %v2366
    %3184 = vmatprep.subr.bf16.mxu0 %v2375
    %3185 = vmatpush1.bf16.msra.mxu0 %v2374
    %3186 = vmatprep.subr.bf16.mxu0 %v2383
    %3187 = vmatpush1.bf16.msra.mxu0 %v2382
    %3188 = vmatprep.subr.bf16.mxu0 %v2391
    %3189 = vmatpush1.bf16.msra.mxu0 %v2390
    %3190 = vmatprep.subr.bf16.mxu0 %v2399
    %3191 = vmatpush1.bf16.msra.mxu0 %v2398
    %3192 = vmatprep.subr.bf16.mxu0 %v2407
    %3193 = vmatpush1.bf16.msra.mxu0 %v2406
    %3194 = vmatprep.subr.bf16.mxu0 %v2415
    %3195 = vmatpush1.bf16.msra.mxu0 %v2414
    %3196 = vmatprep.mubr.bf16.mxu0 %v1309
    %3197 = vmatmul.mubr.bf16.gmra.mrb[0].mxu0 %v1308
    %v3198 = vpop.f32.mrb[0].mxu0
    %v3199 = vadd.f32 %v1333, %v3198
    %v3200 = vpop.f32.mrb[0].mxu0
    %v3201 = vadd.f32 %v1337, %v3200
    %v3202 = vpop.f32.mrb[0].mxu0
    %v3203 = vpop.f32.mrb[0].mxu0
    %3204 = vdwg.mxu0
    %3205 = vmatprep.subr.bf16.mxu0 %v2423
    %3206 = vmatpush1.bf16.msra.mxu0 %v2422
    %3207 = vmatprep.subr.bf16.mxu0 %v2431
    %3208 = vmatpush1.bf16.msra.mxu0 %v2430
    %3209 = vmatprep.subr.bf16.mxu0 %v2439
    %3210 = vmatpush1.bf16.msra.mxu0 %v2438
    %3211 = vmatprep.subr.bf16.mxu0 %v2447
    %3212 = vmatpush1.bf16.msra.mxu0 %v2446
    %3213 = vmatprep.subr.bf16.mxu0 %v2455
    %3214 = vmatpush1.bf16.msra.mxu0 %v2454
    %3215 = vmatprep.subr.bf16.mxu0 %v2463
    %3216 = vmatpush1.bf16.msra.mxu0 %v2462
    %3217 = vmatprep.subr.bf16.mxu0 %v2471
    %3218 = vmatpush1.bf16.msra.mxu0 %v2470
    %3219 = vmatprep.subr.bf16.mxu0 %v2479
    %3220 = vmatpush1.bf16.msra.mxu0 %v2478
    %3221 = vmatprep.subr.bf16.mxu0 %v2487
    %3222 = vmatpush1.bf16.msra.mxu0 %v2486
    %3223 = vmatprep.subr.bf16.mxu0 %v2495
    %3224 = vmatpush1.bf16.msra.mxu0 %v2494
    %3225 = vmatprep.subr.bf16.mxu0 %v2503
    %3226 = vmatpush1.bf16.msra.mxu0 %v2502
    %3227 = vmatprep.subr.bf16.mxu0 %v2511
    %3228 = vmatpush1.bf16.msra.mxu0 %v2510
    %3229 = vmatprep.subr.bf16.mxu0 %v2519
    %3230 = vmatpush1.bf16.msra.mxu0 %v2518
    %3231 = vmatprep.subr.bf16.mxu0 %v2527
    %3232 = vmatpush1.bf16.msra.mxu0 %v2526
    %3233 = vmatprep.subr.bf16.mxu0 %v2535
    %3234 = vmatpush1.bf16.msra.mxu0 %v2534
    %3235 = vmatprep.subr.bf16.mxu0 %v2543
    %3236 = vmatpush1.bf16.msra.mxu0 %v2542
    %3237 = vmatprep.mubr.bf16.mxu0 %v1311
    %3238 = vmatmul.mubr.bf16.gmra.mrb[0].mxu0 %v1310
    %v3239 = vpop.f32.mrb[0].mxu0
    %v3240 = vadd.f32 %v3199, %v3239
    %v3241 = vpop.f32.mrb[0].mxu0
    %v3242 = vadd.f32 %v3201, %v3241
    %v3243 = vpop.f32.mrb[0].mxu0
    %v3244 = vpop.f32.mrb[0].mxu0
    %3245 = vdwg.mxu0
    %3246 = vmatprep.subr.bf16.mxu0 %v2551
    %3247 = vmatpush1.bf16.msra.mxu0 %v2550
    %3248 = vmatprep.subr.bf16.mxu0 %v2559
    %3249 = vmatpush1.bf16.msra.mxu0 %v2558
    %3250 = vmatprep.subr.bf16.mxu0 %v2567
    %3251 = vmatpush1.bf16.msra.mxu0 %v2566
    %3252 = vmatprep.subr.bf16.mxu0 %v2575
    %3253 = vmatpush1.bf16.msra.mxu0 %v2574
    %3254 = vmatprep.subr.bf16.mxu0 %v2583
    %3255 = vmatpush1.bf16.msra.mxu0 %v2582
    %3256 = vmatprep.subr.bf16.mxu0 %v2591
    %3257 = vmatpush1.bf16.msra.mxu0 %v2590
    %3258 = vmatprep.subr.bf16.mxu0 %v2599
    %3259 = vmatpush1.bf16.msra.mxu0 %v2598
    %3260 = vmatprep.subr.bf16.mxu0 0
    %3261 = vmatpush1.bf16.msra.mxu0 0
    %3262 = vmatprep.subr.bf16.mxu0 0
    %3263 = vmatpush1.bf16.msra.mxu0 0
    %3264 = vmatprep.subr.bf16.mxu0 0
    %3265 = vmatpush1.bf16.msra.mxu0 0
    %3266 = vmatprep.subr.bf16.mxu0 0
    %3267 = vmatpush1.bf16.msra.mxu0 0
    %3268 = vmatprep.subr.bf16.mxu0 0
    %3269 = vmatpush1.bf16.msra.mxu0 0
    %3270 = vmatprep.subr.bf16.mxu0 0
    %3271 = vmatpush1.bf16.msra.mxu0 0
    %3272 = vmatprep.subr.bf16.mxu0 0
    %3273 = vmatpush1.bf16.msra.mxu0 0
    %3274 = vmatprep.subr.bf16.mxu0 0
    %3275 = vmatpush1.bf16.msra.mxu0 0
    %3276 = vmatprep.subr.bf16.mxu0 0
    %3277 = vmatpush1.bf16.msra.mxu0 0
    %3278 = vmatprep.mubr.bf16.mxu0 0
    %3279 = vmatmul.mubr.bf16.gmra.mrb[0].mxu0 %v2916
    %v3280 = vpop.f32.mrb[0].mxu0
    %v3281 = vadd.f32 %v3240, %v3280
    %v3282 = vpop.f32.mrb[0].mxu0
    %v3283 = vadd.f32 %v3242, %v3282
    %v3284 = vpop.f32.mrb[0].mxu0
    %v3285 = vpop.f32.mrb[0].mxu0
    %3286 = vdwg.mxu0
    %3287 = vmatprep.subr.bf16.mxu0 %v2297
    %3288 = vmatpush1.bf16.msra.mxu0 %v2296
    %3289 = vmatprep.subr.bf16.mxu0 %v2305
    %3290 = vmatpush1.bf16.msra.mxu0 %v2304
    %3291 = vmatprep.subr.bf16.mxu0 %v2313
    %3292 = vmatpush1.bf16.msra.mxu0 %v2312
    %3293 = vmatprep.subr.bf16.mxu0 %v2321
    %3294 = vmatpush1.bf16.msra.mxu0 %v2320
    %3295 = vmatprep.subr.bf16.mxu0 %v2329
    %3296 = vmatpush1.bf16.msra.mxu0 %v2328
    %3297 = vmatprep.subr.bf16.mxu0 %v2337
    %3298 = vmatpush1.bf16.msra.mxu0 %v2336
    %3299 = vmatprep.subr.bf16.mxu0 %v2345
    %3300 = vmatpush1.bf16.msra.mxu0 %v2344
    %3301 = vmatprep.subr.bf16.mxu0 %v2353
    %3302 = vmatpush1.bf16.msra.mxu0 %v2352
    %3303 = vmatprep.subr.bf16.mxu0 %v2361
    %3304 = vmatpush1.bf16.msra.mxu0 %v2360
    %3305 = vmatprep.subr.bf16.mxu0 %v2369
    %3306 = vmatpush1.bf16.msra.mxu0 %v2368
    %3307 = vmatprep.subr.bf16.mxu0 %v2377
    %3308 = vmatpush1.bf16.msra.mxu0 %v2376
    %3309 = vmatprep.subr.bf16.mxu0 %v2385
    %3310 = vmatpush1.bf16.msra.mxu0 %v2384
    %3311 = vmatprep.subr.bf16.mxu0 %v2393
    %3312 = vmatpush1.bf16.msra.mxu0 %v2392
    %3313 = vmatprep.subr.bf16.mxu0 %v2401
    %3314 = vmatpush1.bf16.msra.mxu0 %v2400
    %3315 = vmatprep.subr.bf16.mxu0 %v2409
    %3316 = vmatpush1.bf16.msra.mxu0 %v2408
    %3317 = vmatprep.subr.bf16.mxu0 %v2417
    %3318 = vmatpush1.bf16.msra.mxu0 %v2416
    %3319 = vmatprep.mubr.bf16.mxu0 %v1309
    %3320 = vmatmul.mubr.bf16.gmra.mrb[0].mxu0 %v1308
    %v3321 = vpop.f32.mrb[0].mxu0
    %v3322 = vadd.f32 %v1341, %v3321
    %v3323 = vpop.f32.mrb[0].mxu0
    %v3324 = vadd.f32 %v1345, %v3323
    %v3325 = vpop.f32.mrb[0].mxu0
    %v3326 = vpop.f32.mrb[0].mxu0
    %3327 = vdwg.mxu0
    %3328 = vmatprep.subr.bf16.mxu0 %v2425
    %3329 = vmatpush1.bf16.msra.mxu0 %v2424
    %3330 = vmatprep.subr.bf16.mxu0 %v2433
    %3331 = vmatpush1.bf16.msra.mxu0 %v2432
    %3332 = vmatprep.subr.bf16.mxu0 %v2441
    %3333 = vmatpush1.bf16.msra.mxu0 %v2440
    %3334 = vmatprep.subr.bf16.mxu0 %v2449
    %3335 = vmatpush1.bf16.msra.mxu0 %v2448
    %3336 = vmatprep.subr.bf16.mxu0 %v2457
    %3337 = vmatpush1.bf16.msra.mxu0 %v2456
    %3338 = vmatprep.subr.bf16.mxu0 %v2465
    %3339 = vmatpush1.bf16.msra.mxu0 %v2464
    %3340 = vmatprep.subr.bf16.mxu0 %v2473
    %3341 = vmatpush1.bf16.msra.mxu0 %v2472
    %3342 = vmatprep.subr.bf16.mxu0 %v2481
    %3343 = vmatpush1.bf16.msra.mxu0 %v2480
    %3344 = vmatprep.subr.bf16.mxu0 %v2489
    %3345 = vmatpush1.bf16.msra.mxu0 %v2488
    %3346 = vmatprep.subr.bf16.mxu0 %v2497
    %3347 = vmatpush1.bf16.msra.mxu0 %v2496
    %3348 = vmatprep.subr.bf16.mxu0 %v2505
    %3349 = vmatpush1.bf16.msra.mxu0 %v2504
    %3350 = vmatprep.subr.bf16.mxu0 %v2513
    %3351 = vmatpush1.bf16.msra.mxu0 %v2512
    %3352 = vmatprep.subr.bf16.mxu0 %v2521
    %3353 = vmatpush1.bf16.msra.mxu0 %v2520
    %3354 = vmatprep.subr.bf16.mxu0 %v2529
    %3355 = vmatpush1.bf16.msra.mxu0 %v2528
    %3356 = vmatprep.subr.bf16.mxu0 %v2537
    %3357 = vmatpush1.bf16.msra.mxu0 %v2536
    %3358 = vmatprep.subr.bf16.mxu0 %v2545
    %3359 = vmatpush1.bf16.msra.mxu0 %v2544
    %3360 = vmatprep.mubr.bf16.mxu0 %v1311
    %3361 = vmatmul.mubr.bf16.gmra.mrb[0].mxu0 %v1310
    %v3362 = vpop.f32.mrb[0].mxu0
    %v3363 = vadd.f32 %v3322, %v3362
    %v3364 = vpop.f32.mrb[0].mxu0
    %v3365 = vadd.f32 %v3324, %v3364
    %v3366 = vpop.f32.mrb[0].mxu0
    %v3367 = vpop.f32.mrb[0].mxu0
    %3368 = vdwg.mxu0
    %3369 = vmatprep.subr.bf16.mxu0 %v2553
    %3370 = vmatpush1.bf16.msra.mxu0 %v2552
    %3371 = vmatprep.subr.bf16.mxu0 %v2561
    %3372 = vmatpush1.bf16.msra.mxu0 %v2560
    %3373 = vmatprep.subr.bf16.mxu0 %v2569
    %3374 = vmatpush1.bf16.msra.mxu0 %v2568
    %3375 = vmatprep.subr.bf16.mxu0 %v2577
    %3376 = vmatpush1.bf16.msra.mxu0 %v2576
    %3377 = vmatprep.subr.bf16.mxu0 %v2585
    %3378 = vmatpush1.bf16.msra.mxu0 %v2584
    %3379 = vmatprep.subr.bf16.mxu0 %v2593
    %3380 = vmatpush1.bf16.msra.mxu0 %v2592
    %3381 = vmatprep.subr.bf16.mxu0 %v2601
    %3382 = vmatpush1.bf16.msra.mxu0 %v2600
    %3383 = vmatprep.subr.bf16.mxu0 0
    %3384 = vmatpush1.bf16.msra.mxu0 0
    %3385 = vmatprep.subr.bf16.mxu0 0
    %3386 = vmatpush1.bf16.msra.mxu0 0
    %3387 = vmatprep.subr.bf16.mxu0 0
    %3388 = vmatpush1.bf16.msra.mxu0 0
    %3389 = vmatprep.subr.bf16.mxu0 0
    %3390 = vmatpush1.bf16.msra.mxu0 0
    %3391 = vmatprep.subr.bf16.mxu0 0
    %3392 = vmatpush1.bf16.msra.mxu0 0
    %3393 = vmatprep.subr.bf16.mxu0 0
    %3394 = vmatpush1.bf16.msra.mxu0 0
    %3395 = vmatprep.subr.bf16.mxu0 0
    %3396 = vmatpush1.bf16.msra.mxu0 0
    %3397 = vmatprep.subr.bf16.mxu0 0
    %3398 = vmatpush1.bf16.msra.mxu0 0
    %3399 = vmatprep.subr.bf16.mxu0 0
    %3400 = vmatpush1.bf16.msra.mxu0 0
    %3401 = vmatprep.mubr.bf16.mxu0 0
    %3402 = vmatmul.mubr.bf16.gmra.mrb[0].mxu0 %v2916
    %v3403 = vpop.f32.mrb[0].mxu0
    %v3404 = vadd.f32 %v3363, %v3403
    %v3405 = vpop.f32.mrb[0].mxu0
    %v3406 = vadd.f32 %v3365, %v3405
    %v3407 = vpop.f32.mrb[0].mxu0
    %v3408 = vpop.f32.mrb[0].mxu0
    %3409 = vdwg.mxu0
    %v3410 = vmax.f32 %v3035, 0.0
    %v3411 = vmax.f32 %v3037, 0.0
    %v3412 = vmax.f32 %v3158, 0.0
    %v3413 = vmax.f32 %v3160, 0.0
    %v3414 = vmax.f32 %v3281, 0.0
    %v3415 = vmax.f32 %v3283, 0.0
    %v3416 = vmax.f32 %v3404, 0.0
    %v3417 = vmax.f32 %v3406, 0.0
    %v3418 = vsel %vm735, %v3410, 0.0
    %v3419 = vsel %vm735, %v3411, 0.0
    %v3420 = vadd.f32 %v3418, %v3419
    %v3421 = vsel %vm735, %v3412, 0.0
    %v3422 = vadd.f32 %v3420, %v3421
    %v3423 = vsel %vm735, %v3413, 0.0
    %v3424 = vadd.f32 %v3422, %v3423
    %v3425 = vsel %vm735, %v3414, 0.0
    %v3426 = vadd.f32 %v3424, %v3425
    %v3427 = vsel %vm735, %v3415, 0.0
    %v3428 = vadd.f32 %v3426, %v3427
    %v3429 = vsel %vm735, %v3416, 0.0
    %v3430 = vadd.f32 %v3428, %v3429
    %v3431 = vsel %vm735, %v3417, 0.0
    %v3432 = vadd.f32 %v3430, %v3431
    %3433 = vadd.xlane.f32.xlu0 %v3432
    %v3434 = vpop.xlane.xlu0 %3433
    %v3435 = vrcp.pop 1024.0
    %v3436 = vmul.f32 %v3434, %v3435
    %v3437 = vsub.f32 %v3410, %v3436
    %v3438 = vsub.f32 %v3411, %v3436
    %v3439 = vsub.f32 %v3412, %v3436
    %v3440 = vsub.f32 %v3413, %v3436
    %v3441 = vsub.f32 %v3414, %v3436
    %v3442 = vsub.f32 %v3415, %v3436
    %v3443 = vsub.f32 %v3416, %v3436
    %v3444 = vsub.f32 %v3417, %v3436
    %v3445 = vmul.f32 %v3437, %v3437
    %v3446 = vmul.f32 %v3438, %v3438
    %v3447 = vmul.f32 %v3439, %v3439
    %v3448 = vmul.f32 %v3440, %v3440
    %v3449 = vmul.f32 %v3441, %v3441
    %v3450 = vmul.f32 %v3442, %v3442
    %v3451 = vmul.f32 %v3443, %v3443
    %v3452 = vmul.f32 %v3444, %v3444
    %v3453 = vsel %vm735, %v3445, 0.0
    %v3454 = vsel %vm735, %v3446, 0.0
    %v3455 = vadd.f32 %v3453, %v3454
    %v3456 = vsel %vm735, %v3447, 0.0
    %v3457 = vadd.f32 %v3455, %v3456
    %v3458 = vsel %vm735, %v3448, 0.0
    %v3459 = vadd.f32 %v3457, %v3458
    %v3460 = vsel %vm735, %v3449, 0.0
    %v3461 = vadd.f32 %v3459, %v3460
    %v3462 = vsel %vm735, %v3450, 0.0
    %v3463 = vadd.f32 %v3461, %v3462
    %v3464 = vsel %vm735, %v3451, 0.0
    %v3465 = vadd.f32 %v3463, %v3464
    %v3466 = vsel %vm735, %v3452, 0.0
    %v3467 = vadd.f32 %v3465, %v3466
    %3468 = vadd.xlane.f32.xlu0 %v3467
    %v3469 = vpop.xlane.xlu0 %3468
    %v3470 = vmul.f32 %v3469, %v3435
    %v3471 = vadd.f32 %v3470, 1e-05
    %v3472 = vrsqrt.pop %v3471
    %v3473 = vmul.f32 %v3437, %v3472
    %v3474 = vmul.f32 %v3438, %v3472
    %v3475 = vmul.f32 %v3439, %v3472
    %v3476 = vmul.f32 %v3440, %v3472
    %v3477 = vmul.f32 %v3441, %v3472
    %v3478 = vmul.f32 %v3442, %v3472
    %v3479 = vmul.f32 %v3443, %v3472
    %v3480 = vmul.f32 %v3444, %v3472
    %v3481 = vld [vmem:[#allocation13] sm:$0xff]
    %v3482 = vld [vmem:[#allocation13 + $0x8] sm:$0xff]
    %v3483 = vld [vmem:[#allocation13 + $0x10] sm:$0xff]
    %v3484 = vld [vmem:[#allocation13 + $0x18] sm:$0xff]
    %v3485 = vld [vmem:[#allocation13 + $0x20] sm:$0xff]
    %v3486 = vld [vmem:[#allocation13 + $0x28] sm:$0xff]
    %v3487 = vld [vmem:[#allocation13 + $0x30] sm:$0xff]
    %v3488 = vld [vmem:[#allocation13 + $0x38] sm:$0xff]
    %v3489 = vld [vmem:[#allocation13 + $0x40] sm:$0xff]
    %v3490 = vld [vmem:[#allocation13 + $0x48] sm:$0xff]
    %v3491 = vld [vmem:[#allocation13 + $0x50] sm:$0xff]
    %v3492 = vld [vmem:[#allocation13 + $0x58] sm:$0xff]
    %v3493 = vld [vmem:[#allocation13 + $0x60] sm:$0xff]
    %v3494 = vld [vmem:[#allocation13 + $0x68] sm:$0xff]
    %v3495 = vld [vmem:[#allocation13 + $0x70] sm:$0xff]
    %v3496 = vld [vmem:[#allocation13 + $0x78] sm:$0xff]
    %v3497 = vld [vmem:[#allocation13 + $0x80] sm:$0xff]
    %v3498 = vld [vmem:[#allocation13 + $0x88] sm:$0xff]
    %v3499 = vld [vmem:[#allocation13 + $0x90] sm:$0xff]
    %v3500 = vld [vmem:[#allocation13 + $0x98] sm:$0xff]
    %v3501 = vld [vmem:[#allocation13 + $0xa0] sm:$0xff]
    %v3502 = vld [vmem:[#allocation13 + $0xa8] sm:$0xff]
    %v3503 = vld [vmem:[#allocation13 + $0xb0] sm:$0xff]
    %v3504 = vld [vmem:[#allocation13 + $0xb8] sm:$0xff]
    %v3505 = vld [vmem:[#allocation13 + $0xc0] sm:$0xff]
    %v3506 = vld [vmem:[#allocation13 + $0xc8] sm:$0xff]
    %v3507 = vld [vmem:[#allocation13 + $0xd0] sm:$0xff]
    %v3508 = vld [vmem:[#allocation13 + $0xd8] sm:$0xff]
    %v3509 = vld [vmem:[#allocation13 + $0xe0] sm:$0xff]
    %v3510 = vld [vmem:[#allocation13 + $0xe8] sm:$0xff]
    %v3511 = vld [vmem:[#allocation13 + $0xf0] sm:$0xff]
    %v3512 = vld [vmem:[#allocation13 + $0xf8] sm:$0xff]
    %v3513 = vld [vmem:[#allocation13 + $0x100] sm:$0xff]
    %v3514 = vld [vmem:[#allocation13 + $0x108] sm:$0xff]
    %v3515 = vld [vmem:[#allocation13 + $0x110] sm:$0xff]
    %v3516 = vld [vmem:[#allocation13 + $0x118] sm:$0xff]
    %v3517 = vld [vmem:[#allocation13 + $0x120] sm:$0xff]
    %v3518 = vld [vmem:[#allocation13 + $0x128] sm:$0xff]
    %v3519 = vld [vmem:[#allocation13 + $0x130] sm:$0xff]
    %v3520 = vld [vmem:[#allocation13 + $0x138] sm:$0xff]
    %v3521 = vld [vmem:[#allocation13 + $0x140] sm:$0xff]
    %v3522 = vld [vmem:[#allocation13 + $0x148] sm:$0xff]
    %v3523 = vld [vmem:[#allocation13 + $0x150] sm:$0xff]
    %v3524 = vld [vmem:[#allocation13 + $0x158] sm:$0xff]
    %v3525 = vld [vmem:[#allocation13 + $0x160] sm:$0xff]
    %v3526 = vld [vmem:[#allocation13 + $0x168] sm:$0xff]
    %v3527 = vld [vmem:[#allocation13 + $0x170] sm:$0xff]
    %v3528 = vld [vmem:[#allocation13 + $0x178] sm:$0xff]
    %v3529 = vld [vmem:[#allocation13 + $0x180] sm:$0xff]
    %v3530 = vld [vmem:[#allocation13 + $0x188] sm:$0xff]
    %v3531 = vld [vmem:[#allocation13 + $0x190] sm:$0xff]
    %v3532 = vld [vmem:[#allocation13 + $0x198] sm:$0xff]
    %v3533 = vld [vmem:[#allocation13 + $0x1a0] sm:$0xff]
    %v3534 = vld [vmem:[#allocation13 + $0x1a8] sm:$0xff]
    %v3535 = vld [vmem:[#allocation13 + $0x1b0] sm:$0xff]
    %v3536 = vld [vmem:[#allocation13 + $0x1b8] sm:$0xff]
    %v3537 = vld [vmem:[#allocation13 + $0x1c0] sm:$0xff]
    %v3538 = vld [vmem:[#allocation13 + $0x1c8] sm:$0xff]
    %v3539 = vld [vmem:[#allocation13 + $0x1d0] sm:$0xff]
    %v3540 = vld [vmem:[#allocation13 + $0x1d8] sm:$0xff]
    %v3541 = vld [vmem:[#allocation13 + $0x1e0] sm:$0xff]
    %v3542 = vld [vmem:[#allocation13 + $0x1e8] sm:$0xff]
    %v3543 = vld [vmem:[#allocation13 + $0x1f0] sm:$0xff]
    %v3544 = vld [vmem:[#allocation13 + $0x1f8] sm:$0xff]
    %v3545 = vld [vmem:[#allocation13 + $0x200] sm:$0xff]
    %v3546 = vld [vmem:[#allocation13 + $0x208] sm:$0xff]
    %v3547 = vld [vmem:[#allocation13 + $0x210] sm:$0xff]
    %v3548 = vld [vmem:[#allocation13 + $0x218] sm:$0xff]
    %v3549 = vld [vmem:[#allocation13 + $0x220] sm:$0xff]
    %v3550 = vld [vmem:[#allocation13 + $0x228] sm:$0xff]
    %v3551 = vld [vmem:[#allocation13 + $0x230] sm:$0xff]
    %v3552 = vld [vmem:[#allocation13 + $0x238] sm:$0xff]
    %v3553 = vld [vmem:[#allocation13 + $0x240] sm:$0xff]
    %v3554 = vld [vmem:[#allocation13 + $0x248] sm:$0xff]
    %v3555 = vld [vmem:[#allocation13 + $0x250] sm:$0xff]
    %v3556 = vld [vmem:[#allocation13 + $0x258] sm:$0xff]
    %v3557 = vld [vmem:[#allocation13 + $0x260] sm:$0xff]
    %v3558 = vld [vmem:[#allocation13 + $0x268] sm:$0xff]
    %v3559 = vld [vmem:[#allocation13 + $0x270] sm:$0xff]
    %v3560 = vld [vmem:[#allocation13 + $0x278] sm:$0xff]
    %v3561 = vld [vmem:[#allocation13 + $0x280] sm:$0xff]
    %v3562 = vld [vmem:[#allocation13 + $0x288] sm:$0xff]
    %v3563 = vld [vmem:[#allocation13 + $0x290] sm:$0xff]
    %v3564 = vld [vmem:[#allocation13 + $0x298] sm:$0xff]
    %v3565 = vld [vmem:[#allocation13 + $0x2a0] sm:$0xff]
    %v3566 = vld [vmem:[#allocation13 + $0x2a8] sm:$0xff]
    %v3567 = vld [vmem:[#allocation13 + $0x2b0] sm:$0xff]
    %v3568 = vld [vmem:[#allocation13 + $0x2b8] sm:$0xff]
    %v3569 = vld [vmem:[#allocation13 + $0x2c0] sm:$0xff]
    %v3570 = vld [vmem:[#allocation13 + $0x2c8] sm:$0xff]
    %v3571 = vld [vmem:[#allocation13 + $0x2d0] sm:$0xff]
    %v3572 = vld [vmem:[#allocation13 + $0x2d8] sm:$0xff]
    %v3573 = vld [vmem:[#allocation13 + $0x2e0] sm:$0xff]
    %v3574 = vld [vmem:[#allocation13 + $0x2e8] sm:$0xff]
    %v3575 = vld [vmem:[#allocation13 + $0x2f0] sm:$0xff]
    %v3576 = vld [vmem:[#allocation13 + $0x2f8] sm:$0xff]
    %v3577 = vld [vmem:[#allocation13 + $0x300] sm:$0xff]
    %v3578 = vld [vmem:[#allocation13 + $0x308] sm:$0xff]
    %v3579 = vld [vmem:[#allocation13 + $0x310] sm:$0xff]
    %v3580 = vld [vmem:[#allocation13 + $0x318] sm:$0xff]
    %v3581 = vld [vmem:[#allocation13 + $0x320] sm:$0xff]
    %v3582 = vld [vmem:[#allocation13 + $0x328] sm:$0xff]
    %v3583 = vld [vmem:[#allocation13 + $0x330] sm:$0xff]
    %v3584 = vld [vmem:[#allocation13 + $0x338] sm:$0xff]
    %v3585 = vld [vmem:[#allocation13 + $0x340] sm:$0xff]
    %v3586 = vld [vmem:[#allocation13 + $0x348] sm:$0xff]
    %v3587 = vld [vmem:[#allocation13 + $0x350] sm:$0xff]
    %v3588 = vld [vmem:[#allocation13 + $0x358] sm:$0xff]
    %v3589 = vld [vmem:[#allocation13 + $0x360] sm:$0xff]
    %v3590 = vld [vmem:[#allocation13 + $0x368] sm:$0xff]
    %v3591 = vld [vmem:[#allocation13 + $0x370] sm:$0xff]
    %v3592 = vld [vmem:[#allocation13 + $0x378] sm:$0xff]
    %v3593 = vld [vmem:[#allocation13 + $0x380] sm:$0xff]
    %v3594 = vld [vmem:[#allocation13 + $0x388] sm:$0xff]
    %v3595 = vld [vmem:[#allocation13 + $0x390] sm:$0xff]
    %v3596 = vld [vmem:[#allocation13 + $0x398] sm:$0xff]
    %v3597 = vld [vmem:[#allocation13 + $0x3a0] sm:$0xff]
    %v3598 = vld [vmem:[#allocation13 + $0x3a8] sm:$0xff]
    %v3599 = vld [vmem:[#allocation13 + $0x3b0] sm:$0xff]
    %v3600 = vld [vmem:[#allocation13 + $0x3b8] sm:$0xff]
    %v3601 = vld [vmem:[#allocation13 + $0x3c0] sm:$0xff]
    %v3602 = vld [vmem:[#allocation13 + $0x3c8] sm:$0xff]
    %v3603 = vld [vmem:[#allocation13 + $0x3d0] sm:$0xff]
    %v3604 = vld [vmem:[#allocation13 + $0x3d8] sm:$0xff]
    %v3605 = vld [vmem:[#allocation13 + $0x3e0] sm:$0xff]
    %v3606 = vld [vmem:[#allocation13 + $0x3e8] sm:$0xff]
    %v3607 = vld [vmem:[#allocation13 + $0x3f0] sm:$0xff]
    %v3608 = vld [vmem:[#allocation13 + $0x3f8] sm:$0xff]
    %v3609 = vld [vmem:[#allocation15] sm:$0x3]
    %v3610 = vpack.c.bf16 %v3473, %v3473
    %v3611 = vpack.c.bf16 %v3474, %v3474
    %v3612 = vpack.c.bf16 %v3475, %v3475
    %v3613 = vpack.c.bf16 %v3476, %v3476
    %v3614 = vpack.c.bf16 %v3477, %v3477
    %v3615 = vpack.c.bf16 %v3478, %v3478
    %v3616 = vpack.c.bf16 %v3479, %v3479
    %v3617 = vpack.c.bf16 %v3480, %v3480
    %v3619 = vlaneseq
    %v3620 = vshrl.u32 %v3619, 7
    %v3621 = vsub.s32 0, %v3620
    %v3622 = vrot.slane %v3609, %v3621
    %v3623 = vlaneseq
    %v3624 = vshrl.u32 %v3623, 7
    %v3625 = vsub.s32 1, %v3624
    %v3626 = vrot.slane %v3609, %v3625
    %v3757 = vunpack.c.l.b16 %v3481
    %v3758 = vunpack.c.h.b16 %v3481
    %v3759 = vunpack.c.l.b16 %v3482
    %v3760 = vunpack.c.h.b16 %v3482
    %v3761 = vunpack.c.l.b16 %v3483
    %v3762 = vunpack.c.h.b16 %v3483
    %v3763 = vunpack.c.l.b16 %v3484
    %v3764 = vunpack.c.h.b16 %v3484
    %v3765 = vunpack.c.l.b16 %v3485
    %v3766 = vunpack.c.h.b16 %v3485
    %v3767 = vunpack.c.l.b16 %v3486
    %v3768 = vunpack.c.h.b16 %v3486
    %v3769 = vunpack.c.l.b16 %v3487
    %v3770 = vunpack.c.h.b16 %v3487
    %v3771 = vunpack.c.l.b16 %v3488
    %v3772 = vunpack.c.h.b16 %v3488
    %v3773 = vunpack.c.l.b16 %v3489
    %v3774 = vunpack.c.h.b16 %v3489
    %v3775 = vunpack.c.l.b16 %v3490
    %v3776 = vunpack.c.h.b16 %v3490
    %v3777 = vunpack.c.l.b16 %v3491
    %v3778 = vunpack.c.h.b16 %v3491
    %v3779 = vunpack.c.l.b16 %v3492
    %v3780 = vunpack.c.h.b16 %v3492
    %v3781 = vunpack.c.l.b16 %v3493
    %v3782 = vunpack.c.h.b16 %v3493
    %v3783 = vunpack.c.l.b16 %v3494
    %v3784 = vunpack.c.h.b16 %v3494
    %v3785 = vunpack.c.l.b16 %v3495
    %v3786 = vunpack.c.h.b16 %v3495
    %v3787 = vunpack.c.l.b16 %v3496
    %v3788 = vunpack.c.h.b16 %v3496
    %v3789 = vunpack.c.l.b16 %v3497
    %v3790 = vunpack.c.h.b16 %v3497
    %v3791 = vunpack.c.l.b16 %v3498
    %v3792 = vunpack.c.h.b16 %v3498
    %v3793 = vunpack.c.l.b16 %v3499
    %v3794 = vunpack.c.h.b16 %v3499
    %v3795 = vunpack.c.l.b16 %v3500
    %v3796 = vunpack.c.h.b16 %v3500
    %v3797 = vunpack.c.l.b16 %v3501
    %v3798 = vunpack.c.h.b16 %v3501
    %v3799 = vunpack.c.l.b16 %v3502
    %v3800 = vunpack.c.h.b16 %v3502
    %v3801 = vunpack.c.l.b16 %v3503
    %v3802 = vunpack.c.h.b16 %v3503
    %v3803 = vunpack.c.l.b16 %v3504
    %v3804 = vunpack.c.h.b16 %v3504
    %v3805 = vunpack.c.l.b16 %v3505
    %v3806 = vunpack.c.h.b16 %v3505
    %v3807 = vunpack.c.l.b16 %v3506
    %v3808 = vunpack.c.h.b16 %v3506
    %v3809 = vunpack.c.l.b16 %v3507
    %v3810 = vunpack.c.h.b16 %v3507
    %v3811 = vunpack.c.l.b16 %v3508
    %v3812 = vunpack.c.h.b16 %v3508
    %v3813 = vunpack.c.l.b16 %v3509
    %v3814 = vunpack.c.h.b16 %v3509
    %v3815 = vunpack.c.l.b16 %v3510
    %v3816 = vunpack.c.h.b16 %v3510
    %v3817 = vunpack.c.l.b16 %v3511
    %v3818 = vunpack.c.h.b16 %v3511
    %v3819 = vunpack.c.l.b16 %v3512
    %v3820 = vunpack.c.h.b16 %v3512
    %v3821 = vunpack.c.l.b16 %v3513
    %v3822 = vunpack.c.h.b16 %v3513
    %v3823 = vunpack.c.l.b16 %v3514
    %v3824 = vunpack.c.h.b16 %v3514
    %v3825 = vunpack.c.l.b16 %v3515
    %v3826 = vunpack.c.h.b16 %v3515
    %v3827 = vunpack.c.l.b16 %v3516
    %v3828 = vunpack.c.h.b16 %v3516
    %v3829 = vunpack.c.l.b16 %v3517
    %v3830 = vunpack.c.h.b16 %v3517
    %v3831 = vunpack.c.l.b16 %v3518
    %v3832 = vunpack.c.h.b16 %v3518
    %v3833 = vunpack.c.l.b16 %v3519
    %v3834 = vunpack.c.h.b16 %v3519
    %v3835 = vunpack.c.l.b16 %v3520
    %v3836 = vunpack.c.h.b16 %v3520
    %v3837 = vunpack.c.l.b16 %v3521
    %v3838 = vunpack.c.h.b16 %v3521
    %v3839 = vunpack.c.l.b16 %v3522
    %v3840 = vunpack.c.h.b16 %v3522
    %v3841 = vunpack.c.l.b16 %v3523
    %v3842 = vunpack.c.h.b16 %v3523
    %v3843 = vunpack.c.l.b16 %v3524
    %v3844 = vunpack.c.h.b16 %v3524
    %v3845 = vunpack.c.l.b16 %v3525
    %v3846 = vunpack.c.h.b16 %v3525
    %v3847 = vunpack.c.l.b16 %v3526
    %v3848 = vunpack.c.h.b16 %v3526
    %v3849 = vunpack.c.l.b16 %v3527
    %v3850 = vunpack.c.h.b16 %v3527
    %v3851 = vunpack.c.l.b16 %v3528
    %v3852 = vunpack.c.h.b16 %v3528
    %v3853 = vunpack.c.l.b16 %v3529
    %v3854 = vunpack.c.h.b16 %v3529
    %v3855 = vunpack.c.l.b16 %v3530
    %v3856 = vunpack.c.h.b16 %v3530
    %v3857 = vunpack.c.l.b16 %v3531
    %v3858 = vunpack.c.h.b16 %v3531
    %v3859 = vunpack.c.l.b16 %v3532
    %v3860 = vunpack.c.h.b16 %v3532
    %v3861 = vunpack.c.l.b16 %v3533
    %v3862 = vunpack.c.h.b16 %v3533
    %v3863 = vunpack.c.l.b16 %v3534
    %v3864 = vunpack.c.h.b16 %v3534
    %v3865 = vunpack.c.l.b16 %v3535
    %v3866 = vunpack.c.h.b16 %v3535
    %v3867 = vunpack.c.l.b16 %v3536
    %v3868 = vunpack.c.h.b16 %v3536
    %v3869 = vunpack.c.l.b16 %v3537
    %v3870 = vunpack.c.h.b16 %v3537
    %v3871 = vunpack.c.l.b16 %v3538
    %v3872 = vunpack.c.h.b16 %v3538
    %v3873 = vunpack.c.l.b16 %v3539
    %v3874 = vunpack.c.h.b16 %v3539
    %v3875 = vunpack.c.l.b16 %v3540
    %v3876 = vunpack.c.h.b16 %v3540
    %v3877 = vunpack.c.l.b16 %v3541
    %v3878 = vunpack.c.h.b16 %v3541
    %v3879 = vunpack.c.l.b16 %v3542
    %v3880 = vunpack.c.h.b16 %v3542
    %v3881 = vunpack.c.l.b16 %v3543
    %v3882 = vunpack.c.h.b16 %v3543
    %v3883 = vunpack.c.l.b16 %v3544
    %v3884 = vunpack.c.h.b16 %v3544
    %v3885 = vunpack.c.l.b16 %v3545
    %v3886 = vunpack.c.h.b16 %v3545
    %v3887 = vunpack.c.l.b16 %v3546
    %v3888 = vunpack.c.h.b16 %v3546
    %v3889 = vunpack.c.l.b16 %v3547
    %v3890 = vunpack.c.h.b16 %v3547
    %v3891 = vunpack.c.l.b16 %v3548
    %v3892 = vunpack.c.h.b16 %v3548
    %v3893 = vunpack.c.l.b16 %v3549
    %v3894 = vunpack.c.h.b16 %v3549
    %v3895 = vunpack.c.l.b16 %v3550
    %v3896 = vunpack.c.h.b16 %v3550
    %v3897 = vunpack.c.l.b16 %v3551
    %v3898 = vunpack.c.h.b16 %v3551
    %v3899 = vunpack.c.l.b16 %v3552
    %v3900 = vunpack.c.h.b16 %v3552
    %v3901 = vunpack.c.l.b16 %v3553
    %v3902 = vunpack.c.h.b16 %v3553
    %v3903 = vunpack.c.l.b16 %v3554
    %v3904 = vunpack.c.h.b16 %v3554
    %v3905 = vunpack.c.l.b16 %v3555
    %v3906 = vunpack.c.h.b16 %v3555
    %v3907 = vunpack.c.l.b16 %v3556
    %v3908 = vunpack.c.h.b16 %v3556
    %v3909 = vunpack.c.l.b16 %v3557
    %v3910 = vunpack.c.h.b16 %v3557
    %v3911 = vunpack.c.l.b16 %v3558
    %v3912 = vunpack.c.h.b16 %v3558
    %v3913 = vunpack.c.l.b16 %v3559
    %v3914 = vunpack.c.h.b16 %v3559
    %v3915 = vunpack.c.l.b16 %v3560
    %v3916 = vunpack.c.h.b16 %v3560
    %v3917 = vunpack.c.l.b16 %v3561
    %v3918 = vunpack.c.h.b16 %v3561
    %v3919 = vunpack.c.l.b16 %v3562
    %v3920 = vunpack.c.h.b16 %v3562
    %v3921 = vunpack.c.l.b16 %v3563
    %v3922 = vunpack.c.h.b16 %v3563
    %v3923 = vunpack.c.l.b16 %v3564
    %v3924 = vunpack.c.h.b16 %v3564
    %v3925 = vunpack.c.l.b16 %v3565
    %v3926 = vunpack.c.h.b16 %v3565
    %v3927 = vunpack.c.l.b16 %v3566
    %v3928 = vunpack.c.h.b16 %v3566
    %v3929 = vunpack.c.l.b16 %v3567
    %v3930 = vunpack.c.h.b16 %v3567
    %v3931 = vunpack.c.l.b16 %v3568
    %v3932 = vunpack.c.h.b16 %v3568
    %v3933 = vunpack.c.l.b16 %v3569
    %v3934 = vunpack.c.h.b16 %v3569
    %v3935 = vunpack.c.l.b16 %v3570
    %v3936 = vunpack.c.h.b16 %v3570
    %v3937 = vunpack.c.l.b16 %v3571
    %v3938 = vunpack.c.h.b16 %v3571
    %v3939 = vunpack.c.l.b16 %v3572
    %v3940 = vunpack.c.h.b16 %v3572
    %v3941 = vunpack.c.l.b16 %v3573
    %v3942 = vunpack.c.h.b16 %v3573
    %v3943 = vunpack.c.l.b16 %v3574
    %v3944 = vunpack.c.h.b16 %v3574
    %v3945 = vunpack.c.l.b16 %v3575
    %v3946 = vunpack.c.h.b16 %v3575
    %v3947 = vunpack.c.l.b16 %v3576
    %v3948 = vunpack.c.h.b16 %v3576
    %v3949 = vunpack.c.l.b16 %v3577
    %v3950 = vunpack.c.h.b16 %v3577
    %v3951 = vunpack.c.l.b16 %v3578
    %v3952 = vunpack.c.h.b16 %v3578
    %v3953 = vunpack.c.l.b16 %v3579
    %v3954 = vunpack.c.h.b16 %v3579
    %v3955 = vunpack.c.l.b16 %v3580
    %v3956 = vunpack.c.h.b16 %v3580
    %v3957 = vunpack.c.l.b16 %v3581
    %v3958 = vunpack.c.h.b16 %v3581
    %v3959 = vunpack.c.l.b16 %v3582
    %v3960 = vunpack.c.h.b16 %v3582
    %v3961 = vunpack.c.l.b16 %v3583
    %v3962 = vunpack.c.h.b16 %v3583
    %v3963 = vunpack.c.l.b16 %v3584
    %v3964 = vunpack.c.h.b16 %v3584
    %v3965 = vunpack.c.l.b16 %v3585
    %v3966 = vunpack.c.h.b16 %v3585
    %v3967 = vunpack.c.l.b16 %v3586
    %v3968 = vunpack.c.h.b16 %v3586
    %v3969 = vunpack.c.l.b16 %v3587
    %v3970 = vunpack.c.h.b16 %v3587
    %v3971 = vunpack.c.l.b16 %v3588
    %v3972 = vunpack.c.h.b16 %v3588
    %v3973 = vunpack.c.l.b16 %v3589
    %v3974 = vunpack.c.h.b16 %v3589
    %v3975 = vunpack.c.l.b16 %v3590
    %v3976 = vunpack.c.h.b16 %v3590
    %v3977 = vunpack.c.l.b16 %v3591
    %v3978 = vunpack.c.h.b16 %v3591
    %v3979 = vunpack.c.l.b16 %v3592
    %v3980 = vunpack.c.h.b16 %v3592
    %v3981 = vunpack.c.l.b16 %v3593
    %v3982 = vunpack.c.h.b16 %v3593
    %v3983 = vunpack.c.l.b16 %v3594
    %v3984 = vunpack.c.h.b16 %v3594
    %v3985 = vunpack.c.l.b16 %v3595
    %v3986 = vunpack.c.h.b16 %v3595
    %v3987 = vunpack.c.l.b16 %v3596
    %v3988 = vunpack.c.h.b16 %v3596
    %v3989 = vunpack.c.l.b16 %v3597
    %v3990 = vunpack.c.h.b16 %v3597
    %v3991 = vunpack.c.l.b16 %v3598
    %v3992 = vunpack.c.h.b16 %v3598
    %v3993 = vunpack.c.l.b16 %v3599
    %v3994 = vunpack.c.h.b16 %v3599
    %v3995 = vunpack.c.l.b16 %v3600
    %v3996 = vunpack.c.h.b16 %v3600
    %v3997 = vunpack.c.l.b16 %v3601
    %v3998 = vunpack.c.h.b16 %v3601
    %v3999 = vunpack.c.l.b16 %v3602
    %v4000 = vunpack.c.h.b16 %v3602
    %v4001 = vunpack.c.l.b16 %v3603
    %v4002 = vunpack.c.h.b16 %v3603
    %v4003 = vunpack.c.l.b16 %v3604
    %v4004 = vunpack.c.h.b16 %v3604
    %v4005 = vunpack.c.l.b16 %v3605
    %v4006 = vunpack.c.h.b16 %v3605
    %v4007 = vunpack.c.l.b16 %v3606
    %v4008 = vunpack.c.h.b16 %v3606
    %v4009 = vunpack.c.l.b16 %v3607
    %v4010 = vunpack.c.h.b16 %v3607
    %v4011 = vunpack.c.l.b16 %v3608
    %v4012 = vunpack.c.h.b16 %v3608
    %v4013 = vpack.c.b16 %v3759, %v3757
    %v4014 = vpack.c.b16 %v3760, %v3758
    %v4015 = vpack.c.b16 %v3763, %v3761
    %v4016 = vpack.c.b16 %v3764, %v3762
    %v4017 = vpack.c.b16 %v3767, %v3765
    %v4018 = vpack.c.b16 %v3768, %v3766
    %v4019 = vpack.c.b16 %v3771, %v3769
    %v4020 = vpack.c.b16 %v3772, %v3770
    %v4021 = vpack.c.b16 %v3775, %v3773
    %v4022 = vpack.c.b16 %v3776, %v3774
    %v4023 = vpack.c.b16 %v3779, %v3777
    %v4024 = vpack.c.b16 %v3780, %v3778
    %v4025 = vpack.c.b16 %v3783, %v3781
    %v4026 = vpack.c.b16 %v3784, %v3782
    %v4027 = vpack.c.b16 %v3787, %v3785
    %v4028 = vpack.c.b16 %v3788, %v3786
    %v4029 = vpack.c.b16 %v3791, %v3789
    %v4030 = vpack.c.b16 %v3792, %v3790
    %v4031 = vpack.c.b16 %v3795, %v3793
    %v4032 = vpack.c.b16 %v3796, %v3794
    %v4033 = vpack.c.b16 %v3799, %v3797
    %v4034 = vpack.c.b16 %v3800, %v3798
    %v4035 = vpack.c.b16 %v3803, %v3801
    %v4036 = vpack.c.b16 %v3804, %v3802
    %v4037 = vpack.c.b16 %v3807, %v3805
    %v4038 = vpack.c.b16 %v3808, %v3806
    %v4039 = vpack.c.b16 %v3811, %v3809
    %v4040 = vpack.c.b16 %v3812, %v3810
    %v4041 = vpack.c.b16 %v3815, %v3813
    %v4042 = vpack.c.b16 %v3816, %v3814
    %v4043 = vpack.c.b16 %v3819, %v3817
    %v4044 = vpack.c.b16 %v3820, %v3818
    %v4045 = vpack.c.b16 %v3823, %v3821
    %v4046 = vpack.c.b16 %v3824, %v3822
    %v4047 = vpack.c.b16 %v3827, %v3825
    %v4048 = vpack.c.b16 %v3828, %v3826
    %v4049 = vpack.c.b16 %v3831, %v3829
    %v4050 = vpack.c.b16 %v3832, %v3830
    %v4051 = vpack.c.b16 %v3835, %v3833
    %v4052 = vpack.c.b16 %v3836, %v3834
    %v4053 = vpack.c.b16 %v3839, %v3837
    %v4054 = vpack.c.b16 %v3840, %v3838
    %v4055 = vpack.c.b16 %v3843, %v3841
    %v4056 = vpack.c.b16 %v3844, %v3842
    %v4057 = vpack.c.b16 %v3847, %v3845
    %v4058 = vpack.c.b16 %v3848, %v3846
    %v4059 = vpack.c.b16 %v3851, %v3849
    %v4060 = vpack.c.b16 %v3852, %v3850
    %v4061 = vpack.c.b16 %v3855, %v3853
    %v4062 = vpack.c.b16 %v3856, %v3854
    %v4063 = vpack.c.b16 %v3859, %v3857
    %v4064 = vpack.c.b16 %v3860, %v3858
    %v4065 = vpack.c.b16 %v3863, %v3861
    %v4066 = vpack.c.b16 %v3864, %v3862
    %v4067 = vpack.c.b16 %v3867, %v3865
    %v4068 = vpack.c.b16 %v3868, %v3866
    %v4069 = vpack.c.b16 %v3871, %v3869
    %v4070 = vpack.c.b16 %v3872, %v3870
    %v4071 = vpack.c.b16 %v3875, %v3873
    %v4072 = vpack.c.b16 %v3876, %v3874
    %v4073 = vpack.c.b16 %v3879, %v3877
    %v4074 = vpack.c.b16 %v3880, %v3878
    %v4075 = vpack.c.b16 %v3883, %v3881
    %v4076 = vpack.c.b16 %v3884, %v3882
    %v4077 = vpack.c.b16 %v3887, %v3885
    %v4078 = vpack.c.b16 %v3888, %v3886
    %v4079 = vpack.c.b16 %v3891, %v3889
    %v4080 = vpack.c.b16 %v3892, %v3890
    %v4081 = vpack.c.b16 %v3895, %v3893
    %v4082 = vpack.c.b16 %v3896, %v3894
    %v4083 = vpack.c.b16 %v3899, %v3897
    %v4084 = vpack.c.b16 %v3900, %v3898
    %v4085 = vpack.c.b16 %v3903, %v3901
    %v4086 = vpack.c.b16 %v3904, %v3902
    %v4087 = vpack.c.b16 %v3907, %v3905
    %v4088 = vpack.c.b16 %v3908, %v3906
    %v4089 = vpack.c.b16 %v3911, %v3909
    %v4090 = vpack.c.b16 %v3912, %v3910
    %v4091 = vpack.c.b16 %v3915, %v3913
    %v4092 = vpack.c.b16 %v3916, %v3914
    %v4093 = vpack.c.b16 %v3919, %v3917
    %v4094 = vpack.c.b16 %v3920, %v3918
    %v4095 = vpack.c.b16 %v3923, %v3921
    %v4096 = vpack.c.b16 %v3924, %v3922
    %v4097 = vpack.c.b16 %v3927, %v3925
    %v4098 = vpack.c.b16 %v3928, %v3926
    %v4099 = vpack.c.b16 %v3931, %v3929
    %v4100 = vpack.c.b16 %v3932, %v3930
    %v4101 = vpack.c.b16 %v3935, %v3933
    %v4102 = vpack.c.b16 %v3936, %v3934
    %v4103 = vpack.c.b16 %v3939, %v3937
    %v4104 = vpack.c.b16 %v3940, %v3938
    %v4105 = vpack.c.b16 %v3943, %v3941
    %v4106 = vpack.c.b16 %v3944, %v3942
    %v4107 = vpack.c.b16 %v3947, %v3945
    %v4108 = vpack.c.b16 %v3948, %v3946
    %v4109 = vpack.c.b16 %v3951, %v3949
    %v4110 = vpack.c.b16 %v3952, %v3950
    %v4111 = vpack.c.b16 %v3955, %v3953
    %v4112 = vpack.c.b16 %v3956, %v3954
    %v4113 = vpack.c.b16 %v3959, %v3957
    %v4114 = vpack.c.b16 %v3960, %v3958
    %v4115 = vpack.c.b16 %v3963, %v3961
    %v4116 = vpack.c.b16 %v3964, %v3962
    %v4117 = vpack.c.b16 %v3967, %v3965
    %v4118 = vpack.c.b16 %v3968, %v3966
    %v4119 = vpack.c.b16 %v3971, %v3969
    %v4120 = vpack.c.b16 %v3972, %v3970
    %v4121 = vpack.c.b16 %v3975, %v3973
    %v4122 = vpack.c.b16 %v3976, %v3974
    %v4123 = vpack.c.b16 %v3979, %v3977
    %v4124 = vpack.c.b16 %v3980, %v3978
    %v4125 = vpack.c.b16 %v3983, %v3981
    %v4126 = vpack.c.b16 %v3984, %v3982
    %v4127 = vpack.c.b16 %v3987, %v3985
    %v4128 = vpack.c.b16 %v3988, %v3986
    %v4129 = vpack.c.b16 %v3991, %v3989
    %v4130 = vpack.c.b16 %v3992, %v3990
    %v4131 = vpack.c.b16 %v3995, %v3993
    %v4132 = vpack.c.b16 %v3996, %v3994
    %v4133 = vpack.c.b16 %v3999, %v3997
    %v4134 = vpack.c.b16 %v4000, %v3998
    %v4135 = vpack.c.b16 %v4003, %v4001
    %v4136 = vpack.c.b16 %v4004, %v4002
    %v4137 = vpack.c.b16 %v4007, %v4005
    %v4138 = vpack.c.b16 %v4008, %v4006
    %v4139 = vpack.c.b16 %v4011, %v4009
    %v4140 = vpack.c.b16 %v4012, %v4010
    %4269 = vmatprep.subr.bf16.mxu0 %v4014
    %4270 = vmatpush1.bf16.msra.mxu0 %v4013
    %4271 = vmatprep.subr.bf16.mxu0 %v4016
    %4272 = vmatpush1.bf16.msra.mxu0 %v4015
    %4273 = vmatprep.subr.bf16.mxu0 %v4018
    %4274 = vmatpush1.bf16.msra.mxu0 %v4017
    %4275 = vmatprep.subr.bf16.mxu0 %v4020
    %4276 = vmatpush1.bf16.msra.mxu0 %v4019
    %4277 = vmatprep.subr.bf16.mxu0 %v4022
    %4278 = vmatpush1.bf16.msra.mxu0 %v4021
    %4279 = vmatprep.subr.bf16.mxu0 %v4024
    %4280 = vmatpush1.bf16.msra.mxu0 %v4023
    %4281 = vmatprep.subr.bf16.mxu0 %v4026
    %4282 = vmatpush1.bf16.msra.mxu0 %v4025
    %4283 = vmatprep.subr.bf16.mxu0 %v4028
    %4284 = vmatpush1.bf16.msra.mxu0 %v4027
    %4285 = vmatprep.subr.bf16.mxu0 %v4030
    %4286 = vmatpush1.bf16.msra.mxu0 %v4029
    %4287 = vmatprep.subr.bf16.mxu0 %v4032
    %4288 = vmatpush1.bf16.msra.mxu0 %v4031
    %4289 = vmatprep.subr.bf16.mxu0 %v4034
    %4290 = vmatpush1.bf16.msra.mxu0 %v4033
    %4291 = vmatprep.subr.bf16.mxu0 %v4036
    %4292 = vmatpush1.bf16.msra.mxu0 %v4035
    %4293 = vmatprep.subr.bf16.mxu0 %v4038
    %4294 = vmatpush1.bf16.msra.mxu0 %v4037
    %4295 = vmatprep.subr.bf16.mxu0 %v4040
    %4296 = vmatpush1.bf16.msra.mxu0 %v4039
    %4297 = vmatprep.subr.bf16.mxu0 %v4042
    %4298 = vmatpush1.bf16.msra.mxu0 %v4041
    %4299 = vmatprep.subr.bf16.mxu0 %v4044
    %4300 = vmatpush1.bf16.msra.mxu0 %v4043
    %4301 = vmatprep.mubr.bf16.mxu0 %v3611
    %4302 = vmatmul.mubr.bf16.gmra.mrb[0].mxu0 %v3610
    %v4303 = vpop.f32.mrb[0].mxu0
    %v4304 = vadd.f32 %v3622, %v4303
    %v4305 = vpop.f32.mrb[0].mxu0
    %v4306 = vadd.f32 %v3626, %v4305
    %v4307 = vpop.f32.mrb[0].mxu0
    %v4308 = vpop.f32.mrb[0].mxu0
    %4309 = vdwg.mxu0
    %4310 = vmatprep.subr.bf16.mxu0 %v4046
    %4311 = vmatpush1.bf16.msra.mxu0 %v4045
    %4312 = vmatprep.subr.bf16.mxu0 %v4048
    %4313 = vmatpush1.bf16.msra.mxu0 %v4047
    %4314 = vmatprep.subr.bf16.mxu0 %v4050
    %4315 = vmatpush1.bf16.msra.mxu0 %v4049
    %4316 = vmatprep.subr.bf16.mxu0 %v4052
    %4317 = vmatpush1.bf16.msra.mxu0 %v4051
    %4318 = vmatprep.subr.bf16.mxu0 %v4054
    %4319 = vmatpush1.bf16.msra.mxu0 %v4053
    %4320 = vmatprep.subr.bf16.mxu0 %v4056
    %4321 = vmatpush1.bf16.msra.mxu0 %v4055
    %4322 = vmatprep.subr.bf16.mxu0 %v4058
    %4323 = vmatpush1.bf16.msra.mxu0 %v4057
    %4324 = vmatprep.subr.bf16.mxu0 %v4060
    %4325 = vmatpush1.bf16.msra.mxu0 %v4059
    %4326 = vmatprep.subr.bf16.mxu0 %v4062
    %4327 = vmatpush1.bf16.msra.mxu0 %v4061
    %4328 = vmatprep.subr.bf16.mxu0 %v4064
    %4329 = vmatpush1.bf16.msra.mxu0 %v4063
    %4330 = vmatprep.subr.bf16.mxu0 %v4066
    %4331 = vmatpush1.bf16.msra.mxu0 %v4065
    %4332 = vmatprep.subr.bf16.mxu0 %v4068
    %4333 = vmatpush1.bf16.msra.mxu0 %v4067
    %4334 = vmatprep.subr.bf16.mxu0 %v4070
    %4335 = vmatpush1.bf16.msra.mxu0 %v4069
    %4336 = vmatprep.subr.bf16.mxu0 %v4072
    %4337 = vmatpush1.bf16.msra.mxu0 %v4071
    %4338 = vmatprep.subr.bf16.mxu0 %v4074
    %4339 = vmatpush1.bf16.msra.mxu0 %v4073
    %4340 = vmatprep.subr.bf16.mxu0 %v4076
    %4341 = vmatpush1.bf16.msra.mxu0 %v4075
    %4342 = vmatprep.mubr.bf16.mxu0 %v3613
    %4343 = vmatmul.mubr.bf16.gmra.mrb[0].mxu0 %v3612
    %v4344 = vpop.f32.mrb[0].mxu0
    %v4345 = vadd.f32 %v4304, %v4344
    %v4346 = vpop.f32.mrb[0].mxu0
    %v4347 = vadd.f32 %v4306, %v4346
    %v4348 = vpop.f32.mrb[0].mxu0
    %v4349 = vpop.f32.mrb[0].mxu0
    %4350 = vdwg.mxu0
    %4351 = vmatprep.subr.bf16.mxu0 %v4078
    %4352 = vmatpush1.bf16.msra.mxu0 %v4077
    %4353 = vmatprep.subr.bf16.mxu0 %v4080
    %4354 = vmatpush1.bf16.msra.mxu0 %v4079
    %4355 = vmatprep.subr.bf16.mxu0 %v4082
    %4356 = vmatpush1.bf16.msra.mxu0 %v4081
    %4357 = vmatprep.subr.bf16.mxu0 %v4084
    %4358 = vmatpush1.bf16.msra.mxu0 %v4083
    %4359 = vmatprep.subr.bf16.mxu0 %v4086
    %4360 = vmatpush1.bf16.msra.mxu0 %v4085
    %4361 = vmatprep.subr.bf16.mxu0 %v4088
    %4362 = vmatpush1.bf16.msra.mxu0 %v4087
    %4363 = vmatprep.subr.bf16.mxu0 %v4090
    %4364 = vmatpush1.bf16.msra.mxu0 %v4089
    %4365 = vmatprep.subr.bf16.mxu0 %v4092
    %4366 = vmatpush1.bf16.msra.mxu0 %v4091
    %4367 = vmatprep.subr.bf16.mxu0 %v4094
    %4368 = vmatpush1.bf16.msra.mxu0 %v4093
    %4369 = vmatprep.subr.bf16.mxu0 %v4096
    %4370 = vmatpush1.bf16.msra.mxu0 %v4095
    %4371 = vmatprep.subr.bf16.mxu0 %v4098
    %4372 = vmatpush1.bf16.msra.mxu0 %v4097
    %4373 = vmatprep.subr.bf16.mxu0 %v4100
    %4374 = vmatpush1.bf16.msra.mxu0 %v4099
    %4375 = vmatprep.subr.bf16.mxu0 %v4102
    %4376 = vmatpush1.bf16.msra.mxu0 %v4101
    %4377 = vmatprep.subr.bf16.mxu0 %v4104
    %4378 = vmatpush1.bf16.msra.mxu0 %v4103
    %4379 = vmatprep.subr.bf16.mxu0 %v4106
    %4380 = vmatpush1.bf16.msra.mxu0 %v4105
    %4381 = vmatprep.subr.bf16.mxu0 %v4108
    %4382 = vmatpush1.bf16.msra.mxu0 %v4107
    %4383 = vmatprep.mubr.bf16.mxu0 %v3615
    %4384 = vmatmul.mubr.bf16.gmra.mrb[0].mxu0 %v3614
    %v4385 = vpop.f32.mrb[0].mxu0
    %v4386 = vadd.f32 %v4345, %v4385
    %v4387 = vpop.f32.mrb[0].mxu0
    %v4388 = vadd.f32 %v4347, %v4387
    %v4389 = vpop.f32.mrb[0].mxu0
    %v4390 = vpop.f32.mrb[0].mxu0
    %4391 = vdwg.mxu0
    %4392 = vmatprep.subr.bf16.mxu0 %v4110
    %4393 = vmatpush1.bf16.msra.mxu0 %v4109
    %4394 = vmatprep.subr.bf16.mxu0 %v4112
    %4395 = vmatpush1.bf16.msra.mxu0 %v4111
    %4396 = vmatprep.subr.bf16.mxu0 %v4114
    %4397 = vmatpush1.bf16.msra.mxu0 %v4113
    %4398 = vmatprep.subr.bf16.mxu0 %v4116
    %4399 = vmatpush1.bf16.msra.mxu0 %v4115
    %4400 = vmatprep.subr.bf16.mxu0 %v4118
    %4401 = vmatpush1.bf16.msra.mxu0 %v4117
    %4402 = vmatprep.subr.bf16.mxu0 %v4120
    %4403 = vmatpush1.bf16.msra.mxu0 %v4119
    %4404 = vmatprep.subr.bf16.mxu0 %v4122
    %4405 = vmatpush1.bf16.msra.mxu0 %v4121
    %4406 = vmatprep.subr.bf16.mxu0 %v4124
    %4407 = vmatpush1.bf16.msra.mxu0 %v4123
    %4408 = vmatprep.subr.bf16.mxu0 %v4126
    %4409 = vmatpush1.bf16.msra.mxu0 %v4125
    %4410 = vmatprep.subr.bf16.mxu0 %v4128
    %4411 = vmatpush1.bf16.msra.mxu0 %v4127
    %4412 = vmatprep.subr.bf16.mxu0 %v4130
    %4413 = vmatpush1.bf16.msra.mxu0 %v4129
    %4414 = vmatprep.subr.bf16.mxu0 %v4132
    %4415 = vmatpush1.bf16.msra.mxu0 %v4131
    %4416 = vmatprep.subr.bf16.mxu0 %v4134
    %4417 = vmatpush1.bf16.msra.mxu0 %v4133
    %4418 = vmatprep.subr.bf16.mxu0 %v4136
    %4419 = vmatpush1.bf16.msra.mxu0 %v4135
    %4420 = vmatprep.subr.bf16.mxu0 %v4138
    %4421 = vmatpush1.bf16.msra.mxu0 %v4137
    %4422 = vmatprep.subr.bf16.mxu0 %v4140
    %4423 = vmatpush1.bf16.msra.mxu0 %v4139
    %4424 = vmatprep.mubr.bf16.mxu0 %v3617
    %4425 = vmatmul.mubr.bf16.gmra.mrb[0].mxu0 %v3616
    %v4426 = vpop.f32.mrb[0].mxu0
    %v4427 = vadd.f32 %v4386, %v4426
    %v4428 = vpop.f32.mrb[0].mxu0
    %v4429 = vadd.f32 %v4388, %v4428
    %v4430 = vpop.f32.mrb[0].mxu0
    %v4431 = vpop.f32.mrb[0].mxu0
    %4432 = vdwg.mxu0
    %v4433 = vmax.f32 %v4427, 0.0
    %v4434 = vmax.f32 %v4429, 0.0
    %v4435 = vsel %vm735, %v4433, 0.0
    %v4436 = vsel %vm735, %v4434, 0.0
    %v4437 = vadd.f32 %v4435, %v4436
    %4438 = vadd.xlane.f32.xlu0 %v4437
    %v4439 = vpop.xlane.xlu0 %4438
    %v4440 = vrcp.pop 256.0
    %v4441 = vmul.f32 %v4439, %v4440
    %v4442 = vsub.f32 %v4433, %v4441
    %v4443 = vsub.f32 %v4434, %v4441
    %v4444 = vmul.f32 %v4442, %v4442
    %v4445 = vmul.f32 %v4443, %v4443
    %v4446 = vsel %vm735, %v4444, 0.0
    %v4447 = vsel %vm735, %v4445, 0.0
    %v4448 = vadd.f32 %v4446, %v4447
    %4449 = vadd.xlane.f32.xlu0 %v4448
    %v4450 = vpop.xlane.xlu0 %4449
    %v4451 = vmul.f32 %v4450, %v4440
    %v4452 = vadd.f32 %v4451, 1e-05
    %v4453 = vrsqrt.pop %v4452
    %v4454 = vmul.f32 %v4442, %v4453
    %v4455 = vmul.f32 %v4443, %v4453
    %v4456 = vld [vmem:[%s33] sm:$0xf]
    %v4457 = vld [vmem:[%s33 + $0x4] sm:$0xf]
    %v4458 = vld [vmem:[%s33 + $0x8] sm:$0xf]
    %v4459 = vld [vmem:[%s33 + $0xc] sm:$0xf]
    %v4460 = vld [vmem:[%s33 + $0x10] sm:$0xf]
    %v4461 = vld [vmem:[%s33 + $0x14] sm:$0xf]
    %v4462 = vld [vmem:[%s33 + $0x18] sm:$0xf]
    %v4463 = vld [vmem:[%s33 + $0x1c] sm:$0xf]
    %v4464 = vld [vmem:[%s33 + $0x20] sm:$0xf]
    %v4465 = vld [vmem:[%s33 + $0x24] sm:$0xf]
    %v4466 = vld [vmem:[%s33 + $0x28] sm:$0xf]
    %v4467 = vld [vmem:[%s33 + $0x2c] sm:$0xf]
    %v4468 = vld [vmem:[%s33 + $0x30] sm:$0xf]
    %v4469 = vld [vmem:[%s33 + $0x34] sm:$0xf]
    %v4470 = vld [vmem:[%s33 + $0x38] sm:$0xf]
    %v4471 = vld [vmem:[%s33 + $0x3c] sm:$0xf]
    %v4472 = vld [vmem:[%s33 + $0x40] sm:$0xf]
    %v4473 = vld [vmem:[%s33 + $0x44] sm:$0xf]
    %v4474 = vld [vmem:[%s33 + $0x48] sm:$0xf]
    %v4475 = vld [vmem:[%s33 + $0x4c] sm:$0xf]
    %v4476 = vld [vmem:[%s33 + $0x50] sm:$0xf]
    %v4477 = vld [vmem:[%s33 + $0x54] sm:$0xf]
    %v4478 = vld [vmem:[%s33 + $0x58] sm:$0xf]
    %v4479 = vld [vmem:[%s33 + $0x5c] sm:$0xf]
    %v4480 = vld [vmem:[%s33 + $0x60] sm:$0xf]
    %v4481 = vld [vmem:[%s33 + $0x64] sm:$0xf]
    %v4482 = vld [vmem:[%s33 + $0x68] sm:$0xf]
    %v4483 = vld [vmem:[%s33 + $0x6c] sm:$0xf]
    %v4484 = vld [vmem:[%s33 + $0x70] sm:$0xf]
    %v4485 = vld [vmem:[%s33 + $0x74] sm:$0xf]
    %v4486 = vld [vmem:[%s33 + $0x78] sm:$0xf]
    %v4487 = vld [vmem:[%s33 + $0x7c] sm:$0xf]
    %v4488 = vld [vmem:[#allocation16] sm:$0x1]
    %v4489 = vpack.c.bf16 %v4454, %v4454
    %v4490 = vpack.c.bf16 %v4455, %v4455
    %v4492 = vlaneseq
    %v4493 = vshrl.u32 %v4492, 7
    %v4494 = vsub.s32 0, %v4493
    %v4495 = vrot.slane %v4488, %v4494
    %v4529 = vunpack.c.l.b16 %v4456
    %v4530 = vunpack.c.l.b16 %v4457
    %v4531 = vunpack.c.l.b16 %v4458
    %v4532 = vunpack.c.l.b16 %v4459
    %v4533 = vunpack.c.l.b16 %v4460
    %v4534 = vunpack.c.l.b16 %v4461
    %v4535 = vunpack.c.l.b16 %v4462
    %v4536 = vunpack.c.l.b16 %v4463
    %v4537 = vunpack.c.l.b16 %v4464
    %v4538 = vunpack.c.l.b16 %v4465
    %v4539 = vunpack.c.l.b16 %v4466
    %v4540 = vunpack.c.l.b16 %v4467
    %v4541 = vunpack.c.l.b16 %v4468
    %v4542 = vunpack.c.l.b16 %v4469
    %v4543 = vunpack.c.l.b16 %v4470
    %v4544 = vunpack.c.l.b16 %v4471
    %v4545 = vunpack.c.l.b16 %v4472
    %v4546 = vunpack.c.l.b16 %v4473
    %v4547 = vunpack.c.l.b16 %v4474
    %v4548 = vunpack.c.l.b16 %v4475
    %v4549 = vunpack.c.l.b16 %v4476
    %v4550 = vunpack.c.l.b16 %v4477
    %v4551 = vunpack.c.l.b16 %v4478
    %v4552 = vunpack.c.l.b16 %v4479
    %v4553 = vunpack.c.l.b16 %v4480
    %v4554 = vunpack.c.l.b16 %v4481
    %v4555 = vunpack.c.l.b16 %v4482
    %v4556 = vunpack.c.l.b16 %v4483
    %v4557 = vunpack.c.l.b16 %v4484
    %v4558 = vunpack.c.l.b16 %v4485
    %v4559 = vunpack.c.l.b16 %v4486
    %v4560 = vunpack.c.l.b16 %v4487
    %v4561 = vpack.c.b16 %v4530, %v4529
    %v4562 = vpack.c.b16 %v4532, %v4531
    %v4563 = vpack.c.b16 %v4534, %v4533
    %v4564 = vpack.c.b16 %v4536, %v4535
    %v4565 = vpack.c.b16 %v4538, %v4537
    %v4566 = vpack.c.b16 %v4540, %v4539
    %v4567 = vpack.c.b16 %v4542, %v4541
    %v4568 = vpack.c.b16 %v4544, %v4543
    %v4569 = vpack.c.b16 %v4546, %v4545
    %v4570 = vpack.c.b16 %v4548, %v4547
    %v4571 = vpack.c.b16 %v4550, %v4549
    %v4572 = vpack.c.b16 %v4552, %v4551
    %v4573 = vpack.c.b16 %v4554, %v4553
    %v4574 = vpack.c.b16 %v4556, %v4555
    %v4575 = vpack.c.b16 %v4558, %v4557
    %v4576 = vpack.c.b16 %v4560, %v4559
    %4593 = vmatprep.subr.bf16.mxu0 0
    %4594 = vmatpush1.bf16.msra.mxu0 %v4561
    %4595 = vmatprep.subr.bf16.mxu0 0
    %4596 = vmatpush1.bf16.msra.mxu0 %v4562
    %4597 = vmatprep.subr.bf16.mxu0 0
    %4598 = vmatpush1.bf16.msra.mxu0 %v4563
    %4599 = vmatprep.subr.bf16.mxu0 0
    %4600 = vmatpush1.bf16.msra.mxu0 %v4564
    %4601 = vmatprep.subr.bf16.mxu0 0
    %4602 = vmatpush1.bf16.msra.mxu0 %v4565
    %4603 = vmatprep.subr.bf16.mxu0 0
    %4604 = vmatpush1.bf16.msra.mxu0 %v4566
    %4605 = vmatprep.subr.bf16.mxu0 0
    %4606 = vmatpush1.bf16.msra.mxu0 %v4567
    %4607 = vmatprep.subr.bf16.mxu0 0
    %4608 = vmatpush1.bf16.msra.mxu0 %v4568
    %4609 = vmatprep.subr.bf16.mxu0 0
    %4610 = vmatpush1.bf16.msra.mxu0 %v4569
    %4611 = vmatprep.subr.bf16.mxu0 0
    %4612 = vmatpush1.bf16.msra.mxu0 %v4570
    %4613 = vmatprep.subr.bf16.mxu0 0
    %4614 = vmatpush1.bf16.msra.mxu0 %v4571
    %4615 = vmatprep.subr.bf16.mxu0 0
    %4616 = vmatpush1.bf16.msra.mxu0 %v4572
    %4617 = vmatprep.subr.bf16.mxu0 0
    %4618 = vmatpush1.bf16.msra.mxu0 %v4573
    %4619 = vmatprep.subr.bf16.mxu0 0
    %4620 = vmatpush1.bf16.msra.mxu0 %v4574
    %4621 = vmatprep.subr.bf16.mxu0 0
    %4622 = vmatpush1.bf16.msra.mxu0 %v4575
    %4623 = vmatprep.subr.bf16.mxu0 0
    %4624 = vmatpush1.bf16.msra.mxu0 %v4576
    %4625 = vmatprep.mubr.bf16.mxu0 %v4490
    %4626 = vmatmul.mubr.bf16.gmra.mrb[0].mxu0 %v4489
    %v4627 = vpop.f32.mrb[0].mxu0
    %v4628 = vadd.f32 %v4495, %v4627
    %v4629 = vpop.f32.mrb[0].mxu0
    %v4630 = vpop.f32.mrb[0].mxu0
    %v4631 = vpop.f32.mrb[0].mxu0
    %4632 = vdwg.mxu0
    %v4633 = vmax.f32 %v4628, 0.0
    %v4634 = vsel %vm863, %v4633, 0.0
    %4635 = vadd.xlane.f32.xlu0 %v4634
    %v4636 = vpop.xlane.xlu0 %4635
    %v4637 = vmul.f32 %v4636, %v867
    %v4638 = vsub.f32 %v4633, %v4637
    %v4639 = vmul.f32 %v4638, %v4638
    %v4640 = vsel %vm863, %v4639, 0.0
    %4641 = vadd.xlane.f32.xlu0 %v4640
    %v4642 = vpop.xlane.xlu0 %4641
    %v4643 = vmul.f32 %v4642, %v867
    %v4644 = vadd.f32 %v4643, 1e-05
    %v4645 = vrsqrt.pop %v4644
    %v4646 = vmul.f32 %v4638, %v4645
    %v4647 = vld [vmem:[#allocation18] sm:$0xf]
    %v4648 = vld [vmem:[#allocation18 + $0x4] sm:$0xf]
    %v4649 = vld [vmem:[#allocation18 + $0x8] sm:$0xf]
    %v4650 = vld [vmem:[#allocation18 + $0xc] sm:$0xf]
    %v4651 = vld [vmem:[#allocation18 + $0x10] sm:$0xf]
    %v4652 = vld [vmem:[#allocation18 + $0x14] sm:$0xf]
    %v4653 = vld [vmem:[#allocation18 + $0x18] sm:$0xf]
    %v4654 = vld [vmem:[#allocation18 + $0x1c] sm:$0xf]
    %v4655 = vld [vmem:[#allocation19] sm:$0x1]
    %v4656 = vpack.c.bf16 %v4646, %v4646
    %v4658 = vlaneseq
    %v4659 = vshrl.u32 %v4658, 7
    %v4660 = vsub.s32 0, %v4659
    %v4661 = vrot.slane %v4655, %v4660
    %v4671 = vunpack.c.l.b16 %v4647
    %v4672 = vunpack.c.l.b16 %v4648
    %v4673 = vunpack.c.l.b16 %v4649
    %v4674 = vunpack.c.l.b16 %v4650
    %v4675 = vunpack.c.l.b16 %v4651
    %v4676 = vunpack.c.l.b16 %v4652
    %v4677 = vunpack.c.l.b16 %v4653
    %v4678 = vunpack.c.l.b16 %v4654
    %v4679 = vpack.c.b16 %v4672, %v4671
    %v4680 = vpack.c.b16 %v4674, %v4673
    %v4681 = vpack.c.b16 %v4676, %v4675
    %v4682 = vpack.c.b16 %v4678, %v4677
    %v4688 = vsel %vm918, %v4656, 0
    %4690 = vmatprep.subr.bf16.mxu0 0
    %4691 = vmatpush1.bf16.msra.mxu0 %v4679
    %4692 = vmatprep.subr.bf16.mxu0 0
    %4693 = vmatpush1.bf16.msra.mxu0 %v4680
    %4694 = vmatprep.subr.bf16.mxu0 0
    %4695 = vmatpush1.bf16.msra.mxu0 %v4681
    %4696 = vmatprep.subr.bf16.mxu0 0
    %4697 = vmatpush1.bf16.msra.mxu0 %v4682
    %4698 = vmatprep.subr.bf16.mxu0 0
    %4699 = vmatpush1.bf16.msra.mxu0 0
    %4700 = vmatprep.subr.bf16.mxu0 0
    %4701 = vmatpush1.bf16.msra.mxu0 0
    %4702 = vmatprep.subr.bf16.mxu0 0
    %4703 = vmatpush1.bf16.msra.mxu0 0
    %4704 = vmatprep.subr.bf16.mxu0 0
    %4705 = vmatpush1.bf16.msra.mxu0 0
    %4706 = vmatprep.subr.bf16.mxu0 0
    %4707 = vmatpush1.bf16.msra.mxu0 0
    %4708 = vmatprep.subr.bf16.mxu0 0
    %4709 = vmatpush1.bf16.msra.mxu0 0
    %4710 = vmatprep.subr.bf16.mxu0 0
    %4711 = vmatpush1.bf16.msra.mxu0 0
    %4712 = vmatprep.subr.bf16.mxu0 0
    %4713 = vmatpush1.bf16.msra.mxu0 0
    %4714 = vmatprep.subr.bf16.mxu0 0
    %4715 = vmatpush1.bf16.msra.mxu0 0
    %4716 = vmatprep.subr.bf16.mxu0 0
    %4717 = vmatpush1.bf16.msra.mxu0 0
    %4718 = vmatprep.subr.bf16.mxu0 0
    %4719 = vmatpush1.bf16.msra.mxu0 0
    %4720 = vmatprep.subr.bf16.mxu0 0
    %4721 = vmatpush1.bf16.msra.mxu0 0
    %4722 = vmatprep.mubr.bf16.mxu0 0
    %4723 = vmatmul.mubr.bf16.gmra.mrb[0].mxu0 %v4688
    %v4724 = vpop.f32.mrb[0].mxu0
    %v4725 = vadd.f32 %v4661, %v4724
    %v4726 = vpop.f32.mrb[0].mxu0
    %v4727 = vpop.f32.mrb[0].mxu0
    %v4728 = vpop.f32.mrb[0].mxu0
    %4729 = vdwg.mxu0
    %v4730 = vld [vmem:[%s7] sm:$0x3]
    %v4731 = vld [vmem:[#allocation21] sm:$0xf]
    %v4732 = vld [vmem:[#allocation21 + $0x4] sm:$0xf]
    %v4733 = vld [vmem:[#allocation21 + $0x8] sm:$0xf]
    %v4734 = vld [vmem:[#allocation21 + $0xc] sm:$0xf]
    %v4735 = vld [vmem:[#allocation21 + $0x10] sm:$0x3]
    %v4736 = vld [vmem:[#allocation22] sm:$0x1]
    %v4737 = vpack.c.bf16 %v4730, %v4730
    %v4739 = vlaneseq
    %v4740 = vshrl.u32 %v4739, 7
    %v4741 = vsub.s32 0, %v4740
    %v4742 = vrot.slane %v4736, %v4741
    %v4749 = vunpack.c.l.b16 %v4731
    %v4750 = vunpack.c.l.b16 %v4732
    %v4751 = vunpack.c.l.b16 %v4733
    %v4752 = vunpack.c.l.b16 %v4734
    %v4753 = vunpack.c.l.b16 %v4735
    %v4754 = vpack.c.b16 %v4750, %v4749
    %v4755 = vpack.c.b16 %v4752, %v4751
    %v4756 = vpack.c.b16 %v4753, %v4753
    %vm4759 = vcmask 293888
    %v4761 = vsel %vm4759, %v4737, 0
    %v4764 = vsel %vm735, %v4756, 0
    %4766 = vmatprep.subr.bf16.mxu0 0
    %4767 = vmatpush1.bf16.msra.mxu0 %v4754
    %4768 = vmatprep.subr.bf16.mxu0 0
    %4769 = vmatpush1.bf16.msra.mxu0 %v4755
    %4770 = vmatprep.subr.bf16.mxu0 0
    %4771 = vmatpush1.bf16.msra.mxu0 %v4764
    %4772 = vmatprep.subr.bf16.mxu0 0
    %4773 = vmatpush1.bf16.msra.mxu0 0
    %4774 = vmatprep.subr.bf16.mxu0 0
    %4775 = vmatpush1.bf16.msra.mxu0 0
    %4776 = vmatprep.subr.bf16.mxu0 0
    %4777 = vmatpush1.bf16.msra.mxu0 0
    %4778 = vmatprep.subr.bf16.mxu0 0
    %4779 = vmatpush1.bf16.msra.mxu0 0
    %4780 = vmatprep.subr.bf16.mxu0 0
    %4781 = vmatpush1.bf16.msra.mxu0 0
    %4782 = vmatprep.subr.bf16.mxu0 0
    %4783 = vmatpush1.bf16.msra.mxu0 0
    %4784 = vmatprep.subr.bf16.mxu0 0
    %4785 = vmatpush1.bf16.msra.mxu0 0
    %4786 = vmatprep.subr.bf16.mxu0 0
    %4787 = vmatpush1.bf16.msra.mxu0 0
    %4788 = vmatprep.subr.bf16.mxu0 0
    %4789 = vmatpush1.bf16.msra.mxu0 0
    %4790 = vmatprep.subr.bf16.mxu0 0
    %4791 = vmatpush1.bf16.msra.mxu0 0
    %4792 = vmatprep.subr.bf16.mxu0 0
    %4793 = vmatpush1.bf16.msra.mxu0 0
    %4794 = vmatprep.subr.bf16.mxu0 0
    %4795 = vmatpush1.bf16.msra.mxu0 0
    %4796 = vmatprep.subr.bf16.mxu0 0
    %4797 = vmatpush1.bf16.msra.mxu0 0
    %4798 = vmatprep.mubr.bf16.mxu0 0
    %4799 = vmatmul.mubr.bf16.gmra.mrb[0].mxu0 %v4761
    %v4800 = vpop.f32.mrb[0].mxu0
    %v4801 = vadd.f32 %v4742, %v4800
    %v4802 = vpop.f32.mrb[0].mxu0
    %v4803 = vpop.f32.mrb[0].mxu0
    %v4804 = vpop.f32.mrb[0].mxu0
    %4805 = vdwg.mxu0
    %v4806 = vmax.f32 %v4801, 0.0
    %v4807 = vsel %vm735, %v4806, 0.0
    %4808 = vadd.xlane.f32.xlu0 %v4807
    %v4809 = vpop.xlane.xlu0 %4808
    %v4810 = vmul.f32 %v4809, %v739
    %v4811 = vsub.f32 %v4806, %v4810
    %v4812 = vmul.f32 %v4811, %v4811
    %v4813 = vsel %vm735, %v4812, 0.0
    %4814 = vadd.xlane.f32.xlu0 %v4813
    %v4815 = vpop.xlane.xlu0 %4814
    %v4816 = vmul.f32 %v4815, %v739
    %v4817 = vadd.f32 %v4816, 1e-05
    %v4818 = vrsqrt.pop %v4817
    %v4819 = vmul.f32 %v4811, %v4818
    %v4820 = vld [vmem:[%s45] sm:$0xf]
    %v4821 = vld [vmem:[%s45 + $0x4] sm:$0xf]
    %v4822 = vld [vmem:[%s45 + $0x8] sm:$0xf]
    %v4823 = vld [vmem:[%s45 + $0xc] sm:$0xf]
    %v4824 = vld [vmem:[%s45 + $0x10] sm:$0xf]
    %v4825 = vld [vmem:[%s45 + $0x14] sm:$0xf]
    %v4826 = vld [vmem:[%s45 + $0x18] sm:$0xf]
    %v4827 = vld [vmem:[%s45 + $0x1c] sm:$0xf]
    %v4828 = vld [vmem:[%s45 + $0x20] sm:$0xf]
    %v4829 = vld [vmem:[%s45 + $0x24] sm:$0xf]
    %v4830 = vld [vmem:[%s45 + $0x28] sm:$0xf]
    %v4831 = vld [vmem:[%s45 + $0x2c] sm:$0xf]
    %v4832 = vld [vmem:[%s45 + $0x30] sm:$0xf]
    %v4833 = vld [vmem:[%s45 + $0x34] sm:$0xf]
    %v4834 = vld [vmem:[%s45 + $0x38] sm:$0xf]
    %v4835 = vld [vmem:[%s45 + $0x3c] sm:$0xf]
    %v4836 = vld [vmem:[#allocation24] sm:$0x1]
    %v4837 = vpack.c.bf16 %v4819, %v4819
    %v4839 = vlaneseq
    %v4840 = vshrl.u32 %v4839, 7
    %v4841 = vsub.s32 0, %v4840
    %v4842 = vrot.slane %v4836, %v4841
    %v4860 = vunpack.c.l.b16 %v4820
    %v4861 = vunpack.c.l.b16 %v4821
    %v4862 = vunpack.c.l.b16 %v4822
    %v4863 = vunpack.c.l.b16 %v4823
    %v4864 = vunpack.c.l.b16 %v4824
    %v4865 = vunpack.c.l.b16 %v4825
    %v4866 = vunpack.c.l.b16 %v4826
    %v4867 = vunpack.c.l.b16 %v4827
    %v4868 = vunpack.c.l.b16 %v4828
    %v4869 = vunpack.c.l.b16 %v4829
    %v4870 = vunpack.c.l.b16 %v4830
    %v4871 = vunpack.c.l.b16 %v4831
    %v4872 = vunpack.c.l.b16 %v4832
    %v4873 = vunpack.c.l.b16 %v4833
    %v4874 = vunpack.c.l.b16 %v4834
    %v4875 = vunpack.c.l.b16 %v4835
    %v4876 = vpack.c.b16 %v4861, %v4860
    %v4877 = vpack.c.b16 %v4863, %v4862
    %v4878 = vpack.c.b16 %v4865, %v4864
    %v4879 = vpack.c.b16 %v4867, %v4866
    %v4880 = vpack.c.b16 %v4869, %v4868
    %v4881 = vpack.c.b16 %v4871, %v4870
    %v4882 = vpack.c.b16 %v4873, %v4872
    %v4883 = vpack.c.b16 %v4875, %v4874
    %4892 = vmatprep.subr.bf16.mxu0 0
    %4893 = vmatpush1.bf16.msra.mxu0 %v4876
    %4894 = vmatprep.subr.bf16.mxu0 0
    %4895 = vmatpush1.bf16.msra.mxu0 %v4877
    %4896 = vmatprep.subr.bf16.mxu0 0
    %4897 = vmatpush1.bf16.msra.mxu0 %v4878
    %4898 = vmatprep.subr.bf16.mxu0 0
    %4899 = vmatpush1.bf16.msra.mxu0 %v4879
    %4900 = vmatprep.subr.bf16.mxu0 0
    %4901 = vmatpush1.bf16.msra.mxu0 %v4880
    %4902 = vmatprep.subr.bf16.mxu0 0
    %4903 = vmatpush1.bf16.msra.mxu0 %v4881
    %4904 = vmatprep.subr.bf16.mxu0 0
    %4905 = vmatpush1.bf16.msra.mxu0 %v4882
    %4906 = vmatprep.subr.bf16.mxu0 0
    %4907 = vmatpush1.bf16.msra.mxu0 %v4883
    %4908 = vmatprep.subr.bf16.mxu0 0
    %4909 = vmatpush1.bf16.msra.mxu0 0
    %4910 = vmatprep.subr.bf16.mxu0 0
    %4911 = vmatpush1.bf16.msra.mxu0 0
    %4912 = vmatprep.subr.bf16.mxu0 0
    %4913 = vmatpush1.bf16.msra.mxu0 0
    %4914 = vmatprep.subr.bf16.mxu0 0
    %4915 = vmatpush1.bf16.msra.mxu0 0
    %4916 = vmatprep.subr.bf16.mxu0 0
    %4917 = vmatpush1.bf16.msra.mxu0 0
    %4918 = vmatprep.subr.bf16.mxu0 0
    %4919 = vmatpush1.bf16.msra.mxu0 0
    %4920 = vmatprep.subr.bf16.mxu0 0
    %4921 = vmatpush1.bf16.msra.mxu0 0
    %4922 = vmatprep.subr.bf16.mxu0 0
    %4923 = vmatpush1.bf16.msra.mxu0 0
    %4924 = vmatprep.mubr.bf16.mxu0 0
    %4925 = vmatmul.mubr.bf16.gmra.mrb[0].mxu0 %v4837
    %v4926 = vpop.f32.mrb[0].mxu0
    %v4927 = vadd.f32 %v4842, %v4926
    %v4928 = vpop.f32.mrb[0].mxu0
    %v4929 = vpop.f32.mrb[0].mxu0
    %v4930 = vpop.f32.mrb[0].mxu0
    %4931 = vdwg.mxu0
    %v4932 = vmax.f32 %v4927, 0.0
    %v4933 = vsel %vm863, %v4932, 0.0
    %4934 = vadd.xlane.f32.xlu0 %v4933
    %v4935 = vpop.xlane.xlu0 %4934
    %v4936 = vmul.f32 %v4935, %v867
    %v4937 = vsub.f32 %v4932, %v4936
    %v4938 = vmul.f32 %v4937, %v4937
    %v4939 = vsel %vm863, %v4938, 0.0
    %4940 = vadd.xlane.f32.xlu0 %v4939
    %v4941 = vpop.xlane.xlu0 %4940
    %v4942 = vmul.f32 %v4941, %v867
    %v4943 = vadd.f32 %v4942, 1e-05
    %v4944 = vrsqrt.pop %v4943
    %v4945 = vmul.f32 %v4937, %v4944
    %v4946 = vld [vmem:[#allocation25] sm:$0xf]
    %v4947 = vld [vmem:[#allocation25 + $0x4] sm:$0xf]
    %v4948 = vld [vmem:[#allocation25 + $0x8] sm:$0xf]
    %v4949 = vld [vmem:[#allocation25 + $0xc] sm:$0xf]
    %v4950 = vld [vmem:[#allocation25 + $0x10] sm:$0xf]
    %v4951 = vld [vmem:[#allocation25 + $0x14] sm:$0xf]
    %v4952 = vld [vmem:[#allocation25 + $0x18] sm:$0xf]
    %v4953 = vld [vmem:[#allocation25 + $0x1c] sm:$0xf]
    %v4954 = vld [vmem:[#allocation27] sm:$0x1]
    %v4955 = vpack.c.bf16 %v4945, %v4945
    %v4957 = vlaneseq
    %v4958 = vshrl.u32 %v4957, 7
    %v4959 = vsub.s32 0, %v4958
    %v4960 = vrot.slane %v4954, %v4959
    %v4970 = vunpack.c.l.b16 %v4946
    %v4971 = vunpack.c.l.b16 %v4947
    %v4972 = vunpack.c.l.b16 %v4948
    %v4973 = vunpack.c.l.b16 %v4949
    %v4974 = vunpack.c.l.b16 %v4950
    %v4975 = vunpack.c.l.b16 %v4951
    %v4976 = vunpack.c.l.b16 %v4952
    %v4977 = vunpack.c.l.b16 %v4953
    %v4978 = vpack.c.b16 %v4971, %v4970
    %v4979 = vpack.c.b16 %v4973, %v4972
    %v4980 = vpack.c.b16 %v4975, %v4974
    %v4981 = vpack.c.b16 %v4977, %v4976
    %v4987 = vsel %vm918, %v4955, 0
    %4989 = vmatprep.subr.bf16.mxu0 0
    %4990 = vmatpush1.bf16.msra.mxu0 %v4978
    %4991 = vmatprep.subr.bf16.mxu0 0
    %4992 = vmatpush1.bf16.msra.mxu0 %v4979
    %4993 = vmatprep.subr.bf16.mxu0 0
    %4994 = vmatpush1.bf16.msra.mxu0 %v4980
    %4995 = vmatprep.subr.bf16.mxu0 0
    %4996 = vmatpush1.bf16.msra.mxu0 %v4981
    %4997 = vmatprep.subr.bf16.mxu0 0
    %4998 = vmatpush1.bf16.msra.mxu0 0
    %4999 = vmatprep.subr.bf16.mxu0 0
    %5000 = vmatpush1.bf16.msra.mxu0 0
    %5001 = vmatprep.subr.bf16.mxu0 0
    %5002 = vmatpush1.bf16.msra.mxu0 0
    %5003 = vmatprep.subr.bf16.mxu0 0
    %5004 = vmatpush1.bf16.msra.mxu0 0
    %5005 = vmatprep.subr.bf16.mxu0 0
    %5006 = vmatpush1.bf16.msra.mxu0 0
    %5007 = vmatprep.subr.bf16.mxu0 0
    %5008 = vmatpush1.bf16.msra.mxu0 0
    %5009 = vmatprep.subr.bf16.mxu0 0
    %5010 = vmatpush1.bf16.msra.mxu0 0
    %5011 = vmatprep.subr.bf16.mxu0 0
    %5012 = vmatpush1.bf16.msra.mxu0 0
    %5013 = vmatprep.subr.bf16.mxu0 0
    %5014 = vmatpush1.bf16.msra.mxu0 0
    %5015 = vmatprep.subr.bf16.mxu0 0
    %5016 = vmatpush1.bf16.msra.mxu0 0
    %5017 = vmatprep.subr.bf16.mxu0 0
    %5018 = vmatpush1.bf16.msra.mxu0 0
    %5019 = vmatprep.subr.bf16.mxu0 0
    %5020 = vmatpush1.bf16.msra.mxu0 0
    %5021 = vmatprep.mubr.bf16.mxu0 0
    %5022 = vmatmul.mubr.bf16.gmra.mrb[0].mxu0 %v4987
    %v5023 = vpop.f32.mrb[0].mxu0
    %v5024 = vadd.f32 %v4960, %v5023
    %v5025 = vpop.f32.mrb[0].mxu0
    %v5026 = vpop.f32.mrb[0].mxu0
    %v5027 = vpop.f32.mrb[0].mxu0
    %5028 = vdwg.mxu0
    %v5029 = vld [vmem:[%s9] sm:$0xff]
    %v5030 = vld [vmem:[%s9 + $0x8] sm:$0x3]
    %v5031 = vld [vmem:[#allocation28] sm:$0xff]
    %v5032 = vld [vmem:[#allocation28 + $0x8] sm:$0xff]
    %v5033 = vld [vmem:[#allocation28 + $0x10] sm:$0xff]
    %v5034 = vld [vmem:[#allocation28 + $0x18] sm:$0xff]
    %v5035 = vld [vmem:[#allocation28 + $0x20] sm:$0xff]
    %v5036 = vld [vmem:[#allocation28 + $0x28] sm:$0xff]
    %v5037 = vld [vmem:[#allocation28 + $0x30] sm:$0xff]
    %v5038 = vld [vmem:[#allocation28 + $0x38] sm:$0xff]
    %v5039 = vld [vmem:[#allocation28 + $0x40] sm:$0xff]
    %v5040 = vld [vmem:[#allocation28 + $0x48] sm:$0xff]
    %v5041 = vld [vmem:[#allocation28 + $0x50] sm:$0xff]
    %v5042 = vld [vmem:[#allocation28 + $0x58] sm:$0xff]
    %v5043 = vld [vmem:[#allocation28 + $0x60] sm:$0xff]
    %v5044 = vld [vmem:[#allocation28 + $0x68] sm:$0xff]
    %v5045 = vld [vmem:[#allocation28 + $0x70] sm:$0xff]
    %v5046 = vld [vmem:[#allocation28 + $0x78] sm:$0xff]
    %v5047 = vld [vmem:[#allocation28 + $0x80] sm:$0xff]
    %v5048 = vld [vmem:[#allocation28 + $0x88] sm:$0xff]
    %v5049 = vld [vmem:[#allocation28 + $0x90] sm:$0xff]
    %v5050 = vld [vmem:[#allocation28 + $0x98] sm:$0xff]
    %v5051 = vld [vmem:[#allocation28 + $0xa0] sm:$0xff]
    %v5052 = vld [vmem:[#allocation28 + $0xa8] sm:$0xff]
    %v5053 = vld [vmem:[#allocation28 + $0xb0] sm:$0xff]
    %v5054 = vld [vmem:[#allocation28 + $0xb8] sm:$0xff]
    %v5055 = vld [vmem:[#allocation28 + $0xc0] sm:$0xff]
    %v5056 = vld [vmem:[#allocation28 + $0xc8] sm:$0xff]
    %v5057 = vld [vmem:[#allocation28 + $0xd0] sm:$0xff]
    %v5058 = vld [vmem:[#allocation28 + $0xd8] sm:$0xff]
    %v5059 = vld [vmem:[#allocation28 + $0xe0] sm:$0xff]
    %v5060 = vld [vmem:[#allocation28 + $0xe8] sm:$0xff]
    %v5061 = vld [vmem:[#allocation28 + $0xf0] sm:$0xff]
    %v5062 = vld [vmem:[#allocation28 + $0xf8] sm:$0xff]
    %v5063 = vld [vmem:[#allocation28 + $0x100] sm:$0xff]
    %v5064 = vld [vmem:[#allocation28 + $0x108] sm:$0xff]
    %v5065 = vld [vmem:[#allocation28 + $0x110] sm:$0xff]
    %v5066 = vld [vmem:[#allocation28 + $0x118] sm:$0xff]
    %v5067 = vld [vmem:[#allocation28 + $0x120] sm:$0xff]
    %v5068 = vld [vmem:[#allocation28 + $0x128] sm:$0xff]
    %v5069 = vld [vmem:[#allocation28 + $0x130] sm:$0xff]
    %v5070 = vld [vmem:[#allocation28 + $0x138] sm:$0xff]
    %v5071 = vld [vmem:[#allocation28 + $0x140] sm:$0xff]
    %v5072 = vld [vmem:[#allocation28 + $0x148] sm:$0xff]
    %v5073 = vld [vmem:[#allocation28 + $0x150] sm:$0xff]
    %v5074 = vld [vmem:[#allocation28 + $0x158] sm:$0xff]
    %v5075 = vld [vmem:[#allocation28 + $0x160] sm:$0xff]
    %v5076 = vld [vmem:[#allocation28 + $0x168] sm:$0xff]
    %v5077 = vld [vmem:[#allocation28 + $0x170] sm:$0xff]
    %v5078 = vld [vmem:[#allocation28 + $0x178] sm:$0xff]
    %v5079 = vld [vmem:[#allocation28 + $0x180] sm:$0xff]
    %v5080 = vld [vmem:[#allocation28 + $0x188] sm:$0xff]
    %v5081 = vld [vmem:[#allocation28 + $0x190] sm:$0xff]
    %v5082 = vld [vmem:[#allocation28 + $0x198] sm:$0xff]
    %v5083 = vld [vmem:[#allocation28 + $0x1a0] sm:$0xff]
    %v5084 = vld [vmem:[#allocation28 + $0x1a8] sm:$0xff]
    %v5085 = vld [vmem:[#allocation28 + $0x1b0] sm:$0xff]
    %v5086 = vld [vmem:[#allocation28 + $0x1b8] sm:$0xff]
    %v5087 = vld [vmem:[#allocation28 + $0x1c0] sm:$0xff]
    %v5088 = vld [vmem:[#allocation28 + $0x1c8] sm:$0xff]
    %v5089 = vld [vmem:[#allocation28 + $0x1d0] sm:$0xff]
    %v5090 = vld [vmem:[#allocation28 + $0x1d8] sm:$0xff]
    %v5091 = vld [vmem:[#allocation28 + $0x1e0] sm:$0xff]
    %v5092 = vld [vmem:[#allocation28 + $0x1e8] sm:$0xff]
    %v5093 = vld [vmem:[#allocation28 + $0x1f0] sm:$0xff]
    %v5094 = vld [vmem:[#allocation28 + $0x1f8] sm:$0xff]
    %v5095 = vld [vmem:[#allocation28 + $0x200] sm:$0xff]
    %v5096 = vld [vmem:[#allocation28 + $0x208] sm:$0xff]
    %v5097 = vld [vmem:[#allocation28 + $0x210] sm:$0xff]
    %v5098 = vld [vmem:[#allocation28 + $0x218] sm:$0xff]
    %v5099 = vld [vmem:[#allocation28 + $0x220] sm:$0xff]
    %v5100 = vld [vmem:[#allocation28 + $0x228] sm:$0xff]
    %v5101 = vld [vmem:[#allocation28 + $0x230] sm:$0xff]
    %v5102 = vld [vmem:[#allocation28 + $0x238] sm:$0xff]
    %v5103 = vld [vmem:[#allocation28 + $0x240] sm:$0xff]
    %v5104 = vld [vmem:[#allocation28 + $0x248] sm:$0xff]
    %v5105 = vld [vmem:[#allocation28 + $0x250] sm:$0xff]
    %v5106 = vld [vmem:[#allocation28 + $0x258] sm:$0xff]
    %v5107 = vld [vmem:[#allocation28 + $0x260] sm:$0xff]
    %v5108 = vld [vmem:[#allocation28 + $0x268] sm:$0xff]
    %v5109 = vld [vmem:[#allocation28 + $0x270] sm:$0xff]
    %v5110 = vld [vmem:[#allocation28 + $0x278] sm:$0xff]
    %v5111 = vld [vmem:[#allocation28 + $0x280] sm:$0xff]
    %v5112 = vld [vmem:[#allocation28 + $0x288] sm:$0xff]
    %v5113 = vld [vmem:[#allocation28 + $0x290] sm:$0xff]
    %v5114 = vld [vmem:[#allocation28 + $0x298] sm:$0xff]
    %v5115 = vld [vmem:[#allocation28 + $0x2a0] sm:$0xff]
    %v5116 = vld [vmem:[#allocation28 + $0x2a8] sm:$0xff]
    %v5117 = vld [vmem:[#allocation28 + $0x2b0] sm:$0xff]
    %v5118 = vld [vmem:[#allocation28 + $0x2b8] sm:$0xff]
    %v5119 = vld [vmem:[#allocation28 + $0x2c0] sm:$0xff]
    %v5120 = vld [vmem:[#allocation28 + $0x2c8] sm:$0xff]
    %v5121 = vld [vmem:[#allocation28 + $0x2d0] sm:$0xff]
    %v5122 = vld [vmem:[#allocation28 + $0x2d8] sm:$0xff]
    %v5123 = vld [vmem:[#allocation28 + $0x2e0] sm:$0xff]
    %v5124 = vld [vmem:[#allocation28 + $0x2e8] sm:$0xff]
    %v5125 = vld [vmem:[#allocation28 + $0x2f0] sm:$0xff]
    %v5126 = vld [vmem:[#allocation28 + $0x2f8] sm:$0xff]
    %v5127 = vld [vmem:[#allocation28 + $0x300] sm:$0xff]
    %v5128 = vld [vmem:[#allocation28 + $0x308] sm:$0xff]
    %v5129 = vld [vmem:[#allocation28 + $0x310] sm:$0xff]
    %v5130 = vld [vmem:[#allocation28 + $0x318] sm:$0xff]
    %v5131 = vld [vmem:[#allocation28 + $0x320] sm:$0xff]
    %v5132 = vld [vmem:[#allocation28 + $0x328] sm:$0xff]
    %v5133 = vld [vmem:[#allocation28 + $0x330] sm:$0xff]
    %v5134 = vld [vmem:[#allocation28 + $0x338] sm:$0xff]
    %v5135 = vld [vmem:[#allocation28 + $0x340] sm:$0xff]
    %v5136 = vld [vmem:[#allocation28 + $0x348] sm:$0xff]
    %v5137 = vld [vmem:[#allocation28 + $0x350] sm:$0xff]
    %v5138 = vld [vmem:[#allocation28 + $0x358] sm:$0xff]
    %v5139 = vld [vmem:[#allocation28 + $0x360] sm:$0xff]
    %v5140 = vld [vmem:[#allocation28 + $0x368] sm:$0xff]
    %v5141 = vld [vmem:[#allocation28 + $0x370] sm:$0xff]
    %v5142 = vld [vmem:[#allocation28 + $0x378] sm:$0xff]
    %v5143 = vld [vmem:[#allocation28 + $0x380] sm:$0xff]
    %v5144 = vld [vmem:[#allocation28 + $0x388] sm:$0xff]
    %v5145 = vld [vmem:[#allocation28 + $0x390] sm:$0xff]
    %v5146 = vld [vmem:[#allocation28 + $0x398] sm:$0xff]
    %v5147 = vld [vmem:[#allocation28 + $0x3a0] sm:$0xff]
    %v5148 = vld [vmem:[#allocation28 + $0x3a8] sm:$0xff]
    %v5149 = vld [vmem:[#allocation28 + $0x3b0] sm:$0xff]
    %v5150 = vld [vmem:[#allocation28 + $0x3b8] sm:$0xff]
    %v5151 = vld [vmem:[#allocation28 + $0x3c0] sm:$0xff]
    %v5152 = vld [vmem:[#allocation28 + $0x3c8] sm:$0xff]
    %v5153 = vld [vmem:[#allocation28 + $0x3d0] sm:$0xff]
    %v5154 = vld [vmem:[#allocation28 + $0x3d8] sm:$0xff]
    %v5155 = vld [vmem:[#allocation28 + $0x3e0] sm:$0xff]
    %v5156 = vld [vmem:[#allocation28 + $0x3e8] sm:$0xff]
    %v5157 = vld [vmem:[#allocation28 + $0x3f0] sm:$0xff]
    %v5158 = vld [vmem:[#allocation28 + $0x3f8] sm:$0xff]
    %v5159 = vld [vmem:[#allocation28 + $0x400] sm:$0xff]
    %v5160 = vld [vmem:[#allocation28 + $0x408] sm:$0xff]
    %v5161 = vld [vmem:[#allocation28 + $0x410] sm:$0xff]
    %v5162 = vld [vmem:[#allocation28 + $0x418] sm:$0xff]
    %v5163 = vld [vmem:[#allocation28 + $0x420] sm:$0xff]
    %v5164 = vld [vmem:[#allocation28 + $0x428] sm:$0xff]
    %v5165 = vld [vmem:[#allocation28 + $0x430] sm:$0xff]
    %v5166 = vld [vmem:[#allocation28 + $0x438] sm:$0xff]
    %v5167 = vld [vmem:[#allocation28 + $0x440] sm:$0xff]
    %v5168 = vld [vmem:[#allocation28 + $0x448] sm:$0xff]
    %v5169 = vld [vmem:[#allocation28 + $0x450] sm:$0xff]
    %v5170 = vld [vmem:[#allocation28 + $0x458] sm:$0xff]
    %v5171 = vld [vmem:[#allocation28 + $0x460] sm:$0xff]
    %v5172 = vld [vmem:[#allocation28 + $0x468] sm:$0xff]
    %v5173 = vld [vmem:[#allocation28 + $0x470] sm:$0xff]
    %v5174 = vld [vmem:[#allocation28 + $0x478] sm:$0xff]
    %v5175 = vld [vmem:[#allocation28 + $0x480] sm:$0xff]
    %v5176 = vld [vmem:[#allocation28 + $0x488] sm:$0xff]
    %v5177 = vld [vmem:[#allocation28 + $0x490] sm:$0xff]
    %v5178 = vld [vmem:[#allocation28 + $0x498] sm:$0xff]
    %v5179 = vld [vmem:[#allocation28 + $0x4a0] sm:$0xff]
    %v5180 = vld [vmem:[#allocation28 + $0x4a8] sm:$0xff]
    %v5181 = vld [vmem:[#allocation28 + $0x4b0] sm:$0xff]
    %v5182 = vld [vmem:[#allocation28 + $0x4b8] sm:$0xff]
    %v5183 = vld [vmem:[#allocation28 + $0x4c0] sm:$0xff]
    %v5184 = vld [vmem:[#allocation28 + $0x4c8] sm:$0xff]
    %v5185 = vld [vmem:[#allocation28 + $0x4d0] sm:$0xff]
    %v5186 = vld [vmem:[#allocation28 + $0x4d8] sm:$0xff]
    %v5187 = vld [vmem:[#allocation28 + $0x4e0] sm:$0xff]
    %v5188 = vld [vmem:[#allocation28 + $0x4e8] sm:$0xff]
    %v5189 = vld [vmem:[#allocation28 + $0x4f0] sm:$0xff]
    %v5190 = vld [vmem:[#allocation28 + $0x4f8] sm:$0xff]
    %v5191 = vld [vmem:[#allocation28 + $0x500] sm:$0xff]
    %v5192 = vld [vmem:[#allocation28 + $0x508] sm:$0xff]
    %v5193 = vld [vmem:[#allocation28 + $0x510] sm:$0xff]
    %v5194 = vld [vmem:[#allocation28 + $0x518] sm:$0xff]
    %v5195 = vld [vmem:[#allocation28 + $0x520] sm:$0xff]
    %v5196 = vld [vmem:[#allocation28 + $0x528] sm:$0xff]
    %v5197 = vld [vmem:[#allocation28 + $0x530] sm:$0xff]
    %v5198 = vld [vmem:[#allocation28 + $0x538] sm:$0xff]
    %v5199 = vld [vmem:[#allocation28 + $0x540] sm:$0xff]
    %v5200 = vld [vmem:[#allocation28 + $0x548] sm:$0xff]
    %v5201 = vld [vmem:[#allocation28 + $0x550] sm:$0xff]
    %v5202 = vld [vmem:[#allocation28 + $0x558] sm:$0xff]
    %v5203 = vld [vmem:[#allocation28 + $0x560] sm:$0xff]
    %v5204 = vld [vmem:[#allocation28 + $0x568] sm:$0xff]
    %v5205 = vld [vmem:[#allocation28 + $0x570] sm:$0xff]
    %v5206 = vld [vmem:[#allocation28 + $0x578] sm:$0xff]
    %v5207 = vld [vmem:[#allocation28 + $0x580] sm:$0xff]
    %v5208 = vld [vmem:[#allocation28 + $0x588] sm:$0xff]
    %v5209 = vld [vmem:[#allocation28 + $0x590] sm:$0xff]
    %v5210 = vld [vmem:[#allocation28 + $0x598] sm:$0xff]
    %v5211 = vld [vmem:[#allocation28 + $0x5a0] sm:$0xff]
    %v5212 = vld [vmem:[#allocation28 + $0x5a8] sm:$0xff]
    %v5213 = vld [vmem:[#allocation28 + $0x5b0] sm:$0xff]
    %v5214 = vld [vmem:[#allocation28 + $0x5b8] sm:$0xff]
    %v5215 = vld [vmem:[#allocation28 + $0x5c0] sm:$0xff]
    %v5216 = vld [vmem:[#allocation28 + $0x5c8] sm:$0xff]
    %v5217 = vld [vmem:[#allocation28 + $0x5d0] sm:$0xff]
    %v5218 = vld [vmem:[#allocation28 + $0x5d8] sm:$0xff]
    %v5219 = vld [vmem:[#allocation28 + $0x5e0] sm:$0xff]
    %v5220 = vld [vmem:[#allocation28 + $0x5e8] sm:$0xff]
    %v5221 = vld [vmem:[#allocation28 + $0x5f0] sm:$0xff]
    %v5222 = vld [vmem:[#allocation28 + $0x5f8] sm:$0xff]
    %v5223 = vld [vmem:[#allocation28 + $0x600] sm:$0xff]
    %v5224 = vld [vmem:[#allocation28 + $0x608] sm:$0xff]
    %v5225 = vld [vmem:[#allocation28 + $0x610] sm:$0xff]
    %v5226 = vld [vmem:[#allocation28 + $0x618] sm:$0xff]
    %v5227 = vld [vmem:[#allocation28 + $0x620] sm:$0xff]
    %v5228 = vld [vmem:[#allocation28 + $0x628] sm:$0xff]
    %v5229 = vld [vmem:[#allocation28 + $0x630] sm:$0xff]
    %v5230 = vld [vmem:[#allocation28 + $0x638] sm:$0xff]
    %v5231 = vld [vmem:[#allocation28 + $0x640] sm:$0xff]
    %v5232 = vld [vmem:[#allocation28 + $0x648] sm:$0xff]
    %v5233 = vld [vmem:[#allocation28 + $0x650] sm:$0xff]
    %v5234 = vld [vmem:[#allocation28 + $0x658] sm:$0xff]
    %v5235 = vld [vmem:[#allocation28 + $0x660] sm:$0xff]
    %v5236 = vld [vmem:[#allocation28 + $0x668] sm:$0xff]
    %v5237 = vld [vmem:[#allocation28 + $0x670] sm:$0xff]
    %v5238 = vld [vmem:[#allocation28 + $0x678] sm:$0xff]
    %v5239 = vld [vmem:[#allocation28 + $0x680] sm:$0xff]
    %v5240 = vld [vmem:[#allocation28 + $0x688] sm:$0xff]
    %v5241 = vld [vmem:[#allocation28 + $0x690] sm:$0xff]
    %v5242 = vld [vmem:[#allocation28 + $0x698] sm:$0xff]
    %v5243 = vld [vmem:[#allocation28 + $0x6a0] sm:$0xff]
    %v5244 = vld [vmem:[#allocation28 + $0x6a8] sm:$0xff]
    %v5245 = vld [vmem:[#allocation28 + $0x6b0] sm:$0xff]
    %v5246 = vld [vmem:[#allocation28 + $0x6b8] sm:$0xff]
    %v5247 = vld [vmem:[#allocation28 + $0x6c0] sm:$0xff]
    %v5248 = vld [vmem:[#allocation28 + $0x6c8] sm:$0xff]
    %v5249 = vld [vmem:[#allocation28 + $0x6d0] sm:$0xff]
    %v5250 = vld [vmem:[#allocation28 + $0x6d8] sm:$0xff]
    %v5251 = vld [vmem:[#allocation28 + $0x6e0] sm:$0xff]
    %v5252 = vld [vmem:[#allocation28 + $0x6e8] sm:$0xff]
    %v5253 = vld [vmem:[#allocation28 + $0x6f0] sm:$0xff]
    %v5254 = vld [vmem:[#allocation28 + $0x6f8] sm:$0xff]
    %v5255 = vld [vmem:[#allocation28 + $0x700] sm:$0xff]
    %v5256 = vld [vmem:[#allocation28 + $0x708] sm:$0xff]
    %v5257 = vld [vmem:[#allocation28 + $0x710] sm:$0xff]
    %v5258 = vld [vmem:[#allocation28 + $0x718] sm:$0xff]
    %v5259 = vld [vmem:[#allocation28 + $0x720] sm:$0xff]
    %v5260 = vld [vmem:[#allocation28 + $0x728] sm:$0xff]
    %v5261 = vld [vmem:[#allocation28 + $0x730] sm:$0xff]
    %v5262 = vld [vmem:[#allocation28 + $0x738] sm:$0xff]
    %v5263 = vld [vmem:[#allocation28 + $0x740] sm:$0xff]
    %v5264 = vld [vmem:[#allocation28 + $0x748] sm:$0xff]
    %v5265 = vld [vmem:[#allocation28 + $0x750] sm:$0xff]
    %v5266 = vld [vmem:[#allocation28 + $0x758] sm:$0xff]
    %v5267 = vld [vmem:[#allocation28 + $0x760] sm:$0xff]
    %v5268 = vld [vmem:[#allocation28 + $0x768] sm:$0xff]
    %v5269 = vld [vmem:[#allocation28 + $0x770] sm:$0xff]
    %v5270 = vld [vmem:[#allocation28 + $0x778] sm:$0xff]
    %v5271 = vld [vmem:[#allocation28 + $0x780] sm:$0xff]
    %v5272 = vld [vmem:[#allocation28 + $0x788] sm:$0xff]
    %v5273 = vld [vmem:[#allocation28 + $0x790] sm:$0xff]
    %v5274 = vld [vmem:[#allocation28 + $0x798] sm:$0xff]
    %v5275 = vld [vmem:[#allocation28 + $0x7a0] sm:$0xff]
    %v5276 = vld [vmem:[#allocation28 + $0x7a8] sm:$0xff]
    %v5277 = vld [vmem:[#allocation28 + $0x7b0] sm:$0xff]
    %v5278 = vld [vmem:[#allocation28 + $0x7b8] sm:$0xff]
    %v5279 = vld [vmem:[#allocation28 + $0x7c0] sm:$0xff]
    %v5280 = vld [vmem:[#allocation28 + $0x7c8] sm:$0xff]
    %v5281 = vld [vmem:[#allocation28 + $0x7d0] sm:$0xff]
    %v5282 = vld [vmem:[#allocation28 + $0x7d8] sm:$0xff]
    %v5283 = vld [vmem:[#allocation28 + $0x7e0] sm:$0xff]
    %v5284 = vld [vmem:[#allocation28 + $0x7e8] sm:$0xff]
    %v5285 = vld [vmem:[#allocation28 + $0x7f0] sm:$0xff]
    %v5286 = vld [vmem:[#allocation28 + $0x7f8] sm:$0xff]
    %v5287 = vld [vmem:[#allocation28 + $0x800] sm:$0xff]
    %v5288 = vld [vmem:[#allocation28 + $0x808] sm:$0xff]
    %v5289 = vld [vmem:[#allocation28 + $0x810] sm:$0xff]
    %v5290 = vld [vmem:[#allocation28 + $0x818] sm:$0xff]
    %v5291 = vld [vmem:[#allocation30] sm:$0xff]
    %v5294 = vcombine.high %v5029, %v5029
    %v5296 = vunpack.c.l.s4 1983009808
    %v5297 = vunpack.c.0.s8 %v5296
    %v5298 = vlaneseq
    %v5299 = vshrl.u32 %v5298, 7
    %v5300 = vsub.s32 %v5297, %v5299
    %v5301 = vrot.slane %v5029, %v5300
    %v5303 = vunpack.c.l.s4 1983009808
    %v5304 = vunpack.c.0.s8 %v5303
    %v5305 = vlaneseq
    %v5306 = vshrl.u32 %v5305, 7
    %v5307 = vsub.s32 %v5304, %v5306
    %v5308 = vrot.slane %v5294, %v5307
    %v5309 = vcombine.high %v5301, %v5301
    %v5310 = vcombine.high %v5308, %v5308
    %v5312 = vunpack.c.l.s4 1983009808
    %v5313 = vunpack.c.0.s8 %v5312
    %v5314 = vlaneseq
    %v5315 = vshrl.u32 %v5314, 7
    %v5316 = vsub.s32 %v5313, %v5315
    %v5317 = vrot.slane %v5030, %v5316
    %v5323 = vpack.c.bf16 %v5301, %v5301
    %v5324 = vpack.c.bf16 %v5309, %v5309
    %v5325 = vpack.c.bf16 %v5308, %v5308
    %v5326 = vpack.c.bf16 %v5310, %v5310
    %v5327 = vpack.c.bf16 %v5317, %v5317
    %v5329 = vlaneseq
    %v5330 = vshrl.u32 %v5329, 7
    %v5331 = vsub.s32 0, %v5330
    %v5332 = vrot.slane %v5291, %v5331
    %v5333 = vlaneseq
    %v5334 = vshrl.u32 %v5333, 7
    %v5335 = vsub.s32 1, %v5334
    %v5336 = vrot.slane %v5291, %v5335
    %v5337 = vlaneseq
    %v5338 = vshrl.u32 %v5337, 7
    %v5339 = vsub.s32 2, %v5338
    %v5340 = vrot.slane %v5291, %v5339
    %v5341 = vlaneseq
    %v5342 = vshrl.u32 %v5341, 7
    %v5343 = vsub.s32 3, %v5342
    %v5344 = vrot.slane %v5291, %v5343
    %v5345 = vlaneseq
    %v5346 = vshrl.u32 %v5345, 7
    %v5347 = vsub.s32 4, %v5346
    %v5348 = vrot.slane %v5291, %v5347
    %v5349 = vlaneseq
    %v5350 = vshrl.u32 %v5349, 7
    %v5351 = vsub.s32 5, %v5350
    %v5352 = vrot.slane %v5291, %v5351
    %v5353 = vlaneseq
    %v5354 = vshrl.u32 %v5353, 7
    %v5355 = vsub.s32 6, %v5354
    %v5356 = vrot.slane %v5291, %v5355
    %v5357 = vlaneseq
    %v5358 = vshrl.u32 %v5357, 7
    %v5359 = vsub.s32 7, %v5358
    %v5360 = vrot.slane %v5291, %v5359
    %v5629 = vunpack.c.l.b16 %v5031
    %v5630 = vunpack.c.h.b16 %v5031
    %v5631 = vunpack.c.l.b16 %v5032
    %v5632 = vunpack.c.h.b16 %v5032
    %v5633 = vunpack.c.l.b16 %v5033
    %v5634 = vunpack.c.h.b16 %v5033
    %v5635 = vunpack.c.l.b16 %v5034
    %v5636 = vunpack.c.h.b16 %v5034
    %v5637 = vunpack.c.l.b16 %v5035
    %v5638 = vunpack.c.h.b16 %v5035
    %v5639 = vunpack.c.l.b16 %v5036
    %v5640 = vunpack.c.h.b16 %v5036
    %v5641 = vunpack.c.l.b16 %v5037
    %v5642 = vunpack.c.h.b16 %v5037
    %v5643 = vunpack.c.l.b16 %v5038
    %v5644 = vunpack.c.h.b16 %v5038
    %v5645 = vunpack.c.l.b16 %v5039
    %v5646 = vunpack.c.h.b16 %v5039
    %v5647 = vunpack.c.l.b16 %v5040
    %v5648 = vunpack.c.h.b16 %v5040
    %v5649 = vunpack.c.l.b16 %v5041
    %v5650 = vunpack.c.h.b16 %v5041
    %v5651 = vunpack.c.l.b16 %v5042
    %v5652 = vunpack.c.h.b16 %v5042
    %v5653 = vunpack.c.l.b16 %v5043
    %v5654 = vunpack.c.h.b16 %v5043
    %v5655 = vunpack.c.l.b16 %v5044
    %v5656 = vunpack.c.h.b16 %v5044
    %v5657 = vunpack.c.l.b16 %v5045
    %v5658 = vunpack.c.h.b16 %v5045
    %v5659 = vunpack.c.l.b16 %v5046
    %v5660 = vunpack.c.h.b16 %v5046
    %v5661 = vunpack.c.l.b16 %v5047
    %v5662 = vunpack.c.h.b16 %v5047
    %v5663 = vunpack.c.l.b16 %v5048
    %v5664 = vunpack.c.h.b16 %v5048
    %v5665 = vunpack.c.l.b16 %v5049
    %v5666 = vunpack.c.h.b16 %v5049
    %v5667 = vunpack.c.l.b16 %v5050
    %v5668 = vunpack.c.h.b16 %v5050
    %v5669 = vunpack.c.l.b16 %v5051
    %v5670 = vunpack.c.h.b16 %v5051
    %v5671 = vunpack.c.l.b16 %v5052
    %v5672 = vunpack.c.h.b16 %v5052
    %v5673 = vunpack.c.l.b16 %v5053
    %v5674 = vunpack.c.h.b16 %v5053
    %v5675 = vunpack.c.l.b16 %v5054
    %v5676 = vunpack.c.h.b16 %v5054
    %v5677 = vunpack.c.l.b16 %v5055
    %v5678 = vunpack.c.h.b16 %v5055
    %v5679 = vunpack.c.l.b16 %v5056
    %v5680 = vunpack.c.h.b16 %v5056
    %v5681 = vunpack.c.l.b16 %v5057
    %v5682 = vunpack.c.h.b16 %v5057
    %v5683 = vunpack.c.l.b16 %v5058
    %v5684 = vunpack.c.h.b16 %v5058
    %v5685 = vunpack.c.l.b16 %v5059
    %v5686 = vunpack.c.h.b16 %v5059
    %v5687 = vunpack.c.l.b16 %v5060
    %v5688 = vunpack.c.h.b16 %v5060
    %v5689 = vunpack.c.l.b16 %v5061
    %v5690 = vunpack.c.h.b16 %v5061
    %v5691 = vunpack.c.l.b16 %v5062
    %v5692 = vunpack.c.h.b16 %v5062
    %v5693 = vunpack.c.l.b16 %v5063
    %v5694 = vunpack.c.h.b16 %v5063
    %v5695 = vunpack.c.l.b16 %v5064
    %v5696 = vunpack.c.h.b16 %v5064
    %v5697 = vunpack.c.l.b16 %v5065
    %v5698 = vunpack.c.h.b16 %v5065
    %v5699 = vunpack.c.l.b16 %v5066
    %v5700 = vunpack.c.h.b16 %v5066
    %v5701 = vunpack.c.l.b16 %v5067
    %v5702 = vunpack.c.h.b16 %v5067
    %v5703 = vunpack.c.l.b16 %v5068
    %v5704 = vunpack.c.h.b16 %v5068
    %v5705 = vunpack.c.l.b16 %v5069
    %v5706 = vunpack.c.h.b16 %v5069
    %v5707 = vunpack.c.l.b16 %v5070
    %v5708 = vunpack.c.h.b16 %v5070
    %v5709 = vunpack.c.l.b16 %v5071
    %v5710 = vunpack.c.h.b16 %v5071
    %v5711 = vunpack.c.l.b16 %v5072
    %v5712 = vunpack.c.h.b16 %v5072
    %v5713 = vunpack.c.l.b16 %v5073
    %v5714 = vunpack.c.h.b16 %v5073
    %v5715 = vunpack.c.l.b16 %v5074
    %v5716 = vunpack.c.h.b16 %v5074
    %v5717 = vunpack.c.l.b16 %v5075
    %v5718 = vunpack.c.h.b16 %v5075
    %v5719 = vunpack.c.l.b16 %v5076
    %v5720 = vunpack.c.h.b16 %v5076
    %v5721 = vunpack.c.l.b16 %v5077
    %v5722 = vunpack.c.h.b16 %v5077
    %v5723 = vunpack.c.l.b16 %v5078
    %v5724 = vunpack.c.h.b16 %v5078
    %v5725 = vunpack.c.l.b16 %v5079
    %v5726 = vunpack.c.h.b16 %v5079
    %v5727 = vunpack.c.l.b16 %v5080
    %v5728 = vunpack.c.h.b16 %v5080
    %v5729 = vunpack.c.l.b16 %v5081
    %v5730 = vunpack.c.h.b16 %v5081
    %v5731 = vunpack.c.l.b16 %v5082
    %v5732 = vunpack.c.h.b16 %v5082
    %v5733 = vunpack.c.l.b16 %v5083
    %v5734 = vunpack.c.h.b16 %v5083
    %v5735 = vunpack.c.l.b16 %v5084
    %v5736 = vunpack.c.h.b16 %v5084
    %v5737 = vunpack.c.l.b16 %v5085
    %v5738 = vunpack.c.h.b16 %v5085
    %v5739 = vunpack.c.l.b16 %v5086
    %v5740 = vunpack.c.h.b16 %v5086
    %v5741 = vunpack.c.l.b16 %v5087
    %v5742 = vunpack.c.h.b16 %v5087
    %v5743 = vunpack.c.l.b16 %v5088
    %v5744 = vunpack.c.h.b16 %v5088
    %v5745 = vunpack.c.l.b16 %v5089
    %v5746 = vunpack.c.h.b16 %v5089
    %v5747 = vunpack.c.l.b16 %v5090
    %v5748 = vunpack.c.h.b16 %v5090
    %v5749 = vunpack.c.l.b16 %v5091
    %v5750 = vunpack.c.h.b16 %v5091
    %v5751 = vunpack.c.l.b16 %v5092
    %v5752 = vunpack.c.h.b16 %v5092
    %v5753 = vunpack.c.l.b16 %v5093
    %v5754 = vunpack.c.h.b16 %v5093
    %v5755 = vunpack.c.l.b16 %v5094
    %v5756 = vunpack.c.h.b16 %v5094
    %v5757 = vunpack.c.l.b16 %v5095
    %v5758 = vunpack.c.h.b16 %v5095
    %v5759 = vunpack.c.l.b16 %v5096
    %v5760 = vunpack.c.h.b16 %v5096
    %v5761 = vunpack.c.l.b16 %v5097
    %v5762 = vunpack.c.h.b16 %v5097
    %v5763 = vunpack.c.l.b16 %v5098
    %v5764 = vunpack.c.h.b16 %v5098
    %v5765 = vunpack.c.l.b16 %v5099
    %v5766 = vunpack.c.h.b16 %v5099
    %v5767 = vunpack.c.l.b16 %v5100
    %v5768 = vunpack.c.h.b16 %v5100
    %v5769 = vunpack.c.l.b16 %v5101
    %v5770 = vunpack.c.h.b16 %v5101
    %v5771 = vunpack.c.l.b16 %v5102
    %v5772 = vunpack.c.h.b16 %v5102
    %v5773 = vunpack.c.l.b16 %v5103
    %v5774 = vunpack.c.h.b16 %v5103
    %v5775 = vunpack.c.l.b16 %v5104
    %v5776 = vunpack.c.h.b16 %v5104
    %v5777 = vunpack.c.l.b16 %v5105
    %v5778 = vunpack.c.h.b16 %v5105
    %v5779 = vunpack.c.l.b16 %v5106
    %v5780 = vunpack.c.h.b16 %v5106
    %v5781 = vunpack.c.l.b16 %v5107
    %v5782 = vunpack.c.h.b16 %v5107
    %v5783 = vunpack.c.l.b16 %v5108
    %v5784 = vunpack.c.h.b16 %v5108
    %v5785 = vunpack.c.l.b16 %v5109
    %v5786 = vunpack.c.h.b16 %v5109
    %v5787 = vunpack.c.l.b16 %v5110
    %v5788 = vunpack.c.h.b16 %v5110
    %v5789 = vunpack.c.l.b16 %v5111
    %v5790 = vunpack.c.h.b16 %v5111
    %v5791 = vunpack.c.l.b16 %v5112
    %v5792 = vunpack.c.h.b16 %v5112
    %v5793 = vunpack.c.l.b16 %v5113
    %v5794 = vunpack.c.h.b16 %v5113
    %v5795 = vunpack.c.l.b16 %v5114
    %v5796 = vunpack.c.h.b16 %v5114
    %v5797 = vunpack.c.l.b16 %v5115
    %v5798 = vunpack.c.h.b16 %v5115
    %v5799 = vunpack.c.l.b16 %v5116
    %v5800 = vunpack.c.h.b16 %v5116
    %v5801 = vunpack.c.l.b16 %v5117
    %v5802 = vunpack.c.h.b16 %v5117
    %v5803 = vunpack.c.l.b16 %v5118
    %v5804 = vunpack.c.h.b16 %v5118
    %v5805 = vunpack.c.l.b16 %v5119
    %v5806 = vunpack.c.h.b16 %v5119
    %v5807 = vunpack.c.l.b16 %v5120
    %v5808 = vunpack.c.h.b16 %v5120
    %v5809 = vunpack.c.l.b16 %v5121
    %v5810 = vunpack.c.h.b16 %v5121
    %v5811 = vunpack.c.l.b16 %v5122
    %v5812 = vunpack.c.h.b16 %v5122
    %v5813 = vunpack.c.l.b16 %v5123
    %v5814 = vunpack.c.h.b16 %v5123
    %v5815 = vunpack.c.l.b16 %v5124
    %v5816 = vunpack.c.h.b16 %v5124
    %v5817 = vunpack.c.l.b16 %v5125
    %v5818 = vunpack.c.h.b16 %v5125
    %v5819 = vunpack.c.l.b16 %v5126
    %v5820 = vunpack.c.h.b16 %v5126
    %v5821 = vunpack.c.l.b16 %v5127
    %v5822 = vunpack.c.h.b16 %v5127
    %v5823 = vunpack.c.l.b16 %v5128
    %v5824 = vunpack.c.h.b16 %v5128
    %v5825 = vunpack.c.l.b16 %v5129
    %v5826 = vunpack.c.h.b16 %v5129
    %v5827 = vunpack.c.l.b16 %v5130
    %v5828 = vunpack.c.h.b16 %v5130
    %v5829 = vunpack.c.l.b16 %v5131
    %v5830 = vunpack.c.h.b16 %v5131
    %v5831 = vunpack.c.l.b16 %v5132
    %v5832 = vunpack.c.h.b16 %v5132
    %v5833 = vunpack.c.l.b16 %v5133
    %v5834 = vunpack.c.h.b16 %v5133
    %v5835 = vunpack.c.l.b16 %v5134
    %v5836 = vunpack.c.h.b16 %v5134
    %v5837 = vunpack.c.l.b16 %v5135
    %v5838 = vunpack.c.h.b16 %v5135
    %v5839 = vunpack.c.l.b16 %v5136
    %v5840 = vunpack.c.h.b16 %v5136
    %v5841 = vunpack.c.l.b16 %v5137
    %v5842 = vunpack.c.h.b16 %v5137
    %v5843 = vunpack.c.l.b16 %v5138
    %v5844 = vunpack.c.h.b16 %v5138
    %v5845 = vunpack.c.l.b16 %v5139
    %v5846 = vunpack.c.h.b16 %v5139
    %v5847 = vunpack.c.l.b16 %v5140
    %v5848 = vunpack.c.h.b16 %v5140
    %v5849 = vunpack.c.l.b16 %v5141
    %v5850 = vunpack.c.h.b16 %v5141
    %v5851 = vunpack.c.l.b16 %v5142
    %v5852 = vunpack.c.h.b16 %v5142
    %v5853 = vunpack.c.l.b16 %v5143
    %v5854 = vunpack.c.h.b16 %v5143
    %v5855 = vunpack.c.l.b16 %v5144
    %v5856 = vunpack.c.h.b16 %v5144
    %v5857 = vunpack.c.l.b16 %v5145
    %v5858 = vunpack.c.h.b16 %v5145
    %v5859 = vunpack.c.l.b16 %v5146
    %v5860 = vunpack.c.h.b16 %v5146
    %v5861 = vunpack.c.l.b16 %v5147
    %v5862 = vunpack.c.h.b16 %v5147
    %v5863 = vunpack.c.l.b16 %v5148
    %v5864 = vunpack.c.h.b16 %v5148
    %v5865 = vunpack.c.l.b16 %v5149
    %v5866 = vunpack.c.h.b16 %v5149
    %v5867 = vunpack.c.l.b16 %v5150
    %v5868 = vunpack.c.h.b16 %v5150
    %v5869 = vunpack.c.l.b16 %v5151
    %v5870 = vunpack.c.h.b16 %v5151
    %v5871 = vunpack.c.l.b16 %v5152
    %v5872 = vunpack.c.h.b16 %v5152
    %v5873 = vunpack.c.l.b16 %v5153
    %v5874 = vunpack.c.h.b16 %v5153
    %v5875 = vunpack.c.l.b16 %v5154
    %v5876 = vunpack.c.h.b16 %v5154
    %v5877 = vunpack.c.l.b16 %v5155
    %v5878 = vunpack.c.h.b16 %v5155
    %v5879 = vunpack.c.l.b16 %v5156
    %v5880 = vunpack.c.h.b16 %v5156
    %v5881 = vunpack.c.l.b16 %v5157
    %v5882 = vunpack.c.h.b16 %v5157
    %v5883 = vunpack.c.l.b16 %v5158
    %v5884 = vunpack.c.h.b16 %v5158
    %v5885 = vunpack.c.l.b16 %v5159
    %v5886 = vunpack.c.h.b16 %v5159
    %v5887 = vunpack.c.l.b16 %v5160
    %v5888 = vunpack.c.h.b16 %v5160
    %v5889 = vunpack.c.l.b16 %v5161
    %v5890 = vunpack.c.h.b16 %v5161
    %v5891 = vunpack.c.l.b16 %v5162
    %v5892 = vunpack.c.h.b16 %v5162
    %v5893 = vunpack.c.l.b16 %v5163
    %v5894 = vunpack.c.h.b16 %v5163
    %v5895 = vunpack.c.l.b16 %v5164
    %v5896 = vunpack.c.h.b16 %v5164
    %v5897 = vunpack.c.l.b16 %v5165
    %v5898 = vunpack.c.h.b16 %v5165
    %v5899 = vunpack.c.l.b16 %v5166
    %v5900 = vunpack.c.h.b16 %v5166
    %v5901 = vunpack.c.l.b16 %v5167
    %v5902 = vunpack.c.h.b16 %v5167
    %v5903 = vunpack.c.l.b16 %v5168
    %v5904 = vunpack.c.h.b16 %v5168
    %v5905 = vunpack.c.l.b16 %v5169
    %v5906 = vunpack.c.h.b16 %v5169
    %v5907 = vunpack.c.l.b16 %v5170
    %v5908 = vunpack.c.h.b16 %v5170
    %v5909 = vunpack.c.l.b16 %v5171
    %v5910 = vunpack.c.h.b16 %v5171
    %v5911 = vunpack.c.l.b16 %v5172
    %v5912 = vunpack.c.h.b16 %v5172
    %v5913 = vunpack.c.l.b16 %v5173
    %v5914 = vunpack.c.h.b16 %v5173
    %v5915 = vunpack.c.l.b16 %v5174
    %v5916 = vunpack.c.h.b16 %v5174
    %v5917 = vunpack.c.l.b16 %v5175
    %v5918 = vunpack.c.h.b16 %v5175
    %v5919 = vunpack.c.l.b16 %v5176
    %v5920 = vunpack.c.h.b16 %v5176
    %v5921 = vunpack.c.l.b16 %v5177
    %v5922 = vunpack.c.h.b16 %v5177
    %v5923 = vunpack.c.l.b16 %v5178
    %v5924 = vunpack.c.h.b16 %v5178
    %v5925 = vunpack.c.l.b16 %v5179
    %v5926 = vunpack.c.h.b16 %v5179
    %v5927 = vunpack.c.l.b16 %v5180
    %v5928 = vunpack.c.h.b16 %v5180
    %v5929 = vunpack.c.l.b16 %v5181
    %v5930 = vunpack.c.h.b16 %v5181
    %v5931 = vunpack.c.l.b16 %v5182
    %v5932 = vunpack.c.h.b16 %v5182
    %v5933 = vunpack.c.l.b16 %v5183
    %v5934 = vunpack.c.h.b16 %v5183
    %v5935 = vunpack.c.l.b16 %v5184
    %v5936 = vunpack.c.h.b16 %v5184
    %v5937 = vunpack.c.l.b16 %v5185
    %v5938 = vunpack.c.h.b16 %v5185
    %v5939 = vunpack.c.l.b16 %v5186
    %v5940 = vunpack.c.h.b16 %v5186
    %v5941 = vunpack.c.l.b16 %v5187
    %v5942 = vunpack.c.h.b16 %v5187
    %v5943 = vunpack.c.l.b16 %v5188
    %v5944 = vunpack.c.h.b16 %v5188
    %v5945 = vunpack.c.l.b16 %v5189
    %v5946 = vunpack.c.h.b16 %v5189
    %v5947 = vunpack.c.l.b16 %v5190
    %v5948 = vunpack.c.h.b16 %v5190
    %v5949 = vunpack.c.l.b16 %v5191
    %v5950 = vunpack.c.h.b16 %v5191
    %v5951 = vunpack.c.l.b16 %v5192
    %v5952 = vunpack.c.h.b16 %v5192
    %v5953 = vunpack.c.l.b16 %v5193
    %v5954 = vunpack.c.h.b16 %v5193
    %v5955 = vunpack.c.l.b16 %v5194
    %v5956 = vunpack.c.h.b16 %v5194
    %v5957 = vunpack.c.l.b16 %v5195
    %v5958 = vunpack.c.h.b16 %v5195
    %v5959 = vunpack.c.l.b16 %v5196
    %v5960 = vunpack.c.h.b16 %v5196
    %v5961 = vunpack.c.l.b16 %v5197
    %v5962 = vunpack.c.h.b16 %v5197
    %v5963 = vunpack.c.l.b16 %v5198
    %v5964 = vunpack.c.h.b16 %v5198
    %v5965 = vunpack.c.l.b16 %v5199
    %v5966 = vunpack.c.h.b16 %v5199
    %v5967 = vunpack.c.l.b16 %v5200
    %v5968 = vunpack.c.h.b16 %v5200
    %v5969 = vunpack.c.l.b16 %v5201
    %v5970 = vunpack.c.h.b16 %v5201
    %v5971 = vunpack.c.l.b16 %v5202
    %v5972 = vunpack.c.h.b16 %v5202
    %v5973 = vunpack.c.l.b16 %v5203
    %v5974 = vunpack.c.h.b16 %v5203
    %v5975 = vunpack.c.l.b16 %v5204
    %v5976 = vunpack.c.h.b16 %v5204
    %v5977 = vunpack.c.l.b16 %v5205
    %v5978 = vunpack.c.h.b16 %v5205
    %v5979 = vunpack.c.l.b16 %v5206
    %v5980 = vunpack.c.h.b16 %v5206
    %v5981 = vunpack.c.l.b16 %v5207
    %v5982 = vunpack.c.h.b16 %v5207
    %v5983 = vunpack.c.l.b16 %v5208
    %v5984 = vunpack.c.h.b16 %v5208
    %v5985 = vunpack.c.l.b16 %v5209
    %v5986 = vunpack.c.h.b16 %v5209
    %v5987 = vunpack.c.l.b16 %v5210
    %v5988 = vunpack.c.h.b16 %v5210
    %v5989 = vunpack.c.l.b16 %v5211
    %v5990 = vunpack.c.h.b16 %v5211
    %v5991 = vunpack.c.l.b16 %v5212
    %v5992 = vunpack.c.h.b16 %v5212
    %v5993 = vunpack.c.l.b16 %v5213
    %v5994 = vunpack.c.h.b16 %v5213
    %v5995 = vunpack.c.l.b16 %v5214
    %v5996 = vunpack.c.h.b16 %v5214
    %v5997 = vunpack.c.l.b16 %v5215
    %v5998 = vunpack.c.h.b16 %v5215
    %v5999 = vunpack.c.l.b16 %v5216
    %v6000 = vunpack.c.h.b16 %v5216
    %v6001 = vunpack.c.l.b16 %v5217
    %v6002 = vunpack.c.h.b16 %v5217
    %v6003 = vunpack.c.l.b16 %v5218
    %v6004 = vunpack.c.h.b16 %v5218
    %v6005 = vunpack.c.l.b16 %v5219
    %v6006 = vunpack.c.h.b16 %v5219
    %v6007 = vunpack.c.l.b16 %v5220
    %v6008 = vunpack.c.h.b16 %v5220
    %v6009 = vunpack.c.l.b16 %v5221
    %v6010 = vunpack.c.h.b16 %v5221
    %v6011 = vunpack.c.l.b16 %v5222
    %v6012 = vunpack.c.h.b16 %v5222
    %v6013 = vunpack.c.l.b16 %v5223
    %v6014 = vunpack.c.h.b16 %v5223
    %v6015 = vunpack.c.l.b16 %v5224
    %v6016 = vunpack.c.h.b16 %v5224
    %v6017 = vunpack.c.l.b16 %v5225
    %v6018 = vunpack.c.h.b16 %v5225
    %v6019 = vunpack.c.l.b16 %v5226
    %v6020 = vunpack.c.h.b16 %v5226
    %v6021 = vunpack.c.l.b16 %v5227
    %v6022 = vunpack.c.h.b16 %v5227
    %v6023 = vunpack.c.l.b16 %v5228
    %v6024 = vunpack.c.h.b16 %v5228
    %v6025 = vunpack.c.l.b16 %v5229
    %v6026 = vunpack.c.h.b16 %v5229
    %v6027 = vunpack.c.l.b16 %v5230
    %v6028 = vunpack.c.h.b16 %v5230
    %v6029 = vunpack.c.l.b16 %v5231
    %v6030 = vunpack.c.h.b16 %v5231
    %v6031 = vunpack.c.l.b16 %v5232
    %v6032 = vunpack.c.h.b16 %v5232
    %v6033 = vunpack.c.l.b16 %v5233
    %v6034 = vunpack.c.h.b16 %v5233
    %v6035 = vunpack.c.l.b16 %v5234
    %v6036 = vunpack.c.h.b16 %v5234
    %v6037 = vunpack.c.l.b16 %v5235
    %v6038 = vunpack.c.h.b16 %v5235
    %v6039 = vunpack.c.l.b16 %v5236
    %v6040 = vunpack.c.h.b16 %v5236
    %v6041 = vunpack.c.l.b16 %v5237
    %v6042 = vunpack.c.h.b16 %v5237
    %v6043 = vunpack.c.l.b16 %v5238
    %v6044 = vunpack.c.h.b16 %v5238
    %v6045 = vunpack.c.l.b16 %v5239
    %v6046 = vunpack.c.h.b16 %v5239
    %v6047 = vunpack.c.l.b16 %v5240
    %v6048 = vunpack.c.h.b16 %v5240
    %v6049 = vunpack.c.l.b16 %v5241
    %v6050 = vunpack.c.h.b16 %v5241
    %v6051 = vunpack.c.l.b16 %v5242
    %v6052 = vunpack.c.h.b16 %v5242
    %v6053 = vunpack.c.l.b16 %v5243
    %v6054 = vunpack.c.h.b16 %v5243
    %v6055 = vunpack.c.l.b16 %v5244
    %v6056 = vunpack.c.h.b16 %v5244
    %v6057 = vunpack.c.l.b16 %v5245
    %v6058 = vunpack.c.h.b16 %v5245
    %v6059 = vunpack.c.l.b16 %v5246
    %v6060 = vunpack.c.h.b16 %v5246
    %v6061 = vunpack.c.l.b16 %v5247
    %v6062 = vunpack.c.h.b16 %v5247
    %v6063 = vunpack.c.l.b16 %v5248
    %v6064 = vunpack.c.h.b16 %v5248
    %v6065 = vunpack.c.l.b16 %v5249
    %v6066 = vunpack.c.h.b16 %v5249
    %v6067 = vunpack.c.l.b16 %v5250
    %v6068 = vunpack.c.h.b16 %v5250
    %v6069 = vunpack.c.l.b16 %v5251
    %v6070 = vunpack.c.h.b16 %v5251
    %v6071 = vunpack.c.l.b16 %v5252
    %v6072 = vunpack.c.h.b16 %v5252
    %v6073 = vunpack.c.l.b16 %v5253
    %v6074 = vunpack.c.h.b16 %v5253
    %v6075 = vunpack.c.l.b16 %v5254
    %v6076 = vunpack.c.h.b16 %v5254
    %v6077 = vunpack.c.l.b16 %v5255
    %v6078 = vunpack.c.h.b16 %v5255
    %v6079 = vunpack.c.l.b16 %v5256
    %v6080 = vunpack.c.h.b16 %v5256
    %v6081 = vunpack.c.l.b16 %v5257
    %v6082 = vunpack.c.h.b16 %v5257
    %v6083 = vunpack.c.l.b16 %v5258
    %v6084 = vunpack.c.h.b16 %v5258
    %v6085 = vunpack.c.l.b16 %v5259
    %v6086 = vunpack.c.h.b16 %v5259
    %v6087 = vunpack.c.l.b16 %v5260
    %v6088 = vunpack.c.h.b16 %v5260
    %v6089 = vunpack.c.l.b16 %v5261
    %v6090 = vunpack.c.h.b16 %v5261
    %v6091 = vunpack.c.l.b16 %v5262
    %v6092 = vunpack.c.h.b16 %v5262
    %v6093 = vunpack.c.l.b16 %v5263
    %v6094 = vunpack.c.h.b16 %v5263
    %v6095 = vunpack.c.l.b16 %v5264
    %v6096 = vunpack.c.h.b16 %v5264
    %v6097 = vunpack.c.l.b16 %v5265
    %v6098 = vunpack.c.h.b16 %v5265
    %v6099 = vunpack.c.l.b16 %v5266
    %v6100 = vunpack.c.h.b16 %v5266
    %v6101 = vunpack.c.l.b16 %v5267
    %v6102 = vunpack.c.h.b16 %v5267
    %v6103 = vunpack.c.l.b16 %v5268
    %v6104 = vunpack.c.h.b16 %v5268
    %v6105 = vunpack.c.l.b16 %v5269
    %v6106 = vunpack.c.h.b16 %v5269
    %v6107 = vunpack.c.l.b16 %v5270
    %v6108 = vunpack.c.h.b16 %v5270
    %v6109 = vunpack.c.l.b16 %v5271
    %v6110 = vunpack.c.h.b16 %v5271
    %v6111 = vunpack.c.l.b16 %v5272
    %v6112 = vunpack.c.h.b16 %v5272
    %v6113 = vunpack.c.l.b16 %v5273
    %v6114 = vunpack.c.h.b16 %v5273
    %v6115 = vunpack.c.l.b16 %v5274
    %v6116 = vunpack.c.h.b16 %v5274
    %v6117 = vunpack.c.l.b16 %v5275
    %v6118 = vunpack.c.h.b16 %v5275
    %v6119 = vunpack.c.l.b16 %v5276
    %v6120 = vunpack.c.h.b16 %v5276
    %v6121 = vunpack.c.l.b16 %v5277
    %v6122 = vunpack.c.h.b16 %v5277
    %v6123 = vunpack.c.l.b16 %v5278
    %v6124 = vunpack.c.h.b16 %v5278
    %v6125 = vunpack.c.l.b16 %v5279
    %v6126 = vunpack.c.h.b16 %v5279
    %v6127 = vunpack.c.l.b16 %v5280
    %v6128 = vunpack.c.h.b16 %v5280
    %v6129 = vunpack.c.l.b16 %v5281
    %v6130 = vunpack.c.h.b16 %v5281
    %v6131 = vunpack.c.l.b16 %v5282
    %v6132 = vunpack.c.h.b16 %v5282
    %v6133 = vunpack.c.l.b16 %v5283
    %v6134 = vunpack.c.h.b16 %v5283
    %v6135 = vunpack.c.l.b16 %v5284
    %v6136 = vunpack.c.h.b16 %v5284
    %v6137 = vunpack.c.l.b16 %v5285
    %v6138 = vunpack.c.h.b16 %v5285
    %v6139 = vunpack.c.l.b16 %v5286
    %v6140 = vunpack.c.h.b16 %v5286
    %v6141 = vunpack.c.l.b16 %v5287
    %v6142 = vunpack.c.h.b16 %v5287
    %v6143 = vunpack.c.l.b16 %v5288
    %v6144 = vunpack.c.h.b16 %v5288
    %v6145 = vunpack.c.l.b16 %v5289
    %v6146 = vunpack.c.h.b16 %v5289
    %v6147 = vunpack.c.l.b16 %v5290
    %v6148 = vunpack.c.h.b16 %v5290
    %v6149 = vpack.c.b16 %v5637, %v5629
    %v6150 = vpack.c.b16 %v5638, %v5630
    %v6151 = vpack.c.b16 %v5639, %v5631
    %v6152 = vpack.c.b16 %v5640, %v5632
    %v6153 = vpack.c.b16 %v5641, %v5633
    %v6154 = vpack.c.b16 %v5642, %v5634
    %v6155 = vpack.c.b16 %v5643, %v5635
    %v6156 = vpack.c.b16 %v5644, %v5636
    %v6157 = vpack.c.b16 %v5653, %v5645
    %v6158 = vpack.c.b16 %v5654, %v5646
    %v6159 = vpack.c.b16 %v5655, %v5647
    %v6160 = vpack.c.b16 %v5656, %v5648
    %v6161 = vpack.c.b16 %v5657, %v5649
    %v6162 = vpack.c.b16 %v5658, %v5650
    %v6163 = vpack.c.b16 %v5659, %v5651
    %v6164 = vpack.c.b16 %v5660, %v5652
    %v6165 = vpack.c.b16 %v5669, %v5661
    %v6166 = vpack.c.b16 %v5670, %v5662
    %v6167 = vpack.c.b16 %v5671, %v5663
    %v6168 = vpack.c.b16 %v5672, %v5664
    %v6169 = vpack.c.b16 %v5673, %v5665
    %v6170 = vpack.c.b16 %v5674, %v5666
    %v6171 = vpack.c.b16 %v5675, %v5667
    %v6172 = vpack.c.b16 %v5676, %v5668
    %v6173 = vpack.c.b16 %v5685, %v5677
    %v6174 = vpack.c.b16 %v5686, %v5678
    %v6175 = vpack.c.b16 %v5687, %v5679
    %v6176 = vpack.c.b16 %v5688, %v5680
    %v6177 = vpack.c.b16 %v5689, %v5681
    %v6178 = vpack.c.b16 %v5690, %v5682
    %v6179 = vpack.c.b16 %v5691, %v5683
    %v6180 = vpack.c.b16 %v5692, %v5684
    %v6181 = vpack.c.b16 %v5701, %v5693
    %v6182 = vpack.c.b16 %v5702, %v5694
    %v6183 = vpack.c.b16 %v5703, %v5695
    %v6184 = vpack.c.b16 %v5704, %v5696
    %v6185 = vpack.c.b16 %v5705, %v5697
    %v6186 = vpack.c.b16 %v5706, %v5698
    %v6187 = vpack.c.b16 %v5707, %v5699
    %v6188 = vpack.c.b16 %v5708, %v5700
    %v6189 = vpack.c.b16 %v5717, %v5709
    %v6190 = vpack.c.b16 %v5718, %v5710
    %v6191 = vpack.c.b16 %v5719, %v5711
    %v6192 = vpack.c.b16 %v5720, %v5712
    %v6193 = vpack.c.b16 %v5721, %v5713
    %v6194 = vpack.c.b16 %v5722, %v5714
    %v6195 = vpack.c.b16 %v5723, %v5715
    %v6196 = vpack.c.b16 %v5724, %v5716
    %v6197 = vpack.c.b16 %v5733, %v5725
    %v6198 = vpack.c.b16 %v5734, %v5726
    %v6199 = vpack.c.b16 %v5735, %v5727
    %v6200 = vpack.c.b16 %v5736, %v5728
    %v6201 = vpack.c.b16 %v5737, %v5729
    %v6202 = vpack.c.b16 %v5738, %v5730
    %v6203 = vpack.c.b16 %v5739, %v5731
    %v6204 = vpack.c.b16 %v5740, %v5732
    %v6205 = vpack.c.b16 %v5749, %v5741
    %v6206 = vpack.c.b16 %v5750, %v5742
    %v6207 = vpack.c.b16 %v5751, %v5743
    %v6208 = vpack.c.b16 %v5752, %v5744
    %v6209 = vpack.c.b16 %v5753, %v5745
    %v6210 = vpack.c.b16 %v5754, %v5746
    %v6211 = vpack.c.b16 %v5755, %v5747
    %v6212 = vpack.c.b16 %v5756, %v5748
    %v6213 = vpack.c.b16 %v5765, %v5757
    %v6214 = vpack.c.b16 %v5766, %v5758
    %v6215 = vpack.c.b16 %v5767, %v5759
    %v6216 = vpack.c.b16 %v5768, %v5760
    %v6217 = vpack.c.b16 %v5769, %v5761
    %v6218 = vpack.c.b16 %v5770, %v5762
    %v6219 = vpack.c.b16 %v5771, %v5763
    %v6220 = vpack.c.b16 %v5772, %v5764
    %v6221 = vpack.c.b16 %v5781, %v5773
    %v6222 = vpack.c.b16 %v5782, %v5774
    %v6223 = vpack.c.b16 %v5783, %v5775
    %v6224 = vpack.c.b16 %v5784, %v5776
    %v6225 = vpack.c.b16 %v5785, %v5777
    %v6226 = vpack.c.b16 %v5786, %v5778
    %v6227 = vpack.c.b16 %v5787, %v5779
    %v6228 = vpack.c.b16 %v5788, %v5780
    %v6229 = vpack.c.b16 %v5797, %v5789
    %v6230 = vpack.c.b16 %v5798, %v5790
    %v6231 = vpack.c.b16 %v5799, %v5791
    %v6232 = vpack.c.b16 %v5800, %v5792
    %v6233 = vpack.c.b16 %v5801, %v5793
    %v6234 = vpack.c.b16 %v5802, %v5794
    %v6235 = vpack.c.b16 %v5803, %v5795
    %v6236 = vpack.c.b16 %v5804, %v5796
    %v6237 = vpack.c.b16 %v5813, %v5805
    %v6238 = vpack.c.b16 %v5814, %v5806
    %v6239 = vpack.c.b16 %v5815, %v5807
    %v6240 = vpack.c.b16 %v5816, %v5808
    %v6241 = vpack.c.b16 %v5817, %v5809
    %v6242 = vpack.c.b16 %v5818, %v5810
    %v6243 = vpack.c.b16 %v5819, %v5811
    %v6244 = vpack.c.b16 %v5820, %v5812
    %v6245 = vpack.c.b16 %v5829, %v5821
    %v6246 = vpack.c.b16 %v5830, %v5822
    %v6247 = vpack.c.b16 %v5831, %v5823
    %v6248 = vpack.c.b16 %v5832, %v5824
    %v6249 = vpack.c.b16 %v5833, %v5825
    %v6250 = vpack.c.b16 %v5834, %v5826
    %v6251 = vpack.c.b16 %v5835, %v5827
    %v6252 = vpack.c.b16 %v5836, %v5828
    %v6253 = vpack.c.b16 %v5845, %v5837
    %v6254 = vpack.c.b16 %v5846, %v5838
    %v6255 = vpack.c.b16 %v5847, %v5839
    %v6256 = vpack.c.b16 %v5848, %v5840
    %v6257 = vpack.c.b16 %v5849, %v5841
    %v6258 = vpack.c.b16 %v5850, %v5842
    %v6259 = vpack.c.b16 %v5851, %v5843
    %v6260 = vpack.c.b16 %v5852, %v5844
    %v6261 = vpack.c.b16 %v5861, %v5853
    %v6262 = vpack.c.b16 %v5862, %v5854
    %v6263 = vpack.c.b16 %v5863, %v5855
    %v6264 = vpack.c.b16 %v5864, %v5856
    %v6265 = vpack.c.b16 %v5865, %v5857
    %v6266 = vpack.c.b16 %v5866, %v5858
    %v6267 = vpack.c.b16 %v5867, %v5859
    %v6268 = vpack.c.b16 %v5868, %v5860
    %v6269 = vpack.c.b16 %v5877, %v5869
    %v6270 = vpack.c.b16 %v5878, %v5870
    %v6271 = vpack.c.b16 %v5879, %v5871
    %v6272 = vpack.c.b16 %v5880, %v5872
    %v6273 = vpack.c.b16 %v5881, %v5873
    %v6274 = vpack.c.b16 %v5882, %v5874
    %v6275 = vpack.c.b16 %v5883, %v5875
    %v6276 = vpack.c.b16 %v5884, %v5876
    %v6277 = vpack.c.b16 %v5893, %v5885
    %v6278 = vpack.c.b16 %v5894, %v5886
    %v6279 = vpack.c.b16 %v5895, %v5887
    %v6280 = vpack.c.b16 %v5896, %v5888
    %v6281 = vpack.c.b16 %v5897, %v5889
    %v6282 = vpack.c.b16 %v5898, %v5890
    %v6283 = vpack.c.b16 %v5899, %v5891
    %v6284 = vpack.c.b16 %v5900, %v5892
    %v6285 = vpack.c.b16 %v5909, %v5901
    %v6286 = vpack.c.b16 %v5910, %v5902
    %v6287 = vpack.c.b16 %v5911, %v5903
    %v6288 = vpack.c.b16 %v5912, %v5904
    %v6289 = vpack.c.b16 %v5913, %v5905
    %v6290 = vpack.c.b16 %v5914, %v5906
    %v6291 = vpack.c.b16 %v5915, %v5907
    %v6292 = vpack.c.b16 %v5916, %v5908
    %v6293 = vpack.c.b16 %v5925, %v5917
    %v6294 = vpack.c.b16 %v5926, %v5918
    %v6295 = vpack.c.b16 %v5927, %v5919
    %v6296 = vpack.c.b16 %v5928, %v5920
    %v6297 = vpack.c.b16 %v5929, %v5921
    %v6298 = vpack.c.b16 %v5930, %v5922
    %v6299 = vpack.c.b16 %v5931, %v5923
    %v6300 = vpack.c.b16 %v5932, %v5924
    %v6301 = vpack.c.b16 %v5941, %v5933
    %v6302 = vpack.c.b16 %v5942, %v5934
    %v6303 = vpack.c.b16 %v5943, %v5935
    %v6304 = vpack.c.b16 %v5944, %v5936
    %v6305 = vpack.c.b16 %v5945, %v5937
    %v6306 = vpack.c.b16 %v5946, %v5938
    %v6307 = vpack.c.b16 %v5947, %v5939
    %v6308 = vpack.c.b16 %v5948, %v5940
    %v6309 = vpack.c.b16 %v5957, %v5949
    %v6310 = vpack.c.b16 %v5958, %v5950
    %v6311 = vpack.c.b16 %v5959, %v5951
    %v6312 = vpack.c.b16 %v5960, %v5952
    %v6313 = vpack.c.b16 %v5961, %v5953
    %v6314 = vpack.c.b16 %v5962, %v5954
    %v6315 = vpack.c.b16 %v5963, %v5955
    %v6316 = vpack.c.b16 %v5964, %v5956
    %v6317 = vpack.c.b16 %v5973, %v5965
    %v6318 = vpack.c.b16 %v5974, %v5966
    %v6319 = vpack.c.b16 %v5975, %v5967
    %v6320 = vpack.c.b16 %v5976, %v5968
    %v6321 = vpack.c.b16 %v5977, %v5969
    %v6322 = vpack.c.b16 %v5978, %v5970
    %v6323 = vpack.c.b16 %v5979, %v5971
    %v6324 = vpack.c.b16 %v5980, %v5972
    %v6325 = vpack.c.b16 %v5989, %v5981
    %v6326 = vpack.c.b16 %v5990, %v5982
    %v6327 = vpack.c.b16 %v5991, %v5983
    %v6328 = vpack.c.b16 %v5992, %v5984
    %v6329 = vpack.c.b16 %v5993, %v5985
    %v6330 = vpack.c.b16 %v5994, %v5986
    %v6331 = vpack.c.b16 %v5995, %v5987
    %v6332 = vpack.c.b16 %v5996, %v5988
    %v6333 = vpack.c.b16 %v6005, %v5997
    %v6334 = vpack.c.b16 %v6006, %v5998
    %v6335 = vpack.c.b16 %v6007, %v5999
    %v6336 = vpack.c.b16 %v6008, %v6000
    %v6337 = vpack.c.b16 %v6009, %v6001
    %v6338 = vpack.c.b16 %v6010, %v6002
    %v6339 = vpack.c.b16 %v6011, %v6003
    %v6340 = vpack.c.b16 %v6012, %v6004
    %v6341 = vpack.c.b16 %v6021, %v6013
    %v6342 = vpack.c.b16 %v6022, %v6014
    %v6343 = vpack.c.b16 %v6023, %v6015
    %v6344 = vpack.c.b16 %v6024, %v6016
    %v6345 = vpack.c.b16 %v6025, %v6017
    %v6346 = vpack.c.b16 %v6026, %v6018
    %v6347 = vpack.c.b16 %v6027, %v6019
    %v6348 = vpack.c.b16 %v6028, %v6020
    %v6349 = vpack.c.b16 %v6037, %v6029
    %v6350 = vpack.c.b16 %v6038, %v6030
    %v6351 = vpack.c.b16 %v6039, %v6031
    %v6352 = vpack.c.b16 %v6040, %v6032
    %v6353 = vpack.c.b16 %v6041, %v6033
    %v6354 = vpack.c.b16 %v6042, %v6034
    %v6355 = vpack.c.b16 %v6043, %v6035
    %v6356 = vpack.c.b16 %v6044, %v6036
    %v6357 = vpack.c.b16 %v6053, %v6045
    %v6358 = vpack.c.b16 %v6054, %v6046
    %v6359 = vpack.c.b16 %v6055, %v6047
    %v6360 = vpack.c.b16 %v6056, %v6048
    %v6361 = vpack.c.b16 %v6057, %v6049
    %v6362 = vpack.c.b16 %v6058, %v6050
    %v6363 = vpack.c.b16 %v6059, %v6051
    %v6364 = vpack.c.b16 %v6060, %v6052
    %v6365 = vpack.c.b16 %v6069, %v6061
    %v6366 = vpack.c.b16 %v6070, %v6062
    %v6367 = vpack.c.b16 %v6071, %v6063
    %v6368 = vpack.c.b16 %v6072, %v6064
    %v6369 = vpack.c.b16 %v6073, %v6065
    %v6370 = vpack.c.b16 %v6074, %v6066
    %v6371 = vpack.c.b16 %v6075, %v6067
    %v6372 = vpack.c.b16 %v6076, %v6068
    %v6373 = vpack.c.b16 %v6085, %v6077
    %v6374 = vpack.c.b16 %v6086, %v6078
    %v6375 = vpack.c.b16 %v6087, %v6079
    %v6376 = vpack.c.b16 %v6088, %v6080
    %v6377 = vpack.c.b16 %v6089, %v6081
    %v6378 = vpack.c.b16 %v6090, %v6082
    %v6379 = vpack.c.b16 %v6091, %v6083
    %v6380 = vpack.c.b16 %v6092, %v6084
    %v6381 = vpack.c.b16 %v6101, %v6093
    %v6382 = vpack.c.b16 %v6102, %v6094
    %v6383 = vpack.c.b16 %v6103, %v6095
    %v6384 = vpack.c.b16 %v6104, %v6096
    %v6385 = vpack.c.b16 %v6105, %v6097
    %v6386 = vpack.c.b16 %v6106, %v6098
    %v6387 = vpack.c.b16 %v6107, %v6099
    %v6388 = vpack.c.b16 %v6108, %v6100
    %v6389 = vpack.c.b16 %v6117, %v6109
    %v6390 = vpack.c.b16 %v6118, %v6110
    %v6391 = vpack.c.b16 %v6119, %v6111
    %v6392 = vpack.c.b16 %v6120, %v6112
    %v6393 = vpack.c.b16 %v6121, %v6113
    %v6394 = vpack.c.b16 %v6122, %v6114
    %v6395 = vpack.c.b16 %v6123, %v6115
    %v6396 = vpack.c.b16 %v6124, %v6116
    %v6397 = vpack.c.b16 %v6133, %v6125
    %v6398 = vpack.c.b16 %v6134, %v6126
    %v6399 = vpack.c.b16 %v6135, %v6127
    %v6400 = vpack.c.b16 %v6136, %v6128
    %v6401 = vpack.c.b16 %v6137, %v6129
    %v6402 = vpack.c.b16 %v6138, %v6130
    %v6403 = vpack.c.b16 %v6139, %v6131
    %v6404 = vpack.c.b16 %v6140, %v6132
    %v6405 = vpack.c.b16 %v6141, %v6141
    %v6406 = vpack.c.b16 %v6142, %v6142
    %v6407 = vpack.c.b16 %v6143, %v6143
    %v6408 = vpack.c.b16 %v6144, %v6144
    %v6409 = vpack.c.b16 %v6145, %v6145
    %v6410 = vpack.c.b16 %v6146, %v6146
    %v6411 = vpack.c.b16 %v6147, %v6147
    %v6412 = vpack.c.b16 %v6148, %v6148
    %vm6669 = vcmask 64512
    %v6671 = vsel %vm6669, %v5327, 0
    %vm6673 = vcmask 1043456
    %v6675 = vsel %vm6673, %v6405, 0
    %v6678 = vsel %vm6673, %v6406, 0
    %v6681 = vsel %vm6673, %v6407, 0
    %v6684 = vsel %vm6673, %v6408, 0
    %v6687 = vsel %vm6673, %v6409, 0
    %v6690 = vsel %vm6673, %v6410, 0
    %v6693 = vsel %vm6673, %v6411, 0
    %v6696 = vsel %vm6673, %v6412, 0
    %6698 = vmatprep.subr.bf16.mxu0 %v6150
    %6699 = vmatpush1.bf16.msra.mxu0 %v6149
    %6700 = vmatprep.subr.bf16.mxu0 %v6158
    %6701 = vmatpush1.bf16.msra.mxu0 %v6157
    %6702 = vmatprep.subr.bf16.mxu0 %v6166
    %6703 = vmatpush1.bf16.msra.mxu0 %v6165
    %6704 = vmatprep.subr.bf16.mxu0 %v6174
    %6705 = vmatpush1.bf16.msra.mxu0 %v6173
    %6706 = vmatprep.subr.bf16.mxu0 %v6182
    %6707 = vmatpush1.bf16.msra.mxu0 %v6181
    %6708 = vmatprep.subr.bf16.mxu0 %v6190
    %6709 = vmatpush1.bf16.msra.mxu0 %v6189
    %6710 = vmatprep.subr.bf16.mxu0 %v6198
    %6711 = vmatpush1.bf16.msra.mxu0 %v6197
    %6712 = vmatprep.subr.bf16.mxu0 %v6206
    %6713 = vmatpush1.bf16.msra.mxu0 %v6205
    %6714 = vmatprep.subr.bf16.mxu0 %v6214
    %6715 = vmatpush1.bf16.msra.mxu0 %v6213
    %6716 = vmatprep.subr.bf16.mxu0 %v6222
    %6717 = vmatpush1.bf16.msra.mxu0 %v6221
    %6718 = vmatprep.subr.bf16.mxu0 %v6230
    %6719 = vmatpush1.bf16.msra.mxu0 %v6229
    %6720 = vmatprep.subr.bf16.mxu0 %v6238
    %6721 = vmatpush1.bf16.msra.mxu0 %v6237
    %6722 = vmatprep.subr.bf16.mxu0 %v6246
    %6723 = vmatpush1.bf16.msra.mxu0 %v6245
    %6724 = vmatprep.subr.bf16.mxu0 %v6254
    %6725 = vmatpush1.bf16.msra.mxu0 %v6253
    %6726 = vmatprep.subr.bf16.mxu0 %v6262
    %6727 = vmatpush1.bf16.msra.mxu0 %v6261
    %6728 = vmatprep.subr.bf16.mxu0 %v6270
    %6729 = vmatpush1.bf16.msra.mxu0 %v6269
    %6730 = vmatprep.mubr.bf16.mxu0 %v5324
    %6731 = vmatmul.mubr.bf16.gmra.mrb[0].mxu0 %v5323
    %v6732 = vpop.f32.mrb[0].mxu0
    %v6733 = vadd.f32 %v5332, %v6732
    %v6734 = vpop.f32.mrb[0].mxu0
    %v6735 = vadd.f32 %v5336, %v6734
    %v6736 = vpop.f32.mrb[0].mxu0
    %v6737 = vpop.f32.mrb[0].mxu0
    %6738 = vdwg.mxu0
    %6739 = vmatprep.subr.bf16.mxu0 %v6278
    %6740 = vmatpush1.bf16.msra.mxu0 %v6277
    %6741 = vmatprep.subr.bf16.mxu0 %v6286
    %6742 = vmatpush1.bf16.msra.mxu0 %v6285
    %6743 = vmatprep.subr.bf16.mxu0 %v6294
    %6744 = vmatpush1.bf16.msra.mxu0 %v6293
    %6745 = vmatprep.subr.bf16.mxu0 %v6302
    %6746 = vmatpush1.bf16.msra.mxu0 %v6301
    %6747 = vmatprep.subr.bf16.mxu0 %v6310
    %6748 = vmatpush1.bf16.msra.mxu0 %v6309
    %6749 = vmatprep.subr.bf16.mxu0 %v6318
    %6750 = vmatpush1.bf16.msra.mxu0 %v6317
    %6751 = vmatprep.subr.bf16.mxu0 %v6326
    %6752 = vmatpush1.bf16.msra.mxu0 %v6325
    %6753 = vmatprep.subr.bf16.mxu0 %v6334
    %6754 = vmatpush1.bf16.msra.mxu0 %v6333
    %6755 = vmatprep.subr.bf16.mxu0 %v6342
    %6756 = vmatpush1.bf16.msra.mxu0 %v6341
    %6757 = vmatprep.subr.bf16.mxu0 %v6350
    %6758 = vmatpush1.bf16.msra.mxu0 %v6349
    %6759 = vmatprep.subr.bf16.mxu0 %v6358
    %6760 = vmatpush1.bf16.msra.mxu0 %v6357
    %6761 = vmatprep.subr.bf16.mxu0 %v6366
    %6762 = vmatpush1.bf16.msra.mxu0 %v6365
    %6763 = vmatprep.subr.bf16.mxu0 %v6374
    %6764 = vmatpush1.bf16.msra.mxu0 %v6373
    %6765 = vmatprep.subr.bf16.mxu0 %v6382
    %6766 = vmatpush1.bf16.msra.mxu0 %v6381
    %6767 = vmatprep.subr.bf16.mxu0 %v6390
    %6768 = vmatpush1.bf16.msra.mxu0 %v6389
    %6769 = vmatprep.subr.bf16.mxu0 %v6398
    %6770 = vmatpush1.bf16.msra.mxu0 %v6397
    %6771 = vmatprep.mubr.bf16.mxu0 %v5326
    %6772 = vmatmul.mubr.bf16.gmra.mrb[0].mxu0 %v5325
    %v6773 = vpop.f32.mrb[0].mxu0
    %v6774 = vadd.f32 %v6733, %v6773
    %v6775 = vpop.f32.mrb[0].mxu0
    %v6776 = vadd.f32 %v6735, %v6775
    %v6777 = vpop.f32.mrb[0].mxu0
    %v6778 = vpop.f32.mrb[0].mxu0
    %6779 = vdwg.mxu0
    %6780 = vmatprep.subr.bf16.mxu0 %v6678
    %6781 = vmatpush1.bf16.msra.mxu0 %v6675
    %6782 = vmatprep.subr.bf16.mxu0 0
    %6783 = vmatpush1.bf16.msra.mxu0 0
    %6784 = vmatprep.subr.bf16.mxu0 0
    %6785 = vmatpush1.bf16.msra.mxu0 0
    %6786 = vmatprep.subr.bf16.mxu0 0
    %6787 = vmatpush1.bf16.msra.mxu0 0
    %6788 = vmatprep.subr.bf16.mxu0 0
    %6789 = vmatpush1.bf16.msra.mxu0 0
    %6790 = vmatprep.subr.bf16.mxu0 0
    %6791 = vmatpush1.bf16.msra.mxu0 0
    %6792 = vmatprep.subr.bf16.mxu0 0
    %6793 = vmatpush1.bf16.msra.mxu0 0
    %6794 = vmatprep.subr.bf16.mxu0 0
    %6795 = vmatpush1.bf16.msra.mxu0 0
    %6796 = vmatprep.subr.bf16.mxu0 0
    %6797 = vmatpush1.bf16.msra.mxu0 0
    %6798 = vmatprep.subr.bf16.mxu0 0
    %6799 = vmatpush1.bf16.msra.mxu0 0
    %6800 = vmatprep.subr.bf16.mxu0 0
    %6801 = vmatpush1.bf16.msra.mxu0 0
    %6802 = vmatprep.subr.bf16.mxu0 0
    %6803 = vmatpush1.bf16.msra.mxu0 0
    %6804 = vmatprep.subr.bf16.mxu0 0
    %6805 = vmatpush1.bf16.msra.mxu0 0
    %6806 = vmatprep.subr.bf16.mxu0 0
    %6807 = vmatpush1.bf16.msra.mxu0 0
    %6808 = vmatprep.subr.bf16.mxu0 0
    %6809 = vmatpush1.bf16.msra.mxu0 0
    %6810 = vmatprep.subr.bf16.mxu0 0
    %6811 = vmatpush1.bf16.msra.mxu0 0
    %6812 = vmatprep.mubr.bf16.mxu0 0
    %6813 = vmatmul.mubr.bf16.gmra.mrb[0].mxu0 %v6671
    %v6814 = vpop.f32.mrb[0].mxu0
    %v6815 = vadd.f32 %v6774, %v6814
    %v6816 = vpop.f32.mrb[0].mxu0
    %v6817 = vadd.f32 %v6776, %v6816
    %v6818 = vpop.f32.mrb[0].mxu0
    %v6819 = vpop.f32.mrb[0].mxu0
    %6820 = vdwg.mxu0
    %6821 = vmatprep.subr.bf16.mxu0 %v6152
    %6822 = vmatpush1.bf16.msra.mxu0 %v6151
    %6823 = vmatprep.subr.bf16.mxu0 %v6160
    %6824 = vmatpush1.bf16.msra.mxu0 %v6159
    %6825 = vmatprep.subr.bf16.mxu0 %v6168
    %6826 = vmatpush1.bf16.msra.mxu0 %v6167
    %6827 = vmatprep.subr.bf16.mxu0 %v6176
    %6828 = vmatpush1.bf16.msra.mxu0 %v6175
    %6829 = vmatprep.subr.bf16.mxu0 %v6184
    %6830 = vmatpush1.bf16.msra.mxu0 %v6183
    %6831 = vmatprep.subr.bf16.mxu0 %v6192
    %6832 = vmatpush1.bf16.msra.mxu0 %v6191
    %6833 = vmatprep.subr.bf16.mxu0 %v6200
    %6834 = vmatpush1.bf16.msra.mxu0 %v6199
    %6835 = vmatprep.subr.bf16.mxu0 %v6208
    %6836 = vmatpush1.bf16.msra.mxu0 %v6207
    %6837 = vmatprep.subr.bf16.mxu0 %v6216
    %6838 = vmatpush1.bf16.msra.mxu0 %v6215
    %6839 = vmatprep.subr.bf16.mxu0 %v6224
    %6840 = vmatpush1.bf16.msra.mxu0 %v6223
    %6841 = vmatprep.subr.bf16.mxu0 %v6232
    %6842 = vmatpush1.bf16.msra.mxu0 %v6231
    %6843 = vmatprep.subr.bf16.mxu0 %v6240
    %6844 = vmatpush1.bf16.msra.mxu0 %v6239
    %6845 = vmatprep.subr.bf16.mxu0 %v6248
    %6846 = vmatpush1.bf16.msra.mxu0 %v6247
    %6847 = vmatprep.subr.bf16.mxu0 %v6256
    %6848 = vmatpush1.bf16.msra.mxu0 %v6255
    %6849 = vmatprep.subr.bf16.mxu0 %v6264
    %6850 = vmatpush1.bf16.msra.mxu0 %v6263
    %6851 = vmatprep.subr.bf16.mxu0 %v6272
    %6852 = vmatpush1.bf16.msra.mxu0 %v6271
    %6853 = vmatprep.mubr.bf16.mxu0 %v5324
    %6854 = vmatmul.mubr.bf16.gmra.mrb[0].mxu0 %v5323
    %v6855 = vpop.f32.mrb[0].mxu0
    %v6856 = vadd.f32 %v5340, %v6855
    %v6857 = vpop.f32.mrb[0].mxu0
    %v6858 = vadd.f32 %v5344, %v6857
    %v6859 = vpop.f32.mrb[0].mxu0
    %v6860 = vpop.f32.mrb[0].mxu0
    %6861 = vdwg.mxu0
    %6862 = vmatprep.subr.bf16.mxu0 %v6280
    %6863 = vmatpush1.bf16.msra.mxu0 %v6279
    %6864 = vmatprep.subr.bf16.mxu0 %v6288
    %6865 = vmatpush1.bf16.msra.mxu0 %v6287
    %6866 = vmatprep.subr.bf16.mxu0 %v6296
    %6867 = vmatpush1.bf16.msra.mxu0 %v6295
    %6868 = vmatprep.subr.bf16.mxu0 %v6304
    %6869 = vmatpush1.bf16.msra.mxu0 %v6303
    %6870 = vmatprep.subr.bf16.mxu0 %v6312
    %6871 = vmatpush1.bf16.msra.mxu0 %v6311
    %6872 = vmatprep.subr.bf16.mxu0 %v6320
    %6873 = vmatpush1.bf16.msra.mxu0 %v6319
    %6874 = vmatprep.subr.bf16.mxu0 %v6328
    %6875 = vmatpush1.bf16.msra.mxu0 %v6327
    %6876 = vmatprep.subr.bf16.mxu0 %v6336
    %6877 = vmatpush1.bf16.msra.mxu0 %v6335
    %6878 = vmatprep.subr.bf16.mxu0 %v6344
    %6879 = vmatpush1.bf16.msra.mxu0 %v6343
    %6880 = vmatprep.subr.bf16.mxu0 %v6352
    %6881 = vmatpush1.bf16.msra.mxu0 %v6351
    %6882 = vmatprep.subr.bf16.mxu0 %v6360
    %6883 = vmatpush1.bf16.msra.mxu0 %v6359
    %6884 = vmatprep.subr.bf16.mxu0 %v6368
    %6885 = vmatpush1.bf16.msra.mxu0 %v6367
    %6886 = vmatprep.subr.bf16.mxu0 %v6376
    %6887 = vmatpush1.bf16.msra.mxu0 %v6375
    %6888 = vmatprep.subr.bf16.mxu0 %v6384
    %6889 = vmatpush1.bf16.msra.mxu0 %v6383
    %6890 = vmatprep.subr.bf16.mxu0 %v6392
    %6891 = vmatpush1.bf16.msra.mxu0 %v6391
    %6892 = vmatprep.subr.bf16.mxu0 %v6400
    %6893 = vmatpush1.bf16.msra.mxu0 %v6399
    %6894 = vmatprep.mubr.bf16.mxu0 %v5326
    %6895 = vmatmul.mubr.bf16.gmra.mrb[0].mxu0 %v5325
    %v6896 = vpop.f32.mrb[0].mxu0
    %v6897 = vadd.f32 %v6856, %v6896
    %v6898 = vpop.f32.mrb[0].mxu0
    %v6899 = vadd.f32 %v6858, %v6898
    %v6900 = vpop.f32.mrb[0].mxu0
    %v6901 = vpop.f32.mrb[0].mxu0
    %6902 = vdwg.mxu0
    %6903 = vmatprep.subr.bf16.mxu0 %v6684
    %6904 = vmatpush1.bf16.msra.mxu0 %v6681
    %6905 = vmatprep.subr.bf16.mxu0 0
    %6906 = vmatpush1.bf16.msra.mxu0 0
    %6907 = vmatprep.subr.bf16.mxu0 0
    %6908 = vmatpush1.bf16.msra.mxu0 0
    %6909 = vmatprep.subr.bf16.mxu0 0
    %6910 = vmatpush1.bf16.msra.mxu0 0
    %6911 = vmatprep.subr.bf16.mxu0 0
    %6912 = vmatpush1.bf16.msra.mxu0 0
    %6913 = vmatprep.subr.bf16.mxu0 0
    %6914 = vmatpush1.bf16.msra.mxu0 0
    %6915 = vmatprep.subr.bf16.mxu0 0
    %6916 = vmatpush1.bf16.msra.mxu0 0
    %6917 = vmatprep.subr.bf16.mxu0 0
    %6918 = vmatpush1.bf16.msra.mxu0 0
    %6919 = vmatprep.subr.bf16.mxu0 0
    %6920 = vmatpush1.bf16.msra.mxu0 0
    %6921 = vmatprep.subr.bf16.mxu0 0
    %6922 = vmatpush1.bf16.msra.mxu0 0
    %6923 = vmatprep.subr.bf16.mxu0 0
    %6924 = vmatpush1.bf16.msra.mxu0 0
    %6925 = vmatprep.subr.bf16.mxu0 0
    %6926 = vmatpush1.bf16.msra.mxu0 0
    %6927 = vmatprep.subr.bf16.mxu0 0
    %6928 = vmatpush1.bf16.msra.mxu0 0
    %6929 = vmatprep.subr.bf16.mxu0 0
    %6930 = vmatpush1.bf16.msra.mxu0 0
    %6931 = vmatprep.subr.bf16.mxu0 0
    %6932 = vmatpush1.bf16.msra.mxu0 0
    %6933 = vmatprep.subr.bf16.mxu0 0
    %6934 = vmatpush1.bf16.msra.mxu0 0
    %6935 = vmatprep.mubr.bf16.mxu0 0
    %6936 = vmatmul.mubr.bf16.gmra.mrb[0].mxu0 %v6671
    %v6937 = vpop.f32.mrb[0].mxu0
    %v6938 = vadd.f32 %v6897, %v6937
    %v6939 = vpop.f32.mrb[0].mxu0
    %v6940 = vadd.f32 %v6899, %v6939
    %v6941 = vpop.f32.mrb[0].mxu0
    %v6942 = vpop.f32.mrb[0].mxu0
    %6943 = vdwg.mxu0
    %6944 = vmatprep.subr.bf16.mxu0 %v6154
    %6945 = vmatpush1.bf16.msra.mxu0 %v6153
    %6946 = vmatprep.subr.bf16.mxu0 %v6162
    %6947 = vmatpush1.bf16.msra.mxu0 %v6161
    %6948 = vmatprep.subr.bf16.mxu0 %v6170
    %6949 = vmatpush1.bf16.msra.mxu0 %v6169
    %6950 = vmatprep.subr.bf16.mxu0 %v6178
    %6951 = vmatpush1.bf16.msra.mxu0 %v6177
    %6952 = vmatprep.subr.bf16.mxu0 %v6186
    %6953 = vmatpush1.bf16.msra.mxu0 %v6185
    %6954 = vmatprep.subr.bf16.mxu0 %v6194
    %6955 = vmatpush1.bf16.msra.mxu0 %v6193
    %6956 = vmatprep.subr.bf16.mxu0 %v6202
    %6957 = vmatpush1.bf16.msra.mxu0 %v6201
    %6958 = vmatprep.subr.bf16.mxu0 %v6210
    %6959 = vmatpush1.bf16.msra.mxu0 %v6209
    %6960 = vmatprep.subr.bf16.mxu0 %v6218
    %6961 = vmatpush1.bf16.msra.mxu0 %v6217
    %6962 = vmatprep.subr.bf16.mxu0 %v6226
    %6963 = vmatpush1.bf16.msra.mxu0 %v6225
    %6964 = vmatprep.subr.bf16.mxu0 %v6234
    %6965 = vmatpush1.bf16.msra.mxu0 %v6233
    %6966 = vmatprep.subr.bf16.mxu0 %v6242
    %6967 = vmatpush1.bf16.msra.mxu0 %v6241
    %6968 = vmatprep.subr.bf16.mxu0 %v6250
    %6969 = vmatpush1.bf16.msra.mxu0 %v6249
    %6970 = vmatprep.subr.bf16.mxu0 %v6258
    %6971 = vmatpush1.bf16.msra.mxu0 %v6257
    %6972 = vmatprep.subr.bf16.mxu0 %v6266
    %6973 = vmatpush1.bf16.msra.mxu0 %v6265
    %6974 = vmatprep.subr.bf16.mxu0 %v6274
    %6975 = vmatpush1.bf16.msra.mxu0 %v6273
    %6976 = vmatprep.mubr.bf16.mxu0 %v5324
    %6977 = vmatmul.mubr.bf16.gmra.mrb[0].mxu0 %v5323
    %v6978 = vpop.f32.mrb[0].mxu0
    %v6979 = vadd.f32 %v5348, %v6978
    %v6980 = vpop.f32.mrb[0].mxu0
    %v6981 = vadd.f32 %v5352, %v6980
    %v6982 = vpop.f32.mrb[0].mxu0
    %v6983 = vpop.f32.mrb[0].mxu0
    %6984 = vdwg.mxu0
    %6985 = vmatprep.subr.bf16.mxu0 %v6282
    %6986 = vmatpush1.bf16.msra.mxu0 %v6281
    %6987 = vmatprep.subr.bf16.mxu0 %v6290
    %6988 = vmatpush1.bf16.msra.mxu0 %v6289
    %6989 = vmatprep.subr.bf16.mxu0 %v6298
    %6990 = vmatpush1.bf16.msra.mxu0 %v6297
    %6991 = vmatprep.subr.bf16.mxu0 %v6306
    %6992 = vmatpush1.bf16.msra.mxu0 %v6305
    %6993 = vmatprep.subr.bf16.mxu0 %v6314
    %6994 = vmatpush1.bf16.msra.mxu0 %v6313
    %6995 = vmatprep.subr.bf16.mxu0 %v6322
    %6996 = vmatpush1.bf16.msra.mxu0 %v6321
    %6997 = vmatprep.subr.bf16.mxu0 %v6330
    %6998 = vmatpush1.bf16.msra.mxu0 %v6329
    %6999 = vmatprep.subr.bf16.mxu0 %v6338
    %7000 = vmatpush1.bf16.msra.mxu0 %v6337
    %7001 = vmatprep.subr.bf16.mxu0 %v6346
    %7002 = vmatpush1.bf16.msra.mxu0 %v6345
    %7003 = vmatprep.subr.bf16.mxu0 %v6354
    %7004 = vmatpush1.bf16.msra.mxu0 %v6353
    %7005 = vmatprep.subr.bf16.mxu0 %v6362
    %7006 = vmatpush1.bf16.msra.mxu0 %v6361
    %7007 = vmatprep.subr.bf16.mxu0 %v6370
    %7008 = vmatpush1.bf16.msra.mxu0 %v6369
    %7009 = vmatprep.subr.bf16.mxu0 %v6378
    %7010 = vmatpush1.bf16.msra.mxu0 %v6377
    %7011 = vmatprep.subr.bf16.mxu0 %v6386
    %7012 = vmatpush1.bf16.msra.mxu0 %v6385
    %7013 = vmatprep.subr.bf16.mxu0 %v6394
    %7014 = vmatpush1.bf16.msra.mxu0 %v6393
    %7015 = vmatprep.subr.bf16.mxu0 %v6402
    %7016 = vmatpush1.bf16.msra.mxu0 %v6401
    %7017 = vmatprep.mubr.bf16.mxu0 %v5326
    %7018 = vmatmul.mubr.bf16.gmra.mrb[0].mxu0 %v5325
    %v7019 = vpop.f32.mrb[0].mxu0
    %v7020 = vadd.f32 %v6979, %v7019
    %v7021 = vpop.f32.mrb[0].mxu0
    %v7022 = vadd.f32 %v6981, %v7021
    %v7023 = vpop.f32.mrb[0].mxu0
    %v7024 = vpop.f32.mrb[0].mxu0
    %7025 = vdwg.mxu0
    %7026 = vmatprep.subr.bf16.mxu0 %v6690
    %7027 = vmatpush1.bf16.msra.mxu0 %v6687
    %7028 = vmatprep.subr.bf16.mxu0 0
    %7029 = vmatpush1.bf16.msra.mxu0 0
    %7030 = vmatprep.subr.bf16.mxu0 0
    %7031 = vmatpush1.bf16.msra.mxu0 0
    %7032 = vmatprep.subr.bf16.mxu0 0
    %7033 = vmatpush1.bf16.msra.mxu0 0
    %7034 = vmatprep.subr.bf16.mxu0 0
    %7035 = vmatpush1.bf16.msra.mxu0 0
    %7036 = vmatprep.subr.bf16.mxu0 0
    %7037 = vmatpush1.bf16.msra.mxu0 0
    %7038 = vmatprep.subr.bf16.mxu0 0
    %7039 = vmatpush1.bf16.msra.mxu0 0
    %7040 = vmatprep.subr.bf16.mxu0 0
    %7041 = vmatpush1.bf16.msra.mxu0 0
    %7042 = vmatprep.subr.bf16.mxu0 0
    %7043 = vmatpush1.bf16.msra.mxu0 0
    %7044 = vmatprep.subr.bf16.mxu0 0
    %7045 = vmatpush1.bf16.msra.mxu0 0
    %7046 = vmatprep.subr.bf16.mxu0 0
    %7047 = vmatpush1.bf16.msra.mxu0 0
    %7048 = vmatprep.subr.bf16.mxu0 0
    %7049 = vmatpush1.bf16.msra.mxu0 0
    %7050 = vmatprep.subr.bf16.mxu0 0
    %7051 = vmatpush1.bf16.msra.mxu0 0
    %7052 = vmatprep.subr.bf16.mxu0 0
    %7053 = vmatpush1.bf16.msra.mxu0 0
    %7054 = vmatprep.subr.bf16.mxu0 0
    %7055 = vmatpush1.bf16.msra.mxu0 0
    %7056 = vmatprep.subr.bf16.mxu0 0
    %7057 = vmatpush1.bf16.msra.mxu0 0
    %7058 = vmatprep.mubr.bf16.mxu0 0
    %7059 = vmatmul.mubr.bf16.gmra.mrb[0].mxu0 %v6671
    %v7060 = vpop.f32.mrb[0].mxu0
    %v7061 = vadd.f32 %v7020, %v7060
    %v7062 = vpop.f32.mrb[0].mxu0
    %v7063 = vadd.f32 %v7022, %v7062
    %v7064 = vpop.f32.mrb[0].mxu0
    %v7065 = vpop.f32.mrb[0].mxu0
    %7066 = vdwg.mxu0
    %7067 = vmatprep.subr.bf16.mxu0 %v6156
    %7068 = vmatpush1.bf16.msra.mxu0 %v6155
    %7069 = vmatprep.subr.bf16.mxu0 %v6164
    %7070 = vmatpush1.bf16.msra.mxu0 %v6163
    %7071 = vmatprep.subr.bf16.mxu0 %v6172
    %7072 = vmatpush1.bf16.msra.mxu0 %v6171
    %7073 = vmatprep.subr.bf16.mxu0 %v6180
    %7074 = vmatpush1.bf16.msra.mxu0 %v6179
    %7075 = vmatprep.subr.bf16.mxu0 %v6188
    %7076 = vmatpush1.bf16.msra.mxu0 %v6187
    %7077 = vmatprep.subr.bf16.mxu0 %v6196
    %7078 = vmatpush1.bf16.msra.mxu0 %v6195
    %7079 = vmatprep.subr.bf16.mxu0 %v6204
    %7080 = vmatpush1.bf16.msra.mxu0 %v6203
    %7081 = vmatprep.subr.bf16.mxu0 %v6212
    %7082 = vmatpush1.bf16.msra.mxu0 %v6211
    %7083 = vmatprep.subr.bf16.mxu0 %v6220
    %7084 = vmatpush1.bf16.msra.mxu0 %v6219
    %7085 = vmatprep.subr.bf16.mxu0 %v6228
    %7086 = vmatpush1.bf16.msra.mxu0 %v6227
    %7087 = vmatprep.subr.bf16.mxu0 %v6236
    %7088 = vmatpush1.bf16.msra.mxu0 %v6235
    %7089 = vmatprep.subr.bf16.mxu0 %v6244
    %7090 = vmatpush1.bf16.msra.mxu0 %v6243
    %7091 = vmatprep.subr.bf16.mxu0 %v6252
    %7092 = vmatpush1.bf16.msra.mxu0 %v6251
    %7093 = vmatprep.subr.bf16.mxu0 %v6260
    %7094 = vmatpush1.bf16.msra.mxu0 %v6259
    %7095 = vmatprep.subr.bf16.mxu0 %v6268
    %7096 = vmatpush1.bf16.msra.mxu0 %v6267
    %7097 = vmatprep.subr.bf16.mxu0 %v6276
    %7098 = vmatpush1.bf16.msra.mxu0 %v6275
    %7099 = vmatprep.mubr.bf16.mxu0 %v5324
    %7100 = vmatmul.mubr.bf16.gmra.mrb[0].mxu0 %v5323
    %v7101 = vpop.f32.mrb[0].mxu0
    %v7102 = vadd.f32 %v5356, %v7101
    %v7103 = vpop.f32.mrb[0].mxu0
    %v7104 = vadd.f32 %v5360, %v7103
    %v7105 = vpop.f32.mrb[0].mxu0
    %v7106 = vpop.f32.mrb[0].mxu0
    %7107 = vdwg.mxu0
    %7108 = vmatprep.subr.bf16.mxu0 %v6284
    %7109 = vmatpush1.bf16.msra.mxu0 %v6283
    %7110 = vmatprep.subr.bf16.mxu0 %v6292
    %7111 = vmatpush1.bf16.msra.mxu0 %v6291
    %7112 = vmatprep.subr.bf16.mxu0 %v6300
    %7113 = vmatpush1.bf16.msra.mxu0 %v6299
    %7114 = vmatprep.subr.bf16.mxu0 %v6308
    %7115 = vmatpush1.bf16.msra.mxu0 %v6307
    %7116 = vmatprep.subr.bf16.mxu0 %v6316
    %7117 = vmatpush1.bf16.msra.mxu0 %v6315
    %7118 = vmatprep.subr.bf16.mxu0 %v6324
    %7119 = vmatpush1.bf16.msra.mxu0 %v6323
    %7120 = vmatprep.subr.bf16.mxu0 %v6332
    %7121 = vmatpush1.bf16.msra.mxu0 %v6331
    %7122 = vmatprep.subr.bf16.mxu0 %v6340
    %7123 = vmatpush1.bf16.msra.mxu0 %v6339
    %7124 = vmatprep.subr.bf16.mxu0 %v6348
    %7125 = vmatpush1.bf16.msra.mxu0 %v6347
    %7126 = vmatprep.subr.bf16.mxu0 %v6356
    %7127 = vmatpush1.bf16.msra.mxu0 %v6355
    %7128 = vmatprep.subr.bf16.mxu0 %v6364
    %7129 = vmatpush1.bf16.msra.mxu0 %v6363
    %7130 = vmatprep.subr.bf16.mxu0 %v6372
    %7131 = vmatpush1.bf16.msra.mxu0 %v6371
    %7132 = vmatprep.subr.bf16.mxu0 %v6380
    %7133 = vmatpush1.bf16.msra.mxu0 %v6379
    %7134 = vmatprep.subr.bf16.mxu0 %v6388
    %7135 = vmatpush1.bf16.msra.mxu0 %v6387
    %7136 = vmatprep.subr.bf16.mxu0 %v6396
    %7137 = vmatpush1.bf16.msra.mxu0 %v6395
    %7138 = vmatprep.subr.bf16.mxu0 %v6404
    %7139 = vmatpush1.bf16.msra.mxu0 %v6403
    %7140 = vmatprep.mubr.bf16.mxu0 %v5326
    %7141 = vmatmul.mubr.bf16.gmra.mrb[0].mxu0 %v5325
    %v7142 = vpop.f32.mrb[0].mxu0
    %v7143 = vadd.f32 %v7102, %v7142
    %v7144 = vpop.f32.mrb[0].mxu0
    %v7145 = vadd.f32 %v7104, %v7144
    %v7146 = vpop.f32.mrb[0].mxu0
    %v7147 = vpop.f32.mrb[0].mxu0
    %7148 = vdwg.mxu0
    %7149 = vmatprep.subr.bf16.mxu0 %v6696
    %7150 = vmatpush1.bf16.msra.mxu0 %v6693
    %7151 = vmatprep.subr.bf16.mxu0 0
    %7152 = vmatpush1.bf16.msra.mxu0 0
    %7153 = vmatprep.subr.bf16.mxu0 0
    %7154 = vmatpush1.bf16.msra.mxu0 0
    %7155 = vmatprep.subr.bf16.mxu0 0
    %7156 = vmatpush1.bf16.msra.mxu0 0
    %7157 = vmatprep.subr.bf16.mxu0 0
    %7158 = vmatpush1.bf16.msra.mxu0 0
    %7159 = vmatprep.subr.bf16.mxu0 0
    %7160 = vmatpush1.bf16.msra.mxu0 0
    %7161 = vmatprep.subr.bf16.mxu0 0
    %7162 = vmatpush1.bf16.msra.mxu0 0
    %7163 = vmatprep.subr.bf16.mxu0 0
    %7164 = vmatpush1.bf16.msra.mxu0 0
    %7165 = vmatprep.subr.bf16.mxu0 0
    %7166 = vmatpush1.bf16.msra.mxu0 0
    %7167 = vmatprep.subr.bf16.mxu0 0
    %7168 = vmatpush1.bf16.msra.mxu0 0
    %7169 = vmatprep.subr.bf16.mxu0 0
    %7170 = vmatpush1.bf16.msra.mxu0 0
    %7171 = vmatprep.subr.bf16.mxu0 0
    %7172 = vmatpush1.bf16.msra.mxu0 0
    %7173 = vmatprep.subr.bf16.mxu0 0
    %7174 = vmatpush1.bf16.msra.mxu0 0
    %7175 = vmatprep.subr.bf16.mxu0 0
    %7176 = vmatpush1.bf16.msra.mxu0 0
    %7177 = vmatprep.subr.bf16.mxu0 0
    %7178 = vmatpush1.bf16.msra.mxu0 0
    %7179 = vmatprep.subr.bf16.mxu0 0
    %7180 = vmatpush1.bf16.msra.mxu0 0
    %7181 = vmatprep.mubr.bf16.mxu0 0
    %7182 = vmatmul.mubr.bf16.gmra.mrb[0].mxu0 %v6671
    %v7183 = vpop.f32.mrb[0].mxu0
    %v7184 = vadd.f32 %v7143, %v7183
    %v7185 = vpop.f32.mrb[0].mxu0
    %v7186 = vadd.f32 %v7145, %v7185
    %v7187 = vpop.f32.mrb[0].mxu0
    %v7188 = vpop.f32.mrb[0].mxu0
    %7189 = vdwg.mxu0
    %v7190 = vmax.f32 %v6815, 0.0
    %v7191 = vmax.f32 %v6817, 0.0
    %v7192 = vmax.f32 %v6938, 0.0
    %v7193 = vmax.f32 %v6940, 0.0
    %v7194 = vmax.f32 %v7061, 0.0
    %v7195 = vmax.f32 %v7063, 0.0
    %v7196 = vmax.f32 %v7184, 0.0
    %v7197 = vmax.f32 %v7186, 0.0
    %v7198 = vsel %vm735, %v7190, 0.0
    %v7199 = vsel %vm735, %v7191, 0.0
    %v7200 = vadd.f32 %v7198, %v7199
    %v7201 = vsel %vm735, %v7192, 0.0
    %v7202 = vadd.f32 %v7200, %v7201
    %v7203 = vsel %vm735, %v7193, 0.0
    %v7204 = vadd.f32 %v7202, %v7203
    %v7205 = vsel %vm735, %v7194, 0.0
    %v7206 = vadd.f32 %v7204, %v7205
    %v7207 = vsel %vm735, %v7195, 0.0
    %v7208 = vadd.f32 %v7206, %v7207
    %v7209 = vsel %vm735, %v7196, 0.0
    %v7210 = vadd.f32 %v7208, %v7209
    %v7211 = vsel %vm735, %v7197, 0.0
    %v7212 = vadd.f32 %v7210, %v7211
    %7213 = vadd.xlane.f32.xlu0 %v7212
    %v7214 = vpop.xlane.xlu0 %7213
    %v7215 = vmul.f32 %v7214, %v3435
    %v7216 = vsub.f32 %v7190, %v7215
    %v7217 = vsub.f32 %v7191, %v7215
    %v7218 = vsub.f32 %v7192, %v7215
    %v7219 = vsub.f32 %v7193, %v7215
    %v7220 = vsub.f32 %v7194, %v7215
    %v7221 = vsub.f32 %v7195, %v7215
    %v7222 = vsub.f32 %v7196, %v7215
    %v7223 = vsub.f32 %v7197, %v7215
    %v7224 = vmul.f32 %v7216, %v7216
    %v7225 = vmul.f32 %v7217, %v7217
    %v7226 = vmul.f32 %v7218, %v7218
    %v7227 = vmul.f32 %v7219, %v7219
    %v7228 = vmul.f32 %v7220, %v7220
    %v7229 = vmul.f32 %v7221, %v7221
    %v7230 = vmul.f32 %v7222, %v7222
    %v7231 = vmul.f32 %v7223, %v7223
    %v7232 = vsel %vm735, %v7224, 0.0
    %v7233 = vsel %vm735, %v7225, 0.0
    %v7234 = vadd.f32 %v7232, %v7233
    %v7235 = vsel %vm735, %v7226, 0.0
    %v7236 = vadd.f32 %v7234, %v7235
    %v7237 = vsel %vm735, %v7227, 0.0
    %v7238 = vadd.f32 %v7236, %v7237
    %v7239 = vsel %vm735, %v7228, 0.0
    %v7240 = vadd.f32 %v7238, %v7239
    %v7241 = vsel %vm735, %v7229, 0.0
    %v7242 = vadd.f32 %v7240, %v7241
    %v7243 = vsel %vm735, %v7230, 0.0
    %v7244 = vadd.f32 %v7242, %v7243
    %v7245 = vsel %vm735, %v7231, 0.0
    %v7246 = vadd.f32 %v7244, %v7245
    %7247 = vadd.xlane.f32.xlu0 %v7246
    %v7248 = vpop.xlane.xlu0 %7247
    %v7249 = vmul.f32 %v7248, %v3435
    %v7250 = vadd.f32 %v7249, 1e-05
    %v7251 = vrsqrt.pop %v7250
    %v7252 = vmul.f32 %v7216, %v7251
    %v7253 = vmul.f32 %v7217, %v7251
    %v7254 = vmul.f32 %v7218, %v7251
    %v7255 = vmul.f32 %v7219, %v7251
    %v7256 = vmul.f32 %v7220, %v7251
    %v7257 = vmul.f32 %v7221, %v7251
    %v7258 = vmul.f32 %v7222, %v7251
    %v7259 = vmul.f32 %v7223, %v7251
    %v7260 = vld [vmem:[#allocation31] sm:$0xff]
    %v7261 = vld [vmem:[#allocation31 + $0x8] sm:$0xff]
    %v7262 = vld [vmem:[#allocation31 + $0x10] sm:$0xff]
    %v7263 = vld [vmem:[#allocation31 + $0x18] sm:$0xff]
    %v7264 = vld [vmem:[#allocation31 + $0x20] sm:$0xff]
    %v7265 = vld [vmem:[#allocation31 + $0x28] sm:$0xff]
    %v7266 = vld [vmem:[#allocation31 + $0x30] sm:$0xff]
    %v7267 = vld [vmem:[#allocation31 + $0x38] sm:$0xff]
    %v7268 = vld [vmem:[#allocation31 + $0x40] sm:$0xff]
    %v7269 = vld [vmem:[#allocation31 + $0x48] sm:$0xff]
    %v7270 = vld [vmem:[#allocation31 + $0x50] sm:$0xff]
    %v7271 = vld [vmem:[#allocation31 + $0x58] sm:$0xff]
    %v7272 = vld [vmem:[#allocation31 + $0x60] sm:$0xff]
    %v7273 = vld [vmem:[#allocation31 + $0x68] sm:$0xff]
    %v7274 = vld [vmem:[#allocation31 + $0x70] sm:$0xff]
    %v7275 = vld [vmem:[#allocation31 + $0x78] sm:$0xff]
    %v7276 = vld [vmem:[#allocation31 + $0x80] sm:$0xff]
    %v7277 = vld [vmem:[#allocation31 + $0x88] sm:$0xff]
    %v7278 = vld [vmem:[#allocation31 + $0x90] sm:$0xff]
    %v7279 = vld [vmem:[#allocation31 + $0x98] sm:$0xff]
    %v7280 = vld [vmem:[#allocation31 + $0xa0] sm:$0xff]
    %v7281 = vld [vmem:[#allocation31 + $0xa8] sm:$0xff]
    %v7282 = vld [vmem:[#allocation31 + $0xb0] sm:$0xff]
    %v7283 = vld [vmem:[#allocation31 + $0xb8] sm:$0xff]
    %v7284 = vld [vmem:[#allocation31 + $0xc0] sm:$0xff]
    %v7285 = vld [vmem:[#allocation31 + $0xc8] sm:$0xff]
    %v7286 = vld [vmem:[#allocation31 + $0xd0] sm:$0xff]
    %v7287 = vld [vmem:[#allocation31 + $0xd8] sm:$0xff]
    %v7288 = vld [vmem:[#allocation31 + $0xe0] sm:$0xff]
    %v7289 = vld [vmem:[#allocation31 + $0xe8] sm:$0xff]
    %v7290 = vld [vmem:[#allocation31 + $0xf0] sm:$0xff]
    %v7291 = vld [vmem:[#allocation31 + $0xf8] sm:$0xff]
    %v7292 = vld [vmem:[#allocation31 + $0x100] sm:$0xff]
    %v7293 = vld [vmem:[#allocation31 + $0x108] sm:$0xff]
    %v7294 = vld [vmem:[#allocation31 + $0x110] sm:$0xff]
    %v7295 = vld [vmem:[#allocation31 + $0x118] sm:$0xff]
    %v7296 = vld [vmem:[#allocation31 + $0x120] sm:$0xff]
    %v7297 = vld [vmem:[#allocation31 + $0x128] sm:$0xff]
    %v7298 = vld [vmem:[#allocation31 + $0x130] sm:$0xff]
    %v7299 = vld [vmem:[#allocation31 + $0x138] sm:$0xff]
    %v7300 = vld [vmem:[#allocation31 + $0x140] sm:$0xff]
    %v7301 = vld [vmem:[#allocation31 + $0x148] sm:$0xff]
    %v7302 = vld [vmem:[#allocation31 + $0x150] sm:$0xff]
    %v7303 = vld [vmem:[#allocation31 + $0x158] sm:$0xff]
    %v7304 = vld [vmem:[#allocation31 + $0x160] sm:$0xff]
    %v7305 = vld [vmem:[#allocation31 + $0x168] sm:$0xff]
    %v7306 = vld [vmem:[#allocation31 + $0x170] sm:$0xff]
    %v7307 = vld [vmem:[#allocation31 + $0x178] sm:$0xff]
    %v7308 = vld [vmem:[#allocation31 + $0x180] sm:$0xff]
    %v7309 = vld [vmem:[#allocation31 + $0x188] sm:$0xff]
    %v7310 = vld [vmem:[#allocation31 + $0x190] sm:$0xff]
    %v7311 = vld [vmem:[#allocation31 + $0x198] sm:$0xff]
    %v7312 = vld [vmem:[#allocation31 + $0x1a0] sm:$0xff]
    %v7313 = vld [vmem:[#allocation31 + $0x1a8] sm:$0xff]
    %v7314 = vld [vmem:[#allocation31 + $0x1b0] sm:$0xff]
    %v7315 = vld [vmem:[#allocation31 + $0x1b8] sm:$0xff]
    %v7316 = vld [vmem:[#allocation31 + $0x1c0] sm:$0xff]
    %v7317 = vld [vmem:[#allocation31 + $0x1c8] sm:$0xff]
    %v7318 = vld [vmem:[#allocation31 + $0x1d0] sm:$0xff]
    %v7319 = vld [vmem:[#allocation31 + $0x1d8] sm:$0xff]
    %v7320 = vld [vmem:[#allocation31 + $0x1e0] sm:$0xff]
    %v7321 = vld [vmem:[#allocation31 + $0x1e8] sm:$0xff]
    %v7322 = vld [vmem:[#allocation31 + $0x1f0] sm:$0xff]
    %v7323 = vld [vmem:[#allocation31 + $0x1f8] sm:$0xff]
    %v7324 = vld [vmem:[#allocation31 + $0x200] sm:$0xff]
    %v7325 = vld [vmem:[#allocation31 + $0x208] sm:$0xff]
    %v7326 = vld [vmem:[#allocation31 + $0x210] sm:$0xff]
    %v7327 = vld [vmem:[#allocation31 + $0x218] sm:$0xff]
    %v7328 = vld [vmem:[#allocation31 + $0x220] sm:$0xff]
    %v7329 = vld [vmem:[#allocation31 + $0x228] sm:$0xff]
    %v7330 = vld [vmem:[#allocation31 + $0x230] sm:$0xff]
    %v7331 = vld [vmem:[#allocation31 + $0x238] sm:$0xff]
    %v7332 = vld [vmem:[#allocation31 + $0x240] sm:$0xff]
    %v7333 = vld [vmem:[#allocation31 + $0x248] sm:$0xff]
    %v7334 = vld [vmem:[#allocation31 + $0x250] sm:$0xff]
    %v7335 = vld [vmem:[#allocation31 + $0x258] sm:$0xff]
    %v7336 = vld [vmem:[#allocation31 + $0x260] sm:$0xff]
    %v7337 = vld [vmem:[#allocation31 + $0x268] sm:$0xff]
    %v7338 = vld [vmem:[#allocation31 + $0x270] sm:$0xff]
    %v7339 = vld [vmem:[#allocation31 + $0x278] sm:$0xff]
    %v7340 = vld [vmem:[#allocation31 + $0x280] sm:$0xff]
    %v7341 = vld [vmem:[#allocation31 + $0x288] sm:$0xff]
    %v7342 = vld [vmem:[#allocation31 + $0x290] sm:$0xff]
    %v7343 = vld [vmem:[#allocation31 + $0x298] sm:$0xff]
    %v7344 = vld [vmem:[#allocation31 + $0x2a0] sm:$0xff]
    %v7345 = vld [vmem:[#allocation31 + $0x2a8] sm:$0xff]
    %v7346 = vld [vmem:[#allocation31 + $0x2b0] sm:$0xff]
    %v7347 = vld [vmem:[#allocation31 + $0x2b8] sm:$0xff]
    %v7348 = vld [vmem:[#allocation31 + $0x2c0] sm:$0xff]
    %v7349 = vld [vmem:[#allocation31 + $0x2c8] sm:$0xff]
    %v7350 = vld [vmem:[#allocation31 + $0x2d0] sm:$0xff]
    %v7351 = vld [vmem:[#allocation31 + $0x2d8] sm:$0xff]
    %v7352 = vld [vmem:[#allocation31 + $0x2e0] sm:$0xff]
    %v7353 = vld [vmem:[#allocation31 + $0x2e8] sm:$0xff]
    %v7354 = vld [vmem:[#allocation31 + $0x2f0] sm:$0xff]
    %v7355 = vld [vmem:[#allocation31 + $0x2f8] sm:$0xff]
    %v7356 = vld [vmem:[#allocation31 + $0x300] sm:$0xff]
    %v7357 = vld [vmem:[#allocation31 + $0x308] sm:$0xff]
    %v7358 = vld [vmem:[#allocation31 + $0x310] sm:$0xff]
    %v7359 = vld [vmem:[#allocation31 + $0x318] sm:$0xff]
    %v7360 = vld [vmem:[#allocation31 + $0x320] sm:$0xff]
    %v7361 = vld [vmem:[#allocation31 + $0x328] sm:$0xff]
    %v7362 = vld [vmem:[#allocation31 + $0x330] sm:$0xff]
    %v7363 = vld [vmem:[#allocation31 + $0x338] sm:$0xff]
    %v7364 = vld [vmem:[#allocation31 + $0x340] sm:$0xff]
    %v7365 = vld [vmem:[#allocation31 + $0x348] sm:$0xff]
    %v7366 = vld [vmem:[#allocation31 + $0x350] sm:$0xff]
    %v7367 = vld [vmem:[#allocation31 + $0x358] sm:$0xff]
    %v7368 = vld [vmem:[#allocation31 + $0x360] sm:$0xff]
    %v7369 = vld [vmem:[#allocation31 + $0x368] sm:$0xff]
    %v7370 = vld [vmem:[#allocation31 + $0x370] sm:$0xff]
    %v7371 = vld [vmem:[#allocation31 + $0x378] sm:$0xff]
    %v7372 = vld [vmem:[#allocation31 + $0x380] sm:$0xff]
    %v7373 = vld [vmem:[#allocation31 + $0x388] sm:$0xff]
    %v7374 = vld [vmem:[#allocation31 + $0x390] sm:$0xff]
    %v7375 = vld [vmem:[#allocation31 + $0x398] sm:$0xff]
    %v7376 = vld [vmem:[#allocation31 + $0x3a0] sm:$0xff]
    %v7377 = vld [vmem:[#allocation31 + $0x3a8] sm:$0xff]
    %v7378 = vld [vmem:[#allocation31 + $0x3b0] sm:$0xff]
    %v7379 = vld [vmem:[#allocation31 + $0x3b8] sm:$0xff]
    %v7380 = vld [vmem:[#allocation31 + $0x3c0] sm:$0xff]
    %v7381 = vld [vmem:[#allocation31 + $0x3c8] sm:$0xff]
    %v7382 = vld [vmem:[#allocation31 + $0x3d0] sm:$0xff]
    %v7383 = vld [vmem:[#allocation31 + $0x3d8] sm:$0xff]
    %v7384 = vld [vmem:[#allocation31 + $0x3e0] sm:$0xff]
    %v7385 = vld [vmem:[#allocation31 + $0x3e8] sm:$0xff]
    %v7386 = vld [vmem:[#allocation31 + $0x3f0] sm:$0xff]
    %v7387 = vld [vmem:[#allocation31 + $0x3f8] sm:$0xff]
    %v7388 = vld [vmem:[#allocation33] sm:$0x3]
    %v7389 = vpack.c.bf16 %v7252, %v7252
    %v7390 = vpack.c.bf16 %v7253, %v7253
    %v7391 = vpack.c.bf16 %v7254, %v7254
    %v7392 = vpack.c.bf16 %v7255, %v7255
    %v7393 = vpack.c.bf16 %v7256, %v7256
    %v7394 = vpack.c.bf16 %v7257, %v7257
    %v7395 = vpack.c.bf16 %v7258, %v7258
    %v7396 = vpack.c.bf16 %v7259, %v7259
    %v7398 = vlaneseq
    %v7399 = vshrl.u32 %v7398, 7
    %v7400 = vsub.s32 0, %v7399
    %v7401 = vrot.slane %v7388, %v7400
    %v7402 = vlaneseq
    %v7403 = vshrl.u32 %v7402, 7
    %v7404 = vsub.s32 1, %v7403
    %v7405 = vrot.slane %v7388, %v7404
    %v7536 = vunpack.c.l.b16 %v7260
    %v7537 = vunpack.c.h.b16 %v7260
    %v7538 = vunpack.c.l.b16 %v7261
    %v7539 = vunpack.c.h.b16 %v7261
    %v7540 = vunpack.c.l.b16 %v7262
    %v7541 = vunpack.c.h.b16 %v7262
    %v7542 = vunpack.c.l.b16 %v7263
    %v7543 = vunpack.c.h.b16 %v7263
    %v7544 = vunpack.c.l.b16 %v7264
    %v7545 = vunpack.c.h.b16 %v7264
    %v7546 = vunpack.c.l.b16 %v7265
    %v7547 = vunpack.c.h.b16 %v7265
    %v7548 = vunpack.c.l.b16 %v7266
    %v7549 = vunpack.c.h.b16 %v7266
    %v7550 = vunpack.c.l.b16 %v7267
    %v7551 = vunpack.c.h.b16 %v7267
    %v7552 = vunpack.c.l.b16 %v7268
    %v7553 = vunpack.c.h.b16 %v7268
    %v7554 = vunpack.c.l.b16 %v7269
    %v7555 = vunpack.c.h.b16 %v7269
    %v7556 = vunpack.c.l.b16 %v7270
    %v7557 = vunpack.c.h.b16 %v7270
    %v7558 = vunpack.c.l.b16 %v7271
    %v7559 = vunpack.c.h.b16 %v7271
    %v7560 = vunpack.c.l.b16 %v7272
    %v7561 = vunpack.c.h.b16 %v7272
    %v7562 = vunpack.c.l.b16 %v7273
    %v7563 = vunpack.c.h.b16 %v7273
    %v7564 = vunpack.c.l.b16 %v7274
    %v7565 = vunpack.c.h.b16 %v7274
    %v7566 = vunpack.c.l.b16 %v7275
    %v7567 = vunpack.c.h.b16 %v7275
    %v7568 = vunpack.c.l.b16 %v7276
    %v7569 = vunpack.c.h.b16 %v7276
    %v7570 = vunpack.c.l.b16 %v7277
    %v7571 = vunpack.c.h.b16 %v7277
    %v7572 = vunpack.c.l.b16 %v7278
    %v7573 = vunpack.c.h.b16 %v7278
    %v7574 = vunpack.c.l.b16 %v7279
    %v7575 = vunpack.c.h.b16 %v7279
    %v7576 = vunpack.c.l.b16 %v7280
    %v7577 = vunpack.c.h.b16 %v7280
    %v7578 = vunpack.c.l.b16 %v7281
    %v7579 = vunpack.c.h.b16 %v7281
    %v7580 = vunpack.c.l.b16 %v7282
    %v7581 = vunpack.c.h.b16 %v7282
    %v7582 = vunpack.c.l.b16 %v7283
    %v7583 = vunpack.c.h.b16 %v7283
    %v7584 = vunpack.c.l.b16 %v7284
    %v7585 = vunpack.c.h.b16 %v7284
    %v7586 = vunpack.c.l.b16 %v7285
    %v7587 = vunpack.c.h.b16 %v7285
    %v7588 = vunpack.c.l.b16 %v7286
    %v7589 = vunpack.c.h.b16 %v7286
    %v7590 = vunpack.c.l.b16 %v7287
    %v7591 = vunpack.c.h.b16 %v7287
    %v7592 = vunpack.c.l.b16 %v7288
    %v7593 = vunpack.c.h.b16 %v7288
    %v7594 = vunpack.c.l.b16 %v7289
    %v7595 = vunpack.c.h.b16 %v7289
    %v7596 = vunpack.c.l.b16 %v7290
    %v7597 = vunpack.c.h.b16 %v7290
    %v7598 = vunpack.c.l.b16 %v7291
    %v7599 = vunpack.c.h.b16 %v7291
    %v7600 = vunpack.c.l.b16 %v7292
    %v7601 = vunpack.c.h.b16 %v7292
    %v7602 = vunpack.c.l.b16 %v7293
    %v7603 = vunpack.c.h.b16 %v7293
    %v7604 = vunpack.c.l.b16 %v7294
    %v7605 = vunpack.c.h.b16 %v7294
    %v7606 = vunpack.c.l.b16 %v7295
    %v7607 = vunpack.c.h.b16 %v7295
    %v7608 = vunpack.c.l.b16 %v7296
    %v7609 = vunpack.c.h.b16 %v7296
    %v7610 = vunpack.c.l.b16 %v7297
    %v7611 = vunpack.c.h.b16 %v7297
    %v7612 = vunpack.c.l.b16 %v7298
    %v7613 = vunpack.c.h.b16 %v7298
    %v7614 = vunpack.c.l.b16 %v7299
    %v7615 = vunpack.c.h.b16 %v7299
    %v7616 = vunpack.c.l.b16 %v7300
    %v7617 = vunpack.c.h.b16 %v7300
    %v7618 = vunpack.c.l.b16 %v7301
    %v7619 = vunpack.c.h.b16 %v7301
    %v7620 = vunpack.c.l.b16 %v7302
    %v7621 = vunpack.c.h.b16 %v7302
    %v7622 = vunpack.c.l.b16 %v7303
    %v7623 = vunpack.c.h.b16 %v7303
    %v7624 = vunpack.c.l.b16 %v7304
    %v7625 = vunpack.c.h.b16 %v7304
    %v7626 = vunpack.c.l.b16 %v7305
    %v7627 = vunpack.c.h.b16 %v7305
    %v7628 = vunpack.c.l.b16 %v7306
    %v7629 = vunpack.c.h.b16 %v7306
    %v7630 = vunpack.c.l.b16 %v7307
    %v7631 = vunpack.c.h.b16 %v7307
    %v7632 = vunpack.c.l.b16 %v7308
    %v7633 = vunpack.c.h.b16 %v7308
    %v7634 = vunpack.c.l.b16 %v7309
    %v7635 = vunpack.c.h.b16 %v7309
    %v7636 = vunpack.c.l.b16 %v7310
    %v7637 = vunpack.c.h.b16 %v7310
    %v7638 = vunpack.c.l.b16 %v7311
    %v7639 = vunpack.c.h.b16 %v7311
    %v7640 = vunpack.c.l.b16 %v7312
    %v7641 = vunpack.c.h.b16 %v7312
    %v7642 = vunpack.c.l.b16 %v7313
    %v7643 = vunpack.c.h.b16 %v7313
    %v7644 = vunpack.c.l.b16 %v7314
    %v7645 = vunpack.c.h.b16 %v7314
    %v7646 = vunpack.c.l.b16 %v7315
    %v7647 = vunpack.c.h.b16 %v7315
    %v7648 = vunpack.c.l.b16 %v7316
    %v7649 = vunpack.c.h.b16 %v7316
    %v7650 = vunpack.c.l.b16 %v7317
    %v7651 = vunpack.c.h.b16 %v7317
    %v7652 = vunpack.c.l.b16 %v7318
    %v7653 = vunpack.c.h.b16 %v7318
    %v7654 = vunpack.c.l.b16 %v7319
    %v7655 = vunpack.c.h.b16 %v7319
    %v7656 = vunpack.c.l.b16 %v7320
    %v7657 = vunpack.c.h.b16 %v7320
    %v7658 = vunpack.c.l.b16 %v7321
    %v7659 = vunpack.c.h.b16 %v7321
    %v7660 = vunpack.c.l.b16 %v7322
    %v7661 = vunpack.c.h.b16 %v7322
    %v7662 = vunpack.c.l.b16 %v7323
    %v7663 = vunpack.c.h.b16 %v7323
    %v7664 = vunpack.c.l.b16 %v7324
    %v7665 = vunpack.c.h.b16 %v7324
    %v7666 = vunpack.c.l.b16 %v7325
    %v7667 = vunpack.c.h.b16 %v7325
    %v7668 = vunpack.c.l.b16 %v7326
    %v7669 = vunpack.c.h.b16 %v7326
    %v7670 = vunpack.c.l.b16 %v7327
    %v7671 = vunpack.c.h.b16 %v7327
    %v7672 = vunpack.c.l.b16 %v7328
    %v7673 = vunpack.c.h.b16 %v7328
    %v7674 = vunpack.c.l.b16 %v7329
    %v7675 = vunpack.c.h.b16 %v7329
    %v7676 = vunpack.c.l.b16 %v7330
    %v7677 = vunpack.c.h.b16 %v7330
    %v7678 = vunpack.c.l.b16 %v7331
    %v7679 = vunpack.c.h.b16 %v7331
    %v7680 = vunpack.c.l.b16 %v7332
    %v7681 = vunpack.c.h.b16 %v7332
    %v7682 = vunpack.c.l.b16 %v7333
    %v7683 = vunpack.c.h.b16 %v7333
    %v7684 = vunpack.c.l.b16 %v7334
    %v7685 = vunpack.c.h.b16 %v7334
    %v7686 = vunpack.c.l.b16 %v7335
    %v7687 = vunpack.c.h.b16 %v7335
    %v7688 = vunpack.c.l.b16 %v7336
    %v7689 = vunpack.c.h.b16 %v7336
    %v7690 = vunpack.c.l.b16 %v7337
    %v7691 = vunpack.c.h.b16 %v7337
    %v7692 = vunpack.c.l.b16 %v7338
    %v7693 = vunpack.c.h.b16 %v7338
    %v7694 = vunpack.c.l.b16 %v7339
    %v7695 = vunpack.c.h.b16 %v7339
    %v7696 = vunpack.c.l.b16 %v7340
    %v7697 = vunpack.c.h.b16 %v7340
    %v7698 = vunpack.c.l.b16 %v7341
    %v7699 = vunpack.c.h.b16 %v7341
    %v7700 = vunpack.c.l.b16 %v7342
    %v7701 = vunpack.c.h.b16 %v7342
    %v7702 = vunpack.c.l.b16 %v7343
    %v7703 = vunpack.c.h.b16 %v7343
    %v7704 = vunpack.c.l.b16 %v7344
    %v7705 = vunpack.c.h.b16 %v7344
    %v7706 = vunpack.c.l.b16 %v7345
    %v7707 = vunpack.c.h.b16 %v7345
    %v7708 = vunpack.c.l.b16 %v7346
    %v7709 = vunpack.c.h.b16 %v7346
    %v7710 = vunpack.c.l.b16 %v7347
    %v7711 = vunpack.c.h.b16 %v7347
    %v7712 = vunpack.c.l.b16 %v7348
    %v7713 = vunpack.c.h.b16 %v7348
    %v7714 = vunpack.c.l.b16 %v7349
    %v7715 = vunpack.c.h.b16 %v7349
    %v7716 = vunpack.c.l.b16 %v7350
    %v7717 = vunpack.c.h.b16 %v7350
    %v7718 = vunpack.c.l.b16 %v7351
    %v7719 = vunpack.c.h.b16 %v7351
    %v7720 = vunpack.c.l.b16 %v7352
    %v7721 = vunpack.c.h.b16 %v7352
    %v7722 = vunpack.c.l.b16 %v7353
    %v7723 = vunpack.c.h.b16 %v7353
    %v7724 = vunpack.c.l.b16 %v7354
    %v7725 = vunpack.c.h.b16 %v7354
    %v7726 = vunpack.c.l.b16 %v7355
    %v7727 = vunpack.c.h.b16 %v7355
    %v7728 = vunpack.c.l.b16 %v7356
    %v7729 = vunpack.c.h.b16 %v7356
    %v7730 = vunpack.c.l.b16 %v7357
    %v7731 = vunpack.c.h.b16 %v7357
    %v7732 = vunpack.c.l.b16 %v7358
    %v7733 = vunpack.c.h.b16 %v7358
    %v7734 = vunpack.c.l.b16 %v7359
    %v7735 = vunpack.c.h.b16 %v7359
    %v7736 = vunpack.c.l.b16 %v7360
    %v7737 = vunpack.c.h.b16 %v7360
    %v7738 = vunpack.c.l.b16 %v7361
    %v7739 = vunpack.c.h.b16 %v7361
    %v7740 = vunpack.c.l.b16 %v7362
    %v7741 = vunpack.c.h.b16 %v7362
    %v7742 = vunpack.c.l.b16 %v7363
    %v7743 = vunpack.c.h.b16 %v7363
    %v7744 = vunpack.c.l.b16 %v7364
    %v7745 = vunpack.c.h.b16 %v7364
    %v7746 = vunpack.c.l.b16 %v7365
    %v7747 = vunpack.c.h.b16 %v7365
    %v7748 = vunpack.c.l.b16 %v7366
    %v7749 = vunpack.c.h.b16 %v7366
    %v7750 = vunpack.c.l.b16 %v7367
    %v7751 = vunpack.c.h.b16 %v7367
    %v7752 = vunpack.c.l.b16 %v7368
    %v7753 = vunpack.c.h.b16 %v7368
    %v7754 = vunpack.c.l.b16 %v7369
    %v7755 = vunpack.c.h.b16 %v7369
    %v7756 = vunpack.c.l.b16 %v7370
    %v7757 = vunpack.c.h.b16 %v7370
    %v7758 = vunpack.c.l.b16 %v7371
    %v7759 = vunpack.c.h.b16 %v7371
    %v7760 = vunpack.c.l.b16 %v7372
    %v7761 = vunpack.c.h.b16 %v7372
    %v7762 = vunpack.c.l.b16 %v7373
    %v7763 = vunpack.c.h.b16 %v7373
    %v7764 = vunpack.c.l.b16 %v7374
    %v7765 = vunpack.c.h.b16 %v7374
    %v7766 = vunpack.c.l.b16 %v7375
    %v7767 = vunpack.c.h.b16 %v7375
    %v7768 = vunpack.c.l.b16 %v7376
    %v7769 = vunpack.c.h.b16 %v7376
    %v7770 = vunpack.c.l.b16 %v7377
    %v7771 = vunpack.c.h.b16 %v7377
    %v7772 = vunpack.c.l.b16 %v7378
    %v7773 = vunpack.c.h.b16 %v7378
    %v7774 = vunpack.c.l.b16 %v7379
    %v7775 = vunpack.c.h.b16 %v7379
    %v7776 = vunpack.c.l.b16 %v7380
    %v7777 = vunpack.c.h.b16 %v7380
    %v7778 = vunpack.c.l.b16 %v7381
    %v7779 = vunpack.c.h.b16 %v7381
    %v7780 = vunpack.c.l.b16 %v7382
    %v7781 = vunpack.c.h.b16 %v7382
    %v7782 = vunpack.c.l.b16 %v7383
    %v7783 = vunpack.c.h.b16 %v7383
    %v7784 = vunpack.c.l.b16 %v7384
    %v7785 = vunpack.c.h.b16 %v7384
    %v7786 = vunpack.c.l.b16 %v7385
    %v7787 = vunpack.c.h.b16 %v7385
    %v7788 = vunpack.c.l.b16 %v7386
    %v7789 = vunpack.c.h.b16 %v7386
    %v7790 = vunpack.c.l.b16 %v7387
    %v7791 = vunpack.c.h.b16 %v7387
    %v7792 = vpack.c.b16 %v7538, %v7536
    %v7793 = vpack.c.b16 %v7539, %v7537
    %v7794 = vpack.c.b16 %v7542, %v7540
    %v7795 = vpack.c.b16 %v7543, %v7541
    %v7796 = vpack.c.b16 %v7546, %v7544
    %v7797 = vpack.c.b16 %v7547, %v7545
    %v7798 = vpack.c.b16 %v7550, %v7548
    %v7799 = vpack.c.b16 %v7551, %v7549
    %v7800 = vpack.c.b16 %v7554, %v7552
    %v7801 = vpack.c.b16 %v7555, %v7553
    %v7802 = vpack.c.b16 %v7558, %v7556
    %v7803 = vpack.c.b16 %v7559, %v7557
    %v7804 = vpack.c.b16 %v7562, %v7560
    %v7805 = vpack.c.b16 %v7563, %v7561
    %v7806 = vpack.c.b16 %v7566, %v7564
    %v7807 = vpack.c.b16 %v7567, %v7565
    %v7808 = vpack.c.b16 %v7570, %v7568
    %v7809 = vpack.c.b16 %v7571, %v7569
    %v7810 = vpack.c.b16 %v7574, %v7572
    %v7811 = vpack.c.b16 %v7575, %v7573
    %v7812 = vpack.c.b16 %v7578, %v7576
    %v7813 = vpack.c.b16 %v7579, %v7577
    %v7814 = vpack.c.b16 %v7582, %v7580
    %v7815 = vpack.c.b16 %v7583, %v7581
    %v7816 = vpack.c.b16 %v7586, %v7584
    %v7817 = vpack.c.b16 %v7587, %v7585
    %v7818 = vpack.c.b16 %v7590, %v7588
    %v7819 = vpack.c.b16 %v7591, %v7589
    %v7820 = vpack.c.b16 %v7594, %v7592
    %v7821 = vpack.c.b16 %v7595, %v7593
    %v7822 = vpack.c.b16 %v7598, %v7596
    %v7823 = vpack.c.b16 %v7599, %v7597
    %v7824 = vpack.c.b16 %v7602, %v7600
    %v7825 = vpack.c.b16 %v7603, %v7601
    %v7826 = vpack.c.b16 %v7606, %v7604
    %v7827 = vpack.c.b16 %v7607, %v7605
    %v7828 = vpack.c.b16 %v7610, %v7608
    %v7829 = vpack.c.b16 %v7611, %v7609
    %v7830 = vpack.c.b16 %v7614, %v7612
    %v7831 = vpack.c.b16 %v7615, %v7613
    %v7832 = vpack.c.b16 %v7618, %v7616
    %v7833 = vpack.c.b16 %v7619, %v7617
    %v7834 = vpack.c.b16 %v7622, %v7620
    %v7835 = vpack.c.b16 %v7623, %v7621
    %v7836 = vpack.c.b16 %v7626, %v7624
    %v7837 = vpack.c.b16 %v7627, %v7625
    %v7838 = vpack.c.b16 %v7630, %v7628
    %v7839 = vpack.c.b16 %v7631, %v7629
    %v7840 = vpack.c.b16 %v7634, %v7632
    %v7841 = vpack.c.b16 %v7635, %v7633
    %v7842 = vpack.c.b16 %v7638, %v7636
    %v7843 = vpack.c.b16 %v7639, %v7637
    %v7844 = vpack.c.b16 %v7642, %v7640
    %v7845 = vpack.c.b16 %v7643, %v7641
    %v7846 = vpack.c.b16 %v7646, %v7644
    %v7847 = vpack.c.b16 %v7647, %v7645
    %v7848 = vpack.c.b16 %v7650, %v7648
    %v7849 = vpack.c.b16 %v7651, %v7649
    %v7850 = vpack.c.b16 %v7654, %v7652
    %v7851 = vpack.c.b16 %v7655, %v7653
    %v7852 = vpack.c.b16 %v7658, %v7656
    %v7853 = vpack.c.b16 %v7659, %v7657
    %v7854 = vpack.c.b16 %v7662, %v7660
    %v7855 = vpack.c.b16 %v7663, %v7661
    %v7856 = vpack.c.b16 %v7666, %v7664
    %v7857 = vpack.c.b16 %v7667, %v7665
    %v7858 = vpack.c.b16 %v7670, %v7668
    %v7859 = vpack.c.b16 %v7671, %v7669
    %v7860 = vpack.c.b16 %v7674, %v7672
    %v7861 = vpack.c.b16 %v7675, %v7673
    %v7862 = vpack.c.b16 %v7678, %v7676
    %v7863 = vpack.c.b16 %v7679, %v7677
    %v7864 = vpack.c.b16 %v7682, %v7680
    %v7865 = vpack.c.b16 %v7683, %v7681
    %v7866 = vpack.c.b16 %v7686, %v7684
    %v7867 = vpack.c.b16 %v7687, %v7685
    %v7868 = vpack.c.b16 %v7690, %v7688
    %v7869 = vpack.c.b16 %v7691, %v7689
    %v7870 = vpack.c.b16 %v7694, %v7692
    %v7871 = vpack.c.b16 %v7695, %v7693
    %v7872 = vpack.c.b16 %v7698, %v7696
    %v7873 = vpack.c.b16 %v7699, %v7697
    %v7874 = vpack.c.b16 %v7702, %v7700
    %v7875 = vpack.c.b16 %v7703, %v7701
    %v7876 = vpack.c.b16 %v7706, %v7704
    %v7877 = vpack.c.b16 %v7707, %v7705
    %v7878 = vpack.c.b16 %v7710, %v7708
    %v7879 = vpack.c.b16 %v7711, %v7709
    %v7880 = vpack.c.b16 %v7714, %v7712
    %v7881 = vpack.c.b16 %v7715, %v7713
    %v7882 = vpack.c.b16 %v7718, %v7716
    %v7883 = vpack.c.b16 %v7719, %v7717
    %v7884 = vpack.c.b16 %v7722, %v7720
    %v7885 = vpack.c.b16 %v7723, %v7721
    %v7886 = vpack.c.b16 %v7726, %v7724
    %v7887 = vpack.c.b16 %v7727, %v7725
    %v7888 = vpack.c.b16 %v7730, %v7728
    %v7889 = vpack.c.b16 %v7731, %v7729
    %v7890 = vpack.c.b16 %v7734, %v7732
    %v7891 = vpack.c.b16 %v7735, %v7733
    %v7892 = vpack.c.b16 %v7738, %v7736
    %v7893 = vpack.c.b16 %v7739, %v7737
    %v7894 = vpack.c.b16 %v7742, %v7740
    %v7895 = vpack.c.b16 %v7743, %v7741
    %v7896 = vpack.c.b16 %v7746, %v7744
    %v7897 = vpack.c.b16 %v7747, %v7745
    %v7898 = vpack.c.b16 %v7750, %v7748
    %v7899 = vpack.c.b16 %v7751, %v7749
    %v7900 = vpack.c.b16 %v7754, %v7752
    %v7901 = vpack.c.b16 %v7755, %v7753
    %v7902 = vpack.c.b16 %v7758, %v7756
    %v7903 = vpack.c.b16 %v7759, %v7757
    %v7904 = vpack.c.b16 %v7762, %v7760
    %v7905 = vpack.c.b16 %v7763, %v7761
    %v7906 = vpack.c.b16 %v7766, %v7764
    %v7907 = vpack.c.b16 %v7767, %v7765
    %v7908 = vpack.c.b16 %v7770, %v7768
    %v7909 = vpack.c.b16 %v7771, %v7769
    %v7910 = vpack.c.b16 %v7774, %v7772
    %v7911 = vpack.c.b16 %v7775, %v7773
    %v7912 = vpack.c.b16 %v7778, %v7776
    %v7913 = vpack.c.b16 %v7779, %v7777
    %v7914 = vpack.c.b16 %v7782, %v7780
    %v7915 = vpack.c.b16 %v7783, %v7781
    %v7916 = vpack.c.b16 %v7786, %v7784
    %v7917 = vpack.c.b16 %v7787, %v7785
    %v7918 = vpack.c.b16 %v7790, %v7788
    %v7919 = vpack.c.b16 %v7791, %v7789
    %8048 = vmatprep.subr.bf16.mxu0 %v7793
    %8049 = vmatpush1.bf16.msra.mxu0 %v7792
    %8050 = vmatprep.subr.bf16.mxu0 %v7795
    %8051 = vmatpush1.bf16.msra.mxu0 %v7794
    %8052 = vmatprep.subr.bf16.mxu0 %v7797
    %8053 = vmatpush1.bf16.msra.mxu0 %v7796
    %8054 = vmatprep.subr.bf16.mxu0 %v7799
    %8055 = vmatpush1.bf16.msra.mxu0 %v7798
    %8056 = vmatprep.subr.bf16.mxu0 %v7801
    %8057 = vmatpush1.bf16.msra.mxu0 %v7800
    %8058 = vmatprep.subr.bf16.mxu0 %v7803
    %8059 = vmatpush1.bf16.msra.mxu0 %v7802
    %8060 = vmatprep.subr.bf16.mxu0 %v7805
    %8061 = vmatpush1.bf16.msra.mxu0 %v7804
    %8062 = vmatprep.subr.bf16.mxu0 %v7807
    %8063 = vmatpush1.bf16.msra.mxu0 %v7806
    %8064 = vmatprep.subr.bf16.mxu0 %v7809
    %8065 = vmatpush1.bf16.msra.mxu0 %v7808
    %8066 = vmatprep.subr.bf16.mxu0 %v7811
    %8067 = vmatpush1.bf16.msra.mxu0 %v7810
    %8068 = vmatprep.subr.bf16.mxu0 %v7813
    %8069 = vmatpush1.bf16.msra.mxu0 %v7812
    %8070 = vmatprep.subr.bf16.mxu0 %v7815
    %8071 = vmatpush1.bf16.msra.mxu0 %v7814
    %8072 = vmatprep.subr.bf16.mxu0 %v7817
    %8073 = vmatpush1.bf16.msra.mxu0 %v7816
    %8074 = vmatprep.subr.bf16.mxu0 %v7819
    %8075 = vmatpush1.bf16.msra.mxu0 %v7818
    %8076 = vmatprep.subr.bf16.mxu0 %v7821
    %8077 = vmatpush1.bf16.msra.mxu0 %v7820
    %8078 = vmatprep.subr.bf16.mxu0 %v7823
    %8079 = vmatpush1.bf16.msra.mxu0 %v7822
    %8080 = vmatprep.mubr.bf16.mxu0 %v7390
    %8081 = vmatmul.mubr.bf16.gmra.mrb[0].mxu0 %v7389
    %v8082 = vpop.f32.mrb[0].mxu0
    %v8083 = vadd.f32 %v7401, %v8082
    %v8084 = vpop.f32.mrb[0].mxu0
    %v8085 = vadd.f32 %v7405, %v8084
    %v8086 = vpop.f32.mrb[0].mxu0
    %v8087 = vpop.f32.mrb[0].mxu0
    %8088 = vdwg.mxu0
    %8089 = vmatprep.subr.bf16.mxu0 %v7825
    %8090 = vmatpush1.bf16.msra.mxu0 %v7824
    %8091 = vmatprep.subr.bf16.mxu0 %v7827
    %8092 = vmatpush1.bf16.msra.mxu0 %v7826
    %8093 = vmatprep.subr.bf16.mxu0 %v7829
    %8094 = vmatpush1.bf16.msra.mxu0 %v7828
    %8095 = vmatprep.subr.bf16.mxu0 %v7831
    %8096 = vmatpush1.bf16.msra.mxu0 %v7830
    %8097 = vmatprep.subr.bf16.mxu0 %v7833
    %8098 = vmatpush1.bf16.msra.mxu0 %v7832
    %8099 = vmatprep.subr.bf16.mxu0 %v7835
    %8100 = vmatpush1.bf16.msra.mxu0 %v7834
    %8101 = vmatprep.subr.bf16.mxu0 %v7837
    %8102 = vmatpush1.bf16.msra.mxu0 %v7836
    %8103 = vmatprep.subr.bf16.mxu0 %v7839
    %8104 = vmatpush1.bf16.msra.mxu0 %v7838
    %8105 = vmatprep.subr.bf16.mxu0 %v7841
    %8106 = vmatpush1.bf16.msra.mxu0 %v7840
    %8107 = vmatprep.subr.bf16.mxu0 %v7843
    %8108 = vmatpush1.bf16.msra.mxu0 %v7842
    %8109 = vmatprep.subr.bf16.mxu0 %v7845
    %8110 = vmatpush1.bf16.msra.mxu0 %v7844
    %8111 = vmatprep.subr.bf16.mxu0 %v7847
    %8112 = vmatpush1.bf16.msra.mxu0 %v7846
    %8113 = vmatprep.subr.bf16.mxu0 %v7849
    %8114 = vmatpush1.bf16.msra.mxu0 %v7848
    %8115 = vmatprep.subr.bf16.mxu0 %v7851
    %8116 = vmatpush1.bf16.msra.mxu0 %v7850
    %8117 = vmatprep.subr.bf16.mxu0 %v7853
    %8118 = vmatpush1.bf16.msra.mxu0 %v7852
    %8119 = vmatprep.subr.bf16.mxu0 %v7855
    %8120 = vmatpush1.bf16.msra.mxu0 %v7854
    %8121 = vmatprep.mubr.bf16.mxu0 %v7392
    %8122 = vmatmul.mubr.bf16.gmra.mrb[0].mxu0 %v7391
    %v8123 = vpop.f32.mrb[0].mxu0
    %v8124 = vadd.f32 %v8083, %v8123
    %v8125 = vpop.f32.mrb[0].mxu0
    %v8126 = vadd.f32 %v8085, %v8125
    %v8127 = vpop.f32.mrb[0].mxu0
    %v8128 = vpop.f32.mrb[0].mxu0
    %8129 = vdwg.mxu0
    %8130 = vmatprep.subr.bf16.mxu0 %v7857
    %8131 = vmatpush1.bf16.msra.mxu0 %v7856
    %8132 = vmatprep.subr.bf16.mxu0 %v7859
    %8133 = vmatpush1.bf16.msra.mxu0 %v7858
    %8134 = vmatprep.subr.bf16.mxu0 %v7861
    %8135 = vmatpush1.bf16.msra.mxu0 %v7860
    %8136 = vmatprep.subr.bf16.mxu0 %v7863
    %8137 = vmatpush1.bf16.msra.mxu0 %v7862
    %8138 = vmatprep.subr.bf16.mxu0 %v7865
    %8139 = vmatpush1.bf16.msra.mxu0 %v7864
    %8140 = vmatprep.subr.bf16.mxu0 %v7867
    %8141 = vmatpush1.bf16.msra.mxu0 %v7866
    %8142 = vmatprep.subr.bf16.mxu0 %v7869
    %8143 = vmatpush1.bf16.msra.mxu0 %v7868
    %8144 = vmatprep.subr.bf16.mxu0 %v7871
    %8145 = vmatpush1.bf16.msra.mxu0 %v7870
    %8146 = vmatprep.subr.bf16.mxu0 %v7873
    %8147 = vmatpush1.bf16.msra.mxu0 %v7872
    %8148 = vmatprep.subr.bf16.mxu0 %v7875
    %8149 = vmatpush1.bf16.msra.mxu0 %v7874
    %8150 = vmatprep.subr.bf16.mxu0 %v7877
    %8151 = vmatpush1.bf16.msra.mxu0 %v7876
    %8152 = vmatprep.subr.bf16.mxu0 %v7879
    %8153 = vmatpush1.bf16.msra.mxu0 %v7878
    %8154 = vmatprep.subr.bf16.mxu0 %v7881
    %8155 = vmatpush1.bf16.msra.mxu0 %v7880
    %8156 = vmatprep.subr.bf16.mxu0 %v7883
    %8157 = vmatpush1.bf16.msra.mxu0 %v7882
    %8158 = vmatprep.subr.bf16.mxu0 %v7885
    %8159 = vmatpush1.bf16.msra.mxu0 %v7884
    %8160 = vmatprep.subr.bf16.mxu0 %v7887
    %8161 = vmatpush1.bf16.msra.mxu0 %v7886
    %8162 = vmatprep.mubr.bf16.mxu0 %v7394
    %8163 = vmatmul.mubr.bf16.gmra.mrb[0].mxu0 %v7393
    %v8164 = vpop.f32.mrb[0].mxu0
    %v8165 = vadd.f32 %v8124, %v8164
    %v8166 = vpop.f32.mrb[0].mxu0
    %v8167 = vadd.f32 %v8126, %v8166
    %v8168 = vpop.f32.mrb[0].mxu0
    %v8169 = vpop.f32.mrb[0].mxu0
    %8170 = vdwg.mxu0
    %8171 = vmatprep.subr.bf16.mxu0 %v7889
    %8172 = vmatpush1.bf16.msra.mxu0 %v7888
    %8173 = vmatprep.subr.bf16.mxu0 %v7891
    %8174 = vmatpush1.bf16.msra.mxu0 %v7890
    %8175 = vmatprep.subr.bf16.mxu0 %v7893
    %8176 = vmatpush1.bf16.msra.mxu0 %v7892
    %8177 = vmatprep.subr.bf16.mxu0 %v7895
    %8178 = vmatpush1.bf16.msra.mxu0 %v7894
    %8179 = vmatprep.subr.bf16.mxu0 %v7897
    %8180 = vmatpush1.bf16.msra.mxu0 %v7896
    %8181 = vmatprep.subr.bf16.mxu0 %v7899
    %8182 = vmatpush1.bf16.msra.mxu0 %v7898
    %8183 = vmatprep.subr.bf16.mxu0 %v7901
    %8184 = vmatpush1.bf16.msra.mxu0 %v7900
    %8185 = vmatprep.subr.bf16.mxu0 %v7903
    %8186 = vmatpush1.bf16.msra.mxu0 %v7902
    %8187 = vmatprep.subr.bf16.mxu0 %v7905
    %8188 = vmatpush1.bf16.msra.mxu0 %v7904
    %8189 = vmatprep.subr.bf16.mxu0 %v7907
    %8190 = vmatpush1.bf16.msra.mxu0 %v7906
    %8191 = vmatprep.subr.bf16.mxu0 %v7909
    %8192 = vmatpush1.bf16.msra.mxu0 %v7908
    %8193 = vmatprep.subr.bf16.mxu0 %v7911
    %8194 = vmatpush1.bf16.msra.mxu0 %v7910
    %8195 = vmatprep.subr.bf16.mxu0 %v7913
    %8196 = vmatpush1.bf16.msra.mxu0 %v7912
    %8197 = vmatprep.subr.bf16.mxu0 %v7915
    %8198 = vmatpush1.bf16.msra.mxu0 %v7914
    %8199 = vmatprep.subr.bf16.mxu0 %v7917
    %8200 = vmatpush1.bf16.msra.mxu0 %v7916
    %8201 = vmatprep.subr.bf16.mxu0 %v7919
    %8202 = vmatpush1.bf16.msra.mxu0 %v7918
    %8203 = vmatprep.mubr.bf16.mxu0 %v7396
    %8204 = vmatmul.mubr.bf16.gmra.mrb[0].mxu0 %v7395
    %v8205 = vpop.f32.mrb[0].mxu0
    %v8206 = vadd.f32 %v8165, %v8205
    %v8207 = vpop.f32.mrb[0].mxu0
    %v8208 = vadd.f32 %v8167, %v8207
    %v8209 = vpop.f32.mrb[0].mxu0
    %v8210 = vpop.f32.mrb[0].mxu0
    %8211 = vdwg.mxu0
    %v8212 = vmax.f32 %v8206, 0.0
    %v8213 = vmax.f32 %v8208, 0.0
    %v8214 = vsel %vm735, %v8212, 0.0
    %v8215 = vsel %vm735, %v8213, 0.0
    %v8216 = vadd.f32 %v8214, %v8215
    %8217 = vadd.xlane.f32.xlu0 %v8216
    %v8218 = vpop.xlane.xlu0 %8217
    %v8219 = vmul.f32 %v8218, %v4440
    %v8220 = vsub.f32 %v8212, %v8219
    %v8221 = vsub.f32 %v8213, %v8219
    %v8222 = vmul.f32 %v8220, %v8220
    %v8223 = vmul.f32 %v8221, %v8221
    %v8224 = vsel %vm735, %v8222, 0.0
    %v8225 = vsel %vm735, %v8223, 0.0
    %v8226 = vadd.f32 %v8224, %v8225
    %8227 = vadd.xlane.f32.xlu0 %v8226
    %v8228 = vpop.xlane.xlu0 %8227
    %v8229 = vmul.f32 %v8228, %v4440
    %v8230 = vadd.f32 %v8229, 1e-05
    %v8231 = vrsqrt.pop %v8230
    %v8232 = vmul.f32 %v8220, %v8231
    %v8233 = vmul.f32 %v8221, %v8231
    %v8234 = vld [vmem:[%s61] sm:$0xf]
    %v8235 = vld [vmem:[%s61 + $0x4] sm:$0xf]
    %v8236 = vld [vmem:[%s61 + $0x8] sm:$0xf]
    %v8237 = vld [vmem:[%s61 + $0xc] sm:$0xf]
    %v8238 = vld [vmem:[%s61 + $0x10] sm:$0xf]
    %v8239 = vld [vmem:[%s61 + $0x14] sm:$0xf]
    %v8240 = vld [vmem:[%s61 + $0x18] sm:$0xf]
    %v8241 = vld [vmem:[%s61 + $0x1c] sm:$0xf]
    %v8242 = vld [vmem:[%s61 + $0x20] sm:$0xf]
    %v8243 = vld [vmem:[%s61 + $0x24] sm:$0xf]
    %v8244 = vld [vmem:[%s61 + $0x28] sm:$0xf]
    %v8245 = vld [vmem:[%s61 + $0x2c] sm:$0xf]
    %v8246 = vld [vmem:[%s61 + $0x30] sm:$0xf]
    %v8247 = vld [vmem:[%s61 + $0x34] sm:$0xf]
    %v8248 = vld [vmem:[%s61 + $0x38] sm:$0xf]
    %v8249 = vld [vmem:[%s61 + $0x3c] sm:$0xf]
    %v8250 = vld [vmem:[%s61 + $0x40] sm:$0xf]
    %v8251 = vld [vmem:[%s61 + $0x44] sm:$0xf]
    %v8252 = vld [vmem:[%s61 + $0x48] sm:$0xf]
    %v8253 = vld [vmem:[%s61 + $0x4c] sm:$0xf]
    %v8254 = vld [vmem:[%s61 + $0x50] sm:$0xf]
    %v8255 = vld [vmem:[%s61 + $0x54] sm:$0xf]
    %v8256 = vld [vmem:[%s61 + $0x58] sm:$0xf]
    %v8257 = vld [vmem:[%s61 + $0x5c] sm:$0xf]
    %v8258 = vld [vmem:[%s61 + $0x60] sm:$0xf]
    %v8259 = vld [vmem:[%s61 + $0x64] sm:$0xf]
    %v8260 = vld [vmem:[%s61 + $0x68] sm:$0xf]
    %v8261 = vld [vmem:[%s61 + $0x6c] sm:$0xf]
    %v8262 = vld [vmem:[%s61 + $0x70] sm:$0xf]
    %v8263 = vld [vmem:[%s61 + $0x74] sm:$0xf]
    %v8264 = vld [vmem:[%s61 + $0x78] sm:$0xf]
    %v8265 = vld [vmem:[%s61 + $0x7c] sm:$0xf]
    %v8266 = vld [vmem:[#allocation34] sm:$0x1]
    %v8267 = vpack.c.bf16 %v8232, %v8232
    %v8268 = vpack.c.bf16 %v8233, %v8233
    %v8270 = vlaneseq
    %v8271 = vshrl.u32 %v8270, 7
    %v8272 = vsub.s32 0, %v8271
    %v8273 = vrot.slane %v8266, %v8272
    %v8307 = vunpack.c.l.b16 %v8234
    %v8308 = vunpack.c.l.b16 %v8235
    %v8309 = vunpack.c.l.b16 %v8236
    %v8310 = vunpack.c.l.b16 %v8237
    %v8311 = vunpack.c.l.b16 %v8238
    %v8312 = vunpack.c.l.b16 %v8239
    %v8313 = vunpack.c.l.b16 %v8240
    %v8314 = vunpack.c.l.b16 %v8241
    %v8315 = vunpack.c.l.b16 %v8242
    %v8316 = vunpack.c.l.b16 %v8243
    %v8317 = vunpack.c.l.b16 %v8244
    %v8318 = vunpack.c.l.b16 %v8245
    %v8319 = vunpack.c.l.b16 %v8246
    %v8320 = vunpack.c.l.b16 %v8247
    %v8321 = vunpack.c.l.b16 %v8248
    %v8322 = vunpack.c.l.b16 %v8249
    %v8323 = vunpack.c.l.b16 %v8250
    %v8324 = vunpack.c.l.b16 %v8251
    %v8325 = vunpack.c.l.b16 %v8252
    %v8326 = vunpack.c.l.b16 %v8253
    %v8327 = vunpack.c.l.b16 %v8254
    %v8328 = vunpack.c.l.b16 %v8255
    %v8329 = vunpack.c.l.b16 %v8256
    %v8330 = vunpack.c.l.b16 %v8257
    %v8331 = vunpack.c.l.b16 %v8258
    %v8332 = vunpack.c.l.b16 %v8259
    %v8333 = vunpack.c.l.b16 %v8260
    %v8334 = vunpack.c.l.b16 %v8261
    %v8335 = vunpack.c.l.b16 %v8262
    %v8336 = vunpack.c.l.b16 %v8263
    %v8337 = vunpack.c.l.b16 %v8264
    %v8338 = vunpack.c.l.b16 %v8265
    %v8339 = vpack.c.b16 %v8308, %v8307
    %v8340 = vpack.c.b16 %v8310, %v8309
    %v8341 = vpack.c.b16 %v8312, %v8311
    %v8342 = vpack.c.b16 %v8314, %v8313
    %v8343 = vpack.c.b16 %v8316, %v8315
    %v8344 = vpack.c.b16 %v8318, %v8317
    %v8345 = vpack.c.b16 %v8320, %v8319
    %v8346 = vpack.c.b16 %v8322, %v8321
    %v8347 = vpack.c.b16 %v8324, %v8323
    %v8348 = vpack.c.b16 %v8326, %v8325
    %v8349 = vpack.c.b16 %v8328, %v8327
    %v8350 = vpack.c.b16 %v8330, %v8329
    %v8351 = vpack.c.b16 %v8332, %v8331
    %v8352 = vpack.c.b16 %v8334, %v8333
    %v8353 = vpack.c.b16 %v8336, %v8335
    %v8354 = vpack.c.b16 %v8338, %v8337
    %8371 = vmatprep.subr.bf16.mxu0 0
    %8372 = vmatpush1.bf16.msra.mxu0 %v8339
    %8373 = vmatprep.subr.bf16.mxu0 0
    %8374 = vmatpush1.bf16.msra.mxu0 %v8340
    %8375 = vmatprep.subr.bf16.mxu0 0
    %8376 = vmatpush1.bf16.msra.mxu0 %v8341
    %8377 = vmatprep.subr.bf16.mxu0 0
    %8378 = vmatpush1.bf16.msra.mxu0 %v8342
    %8379 = vmatprep.subr.bf16.mxu0 0
    %8380 = vmatpush1.bf16.msra.mxu0 %v8343
    %8381 = vmatprep.subr.bf16.mxu0 0
    %8382 = vmatpush1.bf16.msra.mxu0 %v8344
    %8383 = vmatprep.subr.bf16.mxu0 0
    %8384 = vmatpush1.bf16.msra.mxu0 %v8345
    %8385 = vmatprep.subr.bf16.mxu0 0
    %8386 = vmatpush1.bf16.msra.mxu0 %v8346
    %8387 = vmatprep.subr.bf16.mxu0 0
    %8388 = vmatpush1.bf16.msra.mxu0 %v8347
    %8389 = vmatprep.subr.bf16.mxu0 0
    %8390 = vmatpush1.bf16.msra.mxu0 %v8348
    %8391 = vmatprep.subr.bf16.mxu0 0
    %8392 = vmatpush1.bf16.msra.mxu0 %v8349
    %8393 = vmatprep.subr.bf16.mxu0 0
    %8394 = vmatpush1.bf16.msra.mxu0 %v8350
    %8395 = vmatprep.subr.bf16.mxu0 0
    %8396 = vmatpush1.bf16.msra.mxu0 %v8351
    %8397 = vmatprep.subr.bf16.mxu0 0
    %8398 = vmatpush1.bf16.msra.mxu0 %v8352
    %8399 = vmatprep.subr.bf16.mxu0 0
    %8400 = vmatpush1.bf16.msra.mxu0 %v8353
    %8401 = vmatprep.subr.bf16.mxu0 0
    %8402 = vmatpush1.bf16.msra.mxu0 %v8354
    %8403 = vmatprep.mubr.bf16.mxu0 %v8268
    %8404 = vmatmul.mubr.bf16.gmra.mrb[0].mxu0 %v8267
    %v8405 = vpop.f32.mrb[0].mxu0
    %v8406 = vadd.f32 %v8273, %v8405
    %v8407 = vpop.f32.mrb[0].mxu0
    %v8408 = vpop.f32.mrb[0].mxu0
    %v8409 = vpop.f32.mrb[0].mxu0
    %8410 = vdwg.mxu0
    %v8411 = vmax.f32 %v8406, 0.0
    %v8412 = vsel %vm863, %v8411, 0.0
    %8413 = vadd.xlane.f32.xlu0 %v8412
    %v8414 = vpop.xlane.xlu0 %8413
    %v8415 = vmul.f32 %v8414, %v867
    %v8416 = vsub.f32 %v8411, %v8415
    %v8417 = vmul.f32 %v8416, %v8416
    %v8418 = vsel %vm863, %v8417, 0.0
    %8419 = vadd.xlane.f32.xlu0 %v8418
    %v8420 = vpop.xlane.xlu0 %8419
    %v8421 = vmul.f32 %v8420, %v867
    %v8422 = vadd.f32 %v8421, 1e-05
    %v8423 = vrsqrt.pop %v8422
    %v8424 = vmul.f32 %v8416, %v8423
    %v8425 = vld [vmem:[#allocation36] sm:$0xf]
    %v8426 = vld [vmem:[#allocation36 + $0x4] sm:$0xf]
    %v8427 = vld [vmem:[#allocation36 + $0x8] sm:$0xf]
    %v8428 = vld [vmem:[#allocation36 + $0xc] sm:$0xf]
    %v8429 = vld [vmem:[#allocation36 + $0x10] sm:$0xf]
    %v8430 = vld [vmem:[#allocation36 + $0x14] sm:$0xf]
    %v8431 = vld [vmem:[#allocation36 + $0x18] sm:$0xf]
    %v8432 = vld [vmem:[#allocation36 + $0x1c] sm:$0xf]
    %v8433 = vld [vmem:[#allocation37] sm:$0x1]
    %v8434 = vpack.c.bf16 %v8424, %v8424
    %v8436 = vlaneseq
    %v8437 = vshrl.u32 %v8436, 7
    %v8438 = vsub.s32 0, %v8437
    %v8439 = vrot.slane %v8433, %v8438
    %v8449 = vunpack.c.l.b16 %v8425
    %v8450 = vunpack.c.l.b16 %v8426
    %v8451 = vunpack.c.l.b16 %v8427
    %v8452 = vunpack.c.l.b16 %v8428
    %v8453 = vunpack.c.l.b16 %v8429
    %v8454 = vunpack.c.l.b16 %v8430
    %v8455 = vunpack.c.l.b16 %v8431
    %v8456 = vunpack.c.l.b16 %v8432
    %v8457 = vpack.c.b16 %v8450, %v8449
    %v8458 = vpack.c.b16 %v8452, %v8451
    %v8459 = vpack.c.b16 %v8454, %v8453
    %v8460 = vpack.c.b16 %v8456, %v8455
    %v8466 = vsel %vm918, %v8434, 0
    %8468 = vmatprep.subr.bf16.mxu0 0
    %8469 = vmatpush1.bf16.msra.mxu0 %v8457
    %8470 = vmatprep.subr.bf16.mxu0 0
    %8471 = vmatpush1.bf16.msra.mxu0 %v8458
    %8472 = vmatprep.subr.bf16.mxu0 0
    %8473 = vmatpush1.bf16.msra.mxu0 %v8459
    %8474 = vmatprep.subr.bf16.mxu0 0
    %8475 = vmatpush1.bf16.msra.mxu0 %v8460
    %8476 = vmatprep.subr.bf16.mxu0 0
    %8477 = vmatpush1.bf16.msra.mxu0 0
    %8478 = vmatprep.subr.bf16.mxu0 0
    %8479 = vmatpush1.bf16.msra.mxu0 0
    %8480 = vmatprep.subr.bf16.mxu0 0
    %8481 = vmatpush1.bf16.msra.mxu0 0
    %8482 = vmatprep.subr.bf16.mxu0 0
    %8483 = vmatpush1.bf16.msra.mxu0 0
    %8484 = vmatprep.subr.bf16.mxu0 0
    %8485 = vmatpush1.bf16.msra.mxu0 0
    %8486 = vmatprep.subr.bf16.mxu0 0
    %8487 = vmatpush1.bf16.msra.mxu0 0
    %8488 = vmatprep.subr.bf16.mxu0 0
    %8489 = vmatpush1.bf16.msra.mxu0 0
    %8490 = vmatprep.subr.bf16.mxu0 0
    %8491 = vmatpush1.bf16.msra.mxu0 0
    %8492 = vmatprep.subr.bf16.mxu0 0
    %8493 = vmatpush1.bf16.msra.mxu0 0
    %8494 = vmatprep.subr.bf16.mxu0 0
    %8495 = vmatpush1.bf16.msra.mxu0 0
    %8496 = vmatprep.subr.bf16.mxu0 0
    %8497 = vmatpush1.bf16.msra.mxu0 0
    %8498 = vmatprep.subr.bf16.mxu0 0
    %8499 = vmatpush1.bf16.msra.mxu0 0
    %8500 = vmatprep.mubr.bf16.mxu0 0
    %8501 = vmatmul.mubr.bf16.gmra.mrb[0].mxu0 %v8466
    %v8502 = vpop.f32.mrb[0].mxu0
    %v8503 = vadd.f32 %v8439, %v8502
    %v8504 = vpop.f32.mrb[0].mxu0
    %v8505 = vpop.f32.mrb[0].mxu0
    %v8506 = vpop.f32.mrb[0].mxu0
    %8507 = vdwg.mxu0
    %v8508 = vadd.f32 %v957, %v4725
    %v8509 = vadd.f32 %v8508, %v5024
    %v8510 = vadd.f32 %v8509, %v8503
    %v8511 = vld [vmem:[%s11] sm:$0xff]
    %v8512 = vld [vmem:[%s11 + $0x8] sm:$0xf]
    %vm8513 = vcmask 113664
    %v8514 = vsel %vm8513, %v8511, 0.0
    %8515 = vadd.xlane.f32.xlu0 %v8514
    %v8516 = vpop.xlane.xlu0 %8515
    %vm8517 = vcmask 109568
    %v8518 = vsel %vm8517, %v8512, 0.0
    %8519 = vadd.xlane.f32.xlu0 %v8518
    %v8520 = vpop.xlane.xlu0 %8519
    %v8521 = vrcp.pop 14.0
    %v8522 = vmul.f32 %v8516, %v8521
    %v8523 = vmul.f32 %v8520, %v8521
    %v8524 = vsub.f32 %v8511, %v8522
    %v8525 = vsub.f32 %v8512, %v8523
    %v8526 = vmul.f32 %v8524, %v8524
    %v8527 = vmul.f32 %v8525, %v8525
    %v8528 = vsel %vm8513, %v8526, 0.0
    %8529 = vadd.xlane.f32.xlu0 %v8528
    %v8530 = vpop.xlane.xlu0 %8529
    %v8531 = vsel %vm8517, %v8527, 0.0
    %8532 = vadd.xlane.f32.xlu0 %v8531
    %v8533 = vpop.xlane.xlu0 %8532
    %v8534 = vmul.f32 %v8530, %v8521
    %v8535 = vmul.f32 %v8533, %v8521
    %v8536 = vadd.f32 %v8534, 1e-05
    %v8537 = vadd.f32 %v8535, 1e-05
    %v8538 = vrsqrt.pop %v8536
    %v8539 = vrsqrt.pop %v8537
    %v8540 = vmul.f32 %v8524, %v8538
    %v8541 = vmul.f32 %v8525, %v8539
    %v8542 = vld [vmem:[#allocation39] sm:$0xff]
    %v8543 = vld [vmem:[#allocation39 + $0x8] sm:$0x77]
    %v8544 = vld [vmem:[#allocation40] sm:$0x3]
    %v8545 = vpack.c.bf16 %v8541, %v8540
    %v8547 = vlaneseq
    %v8548 = vshrl.u32 %v8547, 7
    %v8549 = vsub.s32 0, %v8548
    %v8550 = vrot.slane %v8544, %v8549
    %v8551 = vlaneseq
    %v8552 = vshrl.u32 %v8551, 7
    %v8553 = vsub.s32 1, %v8552
    %v8554 = vrot.slane %v8544, %v8553
    %v8559 = vunpack.c.l.b16 %v8542
    %v8560 = vunpack.c.h.b16 %v8542
    %v8561 = vunpack.c.l.b16 %v8543
    %v8562 = vunpack.c.h.b16 %v8543
    %v8563 = vpack.c.b16 %v8561, %v8559
    %v8564 = vpack.c.b16 %v8562, %v8560
    %v8566 = vsel %vm8513, %v8545, 0
    %v8569 = vsel %vm690, %v8563, 0
    %v8572 = vsel %vm690, %v8564, 0
    %8574 = vmatprep.subr.bf16.mxu0 %v8572
    %8575 = vmatpush1.bf16.msra.mxu0 %v8569
    %8576 = vmatprep.subr.bf16.mxu0 0
    %8577 = vmatpush1.bf16.msra.mxu0 0
    %8578 = vmatprep.subr.bf16.mxu0 0
    %8579 = vmatpush1.bf16.msra.mxu0 0
    %8580 = vmatprep.subr.bf16.mxu0 0
    %8581 = vmatpush1.bf16.msra.mxu0 0
    %8582 = vmatprep.subr.bf16.mxu0 0
    %8583 = vmatpush1.bf16.msra.mxu0 0
    %8584 = vmatprep.subr.bf16.mxu0 0
    %8585 = vmatpush1.bf16.msra.mxu0 0
    %8586 = vmatprep.subr.bf16.mxu0 0
    %8587 = vmatpush1.bf16.msra.mxu0 0
    %8588 = vmatprep.subr.bf16.mxu0 0
    %8589 = vmatpush1.bf16.msra.mxu0 0
    %8590 = vmatprep.subr.bf16.mxu0 0
    %8591 = vmatpush1.bf16.msra.mxu0 0
    %8592 = vmatprep.subr.bf16.mxu0 0
    %8593 = vmatpush1.bf16.msra.mxu0 0
    %8594 = vmatprep.subr.bf16.mxu0 0
    %8595 = vmatpush1.bf16.msra.mxu0 0
    %8596 = vmatprep.subr.bf16.mxu0 0
    %8597 = vmatpush1.bf16.msra.mxu0 0
    %8598 = vmatprep.subr.bf16.mxu0 0
    %8599 = vmatpush1.bf16.msra.mxu0 0
    %8600 = vmatprep.subr.bf16.mxu0 0
    %8601 = vmatpush1.bf16.msra.mxu0 0
    %8602 = vmatprep.subr.bf16.mxu0 0
    %8603 = vmatpush1.bf16.msra.mxu0 0
    %8604 = vmatprep.subr.bf16.mxu0 0
    %8605 = vmatpush1.bf16.msra.mxu0 0
    %8606 = vmatprep.mubr.bf16.mxu0 0
    %8607 = vmatmul.mubr.bf16.gmra.mrb[0].mxu0 %v8566
    %v8608 = vpop.f32.mrb[0].mxu0
    %v8609 = vadd.f32 %v8550, %v8608
    %v8610 = vpop.f32.mrb[0].mxu0
    %v8611 = vadd.f32 %v8554, %v8610
    %v8612 = vpop.f32.mrb[0].mxu0
    %v8613 = vadd.f32 %v8550, %v8612
    %v8614 = vpop.f32.mrb[0].mxu0
    %v8615 = vadd.f32 %v8554, %v8614
    %8616 = vdwg.mxu0
    %v8617 = vmax.f32 %v8609, 0.0
    %v8618 = vmax.f32 %v8611, 0.0
    %v8619 = vmax.f32 %v8613, 0.0
    %v8620 = vmax.f32 %v8615, 0.0
    %v8621 = vadd.f32 %v8617, %v8618
    %8622 = vadd.xlane.f32.xlu0 %v8621
    %v8623 = vpop.xlane.xlu0 %8622
    %v8624 = vsel %vm6673, %v8619, 0.0
    %v8625 = vsel %vm6673, %v8620, 0.0
    %v8626 = vadd.f32 %v8624, %v8625
    %8627 = vadd.xlane.f32.xlu0 %v8626
    %v8628 = vpop.xlane.xlu0 %8627
    %v8629 = vmul.f32 %v8623, %v4440
    %v8630 = vmul.f32 %v8628, %v4440
    %v8631 = vsub.f32 %v8617, %v8629
    %v8632 = vsub.f32 %v8618, %v8629
    %v8633 = vsub.f32 %v8619, %v8630
    %v8634 = vsub.f32 %v8620, %v8630
    %v8635 = vmul.f32 %v8631, %v8631
    %v8636 = vmul.f32 %v8632, %v8632
    %v8637 = vmul.f32 %v8633, %v8633
    %v8638 = vmul.f32 %v8634, %v8634
    %v8639 = vadd.f32 %v8635, %v8636
    %8640 = vadd.xlane.f32.xlu0 %v8639
    %v8641 = vpop.xlane.xlu0 %8640
    %v8642 = vsel %vm6673, %v8637, 0.0
    %v8643 = vsel %vm6673, %v8638, 0.0
    %v8644 = vadd.f32 %v8642, %v8643
    %8645 = vadd.xlane.f32.xlu0 %v8644
    %v8646 = vpop.xlane.xlu0 %8645
    %v8647 = vmul.f32 %v8641, %v4440
    %v8648 = vmul.f32 %v8646, %v4440
    %v8649 = vadd.f32 %v8647, 1e-05
    %v8650 = vadd.f32 %v8648, 1e-05
    %v8651 = vrsqrt.pop %v8649
    %v8652 = vrsqrt.pop %v8650
    %v8653 = vmul.f32 %v8631, %v8651
    %v8654 = vmul.f32 %v8632, %v8651
    %v8655 = vmul.f32 %v8633, %v8652
    %v8656 = vmul.f32 %v8634, %v8652
    %v8657 = vld [vmem:[#allocation42] sm:$0xf]
    %v8658 = vld [vmem:[#allocation42 + $0x4] sm:$0xf]
    %v8659 = vld [vmem:[#allocation42 + $0x8] sm:$0xf]
    %v8660 = vld [vmem:[#allocation42 + $0xc] sm:$0xf]
    %v8661 = vld [vmem:[#allocation42 + $0x10] sm:$0xf]
    %v8662 = vld [vmem:[#allocation42 + $0x14] sm:$0xf]
    %v8663 = vld [vmem:[#allocation42 + $0x18] sm:$0xf]
    %v8664 = vld [vmem:[#allocation42 + $0x1c] sm:$0xf]
    %v8665 = vld [vmem:[#allocation42 + $0x20] sm:$0xf]
    %v8666 = vld [vmem:[#allocation42 + $0x24] sm:$0xf]
    %v8667 = vld [vmem:[#allocation42 + $0x28] sm:$0xf]
    %v8668 = vld [vmem:[#allocation42 + $0x2c] sm:$0xf]
    %v8669 = vld [vmem:[#allocation42 + $0x30] sm:$0xf]
    %v8670 = vld [vmem:[#allocation42 + $0x34] sm:$0xf]
    %v8671 = vld [vmem:[#allocation42 + $0x38] sm:$0xf]
    %v8672 = vld [vmem:[#allocation42 + $0x3c] sm:$0xf]
    %v8673 = vld [vmem:[#allocation42 + $0x40] sm:$0xf]
    %v8674 = vld [vmem:[#allocation42 + $0x44] sm:$0xf]
    %v8675 = vld [vmem:[#allocation42 + $0x48] sm:$0xf]
    %v8676 = vld [vmem:[#allocation42 + $0x4c] sm:$0xf]
    %v8677 = vld [vmem:[#allocation42 + $0x50] sm:$0xf]
    %v8678 = vld [vmem:[#allocation42 + $0x54] sm:$0xf]
    %v8679 = vld [vmem:[#allocation42 + $0x58] sm:$0xf]
    %v8680 = vld [vmem:[#allocation42 + $0x5c] sm:$0xf]
    %v8681 = vld [vmem:[#allocation42 + $0x60] sm:$0xf]
    %v8682 = vld [vmem:[#allocation42 + $0x64] sm:$0xf]
    %v8683 = vld [vmem:[#allocation42 + $0x68] sm:$0xf]
    %v8684 = vld [vmem:[#allocation42 + $0x6c] sm:$0xf]
    %v8685 = vld [vmem:[#allocation42 + $0x70] sm:$0xf]
    %v8686 = vld [vmem:[#allocation42 + $0x74] sm:$0xf]
    %v8687 = vld [vmem:[#allocation42 + $0x78] sm:$0xf]
    %v8688 = vld [vmem:[#allocation42 + $0x7c] sm:$0xf]
    %v8689 = vld [vmem:[#allocation43] sm:$0x1]
    %v8690 = vpack.c.bf16 %v8655, %v8653
    %v8691 = vpack.c.bf16 %v8656, %v8654
    %v8693 = vlaneseq
    %v8694 = vshrl.u32 %v8693, 7
    %v8695 = vsub.s32 0, %v8694
    %v8696 = vrot.slane %v8689, %v8695
    %v8730 = vunpack.c.l.b16 %v8657
    %v8731 = vunpack.c.l.b16 %v8658
    %v8732 = vunpack.c.l.b16 %v8659
    %v8733 = vunpack.c.l.b16 %v8660
    %v8734 = vunpack.c.l.b16 %v8661
    %v8735 = vunpack.c.l.b16 %v8662
    %v8736 = vunpack.c.l.b16 %v8663
    %v8737 = vunpack.c.l.b16 %v8664
    %v8738 = vunpack.c.l.b16 %v8665
    %v8739 = vunpack.c.l.b16 %v8666
    %v8740 = vunpack.c.l.b16 %v8667
    %v8741 = vunpack.c.l.b16 %v8668
    %v8742 = vunpack.c.l.b16 %v8669
    %v8743 = vunpack.c.l.b16 %v8670
    %v8744 = vunpack.c.l.b16 %v8671
    %v8745 = vunpack.c.l.b16 %v8672
    %v8746 = vunpack.c.l.b16 %v8673
    %v8747 = vunpack.c.l.b16 %v8674
    %v8748 = vunpack.c.l.b16 %v8675
    %v8749 = vunpack.c.l.b16 %v8676
    %v8750 = vunpack.c.l.b16 %v8677
    %v8751 = vunpack.c.l.b16 %v8678
    %v8752 = vunpack.c.l.b16 %v8679
    %v8753 = vunpack.c.l.b16 %v8680
    %v8754 = vunpack.c.l.b16 %v8681
    %v8755 = vunpack.c.l.b16 %v8682
    %v8756 = vunpack.c.l.b16 %v8683
    %v8757 = vunpack.c.l.b16 %v8684
    %v8758 = vunpack.c.l.b16 %v8685
    %v8759 = vunpack.c.l.b16 %v8686
    %v8760 = vunpack.c.l.b16 %v8687
    %v8761 = vunpack.c.l.b16 %v8688
    %v8762 = vpack.c.b16 %v8731, %v8730
    %v8763 = vpack.c.b16 %v8733, %v8732
    %v8764 = vpack.c.b16 %v8735, %v8734
    %v8765 = vpack.c.b16 %v8737, %v8736
    %v8766 = vpack.c.b16 %v8739, %v8738
    %v8767 = vpack.c.b16 %v8741, %v8740
    %v8768 = vpack.c.b16 %v8743, %v8742
    %v8769 = vpack.c.b16 %v8745, %v8744
    %v8770 = vpack.c.b16 %v8747, %v8746
    %v8771 = vpack.c.b16 %v8749, %v8748
    %v8772 = vpack.c.b16 %v8751, %v8750
    %v8773 = vpack.c.b16 %v8753, %v8752
    %v8774 = vpack.c.b16 %v8755, %v8754
    %v8775 = vpack.c.b16 %v8757, %v8756
    %v8776 = vpack.c.b16 %v8759, %v8758
    %v8777 = vpack.c.b16 %v8761, %v8760
    %8794 = vmatprep.subr.bf16.mxu0 0
    %8795 = vmatpush1.bf16.msra.mxu0 %v8762
    %8796 = vmatprep.subr.bf16.mxu0 0
    %8797 = vmatpush1.bf16.msra.mxu0 %v8763
    %8798 = vmatprep.subr.bf16.mxu0 0
    %8799 = vmatpush1.bf16.msra.mxu0 %v8764
    %8800 = vmatprep.subr.bf16.mxu0 0
    %8801 = vmatpush1.bf16.msra.mxu0 %v8765
    %8802 = vmatprep.subr.bf16.mxu0 0
    %8803 = vmatpush1.bf16.msra.mxu0 %v8766
    %8804 = vmatprep.subr.bf16.mxu0 0
    %8805 = vmatpush1.bf16.msra.mxu0 %v8767
    %8806 = vmatprep.subr.bf16.mxu0 0
    %8807 = vmatpush1.bf16.msra.mxu0 %v8768
    %8808 = vmatprep.subr.bf16.mxu0 0
    %8809 = vmatpush1.bf16.msra.mxu0 %v8769
    %8810 = vmatprep.subr.bf16.mxu0 0
    %8811 = vmatpush1.bf16.msra.mxu0 %v8770
    %8812 = vmatprep.subr.bf16.mxu0 0
    %8813 = vmatpush1.bf16.msra.mxu0 %v8771
    %8814 = vmatprep.subr.bf16.mxu0 0
    %8815 = vmatpush1.bf16.msra.mxu0 %v8772
    %8816 = vmatprep.subr.bf16.mxu0 0
    %8817 = vmatpush1.bf16.msra.mxu0 %v8773
    %8818 = vmatprep.subr.bf16.mxu0 0
    %8819 = vmatpush1.bf16.msra.mxu0 %v8774
    %8820 = vmatprep.subr.bf16.mxu0 0
    %8821 = vmatpush1.bf16.msra.mxu0 %v8775
    %8822 = vmatprep.subr.bf16.mxu0 0
    %8823 = vmatpush1.bf16.msra.mxu0 %v8776
    %8824 = vmatprep.subr.bf16.mxu0 0
    %8825 = vmatpush1.bf16.msra.mxu0 %v8777
    %8826 = vmatprep.mubr.bf16.mxu0 %v8691
    %8827 = vmatmul.mubr.bf16.gmra.mrb[0].mxu0 %v8690
    %v8828 = vpop.f32.mrb[0].mxu0
    %v8829 = vadd.f32 %v8696, %v8828
    %v8830 = vpop.f32.mrb[0].mxu0
    %v8831 = vpop.f32.mrb[0].mxu0
    %v8832 = vadd.f32 %v8696, %v8831
    %v8833 = vpop.f32.mrb[0].mxu0
    %8834 = vdwg.mxu0
    %v8835 = vmax.f32 %v8829, 0.0
    %v8836 = vmax.f32 %v8832, 0.0
    %8837 = vadd.xlane.f32.xlu0 %v8835
    %v8838 = vpop.xlane.xlu0 %8837
    %v8839 = vsel %vm6673, %v8836, 0.0
    %8840 = vadd.xlane.f32.xlu0 %v8839
    %v8841 = vpop.xlane.xlu0 %8840
    %v8842 = vmul.f32 %v8838, %v739
    %v8843 = vmul.f32 %v8841, %v739
    %v8844 = vsub.f32 %v8835, %v8842
    %v8845 = vsub.f32 %v8836, %v8843
    %v8846 = vmul.f32 %v8844, %v8844
    %v8847 = vmul.f32 %v8845, %v8845
    %8848 = vadd.xlane.f32.xlu0 %v8846
    %v8849 = vpop.xlane.xlu0 %8848
    %v8850 = vsel %vm6673, %v8847, 0.0
    %8851 = vadd.xlane.f32.xlu0 %v8850
    %v8852 = vpop.xlane.xlu0 %8851
    %v8853 = vmul.f32 %v8849, %v739
    %v8854 = vmul.f32 %v8852, %v739
    %v8855 = vadd.f32 %v8853, 1e-05
    %v8856 = vadd.f32 %v8854, 1e-05
    %v8857 = vrsqrt.pop %v8855
    %v8858 = vrsqrt.pop %v8856
    %v8859 = vmul.f32 %v8844, %v8857
    %v8860 = vmul.f32 %v8845, %v8858
    %v8861 = vld [vmem:[#allocation45] sm:$0xf]
    %v8862 = vld [vmem:[#allocation45 + $0x4] sm:$0xf]
    %v8863 = vld [vmem:[#allocation45 + $0x8] sm:$0xf]
    %v8864 = vld [vmem:[#allocation45 + $0xc] sm:$0xf]
    %v8865 = vld [vmem:[#allocation45 + $0x10] sm:$0xf]
    %v8866 = vld [vmem:[#allocation45 + $0x14] sm:$0xf]
    %v8867 = vld [vmem:[#allocation45 + $0x18] sm:$0xf]
    %v8868 = vld [vmem:[#allocation45 + $0x1c] sm:$0xf]
    %v8869 = vld [vmem:[#allocation45 + $0x20] sm:$0xf]
    %v8870 = vld [vmem:[#allocation45 + $0x24] sm:$0xf]
    %v8871 = vld [vmem:[#allocation45 + $0x28] sm:$0xf]
    %v8872 = vld [vmem:[#allocation45 + $0x2c] sm:$0xf]
    %v8873 = vld [vmem:[#allocation45 + $0x30] sm:$0xf]
    %v8874 = vld [vmem:[#allocation45 + $0x34] sm:$0xf]
    %v8875 = vld [vmem:[#allocation45 + $0x38] sm:$0xf]
    %v8876 = vld [vmem:[#allocation45 + $0x3c] sm:$0xf]
    %v8877 = vld [vmem:[#allocation46] sm:$0x1]
    %v8878 = vpack.c.bf16 %v8860, %v8859
    %v8880 = vlaneseq
    %v8881 = vshrl.u32 %v8880, 7
    %v8882 = vsub.s32 0, %v8881
    %v8883 = vrot.slane %v8877, %v8882
    %v8901 = vunpack.c.l.b16 %v8861
    %v8902 = vunpack.c.l.b16 %v8862
    %v8903 = vunpack.c.l.b16 %v8863
    %v8904 = vunpack.c.l.b16 %v8864
    %v8905 = vunpack.c.l.b16 %v8865
    %v8906 = vunpack.c.l.b16 %v8866
    %v8907 = vunpack.c.l.b16 %v8867
    %v8908 = vunpack.c.l.b16 %v8868
    %v8909 = vunpack.c.l.b16 %v8869
    %v8910 = vunpack.c.l.b16 %v8870
    %v8911 = vunpack.c.l.b16 %v8871
    %v8912 = vunpack.c.l.b16 %v8872
    %v8913 = vunpack.c.l.b16 %v8873
    %v8914 = vunpack.c.l.b16 %v8874
    %v8915 = vunpack.c.l.b16 %v8875
    %v8916 = vunpack.c.l.b16 %v8876
    %v8917 = vpack.c.b16 %v8902, %v8901
    %v8918 = vpack.c.b16 %v8904, %v8903
    %v8919 = vpack.c.b16 %v8906, %v8905
    %v8920 = vpack.c.b16 %v8908, %v8907
    %v8921 = vpack.c.b16 %v8910, %v8909
    %v8922 = vpack.c.b16 %v8912, %v8911
    %v8923 = vpack.c.b16 %v8914, %v8913
    %v8924 = vpack.c.b16 %v8916, %v8915
    %8933 = vmatprep.subr.bf16.mxu0 0
    %8934 = vmatpush1.bf16.msra.mxu0 %v8917
    %8935 = vmatprep.subr.bf16.mxu0 0
    %8936 = vmatpush1.bf16.msra.mxu0 %v8918
    %8937 = vmatprep.subr.bf16.mxu0 0
    %8938 = vmatpush1.bf16.msra.mxu0 %v8919
    %8939 = vmatprep.subr.bf16.mxu0 0
    %8940 = vmatpush1.bf16.msra.mxu0 %v8920
    %8941 = vmatprep.subr.bf16.mxu0 0
    %8942 = vmatpush1.bf16.msra.mxu0 %v8921
    %8943 = vmatprep.subr.bf16.mxu0 0
    %8944 = vmatpush1.bf16.msra.mxu0 %v8922
    %8945 = vmatprep.subr.bf16.mxu0 0
    %8946 = vmatpush1.bf16.msra.mxu0 %v8923
    %8947 = vmatprep.subr.bf16.mxu0 0
    %8948 = vmatpush1.bf16.msra.mxu0 %v8924
    %8949 = vmatprep.subr.bf16.mxu0 0
    %8950 = vmatpush1.bf16.msra.mxu0 0
    %8951 = vmatprep.subr.bf16.mxu0 0
    %8952 = vmatpush1.bf16.msra.mxu0 0
    %8953 = vmatprep.subr.bf16.mxu0 0
    %8954 = vmatpush1.bf16.msra.mxu0 0
    %8955 = vmatprep.subr.bf16.mxu0 0
    %8956 = vmatpush1.bf16.msra.mxu0 0
    %8957 = vmatprep.subr.bf16.mxu0 0
    %8958 = vmatpush1.bf16.msra.mxu0 0
    %8959 = vmatprep.subr.bf16.mxu0 0
    %8960 = vmatpush1.bf16.msra.mxu0 0
    %8961 = vmatprep.subr.bf16.mxu0 0
    %8962 = vmatpush1.bf16.msra.mxu0 0
    %8963 = vmatprep.subr.bf16.mxu0 0
    %8964 = vmatpush1.bf16.msra.mxu0 0
    %8965 = vmatprep.mubr.bf16.mxu0 0
    %8966 = vmatmul.mubr.bf16.gmra.mrb[0].mxu0 %v8878
    %v8967 = vpop.f32.mrb[0].mxu0
    %v8968 = vadd.f32 %v8883, %v8967
    %v8969 = vpop.f32.mrb[0].mxu0
    %v8970 = vpop.f32.mrb[0].mxu0
    %v8971 = vadd.f32 %v8883, %v8970
    %v8972 = vpop.f32.mrb[0].mxu0
    %8973 = vdwg.mxu0
    %v8974 = vld [vmem:[%s1] sm:$0xff]
    %v8975 = vld [vmem:[%s1 + $0x8] sm:$0xf]
    %vm8976 = vcmask 15360
    %v8978 = vsel %vm8976, %v8974, 0
    %v8981 = vsel %vm8976, %v8975, 0
    %v8984 = vsel %vm735, %v8510, 0
    %8986 = vmatprep.subr.mxu0 0.0
    %8987 = vmatpush1.msra.mxu0 %v8984
    %8988 = vmatprep.subr.mxu0 0.0
    %8989 = vmatpush1.msra.mxu0 0.0
    %8990 = vmatprep.subr.mxu0 0.0
    %8991 = vmatpush1.msra.mxu0 0.0
    %8992 = vmatprep.subr.mxu0 0.0
    %8993 = vmatpush1.msra.mxu0 0.0
    %8994 = vmatprep.subr.mxu0 0.0
    %8995 = vmatpush1.msra.mxu0 0.0
    %8996 = vmatprep.subr.mxu0 0.0
    %8997 = vmatpush1.msra.mxu0 0.0
    %8998 = vmatprep.subr.mxu0 0.0
    %8999 = vmatpush1.msra.mxu0 0.0
    %9000 = vmatprep.subr.mxu0 0.0
    %9001 = vmatpush1.msra.mxu0 0.0
    %9002 = vmatprep.subr.mxu0 0.0
    %9003 = vmatpush1.msra.mxu0 0.0
    %9004 = vmatprep.subr.mxu0 0.0
    %9005 = vmatpush1.msra.mxu0 0.0
    %9006 = vmatprep.subr.mxu0 0.0
    %9007 = vmatpush1.msra.mxu0 0.0
    %9008 = vmatprep.subr.mxu0 0.0
    %9009 = vmatpush1.msra.mxu0 0.0
    %9010 = vmatprep.subr.mxu0 0.0
    %9011 = vmatpush1.msra.mxu0 0.0
    %9012 = vmatprep.subr.mxu0 0.0
    %9013 = vmatpush1.msra.mxu0 0.0
    %9014 = vmatprep.subr.mxu0 0.0
    %9015 = vmatpush1.msra.mxu0 0.0
    %9016 = vmatprep.subr.mxu0 0.0
    %9017 = vmatpush1.msra.mxu0 0.0
    %9018 = vmatprep.subr.mxu0 0.0
    %9019 = vmatpush1.msra.mxu0 0.0
    %9020 = vmatprep.subr.mxu0 0.0
    %9021 = vmatpush1.msra.mxu0 0.0
    %9022 = vmatprep.subr.mxu0 0.0
    %9023 = vmatpush1.msra.mxu0 0.0
    %9024 = vmatprep.subr.mxu0 0.0
    %9025 = vmatpush1.msra.mxu0 0.0
    %9026 = vmatprep.subr.mxu0 0.0
    %9027 = vmatpush1.msra.mxu0 0.0
    %9028 = vmatprep.subr.mxu0 0.0
    %9029 = vmatpush1.msra.mxu0 0.0
    %9030 = vmatprep.subr.mxu0 0.0
    %9031 = vmatpush1.msra.mxu0 0.0
    %9032 = vmatprep.subr.mxu0 0.0
    %9033 = vmatpush1.msra.mxu0 0.0
    %9034 = vmatprep.subr.mxu0 0.0
    %9035 = vmatpush1.msra.mxu0 0.0
    %9036 = vmatprep.subr.mxu0 0.0
    %9037 = vmatpush1.msra.mxu0 0.0
    %9038 = vmatprep.subr.mxu0 0.0
    %9039 = vmatpush1.msra.mxu0 0.0
    %9040 = vmatprep.subr.mxu0 0.0
    %9041 = vmatpush1.msra.mxu0 0.0
    %9042 = vmatprep.subr.mxu0 0.0
    %9043 = vmatpush1.msra.mxu0 0.0
    %9044 = vmatprep.subr.mxu0 0.0
    %9045 = vmatpush1.msra.mxu0 0.0
    %9046 = vmatprep.subr.mxu0 0.0
    %9047 = vmatpush1.msra.mxu0 0.0
    %9048 = vmatprep.subr.mxu0 0.0
    %9049 = vmatpush1.msra.mxu0 0.0
    %9050 = vmatprep.mubr.f32.mxu0 0.0
    %9051 = vmatmul.mubr.f32.gmra.mrb[0].mxu0 %v8978
    %v9052 = vpop.f32.mrb[0].mxu0
    %v9053 = vadd.f32 %v8968, %v9052
    %v9054 = vpop.f32.mrb[0].mxu0
    %9055 = vmatprep.mubr.f32.mxu0 0.0
    %9056 = vmatmul.mubr.f32.gmra.mrb[0].mxu0 %v8981
    %v9057 = vpop.f32.mrb[0].mxu0
    %v9058 = vadd.f32 %v8971, %v9057
    %v9059 = vpop.f32.mrb[0].mxu0
    %9060 = vdwg.mxu0
    %9061 = vadd.xlane.f32.xlu0 %v9053
    %v9062 = vpop.xlane.xlu0 %9061
    %v9063 = vsel %vm6673, %v9058, 0.0
    %9064 = vadd.xlane.f32.xlu0 %v9063
    %v9065 = vpop.xlane.xlu0 %9064
    %v9066 = vmul.f32 %v9062, %v739
    %v9067 = vmul.f32 %v9065, %v739
    %v9068 = vsub.f32 %v9053, %v9066
    %v9069 = vsub.f32 %v9058, %v9067
    %v9070 = vmul.f32 %v9068, %v9068
    %v9071 = vmul.f32 %v9069, %v9069
    %9072 = vadd.xlane.f32.xlu0 %v9070
    %v9073 = vpop.xlane.xlu0 %9072
    %v9074 = vsel %vm6673, %v9071, 0.0
    %9075 = vadd.xlane.f32.xlu0 %v9074
    %v9076 = vpop.xlane.xlu0 %9075
    %v9077 = vmul.f32 %v9073, %v739
    %v9078 = vmul.f32 %v9076, %v739
    %v9079 = vadd.f32 %v9077, 1e-05
    %v9080 = vadd.f32 %v9078, 1e-05
    %v9081 = vrsqrt.pop %v9079
    %v9082 = vrsqrt.pop %v9080
    %v9083 = vmul.f32 %v9068, %v9081
    %v9084 = vmul.f32 %v9069, %v9082
    %v9085 = vld [vmem:[#allocation48] sm:$0xff]
    %v9086 = vld [vmem:[#allocation48 + $0x8] sm:$0xff]
    %v9087 = vld [vmem:[#allocation48 + $0x10] sm:$0xff]
    %v9088 = vld [vmem:[#allocation48 + $0x18] sm:$0xff]
    %v9089 = vld [vmem:[#allocation48 + $0x20] sm:$0xff]
    %v9090 = vld [vmem:[#allocation48 + $0x28] sm:$0xff]
    %v9091 = vld [vmem:[#allocation48 + $0x30] sm:$0xff]
    %v9092 = vld [vmem:[#allocation48 + $0x38] sm:$0xff]
    %v9093 = vld [vmem:[#allocation48 + $0x40] sm:$0xff]
    %v9094 = vld [vmem:[#allocation48 + $0x48] sm:$0xff]
    %v9095 = vld [vmem:[#allocation48 + $0x50] sm:$0xff]
    %v9096 = vld [vmem:[#allocation48 + $0x58] sm:$0xff]
    %v9097 = vld [vmem:[#allocation48 + $0x60] sm:$0xff]
    %v9098 = vld [vmem:[#allocation48 + $0x68] sm:$0xff]
    %v9099 = vld [vmem:[#allocation48 + $0x70] sm:$0xff]
    %v9100 = vld [vmem:[#allocation48 + $0x78] sm:$0xff]
    %v9101 = vld [vmem:[#allocation49] sm:$0x3]
    %v9102 = vpack.c.bf16 %v9084, %v9083
    %v9104 = vlaneseq
    %v9105 = vshrl.u32 %v9104, 7
    %v9106 = vsub.s32 0, %v9105
    %v9107 = vrot.slane %v9101, %v9106
    %v9108 = vlaneseq
    %v9109 = vshrl.u32 %v9108, 7
    %v9110 = vsub.s32 1, %v9109
    %v9111 = vrot.slane %v9101, %v9110
    %v9130 = vunpack.c.l.b16 %v9085
    %v9131 = vunpack.c.h.b16 %v9085
    %v9132 = vunpack.c.l.b16 %v9086
    %v9133 = vunpack.c.h.b16 %v9086
    %v9134 = vunpack.c.l.b16 %v9087
    %v9135 = vunpack.c.h.b16 %v9087
    %v9136 = vunpack.c.l.b16 %v9088
    %v9137 = vunpack.c.h.b16 %v9088
    %v9138 = vunpack.c.l.b16 %v9089
    %v9139 = vunpack.c.h.b16 %v9089
    %v9140 = vunpack.c.l.b16 %v9090
    %v9141 = vunpack.c.h.b16 %v9090
    %v9142 = vunpack.c.l.b16 %v9091
    %v9143 = vunpack.c.h.b16 %v9091
    %v9144 = vunpack.c.l.b16 %v9092
    %v9145 = vunpack.c.h.b16 %v9092
    %v9146 = vunpack.c.l.b16 %v9093
    %v9147 = vunpack.c.h.b16 %v9093
    %v9148 = vunpack.c.l.b16 %v9094
    %v9149 = vunpack.c.h.b16 %v9094
    %v9150 = vunpack.c.l.b16 %v9095
    %v9151 = vunpack.c.h.b16 %v9095
    %v9152 = vunpack.c.l.b16 %v9096
    %v9153 = vunpack.c.h.b16 %v9096
    %v9154 = vunpack.c.l.b16 %v9097
    %v9155 = vunpack.c.h.b16 %v9097
    %v9156 = vunpack.c.l.b16 %v9098
    %v9157 = vunpack.c.h.b16 %v9098
    %v9158 = vunpack.c.l.b16 %v9099
    %v9159 = vunpack.c.h.b16 %v9099
    %v9160 = vunpack.c.l.b16 %v9100
    %v9161 = vunpack.c.h.b16 %v9100
    %v9162 = vpack.c.b16 %v9132, %v9130
    %v9163 = vpack.c.b16 %v9133, %v9131
    %v9164 = vpack.c.b16 %v9136, %v9134
    %v9165 = vpack.c.b16 %v9137, %v9135
    %v9166 = vpack.c.b16 %v9140, %v9138
    %v9167 = vpack.c.b16 %v9141, %v9139
    %v9168 = vpack.c.b16 %v9144, %v9142
    %v9169 = vpack.c.b16 %v9145, %v9143
    %v9170 = vpack.c.b16 %v9148, %v9146
    %v9171 = vpack.c.b16 %v9149, %v9147
    %v9172 = vpack.c.b16 %v9152, %v9150
    %v9173 = vpack.c.b16 %v9153, %v9151
    %v9174 = vpack.c.b16 %v9156, %v9154
    %v9175 = vpack.c.b16 %v9157, %v9155
    %v9176 = vpack.c.b16 %v9160, %v9158
    %v9177 = vpack.c.b16 %v9161, %v9159
    %9194 = vmatprep.subr.bf16.mxu0 %v9163
    %9195 = vmatpush1.bf16.msra.mxu0 %v9162
    %9196 = vmatprep.subr.bf16.mxu0 %v9165
    %9197 = vmatpush1.bf16.msra.mxu0 %v9164
    %9198 = vmatprep.subr.bf16.mxu0 %v9167
    %9199 = vmatpush1.bf16.msra.mxu0 %v9166
    %9200 = vmatprep.subr.bf16.mxu0 %v9169
    %9201 = vmatpush1.bf16.msra.mxu0 %v9168
    %9202 = vmatprep.subr.bf16.mxu0 %v9171
    %9203 = vmatpush1.bf16.msra.mxu0 %v9170
    %9204 = vmatprep.subr.bf16.mxu0 %v9173
    %9205 = vmatpush1.bf16.msra.mxu0 %v9172
    %9206 = vmatprep.subr.bf16.mxu0 %v9175
    %9207 = vmatpush1.bf16.msra.mxu0 %v9174
    %9208 = vmatprep.subr.bf16.mxu0 %v9177
    %9209 = vmatpush1.bf16.msra.mxu0 %v9176
    %9210 = vmatprep.subr.bf16.mxu0 0
    %9211 = vmatpush1.bf16.msra.mxu0 0
    %9212 = vmatprep.subr.bf16.mxu0 0
    %9213 = vmatpush1.bf16.msra.mxu0 0
    %9214 = vmatprep.subr.bf16.mxu0 0
    %9215 = vmatpush1.bf16.msra.mxu0 0
    %9216 = vmatprep.subr.bf16.mxu0 0
    %9217 = vmatpush1.bf16.msra.mxu0 0
    %9218 = vmatprep.subr.bf16.mxu0 0
    %9219 = vmatpush1.bf16.msra.mxu0 0
    %9220 = vmatprep.subr.bf16.mxu0 0
    %9221 = vmatpush1.bf16.msra.mxu0 0
    %9222 = vmatprep.subr.bf16.mxu0 0
    %9223 = vmatpush1.bf16.msra.mxu0 0
    %9224 = vmatprep.subr.bf16.mxu0 0
    %9225 = vmatpush1.bf16.msra.mxu0 0
    %9226 = vmatprep.mubr.bf16.mxu0 0
    %9227 = vmatmul.mubr.bf16.gmra.mrb[0].mxu0 %v9102
    %v9228 = vpop.f32.mrb[0].mxu0
    %v9229 = vadd.f32 %v9107, %v9228
    %v9230 = vpop.f32.mrb[0].mxu0
    %v9231 = vadd.f32 %v9111, %v9230
    %v9232 = vpop.f32.mrb[0].mxu0
    %v9233 = vadd.f32 %v9107, %v9232
    %v9234 = vpop.f32.mrb[0].mxu0
    %v9235 = vadd.f32 %v9111, %v9234
    %9236 = vdwg.mxu0
    %v9237 = vmax.f32 %v9229, 0.0
    %v9238 = vmax.f32 %v9231, 0.0
    %v9239 = vmax.f32 %v9233, 0.0
    %v9240 = vmax.f32 %v9235, 0.0
    %v9241 = vadd.f32 %v9237, %v9238
    %9242 = vadd.xlane.f32.xlu0 %v9241
    %v9243 = vpop.xlane.xlu0 %9242
    %v9244 = vsel %vm6673, %v9239, 0.0
    %v9245 = vsel %vm6673, %v9240, 0.0
    %v9246 = vadd.f32 %v9244, %v9245
    %9247 = vadd.xlane.f32.xlu0 %v9246
    %v9248 = vpop.xlane.xlu0 %9247
    %v9249 = vmul.f32 %v9243, %v4440
    %v9250 = vmul.f32 %v9248, %v4440
    %v9251 = vsub.f32 %v9237, %v9249
    %v9252 = vsub.f32 %v9238, %v9249
    %v9253 = vsub.f32 %v9239, %v9250
    %v9254 = vsub.f32 %v9240, %v9250
    %v9255 = vmul.f32 %v9251, %v9251
    %v9256 = vmul.f32 %v9252, %v9252
    %v9257 = vmul.f32 %v9253, %v9253
    %v9258 = vmul.f32 %v9254, %v9254
    %v9259 = vadd.f32 %v9255, %v9256
    %9260 = vadd.xlane.f32.xlu0 %v9259
    %v9261 = vpop.xlane.xlu0 %9260
    %v9262 = vsel %vm6673, %v9257, 0.0
    %v9263 = vsel %vm6673, %v9258, 0.0
    %v9264 = vadd.f32 %v9262, %v9263
    %9265 = vadd.xlane.f32.xlu0 %v9264
    %v9266 = vpop.xlane.xlu0 %9265
    %v9267 = vmul.f32 %v9261, %v4440
    %v9268 = vmul.f32 %v9266, %v4440
    %v9269 = vadd.f32 %v9267, 1e-05
    %v9270 = vadd.f32 %v9268, 1e-05
    %v9271 = vrsqrt.pop %v9269
    %v9272 = vrsqrt.pop %v9270
    %v9273 = vmul.f32 %v9251, %v9271
    %v9274 = vmul.f32 %v9252, %v9271
    %v9275 = vmul.f32 %v9253, %v9272
    %v9276 = vmul.f32 %v9254, %v9272
    %v9277 = vld [vmem:[#allocation51] sm:$0xf]
    %v9278 = vld [vmem:[#allocation51 + $0x4] sm:$0xf]
    %v9279 = vld [vmem:[#allocation51 + $0x8] sm:$0xf]
    %v9280 = vld [vmem:[#allocation51 + $0xc] sm:$0xf]
    %v9281 = vld [vmem:[#allocation51 + $0x10] sm:$0xf]
    %v9282 = vld [vmem:[#allocation51 + $0x14] sm:$0xf]
    %v9283 = vld [vmem:[#allocation51 + $0x18] sm:$0xf]
    %v9284 = vld [vmem:[#allocation51 + $0x1c] sm:$0xf]
    %v9285 = vld [vmem:[#allocation51 + $0x20] sm:$0xf]
    %v9286 = vld [vmem:[#allocation51 + $0x24] sm:$0xf]
    %v9287 = vld [vmem:[#allocation51 + $0x28] sm:$0xf]
    %v9288 = vld [vmem:[#allocation51 + $0x2c] sm:$0xf]
    %v9289 = vld [vmem:[#allocation51 + $0x30] sm:$0xf]
    %v9290 = vld [vmem:[#allocation51 + $0x34] sm:$0xf]
    %v9291 = vld [vmem:[#allocation51 + $0x38] sm:$0xf]
    %v9292 = vld [vmem:[#allocation51 + $0x3c] sm:$0xf]
    %v9293 = vld [vmem:[#allocation51 + $0x40] sm:$0xf]
    %v9294 = vld [vmem:[#allocation51 + $0x44] sm:$0xf]
    %v9295 = vld [vmem:[#allocation51 + $0x48] sm:$0xf]
    %v9296 = vld [vmem:[#allocation51 + $0x4c] sm:$0xf]
    %v9297 = vld [vmem:[#allocation51 + $0x50] sm:$0xf]
    %v9298 = vld [vmem:[#allocation51 + $0x54] sm:$0xf]
    %v9299 = vld [vmem:[#allocation51 + $0x58] sm:$0xf]
    %v9300 = vld [vmem:[#allocation51 + $0x5c] sm:$0xf]
    %v9301 = vld [vmem:[#allocation51 + $0x60] sm:$0xf]
    %v9302 = vld [vmem:[#allocation51 + $0x64] sm:$0xf]
    %v9303 = vld [vmem:[#allocation51 + $0x68] sm:$0xf]
    %v9304 = vld [vmem:[#allocation51 + $0x6c] sm:$0xf]
    %v9305 = vld [vmem:[#allocation51 + $0x70] sm:$0xf]
    %v9306 = vld [vmem:[#allocation51 + $0x74] sm:$0xf]
    %v9307 = vld [vmem:[#allocation51 + $0x78] sm:$0xf]
    %v9308 = vld [vmem:[#allocation51 + $0x7c] sm:$0xf]
    %v9309 = vld [vmem:[#allocation52] sm:$0x1]
    %v9310 = vpack.c.bf16 %v9275, %v9273
    %v9311 = vpack.c.bf16 %v9276, %v9274
    %v9313 = vlaneseq
    %v9314 = vshrl.u32 %v9313, 7
    %v9315 = vsub.s32 0, %v9314
    %v9316 = vrot.slane %v9309, %v9315
    %v9350 = vunpack.c.l.b16 %v9277
    %v9351 = vunpack.c.l.b16 %v9278
    %v9352 = vunpack.c.l.b16 %v9279
    %v9353 = vunpack.c.l.b16 %v9280
    %v9354 = vunpack.c.l.b16 %v9281
    %v9355 = vunpack.c.l.b16 %v9282
    %v9356 = vunpack.c.l.b16 %v9283
    %v9357 = vunpack.c.l.b16 %v9284
    %v9358 = vunpack.c.l.b16 %v9285
    %v9359 = vunpack.c.l.b16 %v9286
    %v9360 = vunpack.c.l.b16 %v9287
    %v9361 = vunpack.c.l.b16 %v9288
    %v9362 = vunpack.c.l.b16 %v9289
    %v9363 = vunpack.c.l.b16 %v9290
    %v9364 = vunpack.c.l.b16 %v9291
    %v9365 = vunpack.c.l.b16 %v9292
    %v9366 = vunpack.c.l.b16 %v9293
    %v9367 = vunpack.c.l.b16 %v9294
    %v9368 = vunpack.c.l.b16 %v9295
    %v9369 = vunpack.c.l.b16 %v9296
    %v9370 = vunpack.c.l.b16 %v9297
    %v9371 = vunpack.c.l.b16 %v9298
    %v9372 = vunpack.c.l.b16 %v9299
    %v9373 = vunpack.c.l.b16 %v9300
    %v9374 = vunpack.c.l.b16 %v9301
    %v9375 = vunpack.c.l.b16 %v9302
    %v9376 = vunpack.c.l.b16 %v9303
    %v9377 = vunpack.c.l.b16 %v9304
    %v9378 = vunpack.c.l.b16 %v9305
    %v9379 = vunpack.c.l.b16 %v9306
    %v9380 = vunpack.c.l.b16 %v9307
    %v9381 = vunpack.c.l.b16 %v9308
    %v9382 = vpack.c.b16 %v9351, %v9350
    %v9383 = vpack.c.b16 %v9353, %v9352
    %v9384 = vpack.c.b16 %v9355, %v9354
    %v9385 = vpack.c.b16 %v9357, %v9356
    %v9386 = vpack.c.b16 %v9359, %v9358
    %v9387 = vpack.c.b16 %v9361, %v9360
    %v9388 = vpack.c.b16 %v9363, %v9362
    %v9389 = vpack.c.b16 %v9365, %v9364
    %v9390 = vpack.c.b16 %v9367, %v9366
    %v9391 = vpack.c.b16 %v9369, %v9368
    %v9392 = vpack.c.b16 %v9371, %v9370
    %v9393 = vpack.c.b16 %v9373, %v9372
    %v9394 = vpack.c.b16 %v9375, %v9374
    %v9395 = vpack.c.b16 %v9377, %v9376
    %v9396 = vpack.c.b16 %v9379, %v9378
    %v9397 = vpack.c.b16 %v9381, %v9380
    %9414 = vmatprep.subr.bf16.mxu0 0
    %9415 = vmatpush1.bf16.msra.mxu0 %v9382
    %9416 = vmatprep.subr.bf16.mxu0 0
    %9417 = vmatpush1.bf16.msra.mxu0 %v9383
    %9418 = vmatprep.subr.bf16.mxu0 0
    %9419 = vmatpush1.bf16.msra.mxu0 %v9384
    %9420 = vmatprep.subr.bf16.mxu0 0
    %9421 = vmatpush1.bf16.msra.mxu0 %v9385
    %9422 = vmatprep.subr.bf16.mxu0 0
    %9423 = vmatpush1.bf16.msra.mxu0 %v9386
    %9424 = vmatprep.subr.bf16.mxu0 0
    %9425 = vmatpush1.bf16.msra.mxu0 %v9387
    %9426 = vmatprep.subr.bf16.mxu0 0
    %9427 = vmatpush1.bf16.msra.mxu0 %v9388
    %9428 = vmatprep.subr.bf16.mxu0 0
    %9429 = vmatpush1.bf16.msra.mxu0 %v9389
    %9430 = vmatprep.subr.bf16.mxu0 0
    %9431 = vmatpush1.bf16.msra.mxu0 %v9390
    %9432 = vmatprep.subr.bf16.mxu0 0
    %9433 = vmatpush1.bf16.msra.mxu0 %v9391
    %9434 = vmatprep.subr.bf16.mxu0 0
    %9435 = vmatpush1.bf16.msra.mxu0 %v9392
    %9436 = vmatprep.subr.bf16.mxu0 0
    %9437 = vmatpush1.bf16.msra.mxu0 %v9393
    %9438 = vmatprep.subr.bf16.mxu0 0
    %9439 = vmatpush1.bf16.msra.mxu0 %v9394
    %9440 = vmatprep.subr.bf16.mxu0 0
    %9441 = vmatpush1.bf16.msra.mxu0 %v9395
    %9442 = vmatprep.subr.bf16.mxu0 0
    %9443 = vmatpush1.bf16.msra.mxu0 %v9396
    %9444 = vmatprep.subr.bf16.mxu0 0
    %9445 = vmatpush1.bf16.msra.mxu0 %v9397
    %9446 = vmatprep.mubr.bf16.mxu0 %v9311
    %9447 = vmatmul.mubr.bf16.gmra.mrb[0].mxu0 %v9310
    %v9448 = vpop.f32.mrb[0].mxu0
    %v9449 = vadd.f32 %v9316, %v9448
    %v9450 = vpop.f32.mrb[0].mxu0
    %v9451 = vpop.f32.mrb[0].mxu0
    %v9452 = vadd.f32 %v9316, %v9451
    %v9453 = vpop.f32.mrb[0].mxu0
    %9454 = vdwg.mxu0
    %v9455 = vmax.f32 %v9449, 0.0
    %v9456 = vmax.f32 %v9452, 0.0
    %9457 = vadd.xlane.f32.xlu0 %v9455
    %v9458 = vpop.xlane.xlu0 %9457
    %v9459 = vsel %vm6673, %v9456, 0.0
    %9460 = vadd.xlane.f32.xlu0 %v9459
    %v9461 = vpop.xlane.xlu0 %9460
    %v9462 = vmul.f32 %v9458, %v739
    %v9463 = vmul.f32 %v9461, %v739
    %v9464 = vsub.f32 %v9455, %v9462
    %v9465 = vsub.f32 %v9456, %v9463
    %v9466 = vmul.f32 %v9464, %v9464
    %v9467 = vmul.f32 %v9465, %v9465
    %9468 = vadd.xlane.f32.xlu0 %v9466
    %v9469 = vpop.xlane.xlu0 %9468
    %v9470 = vsel %vm6673, %v9467, 0.0
    %9471 = vadd.xlane.f32.xlu0 %v9470
    %v9472 = vpop.xlane.xlu0 %9471
    %v9473 = vmul.f32 %v9469, %v739
    %v9474 = vmul.f32 %v9472, %v739
    %v9475 = vadd.f32 %v9473, 1e-05
    %v9476 = vadd.f32 %v9474, 1e-05
    %v9477 = vrsqrt.pop %v9475
    %v9478 = vrsqrt.pop %v9476
    %v9479 = vmul.f32 %v9464, %v9477
    %v9480 = vmul.f32 %v9465, %v9478
    %v9481 = vld [vmem:[#allocation54] sm:$0xf]
    %v9482 = vld [vmem:[#allocation54 + $0x4] sm:$0xf]
    %v9483 = vld [vmem:[#allocation54 + $0x8] sm:$0xf]
    %v9484 = vld [vmem:[#allocation54 + $0xc] sm:$0xf]
    %v9485 = vld [vmem:[#allocation54 + $0x10] sm:$0xf]
    %v9486 = vld [vmem:[#allocation54 + $0x14] sm:$0xf]
    %v9487 = vld [vmem:[#allocation54 + $0x18] sm:$0xf]
    %v9488 = vld [vmem:[#allocation54 + $0x1c] sm:$0xf]
    %v9489 = vld [vmem:[#allocation54 + $0x20] sm:$0xf]
    %v9490 = vld [vmem:[#allocation54 + $0x24] sm:$0xf]
    %v9491 = vld [vmem:[#allocation54 + $0x28] sm:$0xf]
    %v9492 = vld [vmem:[#allocation54 + $0x2c] sm:$0xf]
    %v9493 = vld [vmem:[#allocation54 + $0x30] sm:$0xf]
    %v9494 = vld [vmem:[#allocation54 + $0x34] sm:$0xf]
    %v9495 = vld [vmem:[#allocation54 + $0x38] sm:$0xf]
    %v9496 = vld [vmem:[#allocation54 + $0x3c] sm:$0xf]
    %v9497 = vld [vmem:[#allocation55] sm:$0x1]
    %v9498 = vpack.c.bf16 %v9480, %v9479
    %v9500 = vlaneseq
    %v9501 = vshrl.u32 %v9500, 7
    %v9502 = vsub.s32 0, %v9501
    %v9503 = vrot.slane %v9497, %v9502
    %v9521 = vunpack.c.l.b16 %v9481
    %v9522 = vunpack.c.l.b16 %v9482
    %v9523 = vunpack.c.l.b16 %v9483
    %v9524 = vunpack.c.l.b16 %v9484
    %v9525 = vunpack.c.l.b16 %v9485
    %v9526 = vunpack.c.l.b16 %v9486
    %v9527 = vunpack.c.l.b16 %v9487
    %v9528 = vunpack.c.l.b16 %v9488
    %v9529 = vunpack.c.l.b16 %v9489
    %v9530 = vunpack.c.l.b16 %v9490
    %v9531 = vunpack.c.l.b16 %v9491
    %v9532 = vunpack.c.l.b16 %v9492
    %v9533 = vunpack.c.l.b16 %v9493
    %v9534 = vunpack.c.l.b16 %v9494
    %v9535 = vunpack.c.l.b16 %v9495
    %v9536 = vunpack.c.l.b16 %v9496
    %v9537 = vpack.c.b16 %v9522, %v9521
    %v9538 = vpack.c.b16 %v9524, %v9523
    %v9539 = vpack.c.b16 %v9526, %v9525
    %v9540 = vpack.c.b16 %v9528, %v9527
    %v9541 = vpack.c.b16 %v9530, %v9529
    %v9542 = vpack.c.b16 %v9532, %v9531
    %v9543 = vpack.c.b16 %v9534, %v9533
    %v9544 = vpack.c.b16 %v9536, %v9535
    %9553 = vmatprep.subr.bf16.mxu0 0
    %9554 = vmatpush1.bf16.msra.mxu0 %v9537
    %9555 = vmatprep.subr.bf16.mxu0 0
    %9556 = vmatpush1.bf16.msra.mxu0 %v9538
    %9557 = vmatprep.subr.bf16.mxu0 0
    %9558 = vmatpush1.bf16.msra.mxu0 %v9539
    %9559 = vmatprep.subr.bf16.mxu0 0
    %9560 = vmatpush1.bf16.msra.mxu0 %v9540
    %9561 = vmatprep.subr.bf16.mxu0 0
    %9562 = vmatpush1.bf16.msra.mxu0 %v9541
    %9563 = vmatprep.subr.bf16.mxu0 0
    %9564 = vmatpush1.bf16.msra.mxu0 %v9542
    %9565 = vmatprep.subr.bf16.mxu0 0
    %9566 = vmatpush1.bf16.msra.mxu0 %v9543
    %9567 = vmatprep.subr.bf16.mxu0 0
    %9568 = vmatpush1.bf16.msra.mxu0 %v9544
    %9569 = vmatprep.subr.bf16.mxu0 0
    %9570 = vmatpush1.bf16.msra.mxu0 0
    %9571 = vmatprep.subr.bf16.mxu0 0
    %9572 = vmatpush1.bf16.msra.mxu0 0
    %9573 = vmatprep.subr.bf16.mxu0 0
    %9574 = vmatpush1.bf16.msra.mxu0 0
    %9575 = vmatprep.subr.bf16.mxu0 0
    %9576 = vmatpush1.bf16.msra.mxu0 0
    %9577 = vmatprep.subr.bf16.mxu0 0
    %9578 = vmatpush1.bf16.msra.mxu0 0
    %9579 = vmatprep.subr.bf16.mxu0 0
    %9580 = vmatpush1.bf16.msra.mxu0 0
    %9581 = vmatprep.subr.bf16.mxu0 0
    %9582 = vmatpush1.bf16.msra.mxu0 0
    %9583 = vmatprep.subr.bf16.mxu0 0
    %9584 = vmatpush1.bf16.msra.mxu0 0
    %9585 = vmatprep.mubr.bf16.mxu0 0
    %9586 = vmatmul.mubr.bf16.gmra.mrb[0].mxu0 %v9498
    %v9587 = vpop.f32.mrb[0].mxu0
    %v9588 = vadd.f32 %v9503, %v9587
    %v9589 = vpop.f32.mrb[0].mxu0
    %v9590 = vpop.f32.mrb[0].mxu0
    %v9591 = vadd.f32 %v9503, %v9590
    %v9592 = vpop.f32.mrb[0].mxu0
    %9593 = vdwg.mxu0
    %9594 = vst [vmem:[%s93] sm:$0xff] %v9588
    %9595 = vst [vmem:[%s93 + $0x8] sm:$0xf] %v9591
    // Predicated region
    $region330: #{dqn_forward.1} parent=1 // pred_check
      _
    $region331: #{dqn_forward.1} parent=1 // pred_check_branch
      %9597 = sbr.rel (0) target = $region333
    $region332: #{dqn_forward.1} parent=1 // pred_region
      _
    $region333: #{dqn_forward.1} parent=1 // pred_fallthru
      _
    // Predicated region
    $region334: #{dqn_forward.1} parent=1 // pred_check
      _
    $region335: #{dqn_forward.1} parent=1 // pred_check_branch
      %9599 = sbr.rel (0) target = $region337
    $region336: #{dqn_forward.1} parent=1 // pred_region
      _
    $region337: #{dqn_forward.1} parent=1 // pred_fallthru
      _
    %9600 = vsyncpa [#allocation3], 1
    %9601 = vsyncpa [#allocation5], 1
    %9602 = vsyncpa [#allocation8], 1
    %9603 = vsyncpa [#allocation11], 1
    %9604 = vsyncpa [#allocation14], 1
    %9605 = vsyncpa [#allocation17], 1
    %9606 = vsyncpa [#allocation20], 1
    %9607 = vsyncpa [#allocation23], 1
    %9608 = vsyncpa [#allocation26], 1
    %9609 = vsyncpa [#allocation29], 1
    %9610 = vsyncpa [#allocation32], 1
    %9611 = vsyncpa [#allocation35], 1
    %9612 = vsyncpa [#allocation38], 1
    %9613 = vsyncpa [#allocation41], 1
    %9614 = vsyncpa [#allocation44], 1
    %9615 = vsyncpa [#allocation47], 1
    %9616 = vsyncpa [#allocation50], 1
    %9617 = vsyncpa [#allocation53], 1
    %9618 = vsyncpa [#allocation56], 1

</llo_original>
